<compile_context>
chip_gen: v6e
topology: v6e:2x2x1
jax: 0.10.0
libtpu: 0.0.40
codegen_flags: <defaults>
</compile_context>

<pallas_src>
import math

import jax
import jax.numpy as jnp
from jax import lax
from jax.experimental import pallas as pl
from jax.experimental.pallas import tpu as pltpu

# Synthetic hyper-parameters (modulo_list / feature_dim are external in the
# original code; mid_dim = 2048 is hard-coded in the module).
MODULO_LIST = (11, 13, 17)
FEATURE_DIM = 256
MID_DIM = 2048
NSPLIT = 2                      # w2 column halves (grid items per head)
MID_HALF = MID_DIM // NSPLIT
BN_EPS = 1e-5
OUT_PAD = 128                   # lane-dense shared logits slab width
# Column offset of each head inside the shared 128-wide w3/b3/logits slab.
OUT_OFFSETS = tuple(int(sum(MODULO_LIST[:i])) for i in range(len(MODULO_LIST)))
assert sum(MODULO_LIST) <= OUT_PAD


def _decoder_heads_kernel(x_ref,
                          w1_ref, c1_ref,
                          w2_ref, c2_ref,
                          w3_ref,
                          out_ref):
    """One (head, w2-half) item per grid step.  Weights bf16, math f32."""
    n = pl.program_id(1)

    # Layer 1 (BN1 folded into w1/c1) + GELU.  Recomputed per half — w1 is
    # resident across both halves of a head and the ~17 MFLOP are negligible
    # next to the 4 MiB w2 half-stream.
    x = x_ref[...]                                                    # (B, F) bf16
    h1 = jnp.dot(x, w1_ref[...], preferred_element_type=jnp.float32)  # (B, M) f32
    h1 = jax.nn.gelu(h1 + c1_ref[...], approximate=True)              # EUP tanh

    # Layer 2 half (BN2 folded into w2/c2) + GELU.
    h2 = jnp.dot(h1.astype(jnp.bfloat16), w2_ref[...],
                 preferred_element_type=jnp.float32)                  # (B, M/2) f32
    h2 = jax.nn.gelu(h2 + c2_ref[...], approximate=True)

    # Layer 3 partial product against the matching 1024-row slice of the
    # shared, fully-resident (2048, 128) w3 slab.  Bias is added in f32 in
    # the wrapper after summing the two halves.
    row0 = pl.multiple_of(n * MID_HALF, MID_HALF)
    w3_half = w3_ref[pl.ds(row0, MID_HALF), :]                        # (M/2, 128)
    out_ref[...] = jnp.dot(h2.astype(jnp.bfloat16), w3_half,
                           preferred_element_type=jnp.float32)        # (B, 128)


def simple_decoder_pallas(x, fused):
    """Equivalent of SimpleDecoder.forward: returns a list of (B, modulo) arrays."""
    B = x.shape[0]
    H = fused["w1"].shape[0]
    x_bf16 = x.astype(jnp.bfloat16)

    partial = pl.pallas_call(
        _decoder_heads_kernel,
        out_shape=jax.ShapeDtypeStruct((H, NSPLIT, B, OUT_PAD), jnp.float32),
        grid=(H, NSPLIT),
        in_specs=[
            # x: resident across the whole grid.
            pl.BlockSpec((B, FEATURE_DIM), lambda h, n: (0, 0)),
            # layer 1 (per head; resident across the head's two halves).
            pl.BlockSpec((None, FEATURE_DIM, MID_DIM), lambda h, n: (h, 0, 0)),
            pl.BlockSpec((None, 1, MID_DIM), lambda h, n: (h, 0, 0)),
            # layer 2: 1024-wide column half per grid item (~4 MiB bf16 DMA).
            pl.BlockSpec((None, MID_DIM, MID_HALF), lambda h, n: (h, 0, n)),
            pl.BlockSpec((None, 1, MID_HALF), lambda h, n: (h, 0, n)),
            # layer 3: ONE shared packed slab, constant index -> resident.
            pl.BlockSpec((MID_DIM, OUT_PAD), lambda h, n: (0, 0)),
        ],
        out_specs=pl.BlockSpec((None, None, B, OUT_PAD), lambda h, n: (h, n, 0, 0)),
        compiler_params=pltpu.CompilerParams(
            # All 6 grid items are independent.  (On v7x, pltpu.CORE_PARALLEL
            # here shards them 3/3 across the two TensorCores explicitly;
            # "parallel" is the portable spelling.)
            dimension_semantics=("parallel", "parallel"),
            # ~12 MiB double-buffered bf16 footprint; 32 MiB fits every
            # generation's per-TC VMEM (v7x physical is 64 MiB).
            vmem_limit_bytes=32 * 1024 * 1024,
        ),
    )(x_bf16,
      fused["w1"], fused["c1"],
      fused["w2"], fused["c2"],
      fused["w3"])

    # Sum the two w2/w3 halves, add the f32 bias, slice each head's columns.
    logits = partial.sum(axis=1) + fused["b3"]          # (H, B, OUT_PAD)
    return [logits[i, :, off:off + m]
            for i, (off, m) in enumerate(zip(OUT_OFFSETS, MODULO_LIST))]


def fold_bn_params(params_list):
    """Fold eval-mode BN into the preceding Linear, cast weights to bf16, pack heads."""
    w1s, c1s, w2s, c2s, b3s = [], [], [], [], []
    w3_slab = jnp.zeros((MID_DIM, OUT_PAD), jnp.float32)
    for p, off, modulo in zip(params_list, OUT_OFFSETS, MODULO_LIST):
        s1 = p["g1"] * lax.rsqrt(p["v1"] + BN_EPS)            # (1, M)
        s2 = p["g2"] * lax.rsqrt(p["v2"] + BN_EPS)            # (1, M)
        w1s.append((p["w1"] * s1).astype(jnp.bfloat16))       # scale out columns
        c1s.append((p["b1"] - p["m1"] * s1).astype(jnp.float32))
        w2s.append((p["w2"] * s2).astype(jnp.bfloat16))
        c2s.append((p["b2"] - p["m2"] * s2).astype(jnp.float32))
        # Pack this head's real w3 columns into the shared slab.
        w3_slab = w3_slab.at[:, off:off + modulo].set(p["w3"])
        b3s.append(jnp.zeros((1, OUT_PAD), jnp.float32)
                   .at[:, off:off + modulo].set(p["b3"]))
    return {
        "w1": jnp.stack(w1s), "c1": jnp.stack(c1s),
        "w2": jnp.stack(w2s), "c2": jnp.stack(c2s),
        "w3": w3_slab.astype(jnp.bfloat16),        # shared (MID_DIM, OUT_PAD)
        "b3": jnp.stack(b3s),                      # (H, 1, OUT_PAD) f32
    }


def decoder_block_ref(x, p):
    """Pure-JAX f32 reference for one head (original, un-folded math, exact GELU)."""
    h = x @ p["w1"]
    h = (h - p["m1"]) / jnp.sqrt(p["v1"] + BN_EPS) * p["g1"] + p["b1"]
    h = jax.nn.gelu(h, approximate=False)
    h = h @ p["w2"]
    h = (h - p["m2"]) / jnp.sqrt(p["v2"] + BN_EPS) * p["g2"] + p["b2"]
    h = jax.nn.gelu(h, approximate=False)
    return h @ p["w3"] + p["b3"]


def init_params(key):
    """Deterministic synthetic parameters for each modulo head (f32, PyTorch-like)."""
    params_list = []
    for modulo in MODULO_LIST:
        key, *ks = jax.random.split(key, 13)
        p = {
            # Linear weights stored as (in, out)  [PyTorch stores (out, in)]
            "w1": jax.random.normal(ks[0], (FEATURE_DIM, MID_DIM), jnp.float32)
                  / math.sqrt(FEATURE_DIM),
            "w2": jax.random.normal(ks[1], (MID_DIM, MID_DIM), jnp.float32)
                  / math.sqrt(MID_DIM),
            "w3": jax.random.normal(ks[2], (MID_DIM, modulo), jnp.float32)
                  / math.sqrt(MID_DIM),
            "b3": 0.01 * jax.random.normal(ks[3], (1, modulo), jnp.float32),
            # BatchNorm1d #1 (gamma, beta, running_mean, running_var)
            "g1": 1.0 + 0.1 * jax.random.normal(ks[4], (1, MID_DIM), jnp.float32),
            "b1": 0.1 * jax.random.normal(ks[5], (1, MID_DIM), jnp.float32),
            "m1": 0.1 * jax.random.normal(ks[6], (1, MID_DIM), jnp.float32),
            "v1": 0.9 + 0.1 * jax.nn.softplus(
                jax.random.normal(ks[7], (1, MID_DIM), jnp.float32)),
            # BatchNorm1d #2
            "g2": 1.0 + 0.1 * jax.random.normal(ks[8], (1, MID_DIM), jnp.float32),
            "b2": 0.1 * jax.random.normal(ks[9], (1, MID_DIM), jnp.float32),
            "m2": 0.1 * jax.random.normal(ks[10], (1, MID_DIM), jnp.float32),
            "v2": 0.9 + 0.1 * jax.nn.softplus(
                jax.random.normal(ks[11], (1, MID_DIM), jnp.float32)),
        }
        params_list.append(p)
    return params_list


if __name__ == "__main__":
    key = jax.random.PRNGKey(0)
    key_x, key_p = jax.random.split(key)

    B = 16
    x = jax.random.normal(key_x, (B, FEATURE_DIM), jnp.float32)
    params_list = init_params(key_p)
    fused = fold_bn_params(params_list)

    outs = simple_decoder_pallas(x, fused)
    outs = [jax.block_until_ready(o) for o in outs]

    # Sanity check against a pure-JAX f32 reference (tolerance accounts for
    # bf16 weight/activation streaming and the tanh-approximate GELU).
    for o, p, modulo in zip(outs, params_list, MODULO_LIST):
        assert o.shape == (B, modulo), (o.shape, (B, modulo))
        ref = decoder_block_ref(x, p)
        max_err = jnp.max(jnp.abs(o - ref))
        assert jnp.allclose(o, ref, rtol=5e-2, atol=5e-2), \
            f"mismatch for modulo={modulo}: max abs err {max_err}"

    print("KERNEL_OK")
</pallas_src>

<mosaic_0001>
module attributes {stable_mosaic.version = 11 : i64} {
  func.func @_decoder_heads_kernel(%arg0: i32, %arg1: i32, %arg2: memref<16x256xbf16, #tpu.memory_space<vmem>>, %arg3: memref<1x256x2048xbf16, #tpu.memory_space<vmem>>, %arg4: memref<1x1x2048xf32, #tpu.memory_space<vmem>>, %arg5: memref<1x2048x1024xbf16, #tpu.memory_space<vmem>>, %arg6: memref<1x1x1024xf32, #tpu.memory_space<vmem>>, %arg7: memref<2048x128xbf16, #tpu.memory_space<vmem>>, %arg8: memref<1x1x16x128xf32, #tpu.memory_space<vmem>>) attributes {dimension_semantics = [#tpu.dimension_semantics<parallel>, #tpu.dimension_semantics<parallel>], iteration_bounds = array<i64: 3, 2>, scalar_prefetch = 0 : i64, scratch_operands = 0 : i64, tpu.core_type = #tpu.core_type<tc>, window_params = [{pipeline_mode = #tpu.pipeline_mode<synchronous>, transform_indices = @transform_0, window_bounds = array<i64: 16, 256>}, {transform_indices = @transform_1, window_bounds = array<i64: 1, 256, 2048>}, {transform_indices = @transform_2, window_bounds = array<i64: 1, 1, 2048>}, {transform_indices = @transform_3, window_bounds = array<i64: 1, 2048, 1024>}, {transform_indices = @transform_4, window_bounds = array<i64: 1, 1, 1024>}, {pipeline_mode = #tpu.pipeline_mode<synchronous>, transform_indices = @transform_5, window_bounds = array<i64: 2048, 128>}, {transform_indices = @transform_6, window_bounds = array<i64: 1, 1, 16, 128>}]} {
    %c0 = arith.constant 0 : index
    %c0_0 = arith.constant 0 : index
    %0 = vector.load %arg2[%c0, %c0_0] : memref<16x256xbf16, #tpu.memory_space<vmem>>, vector<16x256xbf16>
    %c0_1 = arith.constant 0 : index
    %c0_2 = arith.constant 0 : index
    %c0_3 = arith.constant 0 : index
    %1 = vector.load %arg3[%c0_1, %c0_2, %c0_3] : memref<1x256x2048xbf16, #tpu.memory_space<vmem>>, vector<1x256x2048xbf16>
    %2 = vector.shape_cast %1 : vector<1x256x2048xbf16> to vector<256x2048xbf16>
    %cst = arith.constant dense<0.000000e+00> : vector<16x2048xf32>
    %3 = tpu.matmul %0, %2, %cst {dimension_numbers = #tpu.dot_dimension_numbers<[1], [0], [0], [1], [0, 0, 1, 1], [], []>} : vector<16x256xbf16>, vector<256x2048xbf16>, vector<16x2048xf32> -> vector<16x2048xf32>
    %c0_4 = arith.constant 0 : index
    %c0_5 = arith.constant 0 : index
    %c0_6 = arith.constant 0 : index
    %4 = vector.load %arg4[%c0_4, %c0_5, %c0_6] : memref<1x1x2048xf32, #tpu.memory_space<vmem>>, vector<1x1x2048xf32>
    %5 = vector.shape_cast %4 : vector<1x1x2048xf32> to vector<1x2048xf32>
    %6 = vector.broadcast %5 : vector<1x2048xf32> to vector<16x2048xf32>
    %7 = arith.addf %3, %6 : vector<16x2048xf32>
    %8 = arith.mulf %7, %7 : vector<16x2048xf32>
    %9 = arith.mulf %7, %8 : vector<16x2048xf32>
    %cst_7 = arith.constant 4.471500e-02 : f32
    %10 = vector.broadcast %cst_7 : f32 to vector<16x2048xf32>
    %11 = arith.mulf %10, %9 : vector<16x2048xf32>
    %12 = arith.addf %7, %11 : vector<16x2048xf32>
    %cst_8 = arith.constant 0.797884583 : f32
    %13 = vector.broadcast %cst_8 : f32 to vector<16x2048xf32>
    %14 = arith.mulf %13, %12 : vector<16x2048xf32>
    %15 = math.tanh %14 : vector<16x2048xf32>
    %cst_9 = arith.constant 1.000000e+00 : f32
    %16 = vector.broadcast %cst_9 : f32 to vector<16x2048xf32>
    %17 = arith.addf %16, %15 : vector<16x2048xf32>
    %cst_10 = arith.constant 5.000000e-01 : f32
    %18 = vector.broadcast %cst_10 : f32 to vector<16x2048xf32>
    %19 = arith.mulf %18, %17 : vector<16x2048xf32>
    %20 = arith.mulf %7, %19 : vector<16x2048xf32>
    %21 = arith.truncf %20 : vector<16x2048xf32> to vector<16x2048xbf16>
    %c0_11 = arith.constant 0 : index
    %c0_12 = arith.constant 0 : index
    %c0_13 = arith.constant 0 : index
    %22 = vector.load %arg5[%c0_11, %c0_12, %c0_13] : memref<1x2048x1024xbf16, #tpu.memory_space<vmem>>, vector<1x2048x1024xbf16>
    %23 = vector.shape_cast %22 : vector<1x2048x1024xbf16> to vector<2048x1024xbf16>
    %cst_14 = arith.constant dense<0.000000e+00> : vector<16x1024xf32>
    %24 = tpu.matmul %21, %23, %cst_14 {dimension_numbers = #tpu.dot_dimension_numbers<[1], [0], [0], [1], [0, 0, 1, 1], [], []>} : vector<16x2048xbf16>, vector<2048x1024xbf16>, vector<16x1024xf32> -> vector<16x1024xf32>
    %c0_15 = arith.constant 0 : index
    %c0_16 = arith.constant 0 : index
    %c0_17 = arith.constant 0 : index
    %25 = vector.load %arg6[%c0_15, %c0_16, %c0_17] : memref<1x1x1024xf32, #tpu.memory_space<vmem>>, vector<1x1x1024xf32>
    %26 = vector.shape_cast %25 : vector<1x1x1024xf32> to vector<1x1024xf32>
    %27 = vector.broadcast %26 : vector<1x1024xf32> to vector<16x1024xf32>
    %28 = arith.addf %24, %27 : vector<16x1024xf32>
    %29 = arith.mulf %28, %28 : vector<16x1024xf32>
    %30 = arith.mulf %28, %29 : vector<16x1024xf32>
    %cst_18 = arith.constant 4.471500e-02 : f32
    %31 = vector.broadcast %cst_18 : f32 to vector<16x1024xf32>
    %32 = arith.mulf %31, %30 : vector<16x1024xf32>
    %33 = arith.addf %28, %32 : vector<16x1024xf32>
    %cst_19 = arith.constant 0.797884583 : f32
    %34 = vector.broadcast %cst_19 : f32 to vector<16x1024xf32>
    %35 = arith.mulf %34, %33 : vector<16x1024xf32>
    %36 = math.tanh %35 : vector<16x1024xf32>
    %cst_20 = arith.constant 1.000000e+00 : f32
    %37 = vector.broadcast %cst_20 : f32 to vector<16x1024xf32>
    %38 = arith.addf %37, %36 : vector<16x1024xf32>
    %cst_21 = arith.constant 5.000000e-01 : f32
    %39 = vector.broadcast %cst_21 : f32 to vector<16x1024xf32>
    %40 = arith.mulf %39, %38 : vector<16x1024xf32>
    %41 = arith.mulf %28, %40 : vector<16x1024xf32>
    %c1024_i32 = arith.constant 1024 : i32
    %42 = arith.muli %arg1, %c1024_i32 : i32
    %43 = tpu.assume_multiple %42, 1024 : i32
    %44 = arith.index_cast %43 : i32 to index
    %c0_22 = arith.constant 0 : index
    %45 = vector.load %arg7[%44, %c0_22] : memref<2048x128xbf16, #tpu.memory_space<vmem>>, vector<1024x128xbf16>
    %46 = arith.truncf %41 : vector<16x1024xf32> to vector<16x1024xbf16>
    %cst_23 = arith.constant dense<0.000000e+00> : vector<16x128xf32>
    %47 = tpu.matmul %46, %45, %cst_23 {dimension_numbers = #tpu.dot_dimension_numbers<[1], [0], [0], [1], [0, 0, 1, 1], [], []>} : vector<16x1024xbf16>, vector<1024x128xbf16>, vector<16x128xf32> -> vector<16x128xf32>
    %c0_24 = arith.constant 0 : index
    %c0_25 = arith.constant 0 : index
    %c0_26 = arith.constant 0 : index
    %c0_27 = arith.constant 0 : index
    %48 = vector.load %arg8[%c0_24, %c0_25, %c0_26, %c0_27] : memref<1x1x16x128xf32, #tpu.memory_space<vmem>>, vector<1x1x16x128xf32>
    %49 = vector.shape_cast %48 : vector<1x1x16x128xf32> to vector<16x128xf32>
    %50 = vector.shape_cast %47 : vector<16x128xf32> to vector<1x1x16x128xf32>
    tpu.vector_store %arg8[%c0_24, %c0_25, %c0_26, %c0_27], %50 {strides = array<i32>} : memref<1x1x16x128xf32, #tpu.memory_space<vmem>>, vector<1x1x16x128xf32>,
    return
  }
  func.func @transform_0(%arg0: i32, %arg1: i32) -> (i32, i32) {
    %c0_i32 = arith.constant 0 : i32
    %c0_i32_0 = arith.constant 0 : i32
    %c0_i32_1 = arith.constant 0 : i32
    return %c0_i32, %c0_i32_0 : i32, i32
  }
  func.func @transform_1(%arg0: i32, %arg1: i32) -> (i32, i32, i32) {
    %c0_i32 = arith.constant 0 : i32
    %c0_i32_0 = arith.constant 0 : i32
    %c0_i32_1 = arith.constant 0 : i32
    return %arg0, %c0_i32, %c0_i32_0 : i32, i32, i32
  }
  func.func @transform_2(%arg0: i32, %arg1: i32) -> (i32, i32, i32) {
    %c0_i32 = arith.constant 0 : i32
    %c0_i32_0 = arith.constant 0 : i32
    %c0_i32_1 = arith.constant 0 : i32
    return %arg0, %c0_i32, %c0_i32_0 : i32, i32, i32
  }
  func.func @transform_3(%arg0: i32, %arg1: i32) -> (i32, i32, i32) {
    %c0_i32 = arith.constant 0 : i32
    %c0_i32_0 = arith.constant 0 : i32
    return %arg0, %c0_i32, %arg1 : i32, i32, i32
  }
  func.func @transform_4(%arg0: i32, %arg1: i32) -> (i32, i32, i32) {
    %c0_i32 = arith.constant 0 : i32
    %c0_i32_0 = arith.constant 0 : i32
    return %arg0, %c0_i32, %arg1 : i32, i32, i32
  }
  func.func @transform_5(%arg0: i32, %arg1: i32) -> (i32, i32) {
    %c0_i32 = arith.constant 0 : i32
    %c0_i32_0 = arith.constant 0 : i32
    %c0_i32_1 = arith.constant 0 : i32
    return %c0_i32, %c0_i32_0 : i32, i32
  }
  func.func @transform_6(%arg0: i32, %arg1: i32) -> (i32, i32, i32, i32) {
    %c0_i32 = arith.constant 0 : i32
    %c0_i32_0 = arith.constant 0 : i32
    %c0_i32_1 = arith.constant 0 : i32
    return %arg0, %arg1, %c0_i32, %c0_i32_0 : i32, i32, i32, i32
  }
}

</mosaic_0001>

<llo_original>
// kernel: tpu_custom_call.1
$region0: #{tpu_custom_call.1}
  #allocation0 [shape = 'u32[]', space=smem, size = 0x4, offset = 0x4, fixed_abs, tag = 'smem constant byte address 0x4 - core index']
  #allocation1 [shape = 'u32[144,128]{1,0:T(1,128)}', space=vmem, size = 0x12000, scoped, tag = 'internal scratch']
  %s0 = inlined_call_operand.hbm [shape: bf16[16,256], index: 0, kind: input, shape index: {}]
  %s1 = inlined_call_operand.hbm [shape: bf16[3,256,2048], index: 1, kind: input, shape index: {}]
  %s2 = inlined_call_operand.hbm [shape: f32[3,1,2048], index: 2, kind: input, shape index: {}]
  %s3 = inlined_call_operand.hbm [shape: bf16[3,2048,2048], index: 3, kind: input, shape index: {}]
  %s4 = inlined_call_operand.hbm [shape: f32[3,1,2048], index: 4, kind: input, shape index: {}]
  %s5 = inlined_call_operand.hbm [shape: bf16[2048,128], index: 5, kind: input, shape index: {}]
  %s6 = inlined_call_operand.hbm [shape: f32[3,2,16,128], index: 6, kind: output, shape index: {}]
  %s7 = sld [smem:[#allocation0]]
  $region81: #{tpu_custom_call.1} parent=0
    _
  %s9 = ssub.s32 1, %s7
  %s10 = scalar_select 0, %s9, %s7
  $region1: #{tpu_custom_call.1} parent=0
    #allocation2 [shape = 'u8[8192]{0}', space=vmem, size = 0x2000, scoped, tag = 'input window, operand 0, single buffered']
    #allocation3 [shape = 's32[2]{0}', space=sflag, size = 0x8, scoped, tag = 'scoped memory for tpu_custom_call.1']
    #allocation4 [shape = 's32[2]{0}', space=sflag, size = 0x8, scoped, tag = 'scoped memory for tpu_custom_call.1']
    #allocation5 [shape = 'u8[2097152]{0}', space=vmem, size = 0x200000, scoped, tag = 'input window, operand 1']
    #allocation6 [shape = 's32[2]{0}', space=sflag, size = 0x8, scoped, tag = 'scoped memory for tpu_custom_call.1']
    #allocation7 [shape = 'u8[16384]{0}', space=vmem, size = 0x4000, scoped, tag = 'input window, operand 2']
    #allocation8 [shape = 'u8[8388608]{0}', space=vmem, size = 0x800000, scoped, tag = 'input window, operand 3']
    #allocation9 [shape = 's32[2]{0}', space=sflag, size = 0x8, scoped, tag = 'scoped memory for tpu_custom_call.1']
    #allocation10 [shape = 'u8[8192]{0}', space=vmem, size = 0x2000, scoped, tag = 'input window, operand 4']
    #allocation11 [shape = 'u8[524288]{0}', space=vmem, size = 0x80000, scoped, tag = 'input window, operand 5, single buffered']
    #allocation12 [shape = 's32[1]{0}', space=sflag, size = 0x4, scoped, tag = 'scoped memory for tpu_custom_call.1']
    #allocation13 [shape = 'u8[16384]{0}', space=vmem, size = 0x4000, scoped, tag = 'output window, operand 0']
    %11 = vsyncpa [#allocation3], 0
    %12 = vsyncpa [#allocation6], 0
    %s13 = scalar_lea.sflag [#allocation6], 1
    %14 = vsyncpa %s13, 0
    %15 = vsyncpa [#allocation9], 0
    %s16 = scalar_lea.sflag [#allocation9], 1
    %17 = vsyncpa %s16, 0
    %18 = vsyncpa [#allocation12], 0
    %19 = vsyncpa [#allocation4], 0
    %s20 = scalar_lea.sflag [#allocation4], 1
    %21 = vsyncpa %s20, 0
    loop: start=0, step=1, limit=8
    $region2: #{tpu_custom_call.1} parent=1 // loop_pre_header
      _
    $region3: #{tpu_custom_call.1} parent=1 // loop_header
      %s23 = sphi 0, %s27
      %p24 = scmp.ge.s32.totalorder %s23, 8
      %s30 = sphi 0, %s42
      %s31 = sphi 0, %s38
      %s32 = sphi 0, %s30
      %s33 = sphi 0, %s31
      %s34 = sphi 0, %s32
      %s35 = sphi 0, %s33
      %s43 = sphi 0, %s43
      %s45 = sphi 0, %s43
      %s46 = sphi 0, %s45
      %s60 = sphi 0, %s46
      %s66 = sphi 0, %s68
      %s69 = sphi 0, %s66
      %s70 = sphi 0, %s69
      %s86 = sphi 0, %s70
      %s92 = sphi 0, %s94
      %s95 = sphi 0, %s92
      %s96 = sphi 0, %s95
      %s112 = sphi 0, %s96
      %s120 = sphi 0, %s122
      %s123 = sphi 0, %s120
      %s124 = sphi 0, %s123
      %s140 = sphi 0, %s124
      %s148 = sphi 0, %s150
      %s151 = sphi 0, %s148
      %s152 = sphi 0, %s151
      %s168 = sphi 0, %s152
      %s172 = sphi 0, %s172
      %s174 = sphi 0, %s172
      %s175 = sphi 0, %s174
      %s189 = sphi 0, %s175
      %s197 = sphi 0, %s199
      %s200 = sphi 0, %s197
      %s201 = sphi 0, %s200
      %s217 = sphi 0, %s201
    $region4: #{tpu_custom_call.1} parent=1 // loop_header_branch
      %26 = sbr.rel (%p24) target = $region8
    $region5: #{tpu_custom_call.1} parent=1 // loop_body
      %s28 = ssub.s32 %s23, 1
      %s29 = ssub.s32 %s23, 2
      %s36 = sadd.s32 1, %s31
      %p37 = scmp.ge.s32.totalorder %s36, 2
      %s38 = scalar_select %p37, 0, %s36
      %s39 = sadd.s32 1, %s30
      %s40 = scalar_select %p37, %s39, %s30
      %p41 = scmp.ge.s32.totalorder %s40, 3
      %s42 = scalar_select %p41, 0, %s40
      %s44 = sadd.s32 %s43, 1
      %p47 = scmp.eq.s32.totalorder %s23, 5
      %p48 = scmp.ne.s32.totalorder %s43, %s45
      %p49 = scmp.eq.s32.totalorder %s23, 0
      %p50 = por %p48, %p49
      %p51 = scmp.ne.s32.totalorder %s43, %s45
      %p52 = scmp.eq.s32.totalorder %s28, 5
      %p53 = por %p51, %p52
      %p54 = scmp.ne.s32.totalorder %s45, %s46
      %p55 = scmp.eq.s32.totalorder %s28, 0
      %p56 = por %p54, %p55
      %p57 = scmp.ne.s32.totalorder %s45, %s46
      %p58 = scmp.eq.s32.totalorder %s29, 5
      %p59 = por %p57, %p58
      %p61 = scmp.ne.s32.totalorder %s46, %s60
      %p62 = scmp.eq.s32.totalorder %s29, 0
      %p63 = por %p61, %p62
      %s64 = ssub.s32 %s30, %s42
      %p65 = scmp.eq.s32.totalorder %s64, 0
      %s67 = sadd.s32 %s66, 1
      %s68 = scalar_select %p65, %s66, %s67
      %p71 = pneg %p65
      %p72 = scmp.eq.s32.totalorder %s23, 5
      %p73 = por %p71, %p72
      %p74 = scmp.ne.s32.totalorder %s66, %s69
      %p75 = scmp.eq.s32.totalorder %s23, 0
      %p76 = por %p74, %p75
      %p77 = scmp.ne.s32.totalorder %s66, %s69
      %p78 = scmp.eq.s32.totalorder %s28, 5
      %p79 = por %p77, %p78
      %p80 = scmp.ne.s32.totalorder %s69, %s70
      %p81 = scmp.eq.s32.totalorder %s28, 0
      %p82 = por %p80, %p81
      %p83 = scmp.ne.s32.totalorder %s69, %s70
      %p84 = scmp.eq.s32.totalorder %s29, 5
      %p85 = por %p83, %p84
      %p87 = scmp.ne.s32.totalorder %s70, %s86
      %p88 = scmp.eq.s32.totalorder %s29, 0
      %p89 = por %p87, %p88
      %s90 = ssub.s32 %s30, %s42
      %p91 = scmp.eq.s32.totalorder %s90, 0
      %s93 = sadd.s32 %s92, 1
      %s94 = scalar_select %p91, %s92, %s93
      %p97 = pneg %p91
      %p98 = scmp.eq.s32.totalorder %s23, 5
      %p99 = por %p97, %p98
      %p100 = scmp.ne.s32.totalorder %s92, %s95
      %p101 = scmp.eq.s32.totalorder %s23, 0
      %p102 = por %p100, %p101
      %p103 = scmp.ne.s32.totalorder %s92, %s95
      %p104 = scmp.eq.s32.totalorder %s28, 5
      %p105 = por %p103, %p104
      %p106 = scmp.ne.s32.totalorder %s95, %s96
      %p107 = scmp.eq.s32.totalorder %s28, 0
      %p108 = por %p106, %p107
      %p109 = scmp.ne.s32.totalorder %s95, %s96
      %p110 = scmp.eq.s32.totalorder %s29, 5
      %p111 = por %p109, %p110
      %p113 = scmp.ne.s32.totalorder %s96, %s112
      %p114 = scmp.eq.s32.totalorder %s29, 0
      %p115 = por %p113, %p114
      %s116 = ssub.s32 %s30, %s42
      %s117 = ssub.s32 %s31, %s38
      %s118 = sor.u32 %s116, %s117
      %p119 = scmp.eq.s32.totalorder %s118, 0
      %s121 = sadd.s32 %s120, 1
      %s122 = scalar_select %p119, %s120, %s121
      %p125 = pneg %p119
      %p126 = scmp.eq.s32.totalorder %s23, 5
      %p127 = por %p125, %p126
      %p128 = scmp.ne.s32.totalorder %s120, %s123
      %p129 = scmp.eq.s32.totalorder %s23, 0
      %p130 = por %p128, %p129
      %p131 = scmp.ne.s32.totalorder %s120, %s123
      %p132 = scmp.eq.s32.totalorder %s28, 5
      %p133 = por %p131, %p132
      %p134 = scmp.ne.s32.totalorder %s123, %s124
      %p135 = scmp.eq.s32.totalorder %s28, 0
      %p136 = por %p134, %p135
      %p137 = scmp.ne.s32.totalorder %s123, %s124
      %p138 = scmp.eq.s32.totalorder %s29, 5
      %p139 = por %p137, %p138
      %p141 = scmp.ne.s32.totalorder %s124, %s140
      %p142 = scmp.eq.s32.totalorder %s29, 0
      %p143 = por %p141, %p142
      %s144 = ssub.s32 %s30, %s42
      %s145 = ssub.s32 %s31, %s38
      %s146 = sor.u32 %s144, %s145
      %p147 = scmp.eq.s32.totalorder %s146, 0
      %s149 = sadd.s32 %s148, 1
      %s150 = scalar_select %p147, %s148, %s149
      %p153 = pneg %p147
      %p154 = scmp.eq.s32.totalorder %s23, 5
      %p155 = por %p153, %p154
      %p156 = scmp.ne.s32.totalorder %s148, %s151
      %p157 = scmp.eq.s32.totalorder %s23, 0
      %p158 = por %p156, %p157
      %p159 = scmp.ne.s32.totalorder %s148, %s151
      %p160 = scmp.eq.s32.totalorder %s28, 5
      %p161 = por %p159, %p160
      %p162 = scmp.ne.s32.totalorder %s151, %s152
      %p163 = scmp.eq.s32.totalorder %s28, 0
      %p164 = por %p162, %p163
      %p165 = scmp.ne.s32.totalorder %s151, %s152
      %p166 = scmp.eq.s32.totalorder %s29, 5
      %p167 = por %p165, %p166
      %p169 = scmp.ne.s32.totalorder %s152, %s168
      %p170 = scmp.eq.s32.totalorder %s29, 0
      %p171 = por %p169, %p170
      %s173 = sadd.s32 %s172, 1
      %p176 = scmp.eq.s32.totalorder %s23, 5
      %p177 = scmp.ne.s32.totalorder %s172, %s174
      %p178 = scmp.eq.s32.totalorder %s23, 0
      %p179 = por %p177, %p178
      %p180 = scmp.ne.s32.totalorder %s172, %s174
      %p181 = scmp.eq.s32.totalorder %s28, 5
      %p182 = por %p180, %p181
      %p183 = scmp.ne.s32.totalorder %s174, %s175
      %p184 = scmp.eq.s32.totalorder %s28, 0
      %p185 = por %p183, %p184
      %p186 = scmp.ne.s32.totalorder %s174, %s175
      %p187 = scmp.eq.s32.totalorder %s29, 5
      %p188 = por %p186, %p187
      %p190 = scmp.ne.s32.totalorder %s175, %s189
      %p191 = scmp.eq.s32.totalorder %s29, 0
      %p192 = por %p190, %p191
      %s193 = ssub.s32 %s30, %s42
      %s194 = ssub.s32 %s31, %s38
      %s195 = sor.u32 %s193, %s194
      %p196 = scmp.eq.s32.totalorder %s195, 0
      %s198 = sadd.s32 %s197, 1
      %s199 = scalar_select %p196, %s197, %s198
      %p202 = pneg %p196
      %p203 = scmp.eq.s32.totalorder %s23, 5
      %p204 = por %p202, %p203
      %p205 = scmp.ne.s32.totalorder %s197, %s200
      %p206 = scmp.eq.s32.totalorder %s23, 0
      %p207 = por %p205, %p206
      %p208 = scmp.ne.s32.totalorder %s197, %s200
      %p209 = scmp.eq.s32.totalorder %s28, 5
      %p210 = por %p208, %p209
      %p211 = scmp.ne.s32.totalorder %s200, %s201
      %p212 = scmp.eq.s32.totalorder %s28, 0
      %p213 = por %p211, %p212
      %p214 = scmp.ne.s32.totalorder %s200, %s201
      %p215 = scmp.eq.s32.totalorder %s29, 5
      %p216 = por %p214, %p215
      %p218 = scmp.ne.s32.totalorder %s201, %s217
      %p219 = scmp.eq.s32.totalorder %s29, 0
      %p220 = por %p218, %p219
      %p221 = scmp.le.s32.totalorder 1, %s23
      %p222 = scmp.lt.s32.totalorder %s23, 7
      %p223 = pnand %p221, %p222
      %p224 = pneg %p223
      // Predicated region
      $region9: #{tpu_custom_call.1} parent=5 // pred_check
        _
      $region10: #{tpu_custom_call.1} parent=5 // pred_check_branch
        %226 = sbr.rel (%p223) target = $region12
      $region11: #{tpu_custom_call.1} parent=5 // pred_region
        %s227 = ssub.s32 %s23, 1
        // Predicated region
        $region13: #{tpu_custom_call.1} parent=11 // pred_check
          %p228 = pneg %p56
        $region14: #{tpu_custom_call.1} parent=11 // pred_check_branch
          %230 = sbr.rel (%p228) target = $region16
        $region15: #{tpu_custom_call.1} parent=11 // pred_region
          %s232 = ssub.s32 256, 256
          %233 = vsyncadd [#allocation3], %s232
          %s234 = sshll.u32 [#allocation2], 4
          %s235 = int_to_ptr.vmem [resolvable:$true] %s234
          %240 = dma.hbm_to_vmem [thread:$0]  %s0, 256, %s235, [#allocation3], 128, 128, 8
        $region16: #{tpu_custom_call.1} parent=11 // pred_fallthru
          _
        // Predicated region
        $region17: #{tpu_custom_call.1} parent=11 // pred_check
          %p241 = pneg %p185
        $region18: #{tpu_custom_call.1} parent=11 // pred_check_branch
          %243 = sbr.rel (%p241) target = $region20
        $region19: #{tpu_custom_call.1} parent=11 // pred_region
          %s245 = ssub.s32 16384, 16384
          %246 = vsyncadd [#allocation12], %s245
          %s247 = sshll.u32 [#allocation11], 4
          %s248 = int_to_ptr.vmem [resolvable:$true] %s247
          %253 = dma.hbm_to_vmem [thread:$0]  %s5, 16384, %s248, [#allocation12], 64, 64, 4
        $region20: #{tpu_custom_call.1} parent=11 // pred_fallthru
          _
      $region12: #{tpu_custom_call.1} parent=5 // pred_fallthru
        _
      %p254 = scmp.lt.s32.totalorder %s23, 6
      // Predicated region
      $region21: #{tpu_custom_call.1} parent=5 // pred_check
        %p255 = pneg %p254
      $region22: #{tpu_custom_call.1} parent=5 // pred_check_branch
        %257 = sbr.rel (%p255) target = $region24
      $region23: #{tpu_custom_call.1} parent=5 // pred_region
        // Predicated region
        $region25: #{tpu_custom_call.1} parent=23 // pred_check
          %p258 = pneg %p76
        $region26: #{tpu_custom_call.1} parent=23 // pred_check_branch
          %260 = sbr.rel (%p258) target = $region28
        $region27: #{tpu_custom_call.1} parent=23 // pred_region
          %s261 = sand.u32 %s23, 1
          %s262 = scalar_lea.sflag [#allocation6], %s261
          %s263 = sand.u32 %s66, 1
          %s264 = smul.addr %s263, 2048
          %s265 = scalar_lea.vmem [#allocation5], %s264
          %s267 = ssub.s32 32768, 32768
          %268 = vsyncadd %s262, %s267
          %s269 = smul.addr %s30, 512
          %s270 = smul.addr %s269, 64
          %s271 = scalar_lea.hbm %s1, %s270
          %s272 = sshll.u32 %s265, 4
          %s273 = int_to_ptr.vmem [resolvable:$true] %s272
          %278 = dma.hbm_to_vmem [thread:$0]  %s271, 32768, %s273, %s262, 1024, 1024, 64
        $region28: #{tpu_custom_call.1} parent=23 // pred_fallthru
          _
        // Predicated region
        $region29: #{tpu_custom_call.1} parent=23 // pred_check
          %p279 = pneg %p102
        $region30: #{tpu_custom_call.1} parent=23 // pred_check_branch
          %281 = sbr.rel (%p279) target = $region32
        $region31: #{tpu_custom_call.1} parent=23 // pred_region
          %s282 = sand.u32 %s23, 1
          %s283 = scalar_lea.sflag [#allocation6], %s282
          %s284 = sand.u32 %s92, 1
          %s285 = smul.addr %s284, 16
          %s286 = scalar_lea.vmem [#allocation7], %s285
          %s288 = ssub.s32 256, 256
          %289 = vsyncadd %s283, %s288
          %s290 = smul.addr %s30, 16
          %s291 = smul.addr %s290, 16
          %s292 = scalar_lea.hbm %s2, %s291
          %s294 = sshll.u32 %s286, 4
          %s295 = int_to_ptr.vmem [resolvable:$true] %s294
          %297 = dma.hbm_to_vmem [thread:$0]  %s292, 256, %s295, %s283
        $region32: #{tpu_custom_call.1} parent=23 // pred_fallthru
          _
        // Predicated region
        $region33: #{tpu_custom_call.1} parent=23 // pred_check
          %p298 = pneg %p130
        $region34: #{tpu_custom_call.1} parent=23 // pred_check_branch
          %300 = sbr.rel (%p298) target = $region36
        $region35: #{tpu_custom_call.1} parent=23 // pred_region
          %s301 = sand.u32 %s23, 1
          %s302 = scalar_lea.sflag [#allocation9], %s301
          %s303 = sand.u32 %s120, 1
          %s304 = smul.addr %s303, 8192
          %s305 = scalar_lea.vmem [#allocation8], %s304
          %s306 = smul.u32 8, %s31
          %s308 = ssub.s32 131072, 131072
          %309 = vsyncadd %s302, %s308
          %s310 = smul.addr %s30, 4096
          %s311 = sadd.s32 %s306, %s310
          %s312 = smul.addr %s311, 64
          %s313 = scalar_lea.hbm %s3, %s312
          %s314 = sshll.u32 %s305, 4
          %s315 = int_to_ptr.vmem [resolvable:$true] %s314
          %320 = dma.hbm_to_vmem [thread:$0]  %s313, 131072, %s315, %s302, 1024, 512, 32
        $region36: #{tpu_custom_call.1} parent=23 // pred_fallthru
          _
        // Predicated region
        $region37: #{tpu_custom_call.1} parent=23 // pred_check
          %p321 = pneg %p158
        $region38: #{tpu_custom_call.1} parent=23 // pred_check_branch
          %323 = sbr.rel (%p321) target = $region40
        $region39: #{tpu_custom_call.1} parent=23 // pred_region
          %s324 = sand.u32 %s23, 1
          %s325 = scalar_lea.sflag [#allocation9], %s324
          %s326 = sand.u32 %s148, 1
          %s327 = smul.addr %s326, 8
          %s328 = scalar_lea.vmem [#allocation10], %s327
          %s329 = smul.u32 8, %s31
          %s331 = ssub.s32 128, 128
          %332 = vsyncadd %s325, %s331
          %s333 = smul.addr %s30, 16
          %s334 = sadd.s32 %s329, %s333
          %s335 = smul.addr %s334, 16
          %s336 = scalar_lea.hbm %s4, %s335
          %s338 = sshll.u32 %s328, 4
          %s339 = int_to_ptr.vmem [resolvable:$true] %s338
          %341 = dma.hbm_to_vmem [thread:$0]  %s336, 128, %s339, %s325
        $region40: #{tpu_custom_call.1} parent=23 // pred_fallthru
          _
      $region24: #{tpu_custom_call.1} parent=5 // pred_fallthru
        _
      %p342 = scmp.le.s32.totalorder 1, %s23
      %p343 = scmp.lt.s32.totalorder %s23, 7
      %p344 = pnand %p342, %p343
      %p345 = pneg %p344
      // Predicated region
      $region41: #{tpu_custom_call.1} parent=5 // pred_check
        _
      $region42: #{tpu_custom_call.1} parent=5 // pred_check_branch
        %347 = sbr.rel (%p344) target = $region44
      $region43: #{tpu_custom_call.1} parent=5 // pred_region
        %s348 = ssub.s32 %s23, 1
        // Predicated region
        $region45: #{tpu_custom_call.1} parent=43 // pred_check
          %p349 = pneg %p56
        $region46: #{tpu_custom_call.1} parent=43 // pred_check_branch
          %351 = sbr.rel (%p349) target = $region48
        $region47: #{tpu_custom_call.1} parent=43 // pred_region
          %352 = dma.done [#allocation3], 256
        $region48: #{tpu_custom_call.1} parent=43 // pred_fallthru
          _
        %s353 = sand.u32 %s28, 1
        %s354 = scalar_lea.sflag [#allocation6], %s353
        %s355 = sand.u32 %s69, 1
        %s356 = smul.addr %s355, 2048
        %s357 = scalar_lea.vmem [#allocation5], %s356
        // Predicated region
        $region49: #{tpu_custom_call.1} parent=43 // pred_check
          %p358 = pneg %p82
        $region50: #{tpu_custom_call.1} parent=43 // pred_check_branch
          %360 = sbr.rel (%p358) target = $region52
        $region51: #{tpu_custom_call.1} parent=43 // pred_region
          %361 = dma.done %s354, 32768
        $region52: #{tpu_custom_call.1} parent=43 // pred_fallthru
          _
        %s362 = sand.u32 %s28, 1
        %s363 = scalar_lea.sflag [#allocation6], %s362
        %s364 = sand.u32 %s95, 1
        %s365 = smul.addr %s364, 16
        %s366 = scalar_lea.vmem [#allocation7], %s365
        // Predicated region
        $region53: #{tpu_custom_call.1} parent=43 // pred_check
          %p367 = pneg %p108
        $region54: #{tpu_custom_call.1} parent=43 // pred_check_branch
          %369 = sbr.rel (%p367) target = $region56
        $region55: #{tpu_custom_call.1} parent=43 // pred_region
          %370 = dma.done %s363, 256
        $region56: #{tpu_custom_call.1} parent=43 // pred_fallthru
          _
        %s371 = sand.u32 %s28, 1
        %s372 = scalar_lea.sflag [#allocation9], %s371
        %s373 = sand.u32 %s123, 1
        %s374 = smul.addr %s373, 8192
        %s375 = scalar_lea.vmem [#allocation8], %s374
        // Predicated region
        $region57: #{tpu_custom_call.1} parent=43 // pred_check
          %p376 = pneg %p136
        $region58: #{tpu_custom_call.1} parent=43 // pred_check_branch
          %378 = sbr.rel (%p376) target = $region60
        $region59: #{tpu_custom_call.1} parent=43 // pred_region
          %379 = dma.done %s372, 131072
        $region60: #{tpu_custom_call.1} parent=43 // pred_fallthru
          _
        %s380 = sand.u32 %s28, 1
        %s381 = scalar_lea.sflag [#allocation9], %s380
        %s382 = sand.u32 %s151, 1
        %s383 = smul.addr %s382, 8
        %s384 = scalar_lea.vmem [#allocation10], %s383
        // Predicated region
        $region61: #{tpu_custom_call.1} parent=43 // pred_check
          %p385 = pneg %p164
        $region62: #{tpu_custom_call.1} parent=43 // pred_check_branch
          %387 = sbr.rel (%p385) target = $region64
        $region63: #{tpu_custom_call.1} parent=43 // pred_region
          %388 = dma.done %s381, 128
        $region64: #{tpu_custom_call.1} parent=43 // pred_fallthru
          _
        // Predicated region
        $region65: #{tpu_custom_call.1} parent=43 // pred_check
          %p389 = pneg %p185
        $region66: #{tpu_custom_call.1} parent=43 // pred_check_branch
          %391 = sbr.rel (%p389) target = $region68
        $region67: #{tpu_custom_call.1} parent=43 // pred_region
          %392 = dma.done [#allocation12], 16384
        $region68: #{tpu_custom_call.1} parent=43 // pred_fallthru
          _
        %p393 = pneg %p56
        %p394 = pneg %p53
        %s395 = sand.u32 %s28, 1
        %s396 = scalar_lea.sflag [#allocation6], %s395
        %s397 = sand.u32 %s69, 1
        %s398 = smul.addr %s397, 2048
        %s399 = scalar_lea.vmem [#allocation5], %s398
        %p400 = pneg %p82
        %p401 = pneg %p79
        %s402 = sand.u32 %s28, 1
        %s403 = scalar_lea.sflag [#allocation6], %s402
        %s404 = sand.u32 %s95, 1
        %s405 = smul.addr %s404, 16
        %s406 = scalar_lea.vmem [#allocation7], %s405
        %p407 = pneg %p108
        %p408 = pneg %p105
        %s409 = sand.u32 %s28, 1
        %s410 = scalar_lea.sflag [#allocation9], %s409
        %s411 = sand.u32 %s123, 1
        %s412 = smul.addr %s411, 8192
        %s413 = scalar_lea.vmem [#allocation8], %s412
        %p414 = pneg %p136
        %p415 = pneg %p133
        %s416 = sand.u32 %s28, 1
        %s417 = scalar_lea.sflag [#allocation9], %s416
        %s418 = sand.u32 %s151, 1
        %s419 = smul.addr %s418, 8
        %s420 = scalar_lea.vmem [#allocation10], %s419
        %p421 = pneg %p164
        %p422 = pneg %p161
        %p423 = pneg %p185
        %p424 = pneg %p182
        %p425 = pneg %p213
        %p426 = pneg %p210
        %s427 = sand.u32 %s200, 1
        %s428 = scalar_lea.sflag [#allocation4], %s427
        %s429 = sand.u32 %s200, 1
        %s430 = smul.addr %s429, 16
        %s431 = scalar_lea.vmem [#allocation13], %s430
        %s432 = smul.u32 8, %s33
        %s433 = smul.u32 8, %s33
        %v435 = vld [vmem:[#allocation2] sm:$0xff]
        %v436 = vld [vmem:[#allocation2 + $0x8] sm:$0xff]
        %v437 = vld [vmem:[%s357] sm:$0xff]
        %v438 = vld [vmem:[%s357 + $0x8] sm:$0xff]
        %v439 = vld [vmem:[%s357 + $0x10] sm:$0xff]
        %v440 = vld [vmem:[%s357 + $0x18] sm:$0xff]
        %v441 = vld [vmem:[%s357 + $0x20] sm:$0xff]
        %v442 = vld [vmem:[%s357 + $0x28] sm:$0xff]
        %v443 = vld [vmem:[%s357 + $0x30] sm:$0xff]
        %v444 = vld [vmem:[%s357 + $0x38] sm:$0xff]
        %v445 = vld [vmem:[%s357 + $0x40] sm:$0xff]
        %v446 = vld [vmem:[%s357 + $0x48] sm:$0xff]
        %v447 = vld [vmem:[%s357 + $0x50] sm:$0xff]
        %v448 = vld [vmem:[%s357 + $0x58] sm:$0xff]
        %v449 = vld [vmem:[%s357 + $0x60] sm:$0xff]
        %v450 = vld [vmem:[%s357 + $0x68] sm:$0xff]
        %v451 = vld [vmem:[%s357 + $0x70] sm:$0xff]
        %v452 = vld [vmem:[%s357 + $0x78] sm:$0xff]
        %v453 = vld [vmem:[%s357 + $0x80] sm:$0xff]
        %v454 = vld [vmem:[%s357 + $0x88] sm:$0xff]
        %v455 = vld [vmem:[%s357 + $0x90] sm:$0xff]
        %v456 = vld [vmem:[%s357 + $0x98] sm:$0xff]
        %v457 = vld [vmem:[%s357 + $0xa0] sm:$0xff]
        %v458 = vld [vmem:[%s357 + $0xa8] sm:$0xff]
        %v459 = vld [vmem:[%s357 + $0xb0] sm:$0xff]
        %v460 = vld [vmem:[%s357 + $0xb8] sm:$0xff]
        %v461 = vld [vmem:[%s357 + $0xc0] sm:$0xff]
        %v462 = vld [vmem:[%s357 + $0xc8] sm:$0xff]
        %v463 = vld [vmem:[%s357 + $0xd0] sm:$0xff]
        %v464 = vld [vmem:[%s357 + $0xd8] sm:$0xff]
        %v465 = vld [vmem:[%s357 + $0xe0] sm:$0xff]
        %v466 = vld [vmem:[%s357 + $0xe8] sm:$0xff]
        %v467 = vld [vmem:[%s357 + $0xf0] sm:$0xff]
        %v468 = vld [vmem:[%s357 + $0xf8] sm:$0xff]
        %v469 = vld [vmem:[%s357 + $0x100] sm:$0xff]
        %v470 = vld [vmem:[%s357 + $0x108] sm:$0xff]
        %v471 = vld [vmem:[%s357 + $0x110] sm:$0xff]
        %v472 = vld [vmem:[%s357 + $0x118] sm:$0xff]
        %v473 = vld [vmem:[%s357 + $0x120] sm:$0xff]
        %v474 = vld [vmem:[%s357 + $0x128] sm:$0xff]
        %v475 = vld [vmem:[%s357 + $0x130] sm:$0xff]
        %v476 = vld [vmem:[%s357 + $0x138] sm:$0xff]
        %v477 = vld [vmem:[%s357 + $0x140] sm:$0xff]
        %v478 = vld [vmem:[%s357 + $0x148] sm:$0xff]
        %v479 = vld [vmem:[%s357 + $0x150] sm:$0xff]
        %v480 = vld [vmem:[%s357 + $0x158] sm:$0xff]
        %v481 = vld [vmem:[%s357 + $0x160] sm:$0xff]
        %v482 = vld [vmem:[%s357 + $0x168] sm:$0xff]
        %v483 = vld [vmem:[%s357 + $0x170] sm:$0xff]
        %v484 = vld [vmem:[%s357 + $0x178] sm:$0xff]
        %v485 = vld [vmem:[%s357 + $0x180] sm:$0xff]
        %v486 = vld [vmem:[%s357 + $0x188] sm:$0xff]
        %v487 = vld [vmem:[%s357 + $0x190] sm:$0xff]
        %v488 = vld [vmem:[%s357 + $0x198] sm:$0xff]
        %v489 = vld [vmem:[%s357 + $0x1a0] sm:$0xff]
        %v490 = vld [vmem:[%s357 + $0x1a8] sm:$0xff]
        %v491 = vld [vmem:[%s357 + $0x1b0] sm:$0xff]
        %v492 = vld [vmem:[%s357 + $0x1b8] sm:$0xff]
        %v493 = vld [vmem:[%s357 + $0x1c0] sm:$0xff]
        %v494 = vld [vmem:[%s357 + $0x1c8] sm:$0xff]
        %v495 = vld [vmem:[%s357 + $0x1d0] sm:$0xff]
        %v496 = vld [vmem:[%s357 + $0x1d8] sm:$0xff]
        %v497 = vld [vmem:[%s357 + $0x1e0] sm:$0xff]
        %v498 = vld [vmem:[%s357 + $0x1e8] sm:$0xff]
        %v499 = vld [vmem:[%s357 + $0x1f0] sm:$0xff]
        %v500 = vld [vmem:[%s357 + $0x1f8] sm:$0xff]
        %v501 = vld [vmem:[%s357 + $0x200] sm:$0xff]
        %v502 = vld [vmem:[%s357 + $0x208] sm:$0xff]
        %v503 = vld [vmem:[%s357 + $0x210] sm:$0xff]
        %v504 = vld [vmem:[%s357 + $0x218] sm:$0xff]
        %v505 = vld [vmem:[%s357 + $0x220] sm:$0xff]
        %v506 = vld [vmem:[%s357 + $0x228] sm:$0xff]
        %v507 = vld [vmem:[%s357 + $0x230] sm:$0xff]
        %v508 = vld [vmem:[%s357 + $0x238] sm:$0xff]
        %v509 = vld [vmem:[%s357 + $0x240] sm:$0xff]
        %v510 = vld [vmem:[%s357 + $0x248] sm:$0xff]
        %v511 = vld [vmem:[%s357 + $0x250] sm:$0xff]
        %v512 = vld [vmem:[%s357 + $0x258] sm:$0xff]
        %v513 = vld [vmem:[%s357 + $0x260] sm:$0xff]
        %v514 = vld [vmem:[%s357 + $0x268] sm:$0xff]
        %v515 = vld [vmem:[%s357 + $0x270] sm:$0xff]
        %v516 = vld [vmem:[%s357 + $0x278] sm:$0xff]
        %v517 = vld [vmem:[%s357 + $0x280] sm:$0xff]
        %v518 = vld [vmem:[%s357 + $0x288] sm:$0xff]
        %v519 = vld [vmem:[%s357 + $0x290] sm:$0xff]
        %v520 = vld [vmem:[%s357 + $0x298] sm:$0xff]
        %v521 = vld [vmem:[%s357 + $0x2a0] sm:$0xff]
        %v522 = vld [vmem:[%s357 + $0x2a8] sm:$0xff]
        %v523 = vld [vmem:[%s357 + $0x2b0] sm:$0xff]
        %v524 = vld [vmem:[%s357 + $0x2b8] sm:$0xff]
        %v525 = vld [vmem:[%s357 + $0x2c0] sm:$0xff]
        %v526 = vld [vmem:[%s357 + $0x2c8] sm:$0xff]
        %v527 = vld [vmem:[%s357 + $0x2d0] sm:$0xff]
        %v528 = vld [vmem:[%s357 + $0x2d8] sm:$0xff]
        %v529 = vld [vmem:[%s357 + $0x2e0] sm:$0xff]
        %v530 = vld [vmem:[%s357 + $0x2e8] sm:$0xff]
        %v531 = vld [vmem:[%s357 + $0x2f0] sm:$0xff]
        %v532 = vld [vmem:[%s357 + $0x2f8] sm:$0xff]
        %v533 = vld [vmem:[%s357 + $0x300] sm:$0xff]
        %v534 = vld [vmem:[%s357 + $0x308] sm:$0xff]
        %v535 = vld [vmem:[%s357 + $0x310] sm:$0xff]
        %v536 = vld [vmem:[%s357 + $0x318] sm:$0xff]
        %v537 = vld [vmem:[%s357 + $0x320] sm:$0xff]
        %v538 = vld [vmem:[%s357 + $0x328] sm:$0xff]
        %v539 = vld [vmem:[%s357 + $0x330] sm:$0xff]
        %v540 = vld [vmem:[%s357 + $0x338] sm:$0xff]
        %v541 = vld [vmem:[%s357 + $0x340] sm:$0xff]
        %v542 = vld [vmem:[%s357 + $0x348] sm:$0xff]
        %v543 = vld [vmem:[%s357 + $0x350] sm:$0xff]
        %v544 = vld [vmem:[%s357 + $0x358] sm:$0xff]
        %v545 = vld [vmem:[%s357 + $0x360] sm:$0xff]
        %v546 = vld [vmem:[%s357 + $0x368] sm:$0xff]
        %v547 = vld [vmem:[%s357 + $0x370] sm:$0xff]
        %v548 = vld [vmem:[%s357 + $0x378] sm:$0xff]
        %v549 = vld [vmem:[%s357 + $0x380] sm:$0xff]
        %v550 = vld [vmem:[%s357 + $0x388] sm:$0xff]
        %v551 = vld [vmem:[%s357 + $0x390] sm:$0xff]
        %v552 = vld [vmem:[%s357 + $0x398] sm:$0xff]
        %v553 = vld [vmem:[%s357 + $0x3a0] sm:$0xff]
        %v554 = vld [vmem:[%s357 + $0x3a8] sm:$0xff]
        %v555 = vld [vmem:[%s357 + $0x3b0] sm:$0xff]
        %v556 = vld [vmem:[%s357 + $0x3b8] sm:$0xff]
        %v557 = vld [vmem:[%s357 + $0x3c0] sm:$0xff]
        %v558 = vld [vmem:[%s357 + $0x3c8] sm:$0xff]
        %v559 = vld [vmem:[%s357 + $0x3d0] sm:$0xff]
        %v560 = vld [vmem:[%s357 + $0x3d8] sm:$0xff]
        %v561 = vld [vmem:[%s357 + $0x3e0] sm:$0xff]
        %v562 = vld [vmem:[%s357 + $0x3e8] sm:$0xff]
        %v563 = vld [vmem:[%s357 + $0x3f0] sm:$0xff]
        %v564 = vld [vmem:[%s357 + $0x3f8] sm:$0xff]
        %v565 = vld [vmem:[%s357 + $0x400] sm:$0xff]
        %v566 = vld [vmem:[%s357 + $0x408] sm:$0xff]
        %v567 = vld [vmem:[%s357 + $0x410] sm:$0xff]
        %v568 = vld [vmem:[%s357 + $0x418] sm:$0xff]
        %v569 = vld [vmem:[%s357 + $0x420] sm:$0xff]
        %v570 = vld [vmem:[%s357 + $0x428] sm:$0xff]
        %v571 = vld [vmem:[%s357 + $0x430] sm:$0xff]
        %v572 = vld [vmem:[%s357 + $0x438] sm:$0xff]
        %v573 = vld [vmem:[%s357 + $0x440] sm:$0xff]
        %v574 = vld [vmem:[%s357 + $0x448] sm:$0xff]
        %v575 = vld [vmem:[%s357 + $0x450] sm:$0xff]
        %v576 = vld [vmem:[%s357 + $0x458] sm:$0xff]
        %v577 = vld [vmem:[%s357 + $0x460] sm:$0xff]
        %v578 = vld [vmem:[%s357 + $0x468] sm:$0xff]
        %v579 = vld [vmem:[%s357 + $0x470] sm:$0xff]
        %v580 = vld [vmem:[%s357 + $0x478] sm:$0xff]
        %v581 = vld [vmem:[%s357 + $0x480] sm:$0xff]
        %v582 = vld [vmem:[%s357 + $0x488] sm:$0xff]
        %v583 = vld [vmem:[%s357 + $0x490] sm:$0xff]
        %v584 = vld [vmem:[%s357 + $0x498] sm:$0xff]
        %v585 = vld [vmem:[%s357 + $0x4a0] sm:$0xff]
        %v586 = vld [vmem:[%s357 + $0x4a8] sm:$0xff]
        %v587 = vld [vmem:[%s357 + $0x4b0] sm:$0xff]
        %v588 = vld [vmem:[%s357 + $0x4b8] sm:$0xff]
        %v589 = vld [vmem:[%s357 + $0x4c0] sm:$0xff]
        %v590 = vld [vmem:[%s357 + $0x4c8] sm:$0xff]
        %v591 = vld [vmem:[%s357 + $0x4d0] sm:$0xff]
        %v592 = vld [vmem:[%s357 + $0x4d8] sm:$0xff]
        %v593 = vld [vmem:[%s357 + $0x4e0] sm:$0xff]
        %v594 = vld [vmem:[%s357 + $0x4e8] sm:$0xff]
        %v595 = vld [vmem:[%s357 + $0x4f0] sm:$0xff]
        %v596 = vld [vmem:[%s357 + $0x4f8] sm:$0xff]
        %v597 = vld [vmem:[%s357 + $0x500] sm:$0xff]
        %v598 = vld [vmem:[%s357 + $0x508] sm:$0xff]
        %v599 = vld [vmem:[%s357 + $0x510] sm:$0xff]
        %v600 = vld [vmem:[%s357 + $0x518] sm:$0xff]
        %v601 = vld [vmem:[%s357 + $0x520] sm:$0xff]
        %v602 = vld [vmem:[%s357 + $0x528] sm:$0xff]
        %v603 = vld [vmem:[%s357 + $0x530] sm:$0xff]
        %v604 = vld [vmem:[%s357 + $0x538] sm:$0xff]
        %v605 = vld [vmem:[%s357 + $0x540] sm:$0xff]
        %v606 = vld [vmem:[%s357 + $0x548] sm:$0xff]
        %v607 = vld [vmem:[%s357 + $0x550] sm:$0xff]
        %v608 = vld [vmem:[%s357 + $0x558] sm:$0xff]
        %v609 = vld [vmem:[%s357 + $0x560] sm:$0xff]
        %v610 = vld [vmem:[%s357 + $0x568] sm:$0xff]
        %v611 = vld [vmem:[%s357 + $0x570] sm:$0xff]
        %v612 = vld [vmem:[%s357 + $0x578] sm:$0xff]
        %v613 = vld [vmem:[%s357 + $0x580] sm:$0xff]
        %v614 = vld [vmem:[%s357 + $0x588] sm:$0xff]
        %v615 = vld [vmem:[%s357 + $0x590] sm:$0xff]
        %v616 = vld [vmem:[%s357 + $0x598] sm:$0xff]
        %v617 = vld [vmem:[%s357 + $0x5a0] sm:$0xff]
        %v618 = vld [vmem:[%s357 + $0x5a8] sm:$0xff]
        %v619 = vld [vmem:[%s357 + $0x5b0] sm:$0xff]
        %v620 = vld [vmem:[%s357 + $0x5b8] sm:$0xff]
        %v621 = vld [vmem:[%s357 + $0x5c0] sm:$0xff]
        %v622 = vld [vmem:[%s357 + $0x5c8] sm:$0xff]
        %v623 = vld [vmem:[%s357 + $0x5d0] sm:$0xff]
        %v624 = vld [vmem:[%s357 + $0x5d8] sm:$0xff]
        %v625 = vld [vmem:[%s357 + $0x5e0] sm:$0xff]
        %v626 = vld [vmem:[%s357 + $0x5e8] sm:$0xff]
        %v627 = vld [vmem:[%s357 + $0x5f0] sm:$0xff]
        %v628 = vld [vmem:[%s357 + $0x5f8] sm:$0xff]
        %v629 = vld [vmem:[%s357 + $0x600] sm:$0xff]
        %v630 = vld [vmem:[%s357 + $0x608] sm:$0xff]
        %v631 = vld [vmem:[%s357 + $0x610] sm:$0xff]
        %v632 = vld [vmem:[%s357 + $0x618] sm:$0xff]
        %v633 = vld [vmem:[%s357 + $0x620] sm:$0xff]
        %v634 = vld [vmem:[%s357 + $0x628] sm:$0xff]
        %v635 = vld [vmem:[%s357 + $0x630] sm:$0xff]
        %v636 = vld [vmem:[%s357 + $0x638] sm:$0xff]
        %v637 = vld [vmem:[%s357 + $0x640] sm:$0xff]
        %v638 = vld [vmem:[%s357 + $0x648] sm:$0xff]
        %v639 = vld [vmem:[%s357 + $0x650] sm:$0xff]
        %v640 = vld [vmem:[%s357 + $0x658] sm:$0xff]
        %v641 = vld [vmem:[%s357 + $0x660] sm:$0xff]
        %v642 = vld [vmem:[%s357 + $0x668] sm:$0xff]
        %v643 = vld [vmem:[%s357 + $0x670] sm:$0xff]
        %v644 = vld [vmem:[%s357 + $0x678] sm:$0xff]
        %v645 = vld [vmem:[%s357 + $0x680] sm:$0xff]
        %v646 = vld [vmem:[%s357 + $0x688] sm:$0xff]
        %v647 = vld [vmem:[%s357 + $0x690] sm:$0xff]
        %v648 = vld [vmem:[%s357 + $0x698] sm:$0xff]
        %v649 = vld [vmem:[%s357 + $0x6a0] sm:$0xff]
        %v650 = vld [vmem:[%s357 + $0x6a8] sm:$0xff]
        %v651 = vld [vmem:[%s357 + $0x6b0] sm:$0xff]
        %v652 = vld [vmem:[%s357 + $0x6b8] sm:$0xff]
        %v653 = vld [vmem:[%s357 + $0x6c0] sm:$0xff]
        %v654 = vld [vmem:[%s357 + $0x6c8] sm:$0xff]
        %v655 = vld [vmem:[%s357 + $0x6d0] sm:$0xff]
        %v656 = vld [vmem:[%s357 + $0x6d8] sm:$0xff]
        %v657 = vld [vmem:[%s357 + $0x6e0] sm:$0xff]
        %v658 = vld [vmem:[%s357 + $0x6e8] sm:$0xff]
        %v659 = vld [vmem:[%s357 + $0x6f0] sm:$0xff]
        %v660 = vld [vmem:[%s357 + $0x6f8] sm:$0xff]
        %v661 = vld [vmem:[%s357 + $0x700] sm:$0xff]
        %v662 = vld [vmem:[%s357 + $0x708] sm:$0xff]
        %v663 = vld [vmem:[%s357 + $0x710] sm:$0xff]
        %v664 = vld [vmem:[%s357 + $0x718] sm:$0xff]
        %v665 = vld [vmem:[%s357 + $0x720] sm:$0xff]
        %v666 = vld [vmem:[%s357 + $0x728] sm:$0xff]
        %v667 = vld [vmem:[%s357 + $0x730] sm:$0xff]
        %v668 = vld [vmem:[%s357 + $0x738] sm:$0xff]
        %v669 = vld [vmem:[%s357 + $0x740] sm:$0xff]
        %v670 = vld [vmem:[%s357 + $0x748] sm:$0xff]
        %v671 = vld [vmem:[%s357 + $0x750] sm:$0xff]
        %v672 = vld [vmem:[%s357 + $0x758] sm:$0xff]
        %v673 = vld [vmem:[%s357 + $0x760] sm:$0xff]
        %v674 = vld [vmem:[%s357 + $0x768] sm:$0xff]
        %v675 = vld [vmem:[%s357 + $0x770] sm:$0xff]
        %v676 = vld [vmem:[%s357 + $0x778] sm:$0xff]
        %v677 = vld [vmem:[%s357 + $0x780] sm:$0xff]
        %v678 = vld [vmem:[%s357 + $0x788] sm:$0xff]
        %v679 = vld [vmem:[%s357 + $0x790] sm:$0xff]
        %v680 = vld [vmem:[%s357 + $0x798] sm:$0xff]
        %v681 = vld [vmem:[%s357 + $0x7a0] sm:$0xff]
        %v682 = vld [vmem:[%s357 + $0x7a8] sm:$0xff]
        %v683 = vld [vmem:[%s357 + $0x7b0] sm:$0xff]
        %v684 = vld [vmem:[%s357 + $0x7b8] sm:$0xff]
        %v685 = vld [vmem:[%s357 + $0x7c0] sm:$0xff]
        %v686 = vld [vmem:[%s357 + $0x7c8] sm:$0xff]
        %v687 = vld [vmem:[%s357 + $0x7d0] sm:$0xff]
        %v688 = vld [vmem:[%s357 + $0x7d8] sm:$0xff]
        %v689 = vld [vmem:[%s357 + $0x7e0] sm:$0xff]
        %v690 = vld [vmem:[%s357 + $0x7e8] sm:$0xff]
        %v691 = vld [vmem:[%s357 + $0x7f0] sm:$0xff]
        %v692 = vld [vmem:[%s357 + $0x7f8] sm:$0xff]
        %v693 = vld [vmem:[%s366] sm:$0xff]
        %v694 = vld [vmem:[%s366 + $0x8] sm:$0xff]
        %v697 = vlaneseq
        %v698 = vshrl.u32 %v697, 7
        %v699 = vsub.s32 0, %v698
        %v700 = vrot.slane %v693, %v699
        %v701 = vlaneseq
        %v702 = vshrl.u32 %v701, 7
        %v703 = vsub.s32 1, %v702
        %v704 = vrot.slane %v693, %v703
        %v705 = vlaneseq
        %v706 = vshrl.u32 %v705, 7
        %v707 = vsub.s32 2, %v706
        %v708 = vrot.slane %v693, %v707
        %v709 = vlaneseq
        %v710 = vshrl.u32 %v709, 7
        %v711 = vsub.s32 3, %v710
        %v712 = vrot.slane %v693, %v711
        %v713 = vlaneseq
        %v714 = vshrl.u32 %v713, 7
        %v715 = vsub.s32 4, %v714
        %v716 = vrot.slane %v693, %v715
        %v717 = vlaneseq
        %v718 = vshrl.u32 %v717, 7
        %v719 = vsub.s32 5, %v718
        %v720 = vrot.slane %v693, %v719
        %v721 = vlaneseq
        %v722 = vshrl.u32 %v721, 7
        %v723 = vsub.s32 6, %v722
        %v724 = vrot.slane %v693, %v723
        %v725 = vlaneseq
        %v726 = vshrl.u32 %v725, 7
        %v727 = vsub.s32 7, %v726
        %v728 = vrot.slane %v693, %v727
        %v729 = vlaneseq
        %v730 = vshrl.u32 %v729, 7
        %v731 = vsub.s32 0, %v730
        %v732 = vrot.slane %v694, %v731
        %v733 = vlaneseq
        %v734 = vshrl.u32 %v733, 7
        %v735 = vsub.s32 1, %v734
        %v736 = vrot.slane %v694, %v735
        %v737 = vlaneseq
        %v738 = vshrl.u32 %v737, 7
        %v739 = vsub.s32 2, %v738
        %v740 = vrot.slane %v694, %v739
        %v741 = vlaneseq
        %v742 = vshrl.u32 %v741, 7
        %v743 = vsub.s32 3, %v742
        %v744 = vrot.slane %v694, %v743
        %v745 = vlaneseq
        %v746 = vshrl.u32 %v745, 7
        %v747 = vsub.s32 4, %v746
        %v748 = vrot.slane %v694, %v747
        %v749 = vlaneseq
        %v750 = vshrl.u32 %v749, 7
        %v751 = vsub.s32 5, %v750
        %v752 = vrot.slane %v694, %v751
        %v753 = vlaneseq
        %v754 = vshrl.u32 %v753, 7
        %v755 = vsub.s32 6, %v754
        %v756 = vrot.slane %v694, %v755
        %v757 = vlaneseq
        %v758 = vshrl.u32 %v757, 7
        %v759 = vsub.s32 7, %v758
        %v760 = vrot.slane %v694, %v759
        %v779 = vunpack.c.l.b16 %v435
        %v780 = vunpack.c.h.b16 %v435
        %v781 = vunpack.c.l.b16 %v436
        %v782 = vunpack.c.h.b16 %v436
        %v783 = vpack.c.b16 %v781, %v779
        %v784 = vpack.c.b16 %v782, %v780
        %v1043 = vunpack.c.l.b16 %v437
        %v1044 = vunpack.c.h.b16 %v437
        %v1045 = vunpack.c.l.b16 %v438
        %v1046 = vunpack.c.h.b16 %v438
        %v1047 = vunpack.c.l.b16 %v439
        %v1048 = vunpack.c.h.b16 %v439
        %v1049 = vunpack.c.l.b16 %v440
        %v1050 = vunpack.c.h.b16 %v440
        %v1051 = vunpack.c.l.b16 %v441
        %v1052 = vunpack.c.h.b16 %v441
        %v1053 = vunpack.c.l.b16 %v442
        %v1054 = vunpack.c.h.b16 %v442
        %v1055 = vunpack.c.l.b16 %v443
        %v1056 = vunpack.c.h.b16 %v443
        %v1057 = vunpack.c.l.b16 %v444
        %v1058 = vunpack.c.h.b16 %v444
        %v1059 = vunpack.c.l.b16 %v445
        %v1060 = vunpack.c.h.b16 %v445
        %v1061 = vunpack.c.l.b16 %v446
        %v1062 = vunpack.c.h.b16 %v446
        %v1063 = vunpack.c.l.b16 %v447
        %v1064 = vunpack.c.h.b16 %v447
        %v1065 = vunpack.c.l.b16 %v448
        %v1066 = vunpack.c.h.b16 %v448
        %v1067 = vunpack.c.l.b16 %v449
        %v1068 = vunpack.c.h.b16 %v449
        %v1069 = vunpack.c.l.b16 %v450
        %v1070 = vunpack.c.h.b16 %v450
        %v1071 = vunpack.c.l.b16 %v451
        %v1072 = vunpack.c.h.b16 %v451
        %v1073 = vunpack.c.l.b16 %v452
        %v1074 = vunpack.c.h.b16 %v452
        %v1075 = vunpack.c.l.b16 %v453
        %v1076 = vunpack.c.h.b16 %v453
        %v1077 = vunpack.c.l.b16 %v454
        %v1078 = vunpack.c.h.b16 %v454
        %v1079 = vunpack.c.l.b16 %v455
        %v1080 = vunpack.c.h.b16 %v455
        %v1081 = vunpack.c.l.b16 %v456
        %v1082 = vunpack.c.h.b16 %v456
        %v1083 = vunpack.c.l.b16 %v457
        %v1084 = vunpack.c.h.b16 %v457
        %v1085 = vunpack.c.l.b16 %v458
        %v1086 = vunpack.c.h.b16 %v458
        %v1087 = vunpack.c.l.b16 %v459
        %v1088 = vunpack.c.h.b16 %v459
        %v1089 = vunpack.c.l.b16 %v460
        %v1090 = vunpack.c.h.b16 %v460
        %v1091 = vunpack.c.l.b16 %v461
        %v1092 = vunpack.c.h.b16 %v461
        %v1093 = vunpack.c.l.b16 %v462
        %v1094 = vunpack.c.h.b16 %v462
        %v1095 = vunpack.c.l.b16 %v463
        %v1096 = vunpack.c.h.b16 %v463
        %v1097 = vunpack.c.l.b16 %v464
        %v1098 = vunpack.c.h.b16 %v464
        %v1099 = vunpack.c.l.b16 %v465
        %v1100 = vunpack.c.h.b16 %v465
        %v1101 = vunpack.c.l.b16 %v466
        %v1102 = vunpack.c.h.b16 %v466
        %v1103 = vunpack.c.l.b16 %v467
        %v1104 = vunpack.c.h.b16 %v467
        %v1105 = vunpack.c.l.b16 %v468
        %v1106 = vunpack.c.h.b16 %v468
        %v1107 = vunpack.c.l.b16 %v469
        %v1108 = vunpack.c.h.b16 %v469
        %v1109 = vunpack.c.l.b16 %v470
        %v1110 = vunpack.c.h.b16 %v470
        %v1111 = vunpack.c.l.b16 %v471
        %v1112 = vunpack.c.h.b16 %v471
        %v1113 = vunpack.c.l.b16 %v472
        %v1114 = vunpack.c.h.b16 %v472
        %v1115 = vunpack.c.l.b16 %v473
        %v1116 = vunpack.c.h.b16 %v473
        %v1117 = vunpack.c.l.b16 %v474
        %v1118 = vunpack.c.h.b16 %v474
        %v1119 = vunpack.c.l.b16 %v475
        %v1120 = vunpack.c.h.b16 %v475
        %v1121 = vunpack.c.l.b16 %v476
        %v1122 = vunpack.c.h.b16 %v476
        %v1123 = vunpack.c.l.b16 %v477
        %v1124 = vunpack.c.h.b16 %v477
        %v1125 = vunpack.c.l.b16 %v478
        %v1126 = vunpack.c.h.b16 %v478
        %v1127 = vunpack.c.l.b16 %v479
        %v1128 = vunpack.c.h.b16 %v479
        %v1129 = vunpack.c.l.b16 %v480
        %v1130 = vunpack.c.h.b16 %v480
        %v1131 = vunpack.c.l.b16 %v481
        %v1132 = vunpack.c.h.b16 %v481
        %v1133 = vunpack.c.l.b16 %v482
        %v1134 = vunpack.c.h.b16 %v482
        %v1135 = vunpack.c.l.b16 %v483
        %v1136 = vunpack.c.h.b16 %v483
        %v1137 = vunpack.c.l.b16 %v484
        %v1138 = vunpack.c.h.b16 %v484
        %v1139 = vunpack.c.l.b16 %v485
        %v1140 = vunpack.c.h.b16 %v485
        %v1141 = vunpack.c.l.b16 %v486
        %v1142 = vunpack.c.h.b16 %v486
        %v1143 = vunpack.c.l.b16 %v487
        %v1144 = vunpack.c.h.b16 %v487
        %v1145 = vunpack.c.l.b16 %v488
        %v1146 = vunpack.c.h.b16 %v488
        %v1147 = vunpack.c.l.b16 %v489
        %v1148 = vunpack.c.h.b16 %v489
        %v1149 = vunpack.c.l.b16 %v490
        %v1150 = vunpack.c.h.b16 %v490
        %v1151 = vunpack.c.l.b16 %v491
        %v1152 = vunpack.c.h.b16 %v491
        %v1153 = vunpack.c.l.b16 %v492
        %v1154 = vunpack.c.h.b16 %v492
        %v1155 = vunpack.c.l.b16 %v493
        %v1156 = vunpack.c.h.b16 %v493
        %v1157 = vunpack.c.l.b16 %v494
        %v1158 = vunpack.c.h.b16 %v494
        %v1159 = vunpack.c.l.b16 %v495
        %v1160 = vunpack.c.h.b16 %v495
        %v1161 = vunpack.c.l.b16 %v496
        %v1162 = vunpack.c.h.b16 %v496
        %v1163 = vunpack.c.l.b16 %v497
        %v1164 = vunpack.c.h.b16 %v497
        %v1165 = vunpack.c.l.b16 %v498
        %v1166 = vunpack.c.h.b16 %v498
        %v1167 = vunpack.c.l.b16 %v499
        %v1168 = vunpack.c.h.b16 %v499
        %v1169 = vunpack.c.l.b16 %v500
        %v1170 = vunpack.c.h.b16 %v500
        %v1171 = vunpack.c.l.b16 %v501
        %v1172 = vunpack.c.h.b16 %v501
        %v1173 = vunpack.c.l.b16 %v502
        %v1174 = vunpack.c.h.b16 %v502
        %v1175 = vunpack.c.l.b16 %v503
        %v1176 = vunpack.c.h.b16 %v503
        %v1177 = vunpack.c.l.b16 %v504
        %v1178 = vunpack.c.h.b16 %v504
        %v1179 = vunpack.c.l.b16 %v505
        %v1180 = vunpack.c.h.b16 %v505
        %v1181 = vunpack.c.l.b16 %v506
        %v1182 = vunpack.c.h.b16 %v506
        %v1183 = vunpack.c.l.b16 %v507
        %v1184 = vunpack.c.h.b16 %v507
        %v1185 = vunpack.c.l.b16 %v508
        %v1186 = vunpack.c.h.b16 %v508
        %v1187 = vunpack.c.l.b16 %v509
        %v1188 = vunpack.c.h.b16 %v509
        %v1189 = vunpack.c.l.b16 %v510
        %v1190 = vunpack.c.h.b16 %v510
        %v1191 = vunpack.c.l.b16 %v511
        %v1192 = vunpack.c.h.b16 %v511
        %v1193 = vunpack.c.l.b16 %v512
        %v1194 = vunpack.c.h.b16 %v512
        %v1195 = vunpack.c.l.b16 %v513
        %v1196 = vunpack.c.h.b16 %v513
        %v1197 = vunpack.c.l.b16 %v514
        %v1198 = vunpack.c.h.b16 %v514
        %v1199 = vunpack.c.l.b16 %v515
        %v1200 = vunpack.c.h.b16 %v515
        %v1201 = vunpack.c.l.b16 %v516
        %v1202 = vunpack.c.h.b16 %v516
        %v1203 = vunpack.c.l.b16 %v517
        %v1204 = vunpack.c.h.b16 %v517
        %v1205 = vunpack.c.l.b16 %v518
        %v1206 = vunpack.c.h.b16 %v518
        %v1207 = vunpack.c.l.b16 %v519
        %v1208 = vunpack.c.h.b16 %v519
        %v1209 = vunpack.c.l.b16 %v520
        %v1210 = vunpack.c.h.b16 %v520
        %v1211 = vunpack.c.l.b16 %v521
        %v1212 = vunpack.c.h.b16 %v521
        %v1213 = vunpack.c.l.b16 %v522
        %v1214 = vunpack.c.h.b16 %v522
        %v1215 = vunpack.c.l.b16 %v523
        %v1216 = vunpack.c.h.b16 %v523
        %v1217 = vunpack.c.l.b16 %v524
        %v1218 = vunpack.c.h.b16 %v524
        %v1219 = vunpack.c.l.b16 %v525
        %v1220 = vunpack.c.h.b16 %v525
        %v1221 = vunpack.c.l.b16 %v526
        %v1222 = vunpack.c.h.b16 %v526
        %v1223 = vunpack.c.l.b16 %v527
        %v1224 = vunpack.c.h.b16 %v527
        %v1225 = vunpack.c.l.b16 %v528
        %v1226 = vunpack.c.h.b16 %v528
        %v1227 = vunpack.c.l.b16 %v529
        %v1228 = vunpack.c.h.b16 %v529
        %v1229 = vunpack.c.l.b16 %v530
        %v1230 = vunpack.c.h.b16 %v530
        %v1231 = vunpack.c.l.b16 %v531
        %v1232 = vunpack.c.h.b16 %v531
        %v1233 = vunpack.c.l.b16 %v532
        %v1234 = vunpack.c.h.b16 %v532
        %v1235 = vunpack.c.l.b16 %v533
        %v1236 = vunpack.c.h.b16 %v533
        %v1237 = vunpack.c.l.b16 %v534
        %v1238 = vunpack.c.h.b16 %v534
        %v1239 = vunpack.c.l.b16 %v535
        %v1240 = vunpack.c.h.b16 %v535
        %v1241 = vunpack.c.l.b16 %v536
        %v1242 = vunpack.c.h.b16 %v536
        %v1243 = vunpack.c.l.b16 %v537
        %v1244 = vunpack.c.h.b16 %v537
        %v1245 = vunpack.c.l.b16 %v538
        %v1246 = vunpack.c.h.b16 %v538
        %v1247 = vunpack.c.l.b16 %v539
        %v1248 = vunpack.c.h.b16 %v539
        %v1249 = vunpack.c.l.b16 %v540
        %v1250 = vunpack.c.h.b16 %v540
        %v1251 = vunpack.c.l.b16 %v541
        %v1252 = vunpack.c.h.b16 %v541
        %v1253 = vunpack.c.l.b16 %v542
        %v1254 = vunpack.c.h.b16 %v542
        %v1255 = vunpack.c.l.b16 %v543
        %v1256 = vunpack.c.h.b16 %v543
        %v1257 = vunpack.c.l.b16 %v544
        %v1258 = vunpack.c.h.b16 %v544
        %v1259 = vunpack.c.l.b16 %v545
        %v1260 = vunpack.c.h.b16 %v545
        %v1261 = vunpack.c.l.b16 %v546
        %v1262 = vunpack.c.h.b16 %v546
        %v1263 = vunpack.c.l.b16 %v547
        %v1264 = vunpack.c.h.b16 %v547
        %v1265 = vunpack.c.l.b16 %v548
        %v1266 = vunpack.c.h.b16 %v548
        %v1267 = vunpack.c.l.b16 %v549
        %v1268 = vunpack.c.h.b16 %v549
        %v1269 = vunpack.c.l.b16 %v550
        %v1270 = vunpack.c.h.b16 %v550
        %v1271 = vunpack.c.l.b16 %v551
        %v1272 = vunpack.c.h.b16 %v551
        %v1273 = vunpack.c.l.b16 %v552
        %v1274 = vunpack.c.h.b16 %v552
        %v1275 = vunpack.c.l.b16 %v553
        %v1276 = vunpack.c.h.b16 %v553
        %v1277 = vunpack.c.l.b16 %v554
        %v1278 = vunpack.c.h.b16 %v554
        %v1279 = vunpack.c.l.b16 %v555
        %v1280 = vunpack.c.h.b16 %v555
        %v1281 = vunpack.c.l.b16 %v556
        %v1282 = vunpack.c.h.b16 %v556
        %v1283 = vunpack.c.l.b16 %v557
        %v1284 = vunpack.c.h.b16 %v557
        %v1285 = vunpack.c.l.b16 %v558
        %v1286 = vunpack.c.h.b16 %v558
        %v1287 = vunpack.c.l.b16 %v559
        %v1288 = vunpack.c.h.b16 %v559
        %v1289 = vunpack.c.l.b16 %v560
        %v1290 = vunpack.c.h.b16 %v560
        %v1291 = vunpack.c.l.b16 %v561
        %v1292 = vunpack.c.h.b16 %v561
        %v1293 = vunpack.c.l.b16 %v562
        %v1294 = vunpack.c.h.b16 %v562
        %v1295 = vunpack.c.l.b16 %v563
        %v1296 = vunpack.c.h.b16 %v563
        %v1297 = vunpack.c.l.b16 %v564
        %v1298 = vunpack.c.h.b16 %v564
        %v1299 = vunpack.c.l.b16 %v565
        %v1300 = vunpack.c.h.b16 %v565
        %v1301 = vunpack.c.l.b16 %v566
        %v1302 = vunpack.c.h.b16 %v566
        %v1303 = vunpack.c.l.b16 %v567
        %v1304 = vunpack.c.h.b16 %v567
        %v1305 = vunpack.c.l.b16 %v568
        %v1306 = vunpack.c.h.b16 %v568
        %v1307 = vunpack.c.l.b16 %v569
        %v1308 = vunpack.c.h.b16 %v569
        %v1309 = vunpack.c.l.b16 %v570
        %v1310 = vunpack.c.h.b16 %v570
        %v1311 = vunpack.c.l.b16 %v571
        %v1312 = vunpack.c.h.b16 %v571
        %v1313 = vunpack.c.l.b16 %v572
        %v1314 = vunpack.c.h.b16 %v572
        %v1315 = vunpack.c.l.b16 %v573
        %v1316 = vunpack.c.h.b16 %v573
        %v1317 = vunpack.c.l.b16 %v574
        %v1318 = vunpack.c.h.b16 %v574
        %v1319 = vunpack.c.l.b16 %v575
        %v1320 = vunpack.c.h.b16 %v575
        %v1321 = vunpack.c.l.b16 %v576
        %v1322 = vunpack.c.h.b16 %v576
        %v1323 = vunpack.c.l.b16 %v577
        %v1324 = vunpack.c.h.b16 %v577
        %v1325 = vunpack.c.l.b16 %v578
        %v1326 = vunpack.c.h.b16 %v578
        %v1327 = vunpack.c.l.b16 %v579
        %v1328 = vunpack.c.h.b16 %v579
        %v1329 = vunpack.c.l.b16 %v580
        %v1330 = vunpack.c.h.b16 %v580
        %v1331 = vunpack.c.l.b16 %v581
        %v1332 = vunpack.c.h.b16 %v581
        %v1333 = vunpack.c.l.b16 %v582
        %v1334 = vunpack.c.h.b16 %v582
        %v1335 = vunpack.c.l.b16 %v583
        %v1336 = vunpack.c.h.b16 %v583
        %v1337 = vunpack.c.l.b16 %v584
        %v1338 = vunpack.c.h.b16 %v584
        %v1339 = vunpack.c.l.b16 %v585
        %v1340 = vunpack.c.h.b16 %v585
        %v1341 = vunpack.c.l.b16 %v586
        %v1342 = vunpack.c.h.b16 %v586
        %v1343 = vunpack.c.l.b16 %v587
        %v1344 = vunpack.c.h.b16 %v587
        %v1345 = vunpack.c.l.b16 %v588
        %v1346 = vunpack.c.h.b16 %v588
        %v1347 = vunpack.c.l.b16 %v589
        %v1348 = vunpack.c.h.b16 %v589
        %v1349 = vunpack.c.l.b16 %v590
        %v1350 = vunpack.c.h.b16 %v590
        %v1351 = vunpack.c.l.b16 %v591
        %v1352 = vunpack.c.h.b16 %v591
        %v1353 = vunpack.c.l.b16 %v592
        %v1354 = vunpack.c.h.b16 %v592
        %v1355 = vunpack.c.l.b16 %v593
        %v1356 = vunpack.c.h.b16 %v593
        %v1357 = vunpack.c.l.b16 %v594
        %v1358 = vunpack.c.h.b16 %v594
        %v1359 = vunpack.c.l.b16 %v595
        %v1360 = vunpack.c.h.b16 %v595
        %v1361 = vunpack.c.l.b16 %v596
        %v1362 = vunpack.c.h.b16 %v596
        %v1363 = vunpack.c.l.b16 %v597
        %v1364 = vunpack.c.h.b16 %v597
        %v1365 = vunpack.c.l.b16 %v598
        %v1366 = vunpack.c.h.b16 %v598
        %v1367 = vunpack.c.l.b16 %v599
        %v1368 = vunpack.c.h.b16 %v599
        %v1369 = vunpack.c.l.b16 %v600
        %v1370 = vunpack.c.h.b16 %v600
        %v1371 = vunpack.c.l.b16 %v601
        %v1372 = vunpack.c.h.b16 %v601
        %v1373 = vunpack.c.l.b16 %v602
        %v1374 = vunpack.c.h.b16 %v602
        %v1375 = vunpack.c.l.b16 %v603
        %v1376 = vunpack.c.h.b16 %v603
        %v1377 = vunpack.c.l.b16 %v604
        %v1378 = vunpack.c.h.b16 %v604
        %v1379 = vunpack.c.l.b16 %v605
        %v1380 = vunpack.c.h.b16 %v605
        %v1381 = vunpack.c.l.b16 %v606
        %v1382 = vunpack.c.h.b16 %v606
        %v1383 = vunpack.c.l.b16 %v607
        %v1384 = vunpack.c.h.b16 %v607
        %v1385 = vunpack.c.l.b16 %v608
        %v1386 = vunpack.c.h.b16 %v608
        %v1387 = vunpack.c.l.b16 %v609
        %v1388 = vunpack.c.h.b16 %v609
        %v1389 = vunpack.c.l.b16 %v610
        %v1390 = vunpack.c.h.b16 %v610
        %v1391 = vunpack.c.l.b16 %v611
        %v1392 = vunpack.c.h.b16 %v611
        %v1393 = vunpack.c.l.b16 %v612
        %v1394 = vunpack.c.h.b16 %v612
        %v1395 = vunpack.c.l.b16 %v613
        %v1396 = vunpack.c.h.b16 %v613
        %v1397 = vunpack.c.l.b16 %v614
        %v1398 = vunpack.c.h.b16 %v614
        %v1399 = vunpack.c.l.b16 %v615
        %v1400 = vunpack.c.h.b16 %v615
        %v1401 = vunpack.c.l.b16 %v616
        %v1402 = vunpack.c.h.b16 %v616
        %v1403 = vunpack.c.l.b16 %v617
        %v1404 = vunpack.c.h.b16 %v617
        %v1405 = vunpack.c.l.b16 %v618
        %v1406 = vunpack.c.h.b16 %v618
        %v1407 = vunpack.c.l.b16 %v619
        %v1408 = vunpack.c.h.b16 %v619
        %v1409 = vunpack.c.l.b16 %v620
        %v1410 = vunpack.c.h.b16 %v620
        %v1411 = vunpack.c.l.b16 %v621
        %v1412 = vunpack.c.h.b16 %v621
        %v1413 = vunpack.c.l.b16 %v622
        %v1414 = vunpack.c.h.b16 %v622
        %v1415 = vunpack.c.l.b16 %v623
        %v1416 = vunpack.c.h.b16 %v623
        %v1417 = vunpack.c.l.b16 %v624
        %v1418 = vunpack.c.h.b16 %v624
        %v1419 = vunpack.c.l.b16 %v625
        %v1420 = vunpack.c.h.b16 %v625
        %v1421 = vunpack.c.l.b16 %v626
        %v1422 = vunpack.c.h.b16 %v626
        %v1423 = vunpack.c.l.b16 %v627
        %v1424 = vunpack.c.h.b16 %v627
        %v1425 = vunpack.c.l.b16 %v628
        %v1426 = vunpack.c.h.b16 %v628
        %v1427 = vunpack.c.l.b16 %v629
        %v1428 = vunpack.c.h.b16 %v629
        %v1429 = vunpack.c.l.b16 %v630
        %v1430 = vunpack.c.h.b16 %v630
        %v1431 = vunpack.c.l.b16 %v631
        %v1432 = vunpack.c.h.b16 %v631
        %v1433 = vunpack.c.l.b16 %v632
        %v1434 = vunpack.c.h.b16 %v632
        %v1435 = vunpack.c.l.b16 %v633
        %v1436 = vunpack.c.h.b16 %v633
        %v1437 = vunpack.c.l.b16 %v634
        %v1438 = vunpack.c.h.b16 %v634
        %v1439 = vunpack.c.l.b16 %v635
        %v1440 = vunpack.c.h.b16 %v635
        %v1441 = vunpack.c.l.b16 %v636
        %v1442 = vunpack.c.h.b16 %v636
        %v1443 = vunpack.c.l.b16 %v637
        %v1444 = vunpack.c.h.b16 %v637
        %v1445 = vunpack.c.l.b16 %v638
        %v1446 = vunpack.c.h.b16 %v638
        %v1447 = vunpack.c.l.b16 %v639
        %v1448 = vunpack.c.h.b16 %v639
        %v1449 = vunpack.c.l.b16 %v640
        %v1450 = vunpack.c.h.b16 %v640
        %v1451 = vunpack.c.l.b16 %v641
        %v1452 = vunpack.c.h.b16 %v641
        %v1453 = vunpack.c.l.b16 %v642
        %v1454 = vunpack.c.h.b16 %v642
        %v1455 = vunpack.c.l.b16 %v643
        %v1456 = vunpack.c.h.b16 %v643
        %v1457 = vunpack.c.l.b16 %v644
        %v1458 = vunpack.c.h.b16 %v644
        %v1459 = vunpack.c.l.b16 %v645
        %v1460 = vunpack.c.h.b16 %v645
        %v1461 = vunpack.c.l.b16 %v646
        %v1462 = vunpack.c.h.b16 %v646
        %v1463 = vunpack.c.l.b16 %v647
        %v1464 = vunpack.c.h.b16 %v647
        %v1465 = vunpack.c.l.b16 %v648
        %v1466 = vunpack.c.h.b16 %v648
        %v1467 = vunpack.c.l.b16 %v649
        %v1468 = vunpack.c.h.b16 %v649
        %v1469 = vunpack.c.l.b16 %v650
        %v1470 = vunpack.c.h.b16 %v650
        %v1471 = vunpack.c.l.b16 %v651
        %v1472 = vunpack.c.h.b16 %v651
        %v1473 = vunpack.c.l.b16 %v652
        %v1474 = vunpack.c.h.b16 %v652
        %v1475 = vunpack.c.l.b16 %v653
        %v1476 = vunpack.c.h.b16 %v653
        %v1477 = vunpack.c.l.b16 %v654
        %v1478 = vunpack.c.h.b16 %v654
        %v1479 = vunpack.c.l.b16 %v655
        %v1480 = vunpack.c.h.b16 %v655
        %v1481 = vunpack.c.l.b16 %v656
        %v1482 = vunpack.c.h.b16 %v656
        %v1483 = vunpack.c.l.b16 %v657
        %v1484 = vunpack.c.h.b16 %v657
        %v1485 = vunpack.c.l.b16 %v658
        %v1486 = vunpack.c.h.b16 %v658
        %v1487 = vunpack.c.l.b16 %v659
        %v1488 = vunpack.c.h.b16 %v659
        %v1489 = vunpack.c.l.b16 %v660
        %v1490 = vunpack.c.h.b16 %v660
        %v1491 = vunpack.c.l.b16 %v661
        %v1492 = vunpack.c.h.b16 %v661
        %v1493 = vunpack.c.l.b16 %v662
        %v1494 = vunpack.c.h.b16 %v662
        %v1495 = vunpack.c.l.b16 %v663
        %v1496 = vunpack.c.h.b16 %v663
        %v1497 = vunpack.c.l.b16 %v664
        %v1498 = vunpack.c.h.b16 %v664
        %v1499 = vunpack.c.l.b16 %v665
        %v1500 = vunpack.c.h.b16 %v665
        %v1501 = vunpack.c.l.b16 %v666
        %v1502 = vunpack.c.h.b16 %v666
        %v1503 = vunpack.c.l.b16 %v667
        %v1504 = vunpack.c.h.b16 %v667
        %v1505 = vunpack.c.l.b16 %v668
        %v1506 = vunpack.c.h.b16 %v668
        %v1507 = vunpack.c.l.b16 %v669
        %v1508 = vunpack.c.h.b16 %v669
        %v1509 = vunpack.c.l.b16 %v670
        %v1510 = vunpack.c.h.b16 %v670
        %v1511 = vunpack.c.l.b16 %v671
        %v1512 = vunpack.c.h.b16 %v671
        %v1513 = vunpack.c.l.b16 %v672
        %v1514 = vunpack.c.h.b16 %v672
        %v1515 = vunpack.c.l.b16 %v673
        %v1516 = vunpack.c.h.b16 %v673
        %v1517 = vunpack.c.l.b16 %v674
        %v1518 = vunpack.c.h.b16 %v674
        %v1519 = vunpack.c.l.b16 %v675
        %v1520 = vunpack.c.h.b16 %v675
        %v1521 = vunpack.c.l.b16 %v676
        %v1522 = vunpack.c.h.b16 %v676
        %v1523 = vunpack.c.l.b16 %v677
        %v1524 = vunpack.c.h.b16 %v677
        %v1525 = vunpack.c.l.b16 %v678
        %v1526 = vunpack.c.h.b16 %v678
        %v1527 = vunpack.c.l.b16 %v679
        %v1528 = vunpack.c.h.b16 %v679
        %v1529 = vunpack.c.l.b16 %v680
        %v1530 = vunpack.c.h.b16 %v680
        %v1531 = vunpack.c.l.b16 %v681
        %v1532 = vunpack.c.h.b16 %v681
        %v1533 = vunpack.c.l.b16 %v682
        %v1534 = vunpack.c.h.b16 %v682
        %v1535 = vunpack.c.l.b16 %v683
        %v1536 = vunpack.c.h.b16 %v683
        %v1537 = vunpack.c.l.b16 %v684
        %v1538 = vunpack.c.h.b16 %v684
        %v1539 = vunpack.c.l.b16 %v685
        %v1540 = vunpack.c.h.b16 %v685
        %v1541 = vunpack.c.l.b16 %v686
        %v1542 = vunpack.c.h.b16 %v686
        %v1543 = vunpack.c.l.b16 %v687
        %v1544 = vunpack.c.h.b16 %v687
        %v1545 = vunpack.c.l.b16 %v688
        %v1546 = vunpack.c.h.b16 %v688
        %v1547 = vunpack.c.l.b16 %v689
        %v1548 = vunpack.c.h.b16 %v689
        %v1549 = vunpack.c.l.b16 %v690
        %v1550 = vunpack.c.h.b16 %v690
        %v1551 = vunpack.c.l.b16 %v691
        %v1552 = vunpack.c.h.b16 %v691
        %v1553 = vunpack.c.l.b16 %v692
        %v1554 = vunpack.c.h.b16 %v692
        %v1555 = vpack.c.b16 %v1059, %v1043
        %v1556 = vpack.c.b16 %v1060, %v1044
        %v1557 = vpack.c.b16 %v1061, %v1045
        %v1558 = vpack.c.b16 %v1062, %v1046
        %v1559 = vpack.c.b16 %v1063, %v1047
        %v1560 = vpack.c.b16 %v1064, %v1048
        %v1561 = vpack.c.b16 %v1065, %v1049
        %v1562 = vpack.c.b16 %v1066, %v1050
        %v1563 = vpack.c.b16 %v1067, %v1051
        %v1564 = vpack.c.b16 %v1068, %v1052
        %v1565 = vpack.c.b16 %v1069, %v1053
        %v1566 = vpack.c.b16 %v1070, %v1054
        %v1567 = vpack.c.b16 %v1071, %v1055
        %v1568 = vpack.c.b16 %v1072, %v1056
        %v1569 = vpack.c.b16 %v1073, %v1057
        %v1570 = vpack.c.b16 %v1074, %v1058
        %v1571 = vpack.c.b16 %v1091, %v1075
        %v1572 = vpack.c.b16 %v1092, %v1076
        %v1573 = vpack.c.b16 %v1093, %v1077
        %v1574 = vpack.c.b16 %v1094, %v1078
        %v1575 = vpack.c.b16 %v1095, %v1079
        %v1576 = vpack.c.b16 %v1096, %v1080
        %v1577 = vpack.c.b16 %v1097, %v1081
        %v1578 = vpack.c.b16 %v1098, %v1082
        %v1579 = vpack.c.b16 %v1099, %v1083
        %v1580 = vpack.c.b16 %v1100, %v1084
        %v1581 = vpack.c.b16 %v1101, %v1085
        %v1582 = vpack.c.b16 %v1102, %v1086
        %v1583 = vpack.c.b16 %v1103, %v1087
        %v1584 = vpack.c.b16 %v1104, %v1088
        %v1585 = vpack.c.b16 %v1105, %v1089
        %v1586 = vpack.c.b16 %v1106, %v1090
        %v1587 = vpack.c.b16 %v1123, %v1107
        %v1588 = vpack.c.b16 %v1124, %v1108
        %v1589 = vpack.c.b16 %v1125, %v1109
        %v1590 = vpack.c.b16 %v1126, %v1110
        %v1591 = vpack.c.b16 %v1127, %v1111
        %v1592 = vpack.c.b16 %v1128, %v1112
        %v1593 = vpack.c.b16 %v1129, %v1113
        %v1594 = vpack.c.b16 %v1130, %v1114
        %v1595 = vpack.c.b16 %v1131, %v1115
        %v1596 = vpack.c.b16 %v1132, %v1116
        %v1597 = vpack.c.b16 %v1133, %v1117
        %v1598 = vpack.c.b16 %v1134, %v1118
        %v1599 = vpack.c.b16 %v1135, %v1119
        %v1600 = vpack.c.b16 %v1136, %v1120
        %v1601 = vpack.c.b16 %v1137, %v1121
        %v1602 = vpack.c.b16 %v1138, %v1122
        %v1603 = vpack.c.b16 %v1155, %v1139
        %v1604 = vpack.c.b16 %v1156, %v1140
        %v1605 = vpack.c.b16 %v1157, %v1141
        %v1606 = vpack.c.b16 %v1158, %v1142
        %v1607 = vpack.c.b16 %v1159, %v1143
        %v1608 = vpack.c.b16 %v1160, %v1144
        %v1609 = vpack.c.b16 %v1161, %v1145
        %v1610 = vpack.c.b16 %v1162, %v1146
        %v1611 = vpack.c.b16 %v1163, %v1147
        %v1612 = vpack.c.b16 %v1164, %v1148
        %v1613 = vpack.c.b16 %v1165, %v1149
        %v1614 = vpack.c.b16 %v1166, %v1150
        %v1615 = vpack.c.b16 %v1167, %v1151
        %v1616 = vpack.c.b16 %v1168, %v1152
        %v1617 = vpack.c.b16 %v1169, %v1153
        %v1618 = vpack.c.b16 %v1170, %v1154
        %v1619 = vpack.c.b16 %v1187, %v1171
        %v1620 = vpack.c.b16 %v1188, %v1172
        %v1621 = vpack.c.b16 %v1189, %v1173
        %v1622 = vpack.c.b16 %v1190, %v1174
        %v1623 = vpack.c.b16 %v1191, %v1175
        %v1624 = vpack.c.b16 %v1192, %v1176
        %v1625 = vpack.c.b16 %v1193, %v1177
        %v1626 = vpack.c.b16 %v1194, %v1178
        %v1627 = vpack.c.b16 %v1195, %v1179
        %v1628 = vpack.c.b16 %v1196, %v1180
        %v1629 = vpack.c.b16 %v1197, %v1181
        %v1630 = vpack.c.b16 %v1198, %v1182
        %v1631 = vpack.c.b16 %v1199, %v1183
        %v1632 = vpack.c.b16 %v1200, %v1184
        %v1633 = vpack.c.b16 %v1201, %v1185
        %v1634 = vpack.c.b16 %v1202, %v1186
        %v1635 = vpack.c.b16 %v1219, %v1203
        %v1636 = vpack.c.b16 %v1220, %v1204
        %v1637 = vpack.c.b16 %v1221, %v1205
        %v1638 = vpack.c.b16 %v1222, %v1206
        %v1639 = vpack.c.b16 %v1223, %v1207
        %v1640 = vpack.c.b16 %v1224, %v1208
        %v1641 = vpack.c.b16 %v1225, %v1209
        %v1642 = vpack.c.b16 %v1226, %v1210
        %v1643 = vpack.c.b16 %v1227, %v1211
        %v1644 = vpack.c.b16 %v1228, %v1212
        %v1645 = vpack.c.b16 %v1229, %v1213
        %v1646 = vpack.c.b16 %v1230, %v1214
        %v1647 = vpack.c.b16 %v1231, %v1215
        %v1648 = vpack.c.b16 %v1232, %v1216
        %v1649 = vpack.c.b16 %v1233, %v1217
        %v1650 = vpack.c.b16 %v1234, %v1218
        %v1651 = vpack.c.b16 %v1251, %v1235
        %v1652 = vpack.c.b16 %v1252, %v1236
        %v1653 = vpack.c.b16 %v1253, %v1237
        %v1654 = vpack.c.b16 %v1254, %v1238
        %v1655 = vpack.c.b16 %v1255, %v1239
        %v1656 = vpack.c.b16 %v1256, %v1240
        %v1657 = vpack.c.b16 %v1257, %v1241
        %v1658 = vpack.c.b16 %v1258, %v1242
        %v1659 = vpack.c.b16 %v1259, %v1243
        %v1660 = vpack.c.b16 %v1260, %v1244
        %v1661 = vpack.c.b16 %v1261, %v1245
        %v1662 = vpack.c.b16 %v1262, %v1246
        %v1663 = vpack.c.b16 %v1263, %v1247
        %v1664 = vpack.c.b16 %v1264, %v1248
        %v1665 = vpack.c.b16 %v1265, %v1249
        %v1666 = vpack.c.b16 %v1266, %v1250
        %v1667 = vpack.c.b16 %v1283, %v1267
        %v1668 = vpack.c.b16 %v1284, %v1268
        %v1669 = vpack.c.b16 %v1285, %v1269
        %v1670 = vpack.c.b16 %v1286, %v1270
        %v1671 = vpack.c.b16 %v1287, %v1271
        %v1672 = vpack.c.b16 %v1288, %v1272
        %v1673 = vpack.c.b16 %v1289, %v1273
        %v1674 = vpack.c.b16 %v1290, %v1274
        %v1675 = vpack.c.b16 %v1291, %v1275
        %v1676 = vpack.c.b16 %v1292, %v1276
        %v1677 = vpack.c.b16 %v1293, %v1277
        %v1678 = vpack.c.b16 %v1294, %v1278
        %v1679 = vpack.c.b16 %v1295, %v1279
        %v1680 = vpack.c.b16 %v1296, %v1280
        %v1681 = vpack.c.b16 %v1297, %v1281
        %v1682 = vpack.c.b16 %v1298, %v1282
        %v1683 = vpack.c.b16 %v1315, %v1299
        %v1684 = vpack.c.b16 %v1316, %v1300
        %v1685 = vpack.c.b16 %v1317, %v1301
        %v1686 = vpack.c.b16 %v1318, %v1302
        %v1687 = vpack.c.b16 %v1319, %v1303
        %v1688 = vpack.c.b16 %v1320, %v1304
        %v1689 = vpack.c.b16 %v1321, %v1305
        %v1690 = vpack.c.b16 %v1322, %v1306
        %v1691 = vpack.c.b16 %v1323, %v1307
        %v1692 = vpack.c.b16 %v1324, %v1308
        %v1693 = vpack.c.b16 %v1325, %v1309
        %v1694 = vpack.c.b16 %v1326, %v1310
        %v1695 = vpack.c.b16 %v1327, %v1311
        %v1696 = vpack.c.b16 %v1328, %v1312
        %v1697 = vpack.c.b16 %v1329, %v1313
        %v1698 = vpack.c.b16 %v1330, %v1314
        %v1699 = vpack.c.b16 %v1347, %v1331
        %v1700 = vpack.c.b16 %v1348, %v1332
        %v1701 = vpack.c.b16 %v1349, %v1333
        %v1702 = vpack.c.b16 %v1350, %v1334
        %v1703 = vpack.c.b16 %v1351, %v1335
        %v1704 = vpack.c.b16 %v1352, %v1336
        %v1705 = vpack.c.b16 %v1353, %v1337
        %v1706 = vpack.c.b16 %v1354, %v1338
        %v1707 = vpack.c.b16 %v1355, %v1339
        %v1708 = vpack.c.b16 %v1356, %v1340
        %v1709 = vpack.c.b16 %v1357, %v1341
        %v1710 = vpack.c.b16 %v1358, %v1342
        %v1711 = vpack.c.b16 %v1359, %v1343
        %v1712 = vpack.c.b16 %v1360, %v1344
        %v1713 = vpack.c.b16 %v1361, %v1345
        %v1714 = vpack.c.b16 %v1362, %v1346
        %v1715 = vpack.c.b16 %v1379, %v1363
        %v1716 = vpack.c.b16 %v1380, %v1364
        %v1717 = vpack.c.b16 %v1381, %v1365
        %v1718 = vpack.c.b16 %v1382, %v1366
        %v1719 = vpack.c.b16 %v1383, %v1367
        %v1720 = vpack.c.b16 %v1384, %v1368
        %v1721 = vpack.c.b16 %v1385, %v1369
        %v1722 = vpack.c.b16 %v1386, %v1370
        %v1723 = vpack.c.b16 %v1387, %v1371
        %v1724 = vpack.c.b16 %v1388, %v1372
        %v1725 = vpack.c.b16 %v1389, %v1373
        %v1726 = vpack.c.b16 %v1390, %v1374
        %v1727 = vpack.c.b16 %v1391, %v1375
        %v1728 = vpack.c.b16 %v1392, %v1376
        %v1729 = vpack.c.b16 %v1393, %v1377
        %v1730 = vpack.c.b16 %v1394, %v1378
        %v1731 = vpack.c.b16 %v1411, %v1395
        %v1732 = vpack.c.b16 %v1412, %v1396
        %v1733 = vpack.c.b16 %v1413, %v1397
        %v1734 = vpack.c.b16 %v1414, %v1398
        %v1735 = vpack.c.b16 %v1415, %v1399
        %v1736 = vpack.c.b16 %v1416, %v1400
        %v1737 = vpack.c.b16 %v1417, %v1401
        %v1738 = vpack.c.b16 %v1418, %v1402
        %v1739 = vpack.c.b16 %v1419, %v1403
        %v1740 = vpack.c.b16 %v1420, %v1404
        %v1741 = vpack.c.b16 %v1421, %v1405
        %v1742 = vpack.c.b16 %v1422, %v1406
        %v1743 = vpack.c.b16 %v1423, %v1407
        %v1744 = vpack.c.b16 %v1424, %v1408
        %v1745 = vpack.c.b16 %v1425, %v1409
        %v1746 = vpack.c.b16 %v1426, %v1410
        %v1747 = vpack.c.b16 %v1443, %v1427
        %v1748 = vpack.c.b16 %v1444, %v1428
        %v1749 = vpack.c.b16 %v1445, %v1429
        %v1750 = vpack.c.b16 %v1446, %v1430
        %v1751 = vpack.c.b16 %v1447, %v1431
        %v1752 = vpack.c.b16 %v1448, %v1432
        %v1753 = vpack.c.b16 %v1449, %v1433
        %v1754 = vpack.c.b16 %v1450, %v1434
        %v1755 = vpack.c.b16 %v1451, %v1435
        %v1756 = vpack.c.b16 %v1452, %v1436
        %v1757 = vpack.c.b16 %v1453, %v1437
        %v1758 = vpack.c.b16 %v1454, %v1438
        %v1759 = vpack.c.b16 %v1455, %v1439
        %v1760 = vpack.c.b16 %v1456, %v1440
        %v1761 = vpack.c.b16 %v1457, %v1441
        %v1762 = vpack.c.b16 %v1458, %v1442
        %v1763 = vpack.c.b16 %v1475, %v1459
        %v1764 = vpack.c.b16 %v1476, %v1460
        %v1765 = vpack.c.b16 %v1477, %v1461
        %v1766 = vpack.c.b16 %v1478, %v1462
        %v1767 = vpack.c.b16 %v1479, %v1463
        %v1768 = vpack.c.b16 %v1480, %v1464
        %v1769 = vpack.c.b16 %v1481, %v1465
        %v1770 = vpack.c.b16 %v1482, %v1466
        %v1771 = vpack.c.b16 %v1483, %v1467
        %v1772 = vpack.c.b16 %v1484, %v1468
        %v1773 = vpack.c.b16 %v1485, %v1469
        %v1774 = vpack.c.b16 %v1486, %v1470
        %v1775 = vpack.c.b16 %v1487, %v1471
        %v1776 = vpack.c.b16 %v1488, %v1472
        %v1777 = vpack.c.b16 %v1489, %v1473
        %v1778 = vpack.c.b16 %v1490, %v1474
        %v1779 = vpack.c.b16 %v1507, %v1491
        %v1780 = vpack.c.b16 %v1508, %v1492
        %v1781 = vpack.c.b16 %v1509, %v1493
        %v1782 = vpack.c.b16 %v1510, %v1494
        %v1783 = vpack.c.b16 %v1511, %v1495
        %v1784 = vpack.c.b16 %v1512, %v1496
        %v1785 = vpack.c.b16 %v1513, %v1497
        %v1786 = vpack.c.b16 %v1514, %v1498
        %v1787 = vpack.c.b16 %v1515, %v1499
        %v1788 = vpack.c.b16 %v1516, %v1500
        %v1789 = vpack.c.b16 %v1517, %v1501
        %v1790 = vpack.c.b16 %v1518, %v1502
        %v1791 = vpack.c.b16 %v1519, %v1503
        %v1792 = vpack.c.b16 %v1520, %v1504
        %v1793 = vpack.c.b16 %v1521, %v1505
        %v1794 = vpack.c.b16 %v1522, %v1506
        %v1795 = vpack.c.b16 %v1539, %v1523
        %v1796 = vpack.c.b16 %v1540, %v1524
        %v1797 = vpack.c.b16 %v1541, %v1525
        %v1798 = vpack.c.b16 %v1542, %v1526
        %v1799 = vpack.c.b16 %v1543, %v1527
        %v1800 = vpack.c.b16 %v1544, %v1528
        %v1801 = vpack.c.b16 %v1545, %v1529
        %v1802 = vpack.c.b16 %v1546, %v1530
        %v1803 = vpack.c.b16 %v1547, %v1531
        %v1804 = vpack.c.b16 %v1548, %v1532
        %v1805 = vpack.c.b16 %v1549, %v1533
        %v1806 = vpack.c.b16 %v1550, %v1534
        %v1807 = vpack.c.b16 %v1551, %v1535
        %v1808 = vpack.c.b16 %v1552, %v1536
        %v1809 = vpack.c.b16 %v1553, %v1537
        %v1810 = vpack.c.b16 %v1554, %v1538
        %2067 = vmatprep.subr.bf16.mxu0 %v1668
        %2068 = vmatpush1.bf16.msra.mxu0 %v1667
        %2069 = vmatprep.subr.bf16.mxu0 %v1652
        %2070 = vmatpush1.bf16.msra.mxu0 %v1651
        %2071 = vmatprep.subr.bf16.mxu0 %v1636
        %2072 = vmatpush1.bf16.msra.mxu0 %v1635
        %2073 = vmatprep.subr.bf16.mxu0 %v1620
        %2074 = vmatpush1.bf16.msra.mxu0 %v1619
        %2075 = vmatprep.subr.bf16.mxu0 %v1604
        %2076 = vmatpush1.bf16.msra.mxu0 %v1603
        %2077 = vmatprep.subr.bf16.mxu0 %v1588
        %2078 = vmatpush1.bf16.msra.mxu0 %v1587
        %2079 = vmatprep.subr.bf16.mxu0 %v1572
        %2080 = vmatpush1.bf16.msra.mxu0 %v1571
        %2081 = vmatprep.subr.bf16.mxu0 %v1556
        %2082 = vmatpush1.bf16.msra.mxu0 %v1555
        %2083 = vmatprep.subr.bf16.mxu0 %v1796
        %2084 = vmatpush2.bf16.msra.mxu0 %v1795
        %2085 = vmatprep.subr.bf16.mxu0 %v1780
        %2086 = vmatpush2.bf16.msra.mxu0 %v1779
        %2087 = vmatprep.subr.bf16.mxu0 %v1764
        %2088 = vmatpush2.bf16.msra.mxu0 %v1763
        %2089 = vmatprep.subr.bf16.mxu0 %v1748
        %2090 = vmatpush2.bf16.msra.mxu0 %v1747
        %2091 = vmatprep.subr.bf16.mxu0 %v1732
        %2092 = vmatpush2.bf16.msra.mxu0 %v1731
        %2093 = vmatprep.subr.bf16.mxu0 %v1716
        %2094 = vmatpush2.bf16.msra.mxu0 %v1715
        %2095 = vmatprep.subr.bf16.mxu0 %v1700
        %2096 = vmatpush2.bf16.msra.mxu0 %v1699
        %2097 = vmatprep.subr.bf16.mxu0 %v1684
        %2098 = vmatpush2.bf16.msra.mxu0 %v1683
        %2099 = vmatprep.mubr.bf16.mxu0 %v784
        %2100 = vmatmul.mubr.bf16.gmra.mxu0 %v783
        %v2101 = vpop.f32.mrf.mxu0
        %v2102 = vadd.f32 %v700, %v2101
        %v2103 = vpop.f32.mrf.mxu0
        %v2104 = vadd.f32 %v704, %v2103
        %v2105 = vpop.f32.mrf.mxu0
        %v2106 = vadd.f32 %v700, %v2105
        %v2107 = vpop.f32.mrf.mxu0
        %v2108 = vadd.f32 %v704, %v2107
        %2109 = vdwg.mxu0
        %2110 = vmatprep.subr.bf16.mxu0 %v1670
        %2111 = vmatpush1.bf16.msra.mxu0 %v1669
        %2112 = vmatprep.subr.bf16.mxu0 %v1654
        %2113 = vmatpush1.bf16.msra.mxu0 %v1653
        %2114 = vmatprep.subr.bf16.mxu0 %v1638
        %2115 = vmatpush1.bf16.msra.mxu0 %v1637
        %2116 = vmatprep.subr.bf16.mxu0 %v1622
        %2117 = vmatpush1.bf16.msra.mxu0 %v1621
        %2118 = vmatprep.subr.bf16.mxu0 %v1606
        %2119 = vmatpush1.bf16.msra.mxu0 %v1605
        %2120 = vmatprep.subr.bf16.mxu0 %v1590
        %2121 = vmatpush1.bf16.msra.mxu0 %v1589
        %2122 = vmatprep.subr.bf16.mxu0 %v1574
        %2123 = vmatpush1.bf16.msra.mxu0 %v1573
        %2124 = vmatprep.subr.bf16.mxu0 %v1558
        %2125 = vmatpush1.bf16.msra.mxu0 %v1557
        %2126 = vmatprep.subr.bf16.mxu0 %v1798
        %2127 = vmatpush2.bf16.msra.mxu0 %v1797
        %2128 = vmatprep.subr.bf16.mxu0 %v1782
        %2129 = vmatpush2.bf16.msra.mxu0 %v1781
        %2130 = vmatprep.subr.bf16.mxu0 %v1766
        %2131 = vmatpush2.bf16.msra.mxu0 %v1765
        %2132 = vmatprep.subr.bf16.mxu0 %v1750
        %2133 = vmatpush2.bf16.msra.mxu0 %v1749
        %2134 = vmatprep.subr.bf16.mxu0 %v1734
        %2135 = vmatpush2.bf16.msra.mxu0 %v1733
        %2136 = vmatprep.subr.bf16.mxu0 %v1718
        %2137 = vmatpush2.bf16.msra.mxu0 %v1717
        %2138 = vmatprep.subr.bf16.mxu0 %v1702
        %2139 = vmatpush2.bf16.msra.mxu0 %v1701
        %2140 = vmatprep.subr.bf16.mxu0 %v1686
        %2141 = vmatpush2.bf16.msra.mxu0 %v1685
        %2142 = vmatprep.mubr.bf16.mxu0 %v784
        %2143 = vmatmul.mubr.bf16.gmra.mxu0 %v783
        %v2144 = vpop.f32.mrf.mxu0
        %v2145 = vadd.f32 %v708, %v2144
        %v2146 = vpop.f32.mrf.mxu0
        %v2147 = vadd.f32 %v712, %v2146
        %v2148 = vpop.f32.mrf.mxu0
        %v2149 = vadd.f32 %v708, %v2148
        %v2150 = vpop.f32.mrf.mxu0
        %v2151 = vadd.f32 %v712, %v2150
        %2152 = vdwg.mxu0
        %2153 = vmatprep.subr.bf16.mxu0 %v1672
        %2154 = vmatpush1.bf16.msra.mxu0 %v1671
        %2155 = vmatprep.subr.bf16.mxu0 %v1656
        %2156 = vmatpush1.bf16.msra.mxu0 %v1655
        %2157 = vmatprep.subr.bf16.mxu0 %v1640
        %2158 = vmatpush1.bf16.msra.mxu0 %v1639
        %2159 = vmatprep.subr.bf16.mxu0 %v1624
        %2160 = vmatpush1.bf16.msra.mxu0 %v1623
        %2161 = vmatprep.subr.bf16.mxu0 %v1608
        %2162 = vmatpush1.bf16.msra.mxu0 %v1607
        %2163 = vmatprep.subr.bf16.mxu0 %v1592
        %2164 = vmatpush1.bf16.msra.mxu0 %v1591
        %2165 = vmatprep.subr.bf16.mxu0 %v1576
        %2166 = vmatpush1.bf16.msra.mxu0 %v1575
        %2167 = vmatprep.subr.bf16.mxu0 %v1560
        %2168 = vmatpush1.bf16.msra.mxu0 %v1559
        %2169 = vmatprep.subr.bf16.mxu0 %v1800
        %2170 = vmatpush2.bf16.msra.mxu0 %v1799
        %2171 = vmatprep.subr.bf16.mxu0 %v1784
        %2172 = vmatpush2.bf16.msra.mxu0 %v1783
        %2173 = vmatprep.subr.bf16.mxu0 %v1768
        %2174 = vmatpush2.bf16.msra.mxu0 %v1767
        %2175 = vmatprep.subr.bf16.mxu0 %v1752
        %2176 = vmatpush2.bf16.msra.mxu0 %v1751
        %2177 = vmatprep.subr.bf16.mxu0 %v1736
        %2178 = vmatpush2.bf16.msra.mxu0 %v1735
        %2179 = vmatprep.subr.bf16.mxu0 %v1720
        %2180 = vmatpush2.bf16.msra.mxu0 %v1719
        %2181 = vmatprep.subr.bf16.mxu0 %v1704
        %2182 = vmatpush2.bf16.msra.mxu0 %v1703
        %2183 = vmatprep.subr.bf16.mxu0 %v1688
        %2184 = vmatpush2.bf16.msra.mxu0 %v1687
        %2185 = vmatprep.mubr.bf16.mxu0 %v784
        %2186 = vmatmul.mubr.bf16.gmra.mxu0 %v783
        %v2187 = vpop.f32.mrf.mxu0
        %v2188 = vadd.f32 %v716, %v2187
        %v2189 = vpop.f32.mrf.mxu0
        %v2190 = vadd.f32 %v720, %v2189
        %v2191 = vpop.f32.mrf.mxu0
        %v2192 = vadd.f32 %v716, %v2191
        %v2193 = vpop.f32.mrf.mxu0
        %v2194 = vadd.f32 %v720, %v2193
        %2195 = vdwg.mxu0
        %2196 = vmatprep.subr.bf16.mxu0 %v1674
        %2197 = vmatpush1.bf16.msra.mxu0 %v1673
        %2198 = vmatprep.subr.bf16.mxu0 %v1658
        %2199 = vmatpush1.bf16.msra.mxu0 %v1657
        %2200 = vmatprep.subr.bf16.mxu0 %v1642
        %2201 = vmatpush1.bf16.msra.mxu0 %v1641
        %2202 = vmatprep.subr.bf16.mxu0 %v1626
        %2203 = vmatpush1.bf16.msra.mxu0 %v1625
        %2204 = vmatprep.subr.bf16.mxu0 %v1610
        %2205 = vmatpush1.bf16.msra.mxu0 %v1609
        %2206 = vmatprep.subr.bf16.mxu0 %v1594
        %2207 = vmatpush1.bf16.msra.mxu0 %v1593
        %2208 = vmatprep.subr.bf16.mxu0 %v1578
        %2209 = vmatpush1.bf16.msra.mxu0 %v1577
        %2210 = vmatprep.subr.bf16.mxu0 %v1562
        %2211 = vmatpush1.bf16.msra.mxu0 %v1561
        %2212 = vmatprep.subr.bf16.mxu0 %v1802
        %2213 = vmatpush2.bf16.msra.mxu0 %v1801
        %2214 = vmatprep.subr.bf16.mxu0 %v1786
        %2215 = vmatpush2.bf16.msra.mxu0 %v1785
        %2216 = vmatprep.subr.bf16.mxu0 %v1770
        %2217 = vmatpush2.bf16.msra.mxu0 %v1769
        %2218 = vmatprep.subr.bf16.mxu0 %v1754
        %2219 = vmatpush2.bf16.msra.mxu0 %v1753
        %2220 = vmatprep.subr.bf16.mxu0 %v1738
        %2221 = vmatpush2.bf16.msra.mxu0 %v1737
        %2222 = vmatprep.subr.bf16.mxu0 %v1722
        %2223 = vmatpush2.bf16.msra.mxu0 %v1721
        %2224 = vmatprep.subr.bf16.mxu0 %v1706
        %2225 = vmatpush2.bf16.msra.mxu0 %v1705
        %2226 = vmatprep.subr.bf16.mxu0 %v1690
        %2227 = vmatpush2.bf16.msra.mxu0 %v1689
        %2228 = vmatprep.mubr.bf16.mxu0 %v784
        %2229 = vmatmul.mubr.bf16.gmra.mxu0 %v783
        %v2230 = vpop.f32.mrf.mxu0
        %v2231 = vadd.f32 %v724, %v2230
        %v2232 = vpop.f32.mrf.mxu0
        %v2233 = vadd.f32 %v728, %v2232
        %v2234 = vpop.f32.mrf.mxu0
        %v2235 = vadd.f32 %v724, %v2234
        %v2236 = vpop.f32.mrf.mxu0
        %v2237 = vadd.f32 %v728, %v2236
        %2238 = vdwg.mxu0
        %2239 = vmatprep.subr.bf16.mxu0 %v1676
        %2240 = vmatpush1.bf16.msra.mxu0 %v1675
        %2241 = vmatprep.subr.bf16.mxu0 %v1660
        %2242 = vmatpush1.bf16.msra.mxu0 %v1659
        %2243 = vmatprep.subr.bf16.mxu0 %v1644
        %2244 = vmatpush1.bf16.msra.mxu0 %v1643
        %2245 = vmatprep.subr.bf16.mxu0 %v1628
        %2246 = vmatpush1.bf16.msra.mxu0 %v1627
        %2247 = vmatprep.subr.bf16.mxu0 %v1612
        %2248 = vmatpush1.bf16.msra.mxu0 %v1611
        %2249 = vmatprep.subr.bf16.mxu0 %v1596
        %2250 = vmatpush1.bf16.msra.mxu0 %v1595
        %2251 = vmatprep.subr.bf16.mxu0 %v1580
        %2252 = vmatpush1.bf16.msra.mxu0 %v1579
        %2253 = vmatprep.subr.bf16.mxu0 %v1564
        %2254 = vmatpush1.bf16.msra.mxu0 %v1563
        %2255 = vmatprep.subr.bf16.mxu0 %v1804
        %2256 = vmatpush2.bf16.msra.mxu0 %v1803
        %2257 = vmatprep.subr.bf16.mxu0 %v1788
        %2258 = vmatpush2.bf16.msra.mxu0 %v1787
        %2259 = vmatprep.subr.bf16.mxu0 %v1772
        %2260 = vmatpush2.bf16.msra.mxu0 %v1771
        %2261 = vmatprep.subr.bf16.mxu0 %v1756
        %2262 = vmatpush2.bf16.msra.mxu0 %v1755
        %2263 = vmatprep.subr.bf16.mxu0 %v1740
        %2264 = vmatpush2.bf16.msra.mxu0 %v1739
        %2265 = vmatprep.subr.bf16.mxu0 %v1724
        %2266 = vmatpush2.bf16.msra.mxu0 %v1723
        %2267 = vmatprep.subr.bf16.mxu0 %v1708
        %2268 = vmatpush2.bf16.msra.mxu0 %v1707
        %2269 = vmatprep.subr.bf16.mxu0 %v1692
        %2270 = vmatpush2.bf16.msra.mxu0 %v1691
        %2271 = vmatprep.mubr.bf16.mxu0 %v784
        %2272 = vmatmul.mubr.bf16.gmra.mxu0 %v783
        %v2273 = vpop.f32.mrf.mxu0
        %v2274 = vadd.f32 %v732, %v2273
        %v2275 = vpop.f32.mrf.mxu0
        %v2276 = vadd.f32 %v736, %v2275
        %v2277 = vpop.f32.mrf.mxu0
        %v2278 = vadd.f32 %v732, %v2277
        %v2279 = vpop.f32.mrf.mxu0
        %v2280 = vadd.f32 %v736, %v2279
        %2281 = vdwg.mxu0
        %2282 = vmatprep.subr.bf16.mxu0 %v1678
        %2283 = vmatpush1.bf16.msra.mxu0 %v1677
        %2284 = vmatprep.subr.bf16.mxu0 %v1662
        %2285 = vmatpush1.bf16.msra.mxu0 %v1661
        %2286 = vmatprep.subr.bf16.mxu0 %v1646
        %2287 = vmatpush1.bf16.msra.mxu0 %v1645
        %2288 = vmatprep.subr.bf16.mxu0 %v1630
        %2289 = vmatpush1.bf16.msra.mxu0 %v1629
        %2290 = vmatprep.subr.bf16.mxu0 %v1614
        %2291 = vmatpush1.bf16.msra.mxu0 %v1613
        %2292 = vmatprep.subr.bf16.mxu0 %v1598
        %2293 = vmatpush1.bf16.msra.mxu0 %v1597
        %2294 = vmatprep.subr.bf16.mxu0 %v1582
        %2295 = vmatpush1.bf16.msra.mxu0 %v1581
        %2296 = vmatprep.subr.bf16.mxu0 %v1566
        %2297 = vmatpush1.bf16.msra.mxu0 %v1565
        %2298 = vmatprep.subr.bf16.mxu0 %v1806
        %2299 = vmatpush2.bf16.msra.mxu0 %v1805
        %2300 = vmatprep.subr.bf16.mxu0 %v1790
        %2301 = vmatpush2.bf16.msra.mxu0 %v1789
        %2302 = vmatprep.subr.bf16.mxu0 %v1774
        %2303 = vmatpush2.bf16.msra.mxu0 %v1773
        %2304 = vmatprep.subr.bf16.mxu0 %v1758
        %2305 = vmatpush2.bf16.msra.mxu0 %v1757
        %2306 = vmatprep.subr.bf16.mxu0 %v1742
        %2307 = vmatpush2.bf16.msra.mxu0 %v1741
        %2308 = vmatprep.subr.bf16.mxu0 %v1726
        %2309 = vmatpush2.bf16.msra.mxu0 %v1725
        %2310 = vmatprep.subr.bf16.mxu0 %v1710
        %2311 = vmatpush2.bf16.msra.mxu0 %v1709
        %2312 = vmatprep.subr.bf16.mxu0 %v1694
        %2313 = vmatpush2.bf16.msra.mxu0 %v1693
        %2314 = vmatprep.mubr.bf16.mxu0 %v784
        %2315 = vmatmul.mubr.bf16.gmra.mxu0 %v783
        %v2316 = vpop.f32.mrf.mxu0
        %v2317 = vadd.f32 %v740, %v2316
        %v2318 = vpop.f32.mrf.mxu0
        %v2319 = vadd.f32 %v744, %v2318
        %v2320 = vpop.f32.mrf.mxu0
        %v2321 = vadd.f32 %v740, %v2320
        %v2322 = vpop.f32.mrf.mxu0
        %v2323 = vadd.f32 %v744, %v2322
        %2324 = vdwg.mxu0
        %2325 = vmatprep.subr.bf16.mxu0 %v1680
        %2326 = vmatpush1.bf16.msra.mxu0 %v1679
        %2327 = vmatprep.subr.bf16.mxu0 %v1664
        %2328 = vmatpush1.bf16.msra.mxu0 %v1663
        %2329 = vmatprep.subr.bf16.mxu0 %v1648
        %2330 = vmatpush1.bf16.msra.mxu0 %v1647
        %2331 = vmatprep.subr.bf16.mxu0 %v1632
        %2332 = vmatpush1.bf16.msra.mxu0 %v1631
        %2333 = vmatprep.subr.bf16.mxu0 %v1616
        %2334 = vmatpush1.bf16.msra.mxu0 %v1615
        %2335 = vmatprep.subr.bf16.mxu0 %v1600
        %2336 = vmatpush1.bf16.msra.mxu0 %v1599
        %2337 = vmatprep.subr.bf16.mxu0 %v1584
        %2338 = vmatpush1.bf16.msra.mxu0 %v1583
        %2339 = vmatprep.subr.bf16.mxu0 %v1568
        %2340 = vmatpush1.bf16.msra.mxu0 %v1567
        %2341 = vmatprep.subr.bf16.mxu0 %v1808
        %2342 = vmatpush2.bf16.msra.mxu0 %v1807
        %2343 = vmatprep.subr.bf16.mxu0 %v1792
        %2344 = vmatpush2.bf16.msra.mxu0 %v1791
        %2345 = vmatprep.subr.bf16.mxu0 %v1776
        %2346 = vmatpush2.bf16.msra.mxu0 %v1775
        %2347 = vmatprep.subr.bf16.mxu0 %v1760
        %2348 = vmatpush2.bf16.msra.mxu0 %v1759
        %2349 = vmatprep.subr.bf16.mxu0 %v1744
        %2350 = vmatpush2.bf16.msra.mxu0 %v1743
        %2351 = vmatprep.subr.bf16.mxu0 %v1728
        %2352 = vmatpush2.bf16.msra.mxu0 %v1727
        %2353 = vmatprep.subr.bf16.mxu0 %v1712
        %2354 = vmatpush2.bf16.msra.mxu0 %v1711
        %2355 = vmatprep.subr.bf16.mxu0 %v1696
        %2356 = vmatpush2.bf16.msra.mxu0 %v1695
        %2357 = vmatprep.mubr.bf16.mxu0 %v784
        %2358 = vmatmul.mubr.bf16.gmra.mxu0 %v783
        %v2359 = vpop.f32.mrf.mxu0
        %v2360 = vadd.f32 %v748, %v2359
        %v2361 = vpop.f32.mrf.mxu0
        %v2362 = vadd.f32 %v752, %v2361
        %v2363 = vpop.f32.mrf.mxu0
        %v2364 = vadd.f32 %v748, %v2363
        %v2365 = vpop.f32.mrf.mxu0
        %v2366 = vadd.f32 %v752, %v2365
        %2367 = vdwg.mxu0
        %2368 = vmatprep.subr.bf16.mxu0 %v1682
        %2369 = vmatpush1.bf16.msra.mxu0 %v1681
        %2370 = vmatprep.subr.bf16.mxu0 %v1666
        %2371 = vmatpush1.bf16.msra.mxu0 %v1665
        %2372 = vmatprep.subr.bf16.mxu0 %v1650
        %2373 = vmatpush1.bf16.msra.mxu0 %v1649
        %2374 = vmatprep.subr.bf16.mxu0 %v1634
        %2375 = vmatpush1.bf16.msra.mxu0 %v1633
        %2376 = vmatprep.subr.bf16.mxu0 %v1618
        %2377 = vmatpush1.bf16.msra.mxu0 %v1617
        %2378 = vmatprep.subr.bf16.mxu0 %v1602
        %2379 = vmatpush1.bf16.msra.mxu0 %v1601
        %2380 = vmatprep.subr.bf16.mxu0 %v1586
        %2381 = vmatpush1.bf16.msra.mxu0 %v1585
        %2382 = vmatprep.subr.bf16.mxu0 %v1570
        %2383 = vmatpush1.bf16.msra.mxu0 %v1569
        %2384 = vmatprep.subr.bf16.mxu0 %v1810
        %2385 = vmatpush2.bf16.msra.mxu0 %v1809
        %2386 = vmatprep.subr.bf16.mxu0 %v1794
        %2387 = vmatpush2.bf16.msra.mxu0 %v1793
        %2388 = vmatprep.subr.bf16.mxu0 %v1778
        %2389 = vmatpush2.bf16.msra.mxu0 %v1777
        %2390 = vmatprep.subr.bf16.mxu0 %v1762
        %2391 = vmatpush2.bf16.msra.mxu0 %v1761
        %2392 = vmatprep.subr.bf16.mxu0 %v1746
        %2393 = vmatpush2.bf16.msra.mxu0 %v1745
        %2394 = vmatprep.subr.bf16.mxu0 %v1730
        %2395 = vmatpush2.bf16.msra.mxu0 %v1729
        %2396 = vmatprep.subr.bf16.mxu0 %v1714
        %2397 = vmatpush2.bf16.msra.mxu0 %v1713
        %2398 = vmatprep.subr.bf16.mxu0 %v1698
        %2399 = vmatpush2.bf16.msra.mxu0 %v1697
        %2400 = vmatprep.mubr.bf16.mxu0 %v784
        %2401 = vmatmul.mubr.bf16.gmra.mxu0 %v783
        %v2402 = vpop.f32.mrf.mxu0
        %v2403 = vadd.f32 %v756, %v2402
        %v2404 = vpop.f32.mrf.mxu0
        %v2405 = vadd.f32 %v760, %v2404
        %v2406 = vpop.f32.mrf.mxu0
        %v2407 = vadd.f32 %v756, %v2406
        %v2408 = vpop.f32.mrf.mxu0
        %v2409 = vadd.f32 %v760, %v2408
        %2410 = vdwg.mxu0
        %v2411 = vmul.f32 %v2102, %v2102
        %v2412 = vmul.f32 %v2104, %v2104
        %v2413 = vmul.f32 %v2145, %v2145
        %v2414 = vmul.f32 %v2147, %v2147
        %v2415 = vmul.f32 %v2188, %v2188
        %v2416 = vmul.f32 %v2190, %v2190
        %v2417 = vmul.f32 %v2231, %v2231
        %v2418 = vmul.f32 %v2233, %v2233
        %v2419 = vmul.f32 %v2274, %v2274
        %v2420 = vmul.f32 %v2276, %v2276
        %v2421 = vmul.f32 %v2317, %v2317
        %v2422 = vmul.f32 %v2319, %v2319
        %v2423 = vmul.f32 %v2360, %v2360
        %v2424 = vmul.f32 %v2362, %v2362
        %v2425 = vmul.f32 %v2403, %v2403
        %v2426 = vmul.f32 %v2405, %v2405
        %v2427 = vmul.f32 %v2106, %v2106
        %v2428 = vmul.f32 %v2108, %v2108
        %v2429 = vmul.f32 %v2149, %v2149
        %v2430 = vmul.f32 %v2151, %v2151
        %v2431 = vmul.f32 %v2192, %v2192
        %v2432 = vmul.f32 %v2194, %v2194
        %v2433 = vmul.f32 %v2235, %v2235
        %v2434 = vmul.f32 %v2237, %v2237
        %v2435 = vmul.f32 %v2278, %v2278
        %v2436 = vmul.f32 %v2280, %v2280
        %v2437 = vmul.f32 %v2321, %v2321
        %v2438 = vmul.f32 %v2323, %v2323
        %v2439 = vmul.f32 %v2364, %v2364
        %v2440 = vmul.f32 %v2366, %v2366
        %v2441 = vmul.f32 %v2407, %v2407
        %v2442 = vmul.f32 %v2409, %v2409
        %v2443 = vmul.f32 %v2102, %v2411
        %v2444 = vmul.f32 %v2104, %v2412
        %v2445 = vmul.f32 %v2145, %v2413
        %v2446 = vmul.f32 %v2147, %v2414
        %v2447 = vmul.f32 %v2188, %v2415
        %v2448 = vmul.f32 %v2190, %v2416
        %v2449 = vmul.f32 %v2231, %v2417
        %v2450 = vmul.f32 %v2233, %v2418
        %v2451 = vmul.f32 %v2274, %v2419
        %v2452 = vmul.f32 %v2276, %v2420
        %v2453 = vmul.f32 %v2317, %v2421
        %v2454 = vmul.f32 %v2319, %v2422
        %v2455 = vmul.f32 %v2360, %v2423
        %v2456 = vmul.f32 %v2362, %v2424
        %v2457 = vmul.f32 %v2403, %v2425
        %v2458 = vmul.f32 %v2405, %v2426
        %v2459 = vmul.f32 %v2106, %v2427
        %v2460 = vmul.f32 %v2108, %v2428
        %v2461 = vmul.f32 %v2149, %v2429
        %v2462 = vmul.f32 %v2151, %v2430
        %v2463 = vmul.f32 %v2192, %v2431
        %v2464 = vmul.f32 %v2194, %v2432
        %v2465 = vmul.f32 %v2235, %v2433
        %v2466 = vmul.f32 %v2237, %v2434
        %v2467 = vmul.f32 %v2278, %v2435
        %v2468 = vmul.f32 %v2280, %v2436
        %v2469 = vmul.f32 %v2321, %v2437
        %v2470 = vmul.f32 %v2323, %v2438
        %v2471 = vmul.f32 %v2364, %v2439
        %v2472 = vmul.f32 %v2366, %v2440
        %v2473 = vmul.f32 %v2407, %v2441
        %v2474 = vmul.f32 %v2409, %v2442
        %v2475 = vmul.f32 %v2443, 0.044715
        %v2476 = vmul.f32 %v2444, 0.044715
        %v2477 = vmul.f32 %v2445, 0.044715
        %v2478 = vmul.f32 %v2446, 0.044715
        %v2479 = vmul.f32 %v2447, 0.044715
        %v2480 = vmul.f32 %v2448, 0.044715
        %v2481 = vmul.f32 %v2449, 0.044715
        %v2482 = vmul.f32 %v2450, 0.044715
        %v2483 = vmul.f32 %v2451, 0.044715
        %v2484 = vmul.f32 %v2452, 0.044715
        %v2485 = vmul.f32 %v2453, 0.044715
        %v2486 = vmul.f32 %v2454, 0.044715
        %v2487 = vmul.f32 %v2455, 0.044715
        %v2488 = vmul.f32 %v2456, 0.044715
        %v2489 = vmul.f32 %v2457, 0.044715
        %v2490 = vmul.f32 %v2458, 0.044715
        %v2491 = vmul.f32 %v2459, 0.044715
        %v2492 = vmul.f32 %v2460, 0.044715
        %v2493 = vmul.f32 %v2461, 0.044715
        %v2494 = vmul.f32 %v2462, 0.044715
        %v2495 = vmul.f32 %v2463, 0.044715
        %v2496 = vmul.f32 %v2464, 0.044715
        %v2497 = vmul.f32 %v2465, 0.044715
        %v2498 = vmul.f32 %v2466, 0.044715
        %v2499 = vmul.f32 %v2467, 0.044715
        %v2500 = vmul.f32 %v2468, 0.044715
        %v2501 = vmul.f32 %v2469, 0.044715
        %v2502 = vmul.f32 %v2470, 0.044715
        %v2503 = vmul.f32 %v2471, 0.044715
        %v2504 = vmul.f32 %v2472, 0.044715
        %v2505 = vmul.f32 %v2473, 0.044715
        %v2506 = vmul.f32 %v2474, 0.044715
        %v2507 = vadd.f32 %v2102, %v2475
        %v2508 = vadd.f32 %v2104, %v2476
        %v2509 = vadd.f32 %v2145, %v2477
        %v2510 = vadd.f32 %v2147, %v2478
        %v2511 = vadd.f32 %v2188, %v2479
        %v2512 = vadd.f32 %v2190, %v2480
        %v2513 = vadd.f32 %v2231, %v2481
        %v2514 = vadd.f32 %v2233, %v2482
        %v2515 = vadd.f32 %v2274, %v2483
        %v2516 = vadd.f32 %v2276, %v2484
        %v2517 = vadd.f32 %v2317, %v2485
        %v2518 = vadd.f32 %v2319, %v2486
        %v2519 = vadd.f32 %v2360, %v2487
        %v2520 = vadd.f32 %v2362, %v2488
        %v2521 = vadd.f32 %v2403, %v2489
        %v2522 = vadd.f32 %v2405, %v2490
        %v2523 = vadd.f32 %v2106, %v2491
        %v2524 = vadd.f32 %v2108, %v2492
        %v2525 = vadd.f32 %v2149, %v2493
        %v2526 = vadd.f32 %v2151, %v2494
        %v2527 = vadd.f32 %v2192, %v2495
        %v2528 = vadd.f32 %v2194, %v2496
        %v2529 = vadd.f32 %v2235, %v2497
        %v2530 = vadd.f32 %v2237, %v2498
        %v2531 = vadd.f32 %v2278, %v2499
        %v2532 = vadd.f32 %v2280, %v2500
        %v2533 = vadd.f32 %v2321, %v2501
        %v2534 = vadd.f32 %v2323, %v2502
        %v2535 = vadd.f32 %v2364, %v2503
        %v2536 = vadd.f32 %v2366, %v2504
        %v2537 = vadd.f32 %v2407, %v2505
        %v2538 = vadd.f32 %v2409, %v2506
        %v2539 = vmul.f32 %v2507, 0.7978846
        %v2540 = vmul.f32 %v2508, 0.7978846
        %v2541 = vmul.f32 %v2509, 0.7978846
        %v2542 = vmul.f32 %v2510, 0.7978846
        %v2543 = vmul.f32 %v2511, 0.7978846
        %v2544 = vmul.f32 %v2512, 0.7978846
        %v2545 = vmul.f32 %v2513, 0.7978846
        %v2546 = vmul.f32 %v2514, 0.7978846
        %v2547 = vmul.f32 %v2515, 0.7978846
        %v2548 = vmul.f32 %v2516, 0.7978846
        %v2549 = vmul.f32 %v2517, 0.7978846
        %v2550 = vmul.f32 %v2518, 0.7978846
        %v2551 = vmul.f32 %v2519, 0.7978846
        %v2552 = vmul.f32 %v2520, 0.7978846
        %v2553 = vmul.f32 %v2521, 0.7978846
        %v2554 = vmul.f32 %v2522, 0.7978846
        %v2555 = vmul.f32 %v2523, 0.7978846
        %v2556 = vmul.f32 %v2524, 0.7978846
        %v2557 = vmul.f32 %v2525, 0.7978846
        %v2558 = vmul.f32 %v2526, 0.7978846
        %v2559 = vmul.f32 %v2527, 0.7978846
        %v2560 = vmul.f32 %v2528, 0.7978846
        %v2561 = vmul.f32 %v2529, 0.7978846
        %v2562 = vmul.f32 %v2530, 0.7978846
        %v2563 = vmul.f32 %v2531, 0.7978846
        %v2564 = vmul.f32 %v2532, 0.7978846
        %v2565 = vmul.f32 %v2533, 0.7978846
        %v2566 = vmul.f32 %v2534, 0.7978846
        %v2567 = vmul.f32 %v2535, 0.7978846
        %v2568 = vmul.f32 %v2536, 0.7978846
        %v2569 = vmul.f32 %v2537, 0.7978846
        %v2570 = vmul.f32 %v2538, 0.7978846
        %v2571 = vtanh.pop %v2539
        %v2572 = vtanh.pop %v2540
        %v2573 = vtanh.pop %v2541
        %v2574 = vtanh.pop %v2542
        %v2575 = vtanh.pop %v2543
        %v2576 = vtanh.pop %v2544
        %v2577 = vtanh.pop %v2545
        %v2578 = vtanh.pop %v2546
        %v2579 = vtanh.pop %v2547
        %v2580 = vtanh.pop %v2548
        %v2581 = vtanh.pop %v2549
        %v2582 = vtanh.pop %v2550
        %v2583 = vtanh.pop %v2551
        %v2584 = vtanh.pop %v2552
        %v2585 = vtanh.pop %v2553
        %v2586 = vtanh.pop %v2554
        %v2587 = vtanh.pop %v2555
        %v2588 = vtanh.pop %v2556
        %v2589 = vtanh.pop %v2557
        %v2590 = vtanh.pop %v2558
        %v2591 = vtanh.pop %v2559
        %v2592 = vtanh.pop %v2560
        %v2593 = vtanh.pop %v2561
        %v2594 = vtanh.pop %v2562
        %v2595 = vtanh.pop %v2563
        %v2596 = vtanh.pop %v2564
        %v2597 = vtanh.pop %v2565
        %v2598 = vtanh.pop %v2566
        %v2599 = vtanh.pop %v2567
        %v2600 = vtanh.pop %v2568
        %v2601 = vtanh.pop %v2569
        %v2602 = vtanh.pop %v2570
        %v2603 = vadd.f32 %v2571, 1.0
        %v2604 = vadd.f32 %v2572, 1.0
        %v2605 = vadd.f32 %v2573, 1.0
        %v2606 = vadd.f32 %v2574, 1.0
        %v2607 = vadd.f32 %v2575, 1.0
        %v2608 = vadd.f32 %v2576, 1.0
        %v2609 = vadd.f32 %v2577, 1.0
        %v2610 = vadd.f32 %v2578, 1.0
        %v2611 = vadd.f32 %v2579, 1.0
        %v2612 = vadd.f32 %v2580, 1.0
        %v2613 = vadd.f32 %v2581, 1.0
        %v2614 = vadd.f32 %v2582, 1.0
        %v2615 = vadd.f32 %v2583, 1.0
        %v2616 = vadd.f32 %v2584, 1.0
        %v2617 = vadd.f32 %v2585, 1.0
        %v2618 = vadd.f32 %v2586, 1.0
        %v2619 = vadd.f32 %v2587, 1.0
        %v2620 = vadd.f32 %v2588, 1.0
        %v2621 = vadd.f32 %v2589, 1.0
        %v2622 = vadd.f32 %v2590, 1.0
        %v2623 = vadd.f32 %v2591, 1.0
        %v2624 = vadd.f32 %v2592, 1.0
        %v2625 = vadd.f32 %v2593, 1.0
        %v2626 = vadd.f32 %v2594, 1.0
        %v2627 = vadd.f32 %v2595, 1.0
        %v2628 = vadd.f32 %v2596, 1.0
        %v2629 = vadd.f32 %v2597, 1.0
        %v2630 = vadd.f32 %v2598, 1.0
        %v2631 = vadd.f32 %v2599, 1.0
        %v2632 = vadd.f32 %v2600, 1.0
        %v2633 = vadd.f32 %v2601, 1.0
        %v2634 = vadd.f32 %v2602, 1.0
        %v2635 = vmul.f32 %v2603, 0.5
        %v2636 = vmul.f32 %v2604, 0.5
        %v2637 = vmul.f32 %v2605, 0.5
        %v2638 = vmul.f32 %v2606, 0.5
        %v2639 = vmul.f32 %v2607, 0.5
        %v2640 = vmul.f32 %v2608, 0.5
        %v2641 = vmul.f32 %v2609, 0.5
        %v2642 = vmul.f32 %v2610, 0.5
        %v2643 = vmul.f32 %v2611, 0.5
        %v2644 = vmul.f32 %v2612, 0.5
        %v2645 = vmul.f32 %v2613, 0.5
        %v2646 = vmul.f32 %v2614, 0.5
        %v2647 = vmul.f32 %v2615, 0.5
        %v2648 = vmul.f32 %v2616, 0.5
        %v2649 = vmul.f32 %v2617, 0.5
        %v2650 = vmul.f32 %v2618, 0.5
        %v2651 = vmul.f32 %v2619, 0.5
        %v2652 = vmul.f32 %v2620, 0.5
        %v2653 = vmul.f32 %v2621, 0.5
        %v2654 = vmul.f32 %v2622, 0.5
        %v2655 = vmul.f32 %v2623, 0.5
        %v2656 = vmul.f32 %v2624, 0.5
        %v2657 = vmul.f32 %v2625, 0.5
        %v2658 = vmul.f32 %v2626, 0.5
        %v2659 = vmul.f32 %v2627, 0.5
        %v2660 = vmul.f32 %v2628, 0.5
        %v2661 = vmul.f32 %v2629, 0.5
        %v2662 = vmul.f32 %v2630, 0.5
        %v2663 = vmul.f32 %v2631, 0.5
        %v2664 = vmul.f32 %v2632, 0.5
        %v2665 = vmul.f32 %v2633, 0.5
        %v2666 = vmul.f32 %v2634, 0.5
        %v2667 = vmul.f32 %v2102, %v2635
        %v2668 = vmul.f32 %v2104, %v2636
        %v2669 = vmul.f32 %v2145, %v2637
        %v2670 = vmul.f32 %v2147, %v2638
        %v2671 = vmul.f32 %v2188, %v2639
        %v2672 = vmul.f32 %v2190, %v2640
        %v2673 = vmul.f32 %v2231, %v2641
        %v2674 = vmul.f32 %v2233, %v2642
        %v2675 = vmul.f32 %v2274, %v2643
        %v2676 = vmul.f32 %v2276, %v2644
        %v2677 = vmul.f32 %v2317, %v2645
        %v2678 = vmul.f32 %v2319, %v2646
        %v2679 = vmul.f32 %v2360, %v2647
        %v2680 = vmul.f32 %v2362, %v2648
        %v2681 = vmul.f32 %v2403, %v2649
        %v2682 = vmul.f32 %v2405, %v2650
        %v2683 = vmul.f32 %v2106, %v2651
        %v2684 = vmul.f32 %v2108, %v2652
        %v2685 = vmul.f32 %v2149, %v2653
        %v2686 = vmul.f32 %v2151, %v2654
        %v2687 = vmul.f32 %v2192, %v2655
        %v2688 = vmul.f32 %v2194, %v2656
        %v2689 = vmul.f32 %v2235, %v2657
        %v2690 = vmul.f32 %v2237, %v2658
        %v2691 = vmul.f32 %v2278, %v2659
        %v2692 = vmul.f32 %v2280, %v2660
        %v2693 = vmul.f32 %v2321, %v2661
        %v2694 = vmul.f32 %v2323, %v2662
        %v2695 = vmul.f32 %v2364, %v2663
        %v2696 = vmul.f32 %v2366, %v2664
        %v2697 = vmul.f32 %v2407, %v2665
        %v2698 = vmul.f32 %v2409, %v2666
        %v2699 = vpack.c.bf16 %v2683, %v2667
        %v2700 = vpack.c.bf16 %v2684, %v2668
        %v2701 = vpack.c.bf16 %v2685, %v2669
        %v2702 = vpack.c.bf16 %v2686, %v2670
        %v2703 = vpack.c.bf16 %v2687, %v2671
        %v2704 = vpack.c.bf16 %v2688, %v2672
        %v2705 = vpack.c.bf16 %v2689, %v2673
        %v2706 = vpack.c.bf16 %v2690, %v2674
        %v2707 = vpack.c.bf16 %v2691, %v2675
        %v2708 = vpack.c.bf16 %v2692, %v2676
        %v2709 = vpack.c.bf16 %v2693, %v2677
        %v2710 = vpack.c.bf16 %v2694, %v2678
        %v2711 = vpack.c.bf16 %v2695, %v2679
        %v2712 = vpack.c.bf16 %v2696, %v2680
        %v2713 = vpack.c.bf16 %v2697, %v2681
        %v2714 = vpack.c.bf16 %v2698, %v2682
        %v2715 = vld [vmem:[%s375] sm:$0xff]
        %v2716 = vld [vmem:[%s375 + $0x8] sm:$0xff]
        %v2717 = vld [vmem:[%s375 + $0x10] sm:$0xff]
        %v2718 = vld [vmem:[%s375 + $0x18] sm:$0xff]
        %v2719 = vld [vmem:[%s375 + $0x20] sm:$0xff]
        %v2720 = vld [vmem:[%s375 + $0x28] sm:$0xff]
        %v2721 = vld [vmem:[%s375 + $0x30] sm:$0xff]
        %v2722 = vld [vmem:[%s375 + $0x38] sm:$0xff]
        %v2723 = vld [vmem:[%s375 + $0x40] sm:$0xff]
        %v2724 = vld [vmem:[%s375 + $0x48] sm:$0xff]
        %v2725 = vld [vmem:[%s375 + $0x50] sm:$0xff]
        %v2726 = vld [vmem:[%s375 + $0x58] sm:$0xff]
        %v2727 = vld [vmem:[%s375 + $0x60] sm:$0xff]
        %v2728 = vld [vmem:[%s375 + $0x68] sm:$0xff]
        %v2729 = vld [vmem:[%s375 + $0x70] sm:$0xff]
        %v2730 = vld [vmem:[%s375 + $0x78] sm:$0xff]
        %v2731 = vld [vmem:[%s375 + $0x80] sm:$0xff]
        %v2732 = vld [vmem:[%s375 + $0x88] sm:$0xff]
        %v2733 = vld [vmem:[%s375 + $0x90] sm:$0xff]
        %v2734 = vld [vmem:[%s375 + $0x98] sm:$0xff]
        %v2735 = vld [vmem:[%s375 + $0xa0] sm:$0xff]
        %v2736 = vld [vmem:[%s375 + $0xa8] sm:$0xff]
        %v2737 = vld [vmem:[%s375 + $0xb0] sm:$0xff]
        %v2738 = vld [vmem:[%s375 + $0xb8] sm:$0xff]
        %v2739 = vld [vmem:[%s375 + $0xc0] sm:$0xff]
        %v2740 = vld [vmem:[%s375 + $0xc8] sm:$0xff]
        %v2741 = vld [vmem:[%s375 + $0xd0] sm:$0xff]
        %v2742 = vld [vmem:[%s375 + $0xd8] sm:$0xff]
        %v2743 = vld [vmem:[%s375 + $0xe0] sm:$0xff]
        %v2744 = vld [vmem:[%s375 + $0xe8] sm:$0xff]
        %v2745 = vld [vmem:[%s375 + $0xf0] sm:$0xff]
        %v2746 = vld [vmem:[%s375 + $0xf8] sm:$0xff]
        %v2747 = vld [vmem:[%s375 + $0x100] sm:$0xff]
        %v2748 = vld [vmem:[%s375 + $0x108] sm:$0xff]
        %v2749 = vld [vmem:[%s375 + $0x110] sm:$0xff]
        %v2750 = vld [vmem:[%s375 + $0x118] sm:$0xff]
        %v2751 = vld [vmem:[%s375 + $0x120] sm:$0xff]
        %v2752 = vld [vmem:[%s375 + $0x128] sm:$0xff]
        %v2753 = vld [vmem:[%s375 + $0x130] sm:$0xff]
        %v2754 = vld [vmem:[%s375 + $0x138] sm:$0xff]
        %v2755 = vld [vmem:[%s375 + $0x140] sm:$0xff]
        %v2756 = vld [vmem:[%s375 + $0x148] sm:$0xff]
        %v2757 = vld [vmem:[%s375 + $0x150] sm:$0xff]
        %v2758 = vld [vmem:[%s375 + $0x158] sm:$0xff]
        %v2759 = vld [vmem:[%s375 + $0x160] sm:$0xff]
        %v2760 = vld [vmem:[%s375 + $0x168] sm:$0xff]
        %v2761 = vld [vmem:[%s375 + $0x170] sm:$0xff]
        %v2762 = vld [vmem:[%s375 + $0x178] sm:$0xff]
        %v2763 = vld [vmem:[%s375 + $0x180] sm:$0xff]
        %v2764 = vld [vmem:[%s375 + $0x188] sm:$0xff]
        %v2765 = vld [vmem:[%s375 + $0x190] sm:$0xff]
        %v2766 = vld [vmem:[%s375 + $0x198] sm:$0xff]
        %v2767 = vld [vmem:[%s375 + $0x1a0] sm:$0xff]
        %v2768 = vld [vmem:[%s375 + $0x1a8] sm:$0xff]
        %v2769 = vld [vmem:[%s375 + $0x1b0] sm:$0xff]
        %v2770 = vld [vmem:[%s375 + $0x1b8] sm:$0xff]
        %v2771 = vld [vmem:[%s375 + $0x1c0] sm:$0xff]
        %v2772 = vld [vmem:[%s375 + $0x1c8] sm:$0xff]
        %v2773 = vld [vmem:[%s375 + $0x1d0] sm:$0xff]
        %v2774 = vld [vmem:[%s375 + $0x1d8] sm:$0xff]
        %v2775 = vld [vmem:[%s375 + $0x1e0] sm:$0xff]
        %v2776 = vld [vmem:[%s375 + $0x1e8] sm:$0xff]
        %v2777 = vld [vmem:[%s375 + $0x1f0] sm:$0xff]
        %v2778 = vld [vmem:[%s375 + $0x1f8] sm:$0xff]
        %v2779 = vld [vmem:[%s375 + $0x200] sm:$0xff]
        %v2780 = vld [vmem:[%s375 + $0x208] sm:$0xff]
        %v2781 = vld [vmem:[%s375 + $0x210] sm:$0xff]
        %v2782 = vld [vmem:[%s375 + $0x218] sm:$0xff]
        %v2783 = vld [vmem:[%s375 + $0x220] sm:$0xff]
        %v2784 = vld [vmem:[%s375 + $0x228] sm:$0xff]
        %v2785 = vld [vmem:[%s375 + $0x230] sm:$0xff]
        %v2786 = vld [vmem:[%s375 + $0x238] sm:$0xff]
        %v2787 = vld [vmem:[%s375 + $0x240] sm:$0xff]
        %v2788 = vld [vmem:[%s375 + $0x248] sm:$0xff]
        %v2789 = vld [vmem:[%s375 + $0x250] sm:$0xff]
        %v2790 = vld [vmem:[%s375 + $0x258] sm:$0xff]
        %v2791 = vld [vmem:[%s375 + $0x260] sm:$0xff]
        %v2792 = vld [vmem:[%s375 + $0x268] sm:$0xff]
        %v2793 = vld [vmem:[%s375 + $0x270] sm:$0xff]
        %v2794 = vld [vmem:[%s375 + $0x278] sm:$0xff]
        %v2795 = vld [vmem:[%s375 + $0x280] sm:$0xff]
        %v2796 = vld [vmem:[%s375 + $0x288] sm:$0xff]
        %v2797 = vld [vmem:[%s375 + $0x290] sm:$0xff]
        %v2798 = vld [vmem:[%s375 + $0x298] sm:$0xff]
        %v2799 = vld [vmem:[%s375 + $0x2a0] sm:$0xff]
        %v2800 = vld [vmem:[%s375 + $0x2a8] sm:$0xff]
        %v2801 = vld [vmem:[%s375 + $0x2b0] sm:$0xff]
        %v2802 = vld [vmem:[%s375 + $0x2b8] sm:$0xff]
        %v2803 = vld [vmem:[%s375 + $0x2c0] sm:$0xff]
        %v2804 = vld [vmem:[%s375 + $0x2c8] sm:$0xff]
        %v2805 = vld [vmem:[%s375 + $0x2d0] sm:$0xff]
        %v2806 = vld [vmem:[%s375 + $0x2d8] sm:$0xff]
        %v2807 = vld [vmem:[%s375 + $0x2e0] sm:$0xff]
        %v2808 = vld [vmem:[%s375 + $0x2e8] sm:$0xff]
        %v2809 = vld [vmem:[%s375 + $0x2f0] sm:$0xff]
        %v2810 = vld [vmem:[%s375 + $0x2f8] sm:$0xff]
        %v2811 = vld [vmem:[%s375 + $0x300] sm:$0xff]
        %v2812 = vld [vmem:[%s375 + $0x308] sm:$0xff]
        %v2813 = vld [vmem:[%s375 + $0x310] sm:$0xff]
        %v2814 = vld [vmem:[%s375 + $0x318] sm:$0xff]
        %v2815 = vld [vmem:[%s375 + $0x320] sm:$0xff]
        %v2816 = vld [vmem:[%s375 + $0x328] sm:$0xff]
        %v2817 = vld [vmem:[%s375 + $0x330] sm:$0xff]
        %v2818 = vld [vmem:[%s375 + $0x338] sm:$0xff]
        %v2819 = vld [vmem:[%s375 + $0x340] sm:$0xff]
        %v2820 = vld [vmem:[%s375 + $0x348] sm:$0xff]
        %v2821 = vld [vmem:[%s375 + $0x350] sm:$0xff]
        %v2822 = vld [vmem:[%s375 + $0x358] sm:$0xff]
        %v2823 = vld [vmem:[%s375 + $0x360] sm:$0xff]
        %v2824 = vld [vmem:[%s375 + $0x368] sm:$0xff]
        %v2825 = vld [vmem:[%s375 + $0x370] sm:$0xff]
        %v2826 = vld [vmem:[%s375 + $0x378] sm:$0xff]
        %v2827 = vld [vmem:[%s375 + $0x380] sm:$0xff]
        %v2828 = vld [vmem:[%s375 + $0x388] sm:$0xff]
        %v2829 = vld [vmem:[%s375 + $0x390] sm:$0xff]
        %v2830 = vld [vmem:[%s375 + $0x398] sm:$0xff]
        %v2831 = vld [vmem:[%s375 + $0x3a0] sm:$0xff]
        %v2832 = vld [vmem:[%s375 + $0x3a8] sm:$0xff]
        %v2833 = vld [vmem:[%s375 + $0x3b0] sm:$0xff]
        %v2834 = vld [vmem:[%s375 + $0x3b8] sm:$0xff]
        %v2835 = vld [vmem:[%s375 + $0x3c0] sm:$0xff]
        %v2836 = vld [vmem:[%s375 + $0x3c8] sm:$0xff]
        %v2837 = vld [vmem:[%s375 + $0x3d0] sm:$0xff]
        %v2838 = vld [vmem:[%s375 + $0x3d8] sm:$0xff]
        %v2839 = vld [vmem:[%s375 + $0x3e0] sm:$0xff]
        %v2840 = vld [vmem:[%s375 + $0x3e8] sm:$0xff]
        %v2841 = vld [vmem:[%s375 + $0x3f0] sm:$0xff]
        %v2842 = vld [vmem:[%s375 + $0x3f8] sm:$0xff]
        %v2843 = vld [vmem:[%s375 + $0x400] sm:$0xff]
        %v2844 = vld [vmem:[%s375 + $0x408] sm:$0xff]
        %v2845 = vld [vmem:[%s375 + $0x410] sm:$0xff]
        %v2846 = vld [vmem:[%s375 + $0x418] sm:$0xff]
        %v2847 = vld [vmem:[%s375 + $0x420] sm:$0xff]
        %v2848 = vld [vmem:[%s375 + $0x428] sm:$0xff]
        %v2849 = vld [vmem:[%s375 + $0x430] sm:$0xff]
        %v2850 = vld [vmem:[%s375 + $0x438] sm:$0xff]
        %v2851 = vld [vmem:[%s375 + $0x440] sm:$0xff]
        %v2852 = vld [vmem:[%s375 + $0x448] sm:$0xff]
        %v2853 = vld [vmem:[%s375 + $0x450] sm:$0xff]
        %v2854 = vld [vmem:[%s375 + $0x458] sm:$0xff]
        %v2855 = vld [vmem:[%s375 + $0x460] sm:$0xff]
        %v2856 = vld [vmem:[%s375 + $0x468] sm:$0xff]
        %v2857 = vld [vmem:[%s375 + $0x470] sm:$0xff]
        %v2858 = vld [vmem:[%s375 + $0x478] sm:$0xff]
        %v2859 = vld [vmem:[%s375 + $0x480] sm:$0xff]
        %v2860 = vld [vmem:[%s375 + $0x488] sm:$0xff]
        %v2861 = vld [vmem:[%s375 + $0x490] sm:$0xff]
        %v2862 = vld [vmem:[%s375 + $0x498] sm:$0xff]
        %v2863 = vld [vmem:[%s375 + $0x4a0] sm:$0xff]
        %v2864 = vld [vmem:[%s375 + $0x4a8] sm:$0xff]
        %v2865 = vld [vmem:[%s375 + $0x4b0] sm:$0xff]
        %v2866 = vld [vmem:[%s375 + $0x4b8] sm:$0xff]
        %v2867 = vld [vmem:[%s375 + $0x4c0] sm:$0xff]
        %v2868 = vld [vmem:[%s375 + $0x4c8] sm:$0xff]
        %v2869 = vld [vmem:[%s375 + $0x4d0] sm:$0xff]
        %v2870 = vld [vmem:[%s375 + $0x4d8] sm:$0xff]
        %v2871 = vld [vmem:[%s375 + $0x4e0] sm:$0xff]
        %v2872 = vld [vmem:[%s375 + $0x4e8] sm:$0xff]
        %v2873 = vld [vmem:[%s375 + $0x4f0] sm:$0xff]
        %v2874 = vld [vmem:[%s375 + $0x4f8] sm:$0xff]
        %v2875 = vld [vmem:[%s375 + $0x500] sm:$0xff]
        %v2876 = vld [vmem:[%s375 + $0x508] sm:$0xff]
        %v2877 = vld [vmem:[%s375 + $0x510] sm:$0xff]
        %v2878 = vld [vmem:[%s375 + $0x518] sm:$0xff]
        %v2879 = vld [vmem:[%s375 + $0x520] sm:$0xff]
        %v2880 = vld [vmem:[%s375 + $0x528] sm:$0xff]
        %v2881 = vld [vmem:[%s375 + $0x530] sm:$0xff]
        %v2882 = vld [vmem:[%s375 + $0x538] sm:$0xff]
        %v2883 = vld [vmem:[%s375 + $0x540] sm:$0xff]
        %v2884 = vld [vmem:[%s375 + $0x548] sm:$0xff]
        %v2885 = vld [vmem:[%s375 + $0x550] sm:$0xff]
        %v2886 = vld [vmem:[%s375 + $0x558] sm:$0xff]
        %v2887 = vld [vmem:[%s375 + $0x560] sm:$0xff]
        %v2888 = vld [vmem:[%s375 + $0x568] sm:$0xff]
        %v2889 = vld [vmem:[%s375 + $0x570] sm:$0xff]
        %v2890 = vld [vmem:[%s375 + $0x578] sm:$0xff]
        %v2891 = vld [vmem:[%s375 + $0x580] sm:$0xff]
        %v2892 = vld [vmem:[%s375 + $0x588] sm:$0xff]
        %v2893 = vld [vmem:[%s375 + $0x590] sm:$0xff]
        %v2894 = vld [vmem:[%s375 + $0x598] sm:$0xff]
        %v2895 = vld [vmem:[%s375 + $0x5a0] sm:$0xff]
        %v2896 = vld [vmem:[%s375 + $0x5a8] sm:$0xff]
        %v2897 = vld [vmem:[%s375 + $0x5b0] sm:$0xff]
        %v2898 = vld [vmem:[%s375 + $0x5b8] sm:$0xff]
        %v2899 = vld [vmem:[%s375 + $0x5c0] sm:$0xff]
        %v2900 = vld [vmem:[%s375 + $0x5c8] sm:$0xff]
        %v2901 = vld [vmem:[%s375 + $0x5d0] sm:$0xff]
        %v2902 = vld [vmem:[%s375 + $0x5d8] sm:$0xff]
        %v2903 = vld [vmem:[%s375 + $0x5e0] sm:$0xff]
        %v2904 = vld [vmem:[%s375 + $0x5e8] sm:$0xff]
        %v2905 = vld [vmem:[%s375 + $0x5f0] sm:$0xff]
        %v2906 = vld [vmem:[%s375 + $0x5f8] sm:$0xff]
        %v2907 = vld [vmem:[%s375 + $0x600] sm:$0xff]
        %v2908 = vld [vmem:[%s375 + $0x608] sm:$0xff]
        %v2909 = vld [vmem:[%s375 + $0x610] sm:$0xff]
        %v2910 = vld [vmem:[%s375 + $0x618] sm:$0xff]
        %v2911 = vld [vmem:[%s375 + $0x620] sm:$0xff]
        %v2912 = vld [vmem:[%s375 + $0x628] sm:$0xff]
        %v2913 = vld [vmem:[%s375 + $0x630] sm:$0xff]
        %v2914 = vld [vmem:[%s375 + $0x638] sm:$0xff]
        %v2915 = vld [vmem:[%s375 + $0x640] sm:$0xff]
        %v2916 = vld [vmem:[%s375 + $0x648] sm:$0xff]
        %v2917 = vld [vmem:[%s375 + $0x650] sm:$0xff]
        %v2918 = vld [vmem:[%s375 + $0x658] sm:$0xff]
        %v2919 = vld [vmem:[%s375 + $0x660] sm:$0xff]
        %v2920 = vld [vmem:[%s375 + $0x668] sm:$0xff]
        %v2921 = vld [vmem:[%s375 + $0x670] sm:$0xff]
        %v2922 = vld [vmem:[%s375 + $0x678] sm:$0xff]
        %v2923 = vld [vmem:[%s375 + $0x680] sm:$0xff]
        %v2924 = vld [vmem:[%s375 + $0x688] sm:$0xff]
        %v2925 = vld [vmem:[%s375 + $0x690] sm:$0xff]
        %v2926 = vld [vmem:[%s375 + $0x698] sm:$0xff]
        %v2927 = vld [vmem:[%s375 + $0x6a0] sm:$0xff]
        %v2928 = vld [vmem:[%s375 + $0x6a8] sm:$0xff]
        %v2929 = vld [vmem:[%s375 + $0x6b0] sm:$0xff]
        %v2930 = vld [vmem:[%s375 + $0x6b8] sm:$0xff]
        %v2931 = vld [vmem:[%s375 + $0x6c0] sm:$0xff]
        %v2932 = vld [vmem:[%s375 + $0x6c8] sm:$0xff]
        %v2933 = vld [vmem:[%s375 + $0x6d0] sm:$0xff]
        %v2934 = vld [vmem:[%s375 + $0x6d8] sm:$0xff]
        %v2935 = vld [vmem:[%s375 + $0x6e0] sm:$0xff]
        %v2936 = vld [vmem:[%s375 + $0x6e8] sm:$0xff]
        %v2937 = vld [vmem:[%s375 + $0x6f0] sm:$0xff]
        %v2938 = vld [vmem:[%s375 + $0x6f8] sm:$0xff]
        %v2939 = vld [vmem:[%s375 + $0x700] sm:$0xff]
        %v2940 = vld [vmem:[%s375 + $0x708] sm:$0xff]
        %v2941 = vld [vmem:[%s375 + $0x710] sm:$0xff]
        %v2942 = vld [vmem:[%s375 + $0x718] sm:$0xff]
        %v2943 = vld [vmem:[%s375 + $0x720] sm:$0xff]
        %v2944 = vld [vmem:[%s375 + $0x728] sm:$0xff]
        %v2945 = vld [vmem:[%s375 + $0x730] sm:$0xff]
        %v2946 = vld [vmem:[%s375 + $0x738] sm:$0xff]
        %v2947 = vld [vmem:[%s375 + $0x740] sm:$0xff]
        %v2948 = vld [vmem:[%s375 + $0x748] sm:$0xff]
        %v2949 = vld [vmem:[%s375 + $0x750] sm:$0xff]
        %v2950 = vld [vmem:[%s375 + $0x758] sm:$0xff]
        %v2951 = vld [vmem:[%s375 + $0x760] sm:$0xff]
        %v2952 = vld [vmem:[%s375 + $0x768] sm:$0xff]
        %v2953 = vld [vmem:[%s375 + $0x770] sm:$0xff]
        %v2954 = vld [vmem:[%s375 + $0x778] sm:$0xff]
        %v2955 = vld [vmem:[%s375 + $0x780] sm:$0xff]
        %v2956 = vld [vmem:[%s375 + $0x788] sm:$0xff]
        %v2957 = vld [vmem:[%s375 + $0x790] sm:$0xff]
        %v2958 = vld [vmem:[%s375 + $0x798] sm:$0xff]
        %v2959 = vld [vmem:[%s375 + $0x7a0] sm:$0xff]
        %v2960 = vld [vmem:[%s375 + $0x7a8] sm:$0xff]
        %v2961 = vld [vmem:[%s375 + $0x7b0] sm:$0xff]
        %v2962 = vld [vmem:[%s375 + $0x7b8] sm:$0xff]
        %v2963 = vld [vmem:[%s375 + $0x7c0] sm:$0xff]
        %v2964 = vld [vmem:[%s375 + $0x7c8] sm:$0xff]
        %v2965 = vld [vmem:[%s375 + $0x7d0] sm:$0xff]
        %v2966 = vld [vmem:[%s375 + $0x7d8] sm:$0xff]
        %v2967 = vld [vmem:[%s375 + $0x7e0] sm:$0xff]
        %v2968 = vld [vmem:[%s375 + $0x7e8] sm:$0xff]
        %v2969 = vld [vmem:[%s375 + $0x7f0] sm:$0xff]
        %v2970 = vld [vmem:[%s375 + $0x7f8] sm:$0xff]
        %v2971 = vld [vmem:[%s375 + $0x800] sm:$0xff]
        %v2972 = vld [vmem:[%s375 + $0x808] sm:$0xff]
        %v2973 = vld [vmem:[%s375 + $0x810] sm:$0xff]
        %v2974 = vld [vmem:[%s375 + $0x818] sm:$0xff]
        %v2975 = vld [vmem:[%s375 + $0x820] sm:$0xff]
        %v2976 = vld [vmem:[%s375 + $0x828] sm:$0xff]
        %v2977 = vld [vmem:[%s375 + $0x830] sm:$0xff]
        %v2978 = vld [vmem:[%s375 + $0x838] sm:$0xff]
        %v2979 = vld [vmem:[%s375 + $0x840] sm:$0xff]
        %v2980 = vld [vmem:[%s375 + $0x848] sm:$0xff]
        %v2981 = vld [vmem:[%s375 + $0x850] sm:$0xff]
        %v2982 = vld [vmem:[%s375 + $0x858] sm:$0xff]
        %v2983 = vld [vmem:[%s375 + $0x860] sm:$0xff]
        %v2984 = vld [vmem:[%s375 + $0x868] sm:$0xff]
        %v2985 = vld [vmem:[%s375 + $0x870] sm:$0xff]
        %v2986 = vld [vmem:[%s375 + $0x878] sm:$0xff]
        %v2987 = vld [vmem:[%s375 + $0x880] sm:$0xff]
        %v2988 = vld [vmem:[%s375 + $0x888] sm:$0xff]
        %v2989 = vld [vmem:[%s375 + $0x890] sm:$0xff]
        %v2990 = vld [vmem:[%s375 + $0x898] sm:$0xff]
        %v2991 = vld [vmem:[%s375 + $0x8a0] sm:$0xff]
        %v2992 = vld [vmem:[%s375 + $0x8a8] sm:$0xff]
        %v2993 = vld [vmem:[%s375 + $0x8b0] sm:$0xff]
        %v2994 = vld [vmem:[%s375 + $0x8b8] sm:$0xff]
        %v2995 = vld [vmem:[%s375 + $0x8c0] sm:$0xff]
        %v2996 = vld [vmem:[%s375 + $0x8c8] sm:$0xff]
        %v2997 = vld [vmem:[%s375 + $0x8d0] sm:$0xff]
        %v2998 = vld [vmem:[%s375 + $0x8d8] sm:$0xff]
        %v2999 = vld [vmem:[%s375 + $0x8e0] sm:$0xff]
        %v3000 = vld [vmem:[%s375 + $0x8e8] sm:$0xff]
        %v3001 = vld [vmem:[%s375 + $0x8f0] sm:$0xff]
        %v3002 = vld [vmem:[%s375 + $0x8f8] sm:$0xff]
        %v3003 = vld [vmem:[%s375 + $0x900] sm:$0xff]
        %v3004 = vld [vmem:[%s375 + $0x908] sm:$0xff]
        %v3005 = vld [vmem:[%s375 + $0x910] sm:$0xff]
        %v3006 = vld [vmem:[%s375 + $0x918] sm:$0xff]
        %v3007 = vld [vmem:[%s375 + $0x920] sm:$0xff]
        %v3008 = vld [vmem:[%s375 + $0x928] sm:$0xff]
        %v3009 = vld [vmem:[%s375 + $0x930] sm:$0xff]
        %v3010 = vld [vmem:[%s375 + $0x938] sm:$0xff]
        %v3011 = vld [vmem:[%s375 + $0x940] sm:$0xff]
        %v3012 = vld [vmem:[%s375 + $0x948] sm:$0xff]
        %v3013 = vld [vmem:[%s375 + $0x950] sm:$0xff]
        %v3014 = vld [vmem:[%s375 + $0x958] sm:$0xff]
        %v3015 = vld [vmem:[%s375 + $0x960] sm:$0xff]
        %v3016 = vld [vmem:[%s375 + $0x968] sm:$0xff]
        %v3017 = vld [vmem:[%s375 + $0x970] sm:$0xff]
        %v3018 = vld [vmem:[%s375 + $0x978] sm:$0xff]
        %v3019 = vld [vmem:[%s375 + $0x980] sm:$0xff]
        %v3020 = vld [vmem:[%s375 + $0x988] sm:$0xff]
        %v3021 = vld [vmem:[%s375 + $0x990] sm:$0xff]
        %v3022 = vld [vmem:[%s375 + $0x998] sm:$0xff]
        %v3023 = vld [vmem:[%s375 + $0x9a0] sm:$0xff]
        %v3024 = vld [vmem:[%s375 + $0x9a8] sm:$0xff]
        %v3025 = vld [vmem:[%s375 + $0x9b0] sm:$0xff]
        %v3026 = vld [vmem:[%s375 + $0x9b8] sm:$0xff]
        %v3027 = vld [vmem:[%s375 + $0x9c0] sm:$0xff]
        %v3028 = vld [vmem:[%s375 + $0x9c8] sm:$0xff]
        %v3029 = vld [vmem:[%s375 + $0x9d0] sm:$0xff]
        %v3030 = vld [vmem:[%s375 + $0x9d8] sm:$0xff]
        %v3031 = vld [vmem:[%s375 + $0x9e0] sm:$0xff]
        %v3032 = vld [vmem:[%s375 + $0x9e8] sm:$0xff]
        %v3033 = vld [vmem:[%s375 + $0x9f0] sm:$0xff]
        %v3034 = vld [vmem:[%s375 + $0x9f8] sm:$0xff]
        %v3035 = vld [vmem:[%s375 + $0xa00] sm:$0xff]
        %v3036 = vld [vmem:[%s375 + $0xa08] sm:$0xff]
        %v3037 = vld [vmem:[%s375 + $0xa10] sm:$0xff]
        %v3038 = vld [vmem:[%s375 + $0xa18] sm:$0xff]
        %v3039 = vld [vmem:[%s375 + $0xa20] sm:$0xff]
        %v3040 = vld [vmem:[%s375 + $0xa28] sm:$0xff]
        %v3041 = vld [vmem:[%s375 + $0xa30] sm:$0xff]
        %v3042 = vld [vmem:[%s375 + $0xa38] sm:$0xff]
        %v3043 = vld [vmem:[%s375 + $0xa40] sm:$0xff]
        %v3044 = vld [vmem:[%s375 + $0xa48] sm:$0xff]
        %v3045 = vld [vmem:[%s375 + $0xa50] sm:$0xff]
        %v3046 = vld [vmem:[%s375 + $0xa58] sm:$0xff]
        %v3047 = vld [vmem:[%s375 + $0xa60] sm:$0xff]
        %v3048 = vld [vmem:[%s375 + $0xa68] sm:$0xff]
        %v3049 = vld [vmem:[%s375 + $0xa70] sm:$0xff]
        %v3050 = vld [vmem:[%s375 + $0xa78] sm:$0xff]
        %v3051 = vld [vmem:[%s375 + $0xa80] sm:$0xff]
        %v3052 = vld [vmem:[%s375 + $0xa88] sm:$0xff]
        %v3053 = vld [vmem:[%s375 + $0xa90] sm:$0xff]
        %v3054 = vld [vmem:[%s375 + $0xa98] sm:$0xff]
        %v3055 = vld [vmem:[%s375 + $0xaa0] sm:$0xff]
        %v3056 = vld [vmem:[%s375 + $0xaa8] sm:$0xff]
        %v3057 = vld [vmem:[%s375 + $0xab0] sm:$0xff]
        %v3058 = vld [vmem:[%s375 + $0xab8] sm:$0xff]
        %v3059 = vld [vmem:[%s375 + $0xac0] sm:$0xff]
        %v3060 = vld [vmem:[%s375 + $0xac8] sm:$0xff]
        %v3061 = vld [vmem:[%s375 + $0xad0] sm:$0xff]
        %v3062 = vld [vmem:[%s375 + $0xad8] sm:$0xff]
        %v3063 = vld [vmem:[%s375 + $0xae0] sm:$0xff]
        %v3064 = vld [vmem:[%s375 + $0xae8] sm:$0xff]
        %v3065 = vld [vmem:[%s375 + $0xaf0] sm:$0xff]
        %v3066 = vld [vmem:[%s375 + $0xaf8] sm:$0xff]
        %v3067 = vld [vmem:[%s375 + $0xb00] sm:$0xff]
        %v3068 = vld [vmem:[%s375 + $0xb08] sm:$0xff]
        %v3069 = vld [vmem:[%s375 + $0xb10] sm:$0xff]
        %v3070 = vld [vmem:[%s375 + $0xb18] sm:$0xff]
        %v3071 = vld [vmem:[%s375 + $0xb20] sm:$0xff]
        %v3072 = vld [vmem:[%s375 + $0xb28] sm:$0xff]
        %v3073 = vld [vmem:[%s375 + $0xb30] sm:$0xff]
        %v3074 = vld [vmem:[%s375 + $0xb38] sm:$0xff]
        %v3075 = vld [vmem:[%s375 + $0xb40] sm:$0xff]
        %v3076 = vld [vmem:[%s375 + $0xb48] sm:$0xff]
        %v3077 = vld [vmem:[%s375 + $0xb50] sm:$0xff]
        %v3078 = vld [vmem:[%s375 + $0xb58] sm:$0xff]
        %v3079 = vld [vmem:[%s375 + $0xb60] sm:$0xff]
        %v3080 = vld [vmem:[%s375 + $0xb68] sm:$0xff]
        %v3081 = vld [vmem:[%s375 + $0xb70] sm:$0xff]
        %v3082 = vld [vmem:[%s375 + $0xb78] sm:$0xff]
        %v3083 = vld [vmem:[%s375 + $0xb80] sm:$0xff]
        %v3084 = vld [vmem:[%s375 + $0xb88] sm:$0xff]
        %v3085 = vld [vmem:[%s375 + $0xb90] sm:$0xff]
        %v3086 = vld [vmem:[%s375 + $0xb98] sm:$0xff]
        %v3087 = vld [vmem:[%s375 + $0xba0] sm:$0xff]
        %v3088 = vld [vmem:[%s375 + $0xba8] sm:$0xff]
        %v3089 = vld [vmem:[%s375 + $0xbb0] sm:$0xff]
        %v3090 = vld [vmem:[%s375 + $0xbb8] sm:$0xff]
        %v3091 = vld [vmem:[%s375 + $0xbc0] sm:$0xff]
        %v3092 = vld [vmem:[%s375 + $0xbc8] sm:$0xff]
        %v3093 = vld [vmem:[%s375 + $0xbd0] sm:$0xff]
        %v3094 = vld [vmem:[%s375 + $0xbd8] sm:$0xff]
        %v3095 = vld [vmem:[%s375 + $0xbe0] sm:$0xff]
        %v3096 = vld [vmem:[%s375 + $0xbe8] sm:$0xff]
        %v3097 = vld [vmem:[%s375 + $0xbf0] sm:$0xff]
        %v3098 = vld [vmem:[%s375 + $0xbf8] sm:$0xff]
        %v3099 = vld [vmem:[%s375 + $0xc00] sm:$0xff]
        %v3100 = vld [vmem:[%s375 + $0xc08] sm:$0xff]
        %v3101 = vld [vmem:[%s375 + $0xc10] sm:$0xff]
        %v3102 = vld [vmem:[%s375 + $0xc18] sm:$0xff]
        %v3103 = vld [vmem:[%s375 + $0xc20] sm:$0xff]
        %v3104 = vld [vmem:[%s375 + $0xc28] sm:$0xff]
        %v3105 = vld [vmem:[%s375 + $0xc30] sm:$0xff]
        %v3106 = vld [vmem:[%s375 + $0xc38] sm:$0xff]
        %v3107 = vld [vmem:[%s375 + $0xc40] sm:$0xff]
        %v3108 = vld [vmem:[%s375 + $0xc48] sm:$0xff]
        %v3109 = vld [vmem:[%s375 + $0xc50] sm:$0xff]
        %v3110 = vld [vmem:[%s375 + $0xc58] sm:$0xff]
        %v3111 = vld [vmem:[%s375 + $0xc60] sm:$0xff]
        %v3112 = vld [vmem:[%s375 + $0xc68] sm:$0xff]
        %v3113 = vld [vmem:[%s375 + $0xc70] sm:$0xff]
        %v3114 = vld [vmem:[%s375 + $0xc78] sm:$0xff]
        %v3115 = vld [vmem:[%s375 + $0xc80] sm:$0xff]
        %v3116 = vld [vmem:[%s375 + $0xc88] sm:$0xff]
        %v3117 = vld [vmem:[%s375 + $0xc90] sm:$0xff]
        %v3118 = vld [vmem:[%s375 + $0xc98] sm:$0xff]
        %v3119 = vld [vmem:[%s375 + $0xca0] sm:$0xff]
        %v3120 = vld [vmem:[%s375 + $0xca8] sm:$0xff]
        %v3121 = vld [vmem:[%s375 + $0xcb0] sm:$0xff]
        %v3122 = vld [vmem:[%s375 + $0xcb8] sm:$0xff]
        %v3123 = vld [vmem:[%s375 + $0xcc0] sm:$0xff]
        %v3124 = vld [vmem:[%s375 + $0xcc8] sm:$0xff]
        %v3125 = vld [vmem:[%s375 + $0xcd0] sm:$0xff]
        %v3126 = vld [vmem:[%s375 + $0xcd8] sm:$0xff]
        %v3127 = vld [vmem:[%s375 + $0xce0] sm:$0xff]
        %v3128 = vld [vmem:[%s375 + $0xce8] sm:$0xff]
        %v3129 = vld [vmem:[%s375 + $0xcf0] sm:$0xff]
        %v3130 = vld [vmem:[%s375 + $0xcf8] sm:$0xff]
        %v3131 = vld [vmem:[%s375 + $0xd00] sm:$0xff]
        %v3132 = vld [vmem:[%s375 + $0xd08] sm:$0xff]
        %v3133 = vld [vmem:[%s375 + $0xd10] sm:$0xff]
        %v3134 = vld [vmem:[%s375 + $0xd18] sm:$0xff]
        %v3135 = vld [vmem:[%s375 + $0xd20] sm:$0xff]
        %v3136 = vld [vmem:[%s375 + $0xd28] sm:$0xff]
        %v3137 = vld [vmem:[%s375 + $0xd30] sm:$0xff]
        %v3138 = vld [vmem:[%s375 + $0xd38] sm:$0xff]
        %v3139 = vld [vmem:[%s375 + $0xd40] sm:$0xff]
        %v3140 = vld [vmem:[%s375 + $0xd48] sm:$0xff]
        %v3141 = vld [vmem:[%s375 + $0xd50] sm:$0xff]
        %v3142 = vld [vmem:[%s375 + $0xd58] sm:$0xff]
        %v3143 = vld [vmem:[%s375 + $0xd60] sm:$0xff]
        %v3144 = vld [vmem:[%s375 + $0xd68] sm:$0xff]
        %v3145 = vld [vmem:[%s375 + $0xd70] sm:$0xff]
        %v3146 = vld [vmem:[%s375 + $0xd78] sm:$0xff]
        %v3147 = vld [vmem:[%s375 + $0xd80] sm:$0xff]
        %v3148 = vld [vmem:[%s375 + $0xd88] sm:$0xff]
        %v3149 = vld [vmem:[%s375 + $0xd90] sm:$0xff]
        %v3150 = vld [vmem:[%s375 + $0xd98] sm:$0xff]
        %v3151 = vld [vmem:[%s375 + $0xda0] sm:$0xff]
        %v3152 = vld [vmem:[%s375 + $0xda8] sm:$0xff]
        %v3153 = vld [vmem:[%s375 + $0xdb0] sm:$0xff]
        %v3154 = vld [vmem:[%s375 + $0xdb8] sm:$0xff]
        %v3155 = vld [vmem:[%s375 + $0xdc0] sm:$0xff]
        %v3156 = vld [vmem:[%s375 + $0xdc8] sm:$0xff]
        %v3157 = vld [vmem:[%s375 + $0xdd0] sm:$0xff]
        %v3158 = vld [vmem:[%s375 + $0xdd8] sm:$0xff]
        %v3159 = vld [vmem:[%s375 + $0xde0] sm:$0xff]
        %v3160 = vld [vmem:[%s375 + $0xde8] sm:$0xff]
        %v3161 = vld [vmem:[%s375 + $0xdf0] sm:$0xff]
        %v3162 = vld [vmem:[%s375 + $0xdf8] sm:$0xff]
        %v3163 = vld [vmem:[%s375 + $0xe00] sm:$0xff]
        %v3164 = vld [vmem:[%s375 + $0xe08] sm:$0xff]
        %v3165 = vld [vmem:[%s375 + $0xe10] sm:$0xff]
        %v3166 = vld [vmem:[%s375 + $0xe18] sm:$0xff]
        %v3167 = vld [vmem:[%s375 + $0xe20] sm:$0xff]
        %v3168 = vld [vmem:[%s375 + $0xe28] sm:$0xff]
        %v3169 = vld [vmem:[%s375 + $0xe30] sm:$0xff]
        %v3170 = vld [vmem:[%s375 + $0xe38] sm:$0xff]
        %v3171 = vld [vmem:[%s375 + $0xe40] sm:$0xff]
        %v3172 = vld [vmem:[%s375 + $0xe48] sm:$0xff]
        %v3173 = vld [vmem:[%s375 + $0xe50] sm:$0xff]
        %v3174 = vld [vmem:[%s375 + $0xe58] sm:$0xff]
        %v3175 = vld [vmem:[%s375 + $0xe60] sm:$0xff]
        %v3176 = vld [vmem:[%s375 + $0xe68] sm:$0xff]
        %v3177 = vld [vmem:[%s375 + $0xe70] sm:$0xff]
        %v3178 = vld [vmem:[%s375 + $0xe78] sm:$0xff]
        %v3179 = vld [vmem:[%s375 + $0xe80] sm:$0xff]
        %v3180 = vld [vmem:[%s375 + $0xe88] sm:$0xff]
        %v3181 = vld [vmem:[%s375 + $0xe90] sm:$0xff]
        %v3182 = vld [vmem:[%s375 + $0xe98] sm:$0xff]
        %v3183 = vld [vmem:[%s375 + $0xea0] sm:$0xff]
        %v3184 = vld [vmem:[%s375 + $0xea8] sm:$0xff]
        %v3185 = vld [vmem:[%s375 + $0xeb0] sm:$0xff]
        %v3186 = vld [vmem:[%s375 + $0xeb8] sm:$0xff]
        %v3187 = vld [vmem:[%s375 + $0xec0] sm:$0xff]
        %v3188 = vld [vmem:[%s375 + $0xec8] sm:$0xff]
        %v3189 = vld [vmem:[%s375 + $0xed0] sm:$0xff]
        %v3190 = vld [vmem:[%s375 + $0xed8] sm:$0xff]
        %v3191 = vld [vmem:[%s375 + $0xee0] sm:$0xff]
        %v3192 = vld [vmem:[%s375 + $0xee8] sm:$0xff]
        %v3193 = vld [vmem:[%s375 + $0xef0] sm:$0xff]
        %v3194 = vld [vmem:[%s375 + $0xef8] sm:$0xff]
        %v3195 = vld [vmem:[%s375 + $0xf00] sm:$0xff]
        %v3196 = vld [vmem:[%s375 + $0xf08] sm:$0xff]
        %v3197 = vld [vmem:[%s375 + $0xf10] sm:$0xff]
        %v3198 = vld [vmem:[%s375 + $0xf18] sm:$0xff]
        %v3199 = vld [vmem:[%s375 + $0xf20] sm:$0xff]
        %v3200 = vld [vmem:[%s375 + $0xf28] sm:$0xff]
        %v3201 = vld [vmem:[%s375 + $0xf30] sm:$0xff]
        %v3202 = vld [vmem:[%s375 + $0xf38] sm:$0xff]
        %v3203 = vld [vmem:[%s375 + $0xf40] sm:$0xff]
        %v3204 = vld [vmem:[%s375 + $0xf48] sm:$0xff]
        %v3205 = vld [vmem:[%s375 + $0xf50] sm:$0xff]
        %v3206 = vld [vmem:[%s375 + $0xf58] sm:$0xff]
        %v3207 = vld [vmem:[%s375 + $0xf60] sm:$0xff]
        %v3208 = vld [vmem:[%s375 + $0xf68] sm:$0xff]
        %v3209 = vld [vmem:[%s375 + $0xf70] sm:$0xff]
        %v3210 = vld [vmem:[%s375 + $0xf78] sm:$0xff]
        %v3211 = vld [vmem:[%s375 + $0xf80] sm:$0xff]
        %v3212 = vld [vmem:[%s375 + $0xf88] sm:$0xff]
        %v3213 = vld [vmem:[%s375 + $0xf90] sm:$0xff]
        %v3214 = vld [vmem:[%s375 + $0xf98] sm:$0xff]
        %v3215 = vld [vmem:[%s375 + $0xfa0] sm:$0xff]
        %v3216 = vld [vmem:[%s375 + $0xfa8] sm:$0xff]
        %v3217 = vld [vmem:[%s375 + $0xfb0] sm:$0xff]
        %v3218 = vld [vmem:[%s375 + $0xfb8] sm:$0xff]
        %v3219 = vld [vmem:[%s375 + $0xfc0] sm:$0xff]
        %v3220 = vld [vmem:[%s375 + $0xfc8] sm:$0xff]
        %v3221 = vld [vmem:[%s375 + $0xfd0] sm:$0xff]
        %v3222 = vld [vmem:[%s375 + $0xfd8] sm:$0xff]
        %v3223 = vld [vmem:[%s375 + $0xfe0] sm:$0xff]
        %v3224 = vld [vmem:[%s375 + $0xfe8] sm:$0xff]
        %v3225 = vld [vmem:[%s375 + $0xff0] sm:$0xff]
        %v3226 = vld [vmem:[%s375 + $0xff8] sm:$0xff]
        %v3227 = vld [vmem:[%s375 + $0x1000] sm:$0xff]
        %v3228 = vld [vmem:[%s375 + $0x1008] sm:$0xff]
        %v3229 = vld [vmem:[%s375 + $0x1010] sm:$0xff]
        %v3230 = vld [vmem:[%s375 + $0x1018] sm:$0xff]
        %v3231 = vld [vmem:[%s375 + $0x1020] sm:$0xff]
        %v3232 = vld [vmem:[%s375 + $0x1028] sm:$0xff]
        %v3233 = vld [vmem:[%s375 + $0x1030] sm:$0xff]
        %v3234 = vld [vmem:[%s375 + $0x1038] sm:$0xff]
        %v3235 = vld [vmem:[%s375 + $0x1040] sm:$0xff]
        %v3236 = vld [vmem:[%s375 + $0x1048] sm:$0xff]
        %v3237 = vld [vmem:[%s375 + $0x1050] sm:$0xff]
        %v3238 = vld [vmem:[%s375 + $0x1058] sm:$0xff]
        %v3239 = vld [vmem:[%s375 + $0x1060] sm:$0xff]
        %v3240 = vld [vmem:[%s375 + $0x1068] sm:$0xff]
        %v3241 = vld [vmem:[%s375 + $0x1070] sm:$0xff]
        %v3242 = vld [vmem:[%s375 + $0x1078] sm:$0xff]
        %v3243 = vld [vmem:[%s375 + $0x1080] sm:$0xff]
        %v3244 = vld [vmem:[%s375 + $0x1088] sm:$0xff]
        %v3245 = vld [vmem:[%s375 + $0x1090] sm:$0xff]
        %v3246 = vld [vmem:[%s375 + $0x1098] sm:$0xff]
        %v3247 = vld [vmem:[%s375 + $0x10a0] sm:$0xff]
        %v3248 = vld [vmem:[%s375 + $0x10a8] sm:$0xff]
        %v3249 = vld [vmem:[%s375 + $0x10b0] sm:$0xff]
        %v3250 = vld [vmem:[%s375 + $0x10b8] sm:$0xff]
        %v3251 = vld [vmem:[%s375 + $0x10c0] sm:$0xff]
        %v3252 = vld [vmem:[%s375 + $0x10c8] sm:$0xff]
        %v3253 = vld [vmem:[%s375 + $0x10d0] sm:$0xff]
        %v3254 = vld [vmem:[%s375 + $0x10d8] sm:$0xff]
        %v3255 = vld [vmem:[%s375 + $0x10e0] sm:$0xff]
        %v3256 = vld [vmem:[%s375 + $0x10e8] sm:$0xff]
        %v3257 = vld [vmem:[%s375 + $0x10f0] sm:$0xff]
        %v3258 = vld [vmem:[%s375 + $0x10f8] sm:$0xff]
        %v3259 = vld [vmem:[%s375 + $0x1100] sm:$0xff]
        %v3260 = vld [vmem:[%s375 + $0x1108] sm:$0xff]
        %v3261 = vld [vmem:[%s375 + $0x1110] sm:$0xff]
        %v3262 = vld [vmem:[%s375 + $0x1118] sm:$0xff]
        %v3263 = vld [vmem:[%s375 + $0x1120] sm:$0xff]
        %v3264 = vld [vmem:[%s375 + $0x1128] sm:$0xff]
        %v3265 = vld [vmem:[%s375 + $0x1130] sm:$0xff]
        %v3266 = vld [vmem:[%s375 + $0x1138] sm:$0xff]
        %v3267 = vld [vmem:[%s375 + $0x1140] sm:$0xff]
        %v3268 = vld [vmem:[%s375 + $0x1148] sm:$0xff]
        %v3269 = vld [vmem:[%s375 + $0x1150] sm:$0xff]
        %v3270 = vld [vmem:[%s375 + $0x1158] sm:$0xff]
        %v3271 = vld [vmem:[%s375 + $0x1160] sm:$0xff]
        %v3272 = vld [vmem:[%s375 + $0x1168] sm:$0xff]
        %v3273 = vld [vmem:[%s375 + $0x1170] sm:$0xff]
        %v3274 = vld [vmem:[%s375 + $0x1178] sm:$0xff]
        %v3275 = vld [vmem:[%s375 + $0x1180] sm:$0xff]
        %v3276 = vld [vmem:[%s375 + $0x1188] sm:$0xff]
        %v3277 = vld [vmem:[%s375 + $0x1190] sm:$0xff]
        %v3278 = vld [vmem:[%s375 + $0x1198] sm:$0xff]
        %v3279 = vld [vmem:[%s375 + $0x11a0] sm:$0xff]
        %v3280 = vld [vmem:[%s375 + $0x11a8] sm:$0xff]
        %v3281 = vld [vmem:[%s375 + $0x11b0] sm:$0xff]
        %v3282 = vld [vmem:[%s375 + $0x11b8] sm:$0xff]
        %v3283 = vld [vmem:[%s375 + $0x11c0] sm:$0xff]
        %v3284 = vld [vmem:[%s375 + $0x11c8] sm:$0xff]
        %v3285 = vld [vmem:[%s375 + $0x11d0] sm:$0xff]
        %v3286 = vld [vmem:[%s375 + $0x11d8] sm:$0xff]
        %v3287 = vld [vmem:[%s375 + $0x11e0] sm:$0xff]
        %v3288 = vld [vmem:[%s375 + $0x11e8] sm:$0xff]
        %v3289 = vld [vmem:[%s375 + $0x11f0] sm:$0xff]
        %v3290 = vld [vmem:[%s375 + $0x11f8] sm:$0xff]
        %v3291 = vld [vmem:[%s375 + $0x1200] sm:$0xff]
        %v3292 = vld [vmem:[%s375 + $0x1208] sm:$0xff]
        %v3293 = vld [vmem:[%s375 + $0x1210] sm:$0xff]
        %v3294 = vld [vmem:[%s375 + $0x1218] sm:$0xff]
        %v3295 = vld [vmem:[%s375 + $0x1220] sm:$0xff]
        %v3296 = vld [vmem:[%s375 + $0x1228] sm:$0xff]
        %v3297 = vld [vmem:[%s375 + $0x1230] sm:$0xff]
        %v3298 = vld [vmem:[%s375 + $0x1238] sm:$0xff]
        %v3299 = vld [vmem:[%s375 + $0x1240] sm:$0xff]
        %v3300 = vld [vmem:[%s375 + $0x1248] sm:$0xff]
        %v3301 = vld [vmem:[%s375 + $0x1250] sm:$0xff]
        %v3302 = vld [vmem:[%s375 + $0x1258] sm:$0xff]
        %v3303 = vld [vmem:[%s375 + $0x1260] sm:$0xff]
        %v3304 = vld [vmem:[%s375 + $0x1268] sm:$0xff]
        %v3305 = vld [vmem:[%s375 + $0x1270] sm:$0xff]
        %v3306 = vld [vmem:[%s375 + $0x1278] sm:$0xff]
        %v3307 = vld [vmem:[%s375 + $0x1280] sm:$0xff]
        %v3308 = vld [vmem:[%s375 + $0x1288] sm:$0xff]
        %v3309 = vld [vmem:[%s375 + $0x1290] sm:$0xff]
        %v3310 = vld [vmem:[%s375 + $0x1298] sm:$0xff]
        %v3311 = vld [vmem:[%s375 + $0x12a0] sm:$0xff]
        %v3312 = vld [vmem:[%s375 + $0x12a8] sm:$0xff]
        %v3313 = vld [vmem:[%s375 + $0x12b0] sm:$0xff]
        %v3314 = vld [vmem:[%s375 + $0x12b8] sm:$0xff]
        %v3315 = vld [vmem:[%s375 + $0x12c0] sm:$0xff]
        %v3316 = vld [vmem:[%s375 + $0x12c8] sm:$0xff]
        %v3317 = vld [vmem:[%s375 + $0x12d0] sm:$0xff]
        %v3318 = vld [vmem:[%s375 + $0x12d8] sm:$0xff]
        %v3319 = vld [vmem:[%s375 + $0x12e0] sm:$0xff]
        %v3320 = vld [vmem:[%s375 + $0x12e8] sm:$0xff]
        %v3321 = vld [vmem:[%s375 + $0x12f0] sm:$0xff]
        %v3322 = vld [vmem:[%s375 + $0x12f8] sm:$0xff]
        %v3323 = vld [vmem:[%s375 + $0x1300] sm:$0xff]
        %v3324 = vld [vmem:[%s375 + $0x1308] sm:$0xff]
        %v3325 = vld [vmem:[%s375 + $0x1310] sm:$0xff]
        %v3326 = vld [vmem:[%s375 + $0x1318] sm:$0xff]
        %v3327 = vld [vmem:[%s375 + $0x1320] sm:$0xff]
        %v3328 = vld [vmem:[%s375 + $0x1328] sm:$0xff]
        %v3329 = vld [vmem:[%s375 + $0x1330] sm:$0xff]
        %v3330 = vld [vmem:[%s375 + $0x1338] sm:$0xff]
        %v3331 = vld [vmem:[%s375 + $0x1340] sm:$0xff]
        %v3332 = vld [vmem:[%s375 + $0x1348] sm:$0xff]
        %v3333 = vld [vmem:[%s375 + $0x1350] sm:$0xff]
        %v3334 = vld [vmem:[%s375 + $0x1358] sm:$0xff]
        %v3335 = vld [vmem:[%s375 + $0x1360] sm:$0xff]
        %v3336 = vld [vmem:[%s375 + $0x1368] sm:$0xff]
        %v3337 = vld [vmem:[%s375 + $0x1370] sm:$0xff]
        %v3338 = vld [vmem:[%s375 + $0x1378] sm:$0xff]
        %v3339 = vld [vmem:[%s375 + $0x1380] sm:$0xff]
        %v3340 = vld [vmem:[%s375 + $0x1388] sm:$0xff]
        %v3341 = vld [vmem:[%s375 + $0x1390] sm:$0xff]
        %v3342 = vld [vmem:[%s375 + $0x1398] sm:$0xff]
        %v3343 = vld [vmem:[%s375 + $0x13a0] sm:$0xff]
        %v3344 = vld [vmem:[%s375 + $0x13a8] sm:$0xff]
        %v3345 = vld [vmem:[%s375 + $0x13b0] sm:$0xff]
        %v3346 = vld [vmem:[%s375 + $0x13b8] sm:$0xff]
        %v3347 = vld [vmem:[%s375 + $0x13c0] sm:$0xff]
        %v3348 = vld [vmem:[%s375 + $0x13c8] sm:$0xff]
        %v3349 = vld [vmem:[%s375 + $0x13d0] sm:$0xff]
        %v3350 = vld [vmem:[%s375 + $0x13d8] sm:$0xff]
        %v3351 = vld [vmem:[%s375 + $0x13e0] sm:$0xff]
        %v3352 = vld [vmem:[%s375 + $0x13e8] sm:$0xff]
        %v3353 = vld [vmem:[%s375 + $0x13f0] sm:$0xff]
        %v3354 = vld [vmem:[%s375 + $0x13f8] sm:$0xff]
        %v3355 = vld [vmem:[%s375 + $0x1400] sm:$0xff]
        %v3356 = vld [vmem:[%s375 + $0x1408] sm:$0xff]
        %v3357 = vld [vmem:[%s375 + $0x1410] sm:$0xff]
        %v3358 = vld [vmem:[%s375 + $0x1418] sm:$0xff]
        %v3359 = vld [vmem:[%s375 + $0x1420] sm:$0xff]
        %v3360 = vld [vmem:[%s375 + $0x1428] sm:$0xff]
        %v3361 = vld [vmem:[%s375 + $0x1430] sm:$0xff]
        %v3362 = vld [vmem:[%s375 + $0x1438] sm:$0xff]
        %v3363 = vld [vmem:[%s375 + $0x1440] sm:$0xff]
        %v3364 = vld [vmem:[%s375 + $0x1448] sm:$0xff]
        %v3365 = vld [vmem:[%s375 + $0x1450] sm:$0xff]
        %v3366 = vld [vmem:[%s375 + $0x1458] sm:$0xff]
        %v3367 = vld [vmem:[%s375 + $0x1460] sm:$0xff]
        %v3368 = vld [vmem:[%s375 + $0x1468] sm:$0xff]
        %v3369 = vld [vmem:[%s375 + $0x1470] sm:$0xff]
        %v3370 = vld [vmem:[%s375 + $0x1478] sm:$0xff]
        %v3371 = vld [vmem:[%s375 + $0x1480] sm:$0xff]
        %v3372 = vld [vmem:[%s375 + $0x1488] sm:$0xff]
        %v3373 = vld [vmem:[%s375 + $0x1490] sm:$0xff]
        %v3374 = vld [vmem:[%s375 + $0x1498] sm:$0xff]
        %v3375 = vld [vmem:[%s375 + $0x14a0] sm:$0xff]
        %v3376 = vld [vmem:[%s375 + $0x14a8] sm:$0xff]
        %v3377 = vld [vmem:[%s375 + $0x14b0] sm:$0xff]
        %v3378 = vld [vmem:[%s375 + $0x14b8] sm:$0xff]
        %v3379 = vld [vmem:[%s375 + $0x14c0] sm:$0xff]
        %v3380 = vld [vmem:[%s375 + $0x14c8] sm:$0xff]
        %v3381 = vld [vmem:[%s375 + $0x14d0] sm:$0xff]
        %v3382 = vld [vmem:[%s375 + $0x14d8] sm:$0xff]
        %v3383 = vld [vmem:[%s375 + $0x14e0] sm:$0xff]
        %v3384 = vld [vmem:[%s375 + $0x14e8] sm:$0xff]
        %v3385 = vld [vmem:[%s375 + $0x14f0] sm:$0xff]
        %v3386 = vld [vmem:[%s375 + $0x14f8] sm:$0xff]
        %v3387 = vld [vmem:[%s375 + $0x1500] sm:$0xff]
        %v3388 = vld [vmem:[%s375 + $0x1508] sm:$0xff]
        %v3389 = vld [vmem:[%s375 + $0x1510] sm:$0xff]
        %v3390 = vld [vmem:[%s375 + $0x1518] sm:$0xff]
        %v3391 = vld [vmem:[%s375 + $0x1520] sm:$0xff]
        %v3392 = vld [vmem:[%s375 + $0x1528] sm:$0xff]
        %v3393 = vld [vmem:[%s375 + $0x1530] sm:$0xff]
        %v3394 = vld [vmem:[%s375 + $0x1538] sm:$0xff]
        %v3395 = vld [vmem:[%s375 + $0x1540] sm:$0xff]
        %v3396 = vld [vmem:[%s375 + $0x1548] sm:$0xff]
        %v3397 = vld [vmem:[%s375 + $0x1550] sm:$0xff]
        %v3398 = vld [vmem:[%s375 + $0x1558] sm:$0xff]
        %v3399 = vld [vmem:[%s375 + $0x1560] sm:$0xff]
        %v3400 = vld [vmem:[%s375 + $0x1568] sm:$0xff]
        %v3401 = vld [vmem:[%s375 + $0x1570] sm:$0xff]
        %v3402 = vld [vmem:[%s375 + $0x1578] sm:$0xff]
        %v3403 = vld [vmem:[%s375 + $0x1580] sm:$0xff]
        %v3404 = vld [vmem:[%s375 + $0x1588] sm:$0xff]
        %v3405 = vld [vmem:[%s375 + $0x1590] sm:$0xff]
        %v3406 = vld [vmem:[%s375 + $0x1598] sm:$0xff]
        %v3407 = vld [vmem:[%s375 + $0x15a0] sm:$0xff]
        %v3408 = vld [vmem:[%s375 + $0x15a8] sm:$0xff]
        %v3409 = vld [vmem:[%s375 + $0x15b0] sm:$0xff]
        %v3410 = vld [vmem:[%s375 + $0x15b8] sm:$0xff]
        %v3411 = vld [vmem:[%s375 + $0x15c0] sm:$0xff]
        %v3412 = vld [vmem:[%s375 + $0x15c8] sm:$0xff]
        %v3413 = vld [vmem:[%s375 + $0x15d0] sm:$0xff]
        %v3414 = vld [vmem:[%s375 + $0x15d8] sm:$0xff]
        %v3415 = vld [vmem:[%s375 + $0x15e0] sm:$0xff]
        %v3416 = vld [vmem:[%s375 + $0x15e8] sm:$0xff]
        %v3417 = vld [vmem:[%s375 + $0x15f0] sm:$0xff]
        %v3418 = vld [vmem:[%s375 + $0x15f8] sm:$0xff]
        %v3419 = vld [vmem:[%s375 + $0x1600] sm:$0xff]
        %v3420 = vld [vmem:[%s375 + $0x1608] sm:$0xff]
        %v3421 = vld [vmem:[%s375 + $0x1610] sm:$0xff]
        %v3422 = vld [vmem:[%s375 + $0x1618] sm:$0xff]
        %v3423 = vld [vmem:[%s375 + $0x1620] sm:$0xff]
        %v3424 = vld [vmem:[%s375 + $0x1628] sm:$0xff]
        %v3425 = vld [vmem:[%s375 + $0x1630] sm:$0xff]
        %v3426 = vld [vmem:[%s375 + $0x1638] sm:$0xff]
        %v3427 = vld [vmem:[%s375 + $0x1640] sm:$0xff]
        %v3428 = vld [vmem:[%s375 + $0x1648] sm:$0xff]
        %v3429 = vld [vmem:[%s375 + $0x1650] sm:$0xff]
        %v3430 = vld [vmem:[%s375 + $0x1658] sm:$0xff]
        %v3431 = vld [vmem:[%s375 + $0x1660] sm:$0xff]
        %v3432 = vld [vmem:[%s375 + $0x1668] sm:$0xff]
        %v3433 = vld [vmem:[%s375 + $0x1670] sm:$0xff]
        %v3434 = vld [vmem:[%s375 + $0x1678] sm:$0xff]
        %v3435 = vld [vmem:[%s375 + $0x1680] sm:$0xff]
        %v3436 = vld [vmem:[%s375 + $0x1688] sm:$0xff]
        %v3437 = vld [vmem:[%s375 + $0x1690] sm:$0xff]
        %v3438 = vld [vmem:[%s375 + $0x1698] sm:$0xff]
        %v3439 = vld [vmem:[%s375 + $0x16a0] sm:$0xff]
        %v3440 = vld [vmem:[%s375 + $0x16a8] sm:$0xff]
        %v3441 = vld [vmem:[%s375 + $0x16b0] sm:$0xff]
        %v3442 = vld [vmem:[%s375 + $0x16b8] sm:$0xff]
        %v3443 = vld [vmem:[%s375 + $0x16c0] sm:$0xff]
        %v3444 = vld [vmem:[%s375 + $0x16c8] sm:$0xff]
        %v3445 = vld [vmem:[%s375 + $0x16d0] sm:$0xff]
        %v3446 = vld [vmem:[%s375 + $0x16d8] sm:$0xff]
        %v3447 = vld [vmem:[%s375 + $0x16e0] sm:$0xff]
        %v3448 = vld [vmem:[%s375 + $0x16e8] sm:$0xff]
        %v3449 = vld [vmem:[%s375 + $0x16f0] sm:$0xff]
        %v3450 = vld [vmem:[%s375 + $0x16f8] sm:$0xff]
        %v3451 = vld [vmem:[%s375 + $0x1700] sm:$0xff]
        %v3452 = vld [vmem:[%s375 + $0x1708] sm:$0xff]
        %v3453 = vld [vmem:[%s375 + $0x1710] sm:$0xff]
        %v3454 = vld [vmem:[%s375 + $0x1718] sm:$0xff]
        %v3455 = vld [vmem:[%s375 + $0x1720] sm:$0xff]
        %v3456 = vld [vmem:[%s375 + $0x1728] sm:$0xff]
        %v3457 = vld [vmem:[%s375 + $0x1730] sm:$0xff]
        %v3458 = vld [vmem:[%s375 + $0x1738] sm:$0xff]
        %v3459 = vld [vmem:[%s375 + $0x1740] sm:$0xff]
        %v3460 = vld [vmem:[%s375 + $0x1748] sm:$0xff]
        %v3461 = vld [vmem:[%s375 + $0x1750] sm:$0xff]
        %v3462 = vld [vmem:[%s375 + $0x1758] sm:$0xff]
        %v3463 = vld [vmem:[%s375 + $0x1760] sm:$0xff]
        %v3464 = vld [vmem:[%s375 + $0x1768] sm:$0xff]
        %v3465 = vld [vmem:[%s375 + $0x1770] sm:$0xff]
        %v3466 = vld [vmem:[%s375 + $0x1778] sm:$0xff]
        %v3467 = vld [vmem:[%s375 + $0x1780] sm:$0xff]
        %v3468 = vld [vmem:[%s375 + $0x1788] sm:$0xff]
        %v3469 = vld [vmem:[%s375 + $0x1790] sm:$0xff]
        %v3470 = vld [vmem:[%s375 + $0x1798] sm:$0xff]
        %v3471 = vld [vmem:[%s375 + $0x17a0] sm:$0xff]
        %v3472 = vld [vmem:[%s375 + $0x17a8] sm:$0xff]
        %v3473 = vld [vmem:[%s375 + $0x17b0] sm:$0xff]
        %v3474 = vld [vmem:[%s375 + $0x17b8] sm:$0xff]
        %v3475 = vld [vmem:[%s375 + $0x17c0] sm:$0xff]
        %v3476 = vld [vmem:[%s375 + $0x17c8] sm:$0xff]
        %v3477 = vld [vmem:[%s375 + $0x17d0] sm:$0xff]
        %v3478 = vld [vmem:[%s375 + $0x17d8] sm:$0xff]
        %v3479 = vld [vmem:[%s375 + $0x17e0] sm:$0xff]
        %v3480 = vld [vmem:[%s375 + $0x17e8] sm:$0xff]
        %v3481 = vld [vmem:[%s375 + $0x17f0] sm:$0xff]
        %v3482 = vld [vmem:[%s375 + $0x17f8] sm:$0xff]
        %v3483 = vld [vmem:[%s375 + $0x1800] sm:$0xff]
        %v3484 = vld [vmem:[%s375 + $0x1808] sm:$0xff]
        %v3485 = vld [vmem:[%s375 + $0x1810] sm:$0xff]
        %v3486 = vld [vmem:[%s375 + $0x1818] sm:$0xff]
        %v3487 = vld [vmem:[%s375 + $0x1820] sm:$0xff]
        %v3488 = vld [vmem:[%s375 + $0x1828] sm:$0xff]
        %v3489 = vld [vmem:[%s375 + $0x1830] sm:$0xff]
        %v3490 = vld [vmem:[%s375 + $0x1838] sm:$0xff]
        %v3491 = vld [vmem:[%s375 + $0x1840] sm:$0xff]
        %v3492 = vld [vmem:[%s375 + $0x1848] sm:$0xff]
        %v3493 = vld [vmem:[%s375 + $0x1850] sm:$0xff]
        %v3494 = vld [vmem:[%s375 + $0x1858] sm:$0xff]
        %v3495 = vld [vmem:[%s375 + $0x1860] sm:$0xff]
        %v3496 = vld [vmem:[%s375 + $0x1868] sm:$0xff]
        %v3497 = vld [vmem:[%s375 + $0x1870] sm:$0xff]
        %v3498 = vld [vmem:[%s375 + $0x1878] sm:$0xff]
        %v3499 = vld [vmem:[%s375 + $0x1880] sm:$0xff]
        %v3500 = vld [vmem:[%s375 + $0x1888] sm:$0xff]
        %v3501 = vld [vmem:[%s375 + $0x1890] sm:$0xff]
        %v3502 = vld [vmem:[%s375 + $0x1898] sm:$0xff]
        %v3503 = vld [vmem:[%s375 + $0x18a0] sm:$0xff]
        %v3504 = vld [vmem:[%s375 + $0x18a8] sm:$0xff]
        %v3505 = vld [vmem:[%s375 + $0x18b0] sm:$0xff]
        %v3506 = vld [vmem:[%s375 + $0x18b8] sm:$0xff]
        %v3507 = vld [vmem:[%s375 + $0x18c0] sm:$0xff]
        %v3508 = vld [vmem:[%s375 + $0x18c8] sm:$0xff]
        %v3509 = vld [vmem:[%s375 + $0x18d0] sm:$0xff]
        %v3510 = vld [vmem:[%s375 + $0x18d8] sm:$0xff]
        %v3511 = vld [vmem:[%s375 + $0x18e0] sm:$0xff]
        %v3512 = vld [vmem:[%s375 + $0x18e8] sm:$0xff]
        %v3513 = vld [vmem:[%s375 + $0x18f0] sm:$0xff]
        %v3514 = vld [vmem:[%s375 + $0x18f8] sm:$0xff]
        %v3515 = vld [vmem:[%s375 + $0x1900] sm:$0xff]
        %v3516 = vld [vmem:[%s375 + $0x1908] sm:$0xff]
        %v3517 = vld [vmem:[%s375 + $0x1910] sm:$0xff]
        %v3518 = vld [vmem:[%s375 + $0x1918] sm:$0xff]
        %v3519 = vld [vmem:[%s375 + $0x1920] sm:$0xff]
        %v3520 = vld [vmem:[%s375 + $0x1928] sm:$0xff]
        %v3521 = vld [vmem:[%s375 + $0x1930] sm:$0xff]
        %v3522 = vld [vmem:[%s375 + $0x1938] sm:$0xff]
        %v3523 = vld [vmem:[%s375 + $0x1940] sm:$0xff]
        %v3524 = vld [vmem:[%s375 + $0x1948] sm:$0xff]
        %v3525 = vld [vmem:[%s375 + $0x1950] sm:$0xff]
        %v3526 = vld [vmem:[%s375 + $0x1958] sm:$0xff]
        %v3527 = vld [vmem:[%s375 + $0x1960] sm:$0xff]
        %v3528 = vld [vmem:[%s375 + $0x1968] sm:$0xff]
        %v3529 = vld [vmem:[%s375 + $0x1970] sm:$0xff]
        %v3530 = vld [vmem:[%s375 + $0x1978] sm:$0xff]
        %v3531 = vld [vmem:[%s375 + $0x1980] sm:$0xff]
        %v3532 = vld [vmem:[%s375 + $0x1988] sm:$0xff]
        %v3533 = vld [vmem:[%s375 + $0x1990] sm:$0xff]
        %v3534 = vld [vmem:[%s375 + $0x1998] sm:$0xff]
        %v3535 = vld [vmem:[%s375 + $0x19a0] sm:$0xff]
        %v3536 = vld [vmem:[%s375 + $0x19a8] sm:$0xff]
        %v3537 = vld [vmem:[%s375 + $0x19b0] sm:$0xff]
        %v3538 = vld [vmem:[%s375 + $0x19b8] sm:$0xff]
        %v3539 = vld [vmem:[%s375 + $0x19c0] sm:$0xff]
        %v3540 = vld [vmem:[%s375 + $0x19c8] sm:$0xff]
        %v3541 = vld [vmem:[%s375 + $0x19d0] sm:$0xff]
        %v3542 = vld [vmem:[%s375 + $0x19d8] sm:$0xff]
        %v3543 = vld [vmem:[%s375 + $0x19e0] sm:$0xff]
        %v3544 = vld [vmem:[%s375 + $0x19e8] sm:$0xff]
        %v3545 = vld [vmem:[%s375 + $0x19f0] sm:$0xff]
        %v3546 = vld [vmem:[%s375 + $0x19f8] sm:$0xff]
        %v3547 = vld [vmem:[%s375 + $0x1a00] sm:$0xff]
        %v3548 = vld [vmem:[%s375 + $0x1a08] sm:$0xff]
        %v3549 = vld [vmem:[%s375 + $0x1a10] sm:$0xff]
        %v3550 = vld [vmem:[%s375 + $0x1a18] sm:$0xff]
        %v3551 = vld [vmem:[%s375 + $0x1a20] sm:$0xff]
        %v3552 = vld [vmem:[%s375 + $0x1a28] sm:$0xff]
        %v3553 = vld [vmem:[%s375 + $0x1a30] sm:$0xff]
        %v3554 = vld [vmem:[%s375 + $0x1a38] sm:$0xff]
        %v3555 = vld [vmem:[%s375 + $0x1a40] sm:$0xff]
        %v3556 = vld [vmem:[%s375 + $0x1a48] sm:$0xff]
        %v3557 = vld [vmem:[%s375 + $0x1a50] sm:$0xff]
        %v3558 = vld [vmem:[%s375 + $0x1a58] sm:$0xff]
        %v3559 = vld [vmem:[%s375 + $0x1a60] sm:$0xff]
        %v3560 = vld [vmem:[%s375 + $0x1a68] sm:$0xff]
        %v3561 = vld [vmem:[%s375 + $0x1a70] sm:$0xff]
        %v3562 = vld [vmem:[%s375 + $0x1a78] sm:$0xff]
        %v3563 = vld [vmem:[%s375 + $0x1a80] sm:$0xff]
        %v3564 = vld [vmem:[%s375 + $0x1a88] sm:$0xff]
        %v3565 = vld [vmem:[%s375 + $0x1a90] sm:$0xff]
        %v3566 = vld [vmem:[%s375 + $0x1a98] sm:$0xff]
        %v3567 = vld [vmem:[%s375 + $0x1aa0] sm:$0xff]
        %v3568 = vld [vmem:[%s375 + $0x1aa8] sm:$0xff]
        %v3569 = vld [vmem:[%s375 + $0x1ab0] sm:$0xff]
        %v3570 = vld [vmem:[%s375 + $0x1ab8] sm:$0xff]
        %v3571 = vld [vmem:[%s375 + $0x1ac0] sm:$0xff]
        %v3572 = vld [vmem:[%s375 + $0x1ac8] sm:$0xff]
        %v3573 = vld [vmem:[%s375 + $0x1ad0] sm:$0xff]
        %v3574 = vld [vmem:[%s375 + $0x1ad8] sm:$0xff]
        %v3575 = vld [vmem:[%s375 + $0x1ae0] sm:$0xff]
        %v3576 = vld [vmem:[%s375 + $0x1ae8] sm:$0xff]
        %v3577 = vld [vmem:[%s375 + $0x1af0] sm:$0xff]
        %v3578 = vld [vmem:[%s375 + $0x1af8] sm:$0xff]
        %v3579 = vld [vmem:[%s375 + $0x1b00] sm:$0xff]
        %v3580 = vld [vmem:[%s375 + $0x1b08] sm:$0xff]
        %v3581 = vld [vmem:[%s375 + $0x1b10] sm:$0xff]
        %v3582 = vld [vmem:[%s375 + $0x1b18] sm:$0xff]
        %v3583 = vld [vmem:[%s375 + $0x1b20] sm:$0xff]
        %v3584 = vld [vmem:[%s375 + $0x1b28] sm:$0xff]
        %v3585 = vld [vmem:[%s375 + $0x1b30] sm:$0xff]
        %v3586 = vld [vmem:[%s375 + $0x1b38] sm:$0xff]
        %v3587 = vld [vmem:[%s375 + $0x1b40] sm:$0xff]
        %v3588 = vld [vmem:[%s375 + $0x1b48] sm:$0xff]
        %v3589 = vld [vmem:[%s375 + $0x1b50] sm:$0xff]
        %v3590 = vld [vmem:[%s375 + $0x1b58] sm:$0xff]
        %v3591 = vld [vmem:[%s375 + $0x1b60] sm:$0xff]
        %v3592 = vld [vmem:[%s375 + $0x1b68] sm:$0xff]
        %v3593 = vld [vmem:[%s375 + $0x1b70] sm:$0xff]
        %v3594 = vld [vmem:[%s375 + $0x1b78] sm:$0xff]
        %v3595 = vld [vmem:[%s375 + $0x1b80] sm:$0xff]
        %v3596 = vld [vmem:[%s375 + $0x1b88] sm:$0xff]
        %v3597 = vld [vmem:[%s375 + $0x1b90] sm:$0xff]
        %v3598 = vld [vmem:[%s375 + $0x1b98] sm:$0xff]
        %v3599 = vld [vmem:[%s375 + $0x1ba0] sm:$0xff]
        %v3600 = vld [vmem:[%s375 + $0x1ba8] sm:$0xff]
        %v3601 = vld [vmem:[%s375 + $0x1bb0] sm:$0xff]
        %v3602 = vld [vmem:[%s375 + $0x1bb8] sm:$0xff]
        %v3603 = vld [vmem:[%s375 + $0x1bc0] sm:$0xff]
        %v3604 = vld [vmem:[%s375 + $0x1bc8] sm:$0xff]
        %v3605 = vld [vmem:[%s375 + $0x1bd0] sm:$0xff]
        %v3606 = vld [vmem:[%s375 + $0x1bd8] sm:$0xff]
        %v3607 = vld [vmem:[%s375 + $0x1be0] sm:$0xff]
        %v3608 = vld [vmem:[%s375 + $0x1be8] sm:$0xff]
        %v3609 = vld [vmem:[%s375 + $0x1bf0] sm:$0xff]
        %v3610 = vld [vmem:[%s375 + $0x1bf8] sm:$0xff]
        %v3611 = vld [vmem:[%s375 + $0x1c00] sm:$0xff]
        %v3612 = vld [vmem:[%s375 + $0x1c08] sm:$0xff]
        %v3613 = vld [vmem:[%s375 + $0x1c10] sm:$0xff]
        %v3614 = vld [vmem:[%s375 + $0x1c18] sm:$0xff]
        %v3615 = vld [vmem:[%s375 + $0x1c20] sm:$0xff]
        %v3616 = vld [vmem:[%s375 + $0x1c28] sm:$0xff]
        %v3617 = vld [vmem:[%s375 + $0x1c30] sm:$0xff]
        %v3618 = vld [vmem:[%s375 + $0x1c38] sm:$0xff]
        %v3619 = vld [vmem:[%s375 + $0x1c40] sm:$0xff]
        %v3620 = vld [vmem:[%s375 + $0x1c48] sm:$0xff]
        %v3621 = vld [vmem:[%s375 + $0x1c50] sm:$0xff]
        %v3622 = vld [vmem:[%s375 + $0x1c58] sm:$0xff]
        %v3623 = vld [vmem:[%s375 + $0x1c60] sm:$0xff]
        %v3624 = vld [vmem:[%s375 + $0x1c68] sm:$0xff]
        %v3625 = vld [vmem:[%s375 + $0x1c70] sm:$0xff]
        %v3626 = vld [vmem:[%s375 + $0x1c78] sm:$0xff]
        %v3627 = vld [vmem:[%s375 + $0x1c80] sm:$0xff]
        %v3628 = vld [vmem:[%s375 + $0x1c88] sm:$0xff]
        %v3629 = vld [vmem:[%s375 + $0x1c90] sm:$0xff]
        %v3630 = vld [vmem:[%s375 + $0x1c98] sm:$0xff]
        %v3631 = vld [vmem:[%s375 + $0x1ca0] sm:$0xff]
        %v3632 = vld [vmem:[%s375 + $0x1ca8] sm:$0xff]
        %v3633 = vld [vmem:[%s375 + $0x1cb0] sm:$0xff]
        %v3634 = vld [vmem:[%s375 + $0x1cb8] sm:$0xff]
        %v3635 = vld [vmem:[%s375 + $0x1cc0] sm:$0xff]
        %v3636 = vld [vmem:[%s375 + $0x1cc8] sm:$0xff]
        %v3637 = vld [vmem:[%s375 + $0x1cd0] sm:$0xff]
        %v3638 = vld [vmem:[%s375 + $0x1cd8] sm:$0xff]
        %v3639 = vld [vmem:[%s375 + $0x1ce0] sm:$0xff]
        %v3640 = vld [vmem:[%s375 + $0x1ce8] sm:$0xff]
        %v3641 = vld [vmem:[%s375 + $0x1cf0] sm:$0xff]
        %v3642 = vld [vmem:[%s375 + $0x1cf8] sm:$0xff]
        %v3643 = vld [vmem:[%s375 + $0x1d00] sm:$0xff]
        %v3644 = vld [vmem:[%s375 + $0x1d08] sm:$0xff]
        %v3645 = vld [vmem:[%s375 + $0x1d10] sm:$0xff]
        %v3646 = vld [vmem:[%s375 + $0x1d18] sm:$0xff]
        %v3647 = vld [vmem:[%s375 + $0x1d20] sm:$0xff]
        %v3648 = vld [vmem:[%s375 + $0x1d28] sm:$0xff]
        %v3649 = vld [vmem:[%s375 + $0x1d30] sm:$0xff]
        %v3650 = vld [vmem:[%s375 + $0x1d38] sm:$0xff]
        %v3651 = vld [vmem:[%s375 + $0x1d40] sm:$0xff]
        %v3652 = vld [vmem:[%s375 + $0x1d48] sm:$0xff]
        %v3653 = vld [vmem:[%s375 + $0x1d50] sm:$0xff]
        %v3654 = vld [vmem:[%s375 + $0x1d58] sm:$0xff]
        %v3655 = vld [vmem:[%s375 + $0x1d60] sm:$0xff]
        %v3656 = vld [vmem:[%s375 + $0x1d68] sm:$0xff]
        %v3657 = vld [vmem:[%s375 + $0x1d70] sm:$0xff]
        %v3658 = vld [vmem:[%s375 + $0x1d78] sm:$0xff]
        %v3659 = vld [vmem:[%s375 + $0x1d80] sm:$0xff]
        %v3660 = vld [vmem:[%s375 + $0x1d88] sm:$0xff]
        %v3661 = vld [vmem:[%s375 + $0x1d90] sm:$0xff]
        %v3662 = vld [vmem:[%s375 + $0x1d98] sm:$0xff]
        %v3663 = vld [vmem:[%s375 + $0x1da0] sm:$0xff]
        %v3664 = vld [vmem:[%s375 + $0x1da8] sm:$0xff]
        %v3665 = vld [vmem:[%s375 + $0x1db0] sm:$0xff]
        %v3666 = vld [vmem:[%s375 + $0x1db8] sm:$0xff]
        %v3667 = vld [vmem:[%s375 + $0x1dc0] sm:$0xff]
        %v3668 = vld [vmem:[%s375 + $0x1dc8] sm:$0xff]
        %v3669 = vld [vmem:[%s375 + $0x1dd0] sm:$0xff]
        %v3670 = vld [vmem:[%s375 + $0x1dd8] sm:$0xff]
        %v3671 = vld [vmem:[%s375 + $0x1de0] sm:$0xff]
        %v3672 = vld [vmem:[%s375 + $0x1de8] sm:$0xff]
        %v3673 = vld [vmem:[%s375 + $0x1df0] sm:$0xff]
        %v3674 = vld [vmem:[%s375 + $0x1df8] sm:$0xff]
        %v3675 = vld [vmem:[%s375 + $0x1e00] sm:$0xff]
        %v3676 = vld [vmem:[%s375 + $0x1e08] sm:$0xff]
        %v3677 = vld [vmem:[%s375 + $0x1e10] sm:$0xff]
        %v3678 = vld [vmem:[%s375 + $0x1e18] sm:$0xff]
        %v3679 = vld [vmem:[%s375 + $0x1e20] sm:$0xff]
        %v3680 = vld [vmem:[%s375 + $0x1e28] sm:$0xff]
        %v3681 = vld [vmem:[%s375 + $0x1e30] sm:$0xff]
        %v3682 = vld [vmem:[%s375 + $0x1e38] sm:$0xff]
        %v3683 = vld [vmem:[%s375 + $0x1e40] sm:$0xff]
        %v3684 = vld [vmem:[%s375 + $0x1e48] sm:$0xff]
        %v3685 = vld [vmem:[%s375 + $0x1e50] sm:$0xff]
        %v3686 = vld [vmem:[%s375 + $0x1e58] sm:$0xff]
        %v3687 = vld [vmem:[%s375 + $0x1e60] sm:$0xff]
        %v3688 = vld [vmem:[%s375 + $0x1e68] sm:$0xff]
        %v3689 = vld [vmem:[%s375 + $0x1e70] sm:$0xff]
        %v3690 = vld [vmem:[%s375 + $0x1e78] sm:$0xff]
        %v3691 = vld [vmem:[%s375 + $0x1e80] sm:$0xff]
        %v3692 = vld [vmem:[%s375 + $0x1e88] sm:$0xff]
        %v3693 = vld [vmem:[%s375 + $0x1e90] sm:$0xff]
        %v3694 = vld [vmem:[%s375 + $0x1e98] sm:$0xff]
        %v3695 = vld [vmem:[%s375 + $0x1ea0] sm:$0xff]
        %v3696 = vld [vmem:[%s375 + $0x1ea8] sm:$0xff]
        %v3697 = vld [vmem:[%s375 + $0x1eb0] sm:$0xff]
        %v3698 = vld [vmem:[%s375 + $0x1eb8] sm:$0xff]
        %v3699 = vld [vmem:[%s375 + $0x1ec0] sm:$0xff]
        %v3700 = vld [vmem:[%s375 + $0x1ec8] sm:$0xff]
        %v3701 = vld [vmem:[%s375 + $0x1ed0] sm:$0xff]
        %v3702 = vld [vmem:[%s375 + $0x1ed8] sm:$0xff]
        %v3703 = vld [vmem:[%s375 + $0x1ee0] sm:$0xff]
        %v3704 = vld [vmem:[%s375 + $0x1ee8] sm:$0xff]
        %v3705 = vld [vmem:[%s375 + $0x1ef0] sm:$0xff]
        %v3706 = vld [vmem:[%s375 + $0x1ef8] sm:$0xff]
        %v3707 = vld [vmem:[%s375 + $0x1f00] sm:$0xff]
        %v3708 = vld [vmem:[%s375 + $0x1f08] sm:$0xff]
        %v3709 = vld [vmem:[%s375 + $0x1f10] sm:$0xff]
        %v3710 = vld [vmem:[%s375 + $0x1f18] sm:$0xff]
        %v3711 = vld [vmem:[%s375 + $0x1f20] sm:$0xff]
        %v3712 = vld [vmem:[%s375 + $0x1f28] sm:$0xff]
        %v3713 = vld [vmem:[%s375 + $0x1f30] sm:$0xff]
        %v3714 = vld [vmem:[%s375 + $0x1f38] sm:$0xff]
        %v3715 = vld [vmem:[%s375 + $0x1f40] sm:$0xff]
        %v3716 = vld [vmem:[%s375 + $0x1f48] sm:$0xff]
        %v3717 = vld [vmem:[%s375 + $0x1f50] sm:$0xff]
        %v3718 = vld [vmem:[%s375 + $0x1f58] sm:$0xff]
        %v3719 = vld [vmem:[%s375 + $0x1f60] sm:$0xff]
        %v3720 = vld [vmem:[%s375 + $0x1f68] sm:$0xff]
        %v3721 = vld [vmem:[%s375 + $0x1f70] sm:$0xff]
        %v3722 = vld [vmem:[%s375 + $0x1f78] sm:$0xff]
        %v3723 = vld [vmem:[%s375 + $0x1f80] sm:$0xff]
        %v3724 = vld [vmem:[%s375 + $0x1f88] sm:$0xff]
        %v3725 = vld [vmem:[%s375 + $0x1f90] sm:$0xff]
        %v3726 = vld [vmem:[%s375 + $0x1f98] sm:$0xff]
        %v3727 = vld [vmem:[%s375 + $0x1fa0] sm:$0xff]
        %v3728 = vld [vmem:[%s375 + $0x1fa8] sm:$0xff]
        %v3729 = vld [vmem:[%s375 + $0x1fb0] sm:$0xff]
        %v3730 = vld [vmem:[%s375 + $0x1fb8] sm:$0xff]
        %v3731 = vld [vmem:[%s375 + $0x1fc0] sm:$0xff]
        %v3732 = vld [vmem:[%s375 + $0x1fc8] sm:$0xff]
        %v3733 = vld [vmem:[%s375 + $0x1fd0] sm:$0xff]
        %v3734 = vld [vmem:[%s375 + $0x1fd8] sm:$0xff]
        %v3735 = vld [vmem:[%s375 + $0x1fe0] sm:$0xff]
        %v3736 = vld [vmem:[%s375 + $0x1fe8] sm:$0xff]
        %v3737 = vld [vmem:[%s375 + $0x1ff0] sm:$0xff]
        %v3738 = vld [vmem:[%s375 + $0x1ff8] sm:$0xff]
        %v3739 = vld [vmem:[%s384] sm:$0xff]
        %v3741 = vlaneseq
        %v3742 = vshrl.u32 %v3741, 7
        %v3743 = vsub.s32 0, %v3742
        %v3744 = vrot.slane %v3739, %v3743
        %v3745 = vlaneseq
        %v3746 = vshrl.u32 %v3745, 7
        %v3747 = vsub.s32 1, %v3746
        %v3748 = vrot.slane %v3739, %v3747
        %v3749 = vlaneseq
        %v3750 = vshrl.u32 %v3749, 7
        %v3751 = vsub.s32 2, %v3750
        %v3752 = vrot.slane %v3739, %v3751
        %v3753 = vlaneseq
        %v3754 = vshrl.u32 %v3753, 7
        %v3755 = vsub.s32 3, %v3754
        %v3756 = vrot.slane %v3739, %v3755
        %v3757 = vlaneseq
        %v3758 = vshrl.u32 %v3757, 7
        %v3759 = vsub.s32 4, %v3758
        %v3760 = vrot.slane %v3739, %v3759
        %v3761 = vlaneseq
        %v3762 = vshrl.u32 %v3761, 7
        %v3763 = vsub.s32 5, %v3762
        %v3764 = vrot.slane %v3739, %v3763
        %v3765 = vlaneseq
        %v3766 = vshrl.u32 %v3765, 7
        %v3767 = vsub.s32 6, %v3766
        %v3768 = vrot.slane %v3739, %v3767
        %v3769 = vlaneseq
        %v3770 = vshrl.u32 %v3769, 7
        %v3771 = vsub.s32 7, %v3770
        %v3772 = vrot.slane %v3739, %v3771
        %v4805 = vunpack.c.l.b16 %v2715
        %v4806 = vunpack.c.h.b16 %v2715
        %v4807 = vunpack.c.l.b16 %v2716
        %v4808 = vunpack.c.h.b16 %v2716
        %v4809 = vunpack.c.l.b16 %v2717
        %v4810 = vunpack.c.h.b16 %v2717
        %v4811 = vunpack.c.l.b16 %v2718
        %v4812 = vunpack.c.h.b16 %v2718
        %v4813 = vunpack.c.l.b16 %v2719
        %v4814 = vunpack.c.h.b16 %v2719
        %v4815 = vunpack.c.l.b16 %v2720
        %v4816 = vunpack.c.h.b16 %v2720
        %v4817 = vunpack.c.l.b16 %v2721
        %v4818 = vunpack.c.h.b16 %v2721
        %v4819 = vunpack.c.l.b16 %v2722
        %v4820 = vunpack.c.h.b16 %v2722
        %v4821 = vunpack.c.l.b16 %v2723
        %v4822 = vunpack.c.h.b16 %v2723
        %v4823 = vunpack.c.l.b16 %v2724
        %v4824 = vunpack.c.h.b16 %v2724
        %v4825 = vunpack.c.l.b16 %v2725
        %v4826 = vunpack.c.h.b16 %v2725
        %v4827 = vunpack.c.l.b16 %v2726
        %v4828 = vunpack.c.h.b16 %v2726
        %v4829 = vunpack.c.l.b16 %v2727
        %v4830 = vunpack.c.h.b16 %v2727
        %v4831 = vunpack.c.l.b16 %v2728
        %v4832 = vunpack.c.h.b16 %v2728
        %v4833 = vunpack.c.l.b16 %v2729
        %v4834 = vunpack.c.h.b16 %v2729
        %v4835 = vunpack.c.l.b16 %v2730
        %v4836 = vunpack.c.h.b16 %v2730
        %v4837 = vunpack.c.l.b16 %v2731
        %v4838 = vunpack.c.h.b16 %v2731
        %v4839 = vunpack.c.l.b16 %v2732
        %v4840 = vunpack.c.h.b16 %v2732
        %v4841 = vunpack.c.l.b16 %v2733
        %v4842 = vunpack.c.h.b16 %v2733
        %v4843 = vunpack.c.l.b16 %v2734
        %v4844 = vunpack.c.h.b16 %v2734
        %v4845 = vunpack.c.l.b16 %v2735
        %v4846 = vunpack.c.h.b16 %v2735
        %v4847 = vunpack.c.l.b16 %v2736
        %v4848 = vunpack.c.h.b16 %v2736
        %v4849 = vunpack.c.l.b16 %v2737
        %v4850 = vunpack.c.h.b16 %v2737
        %v4851 = vunpack.c.l.b16 %v2738
        %v4852 = vunpack.c.h.b16 %v2738
        %v4853 = vunpack.c.l.b16 %v2739
        %v4854 = vunpack.c.h.b16 %v2739
        %v4855 = vunpack.c.l.b16 %v2740
        %v4856 = vunpack.c.h.b16 %v2740
        %v4857 = vunpack.c.l.b16 %v2741
        %v4858 = vunpack.c.h.b16 %v2741
        %v4859 = vunpack.c.l.b16 %v2742
        %v4860 = vunpack.c.h.b16 %v2742
        %v4861 = vunpack.c.l.b16 %v2743
        %v4862 = vunpack.c.h.b16 %v2743
        %v4863 = vunpack.c.l.b16 %v2744
        %v4864 = vunpack.c.h.b16 %v2744
        %v4865 = vunpack.c.l.b16 %v2745
        %v4866 = vunpack.c.h.b16 %v2745
        %v4867 = vunpack.c.l.b16 %v2746
        %v4868 = vunpack.c.h.b16 %v2746
        %v4869 = vunpack.c.l.b16 %v2747
        %v4870 = vunpack.c.h.b16 %v2747
        %v4871 = vunpack.c.l.b16 %v2748
        %v4872 = vunpack.c.h.b16 %v2748
        %v4873 = vunpack.c.l.b16 %v2749
        %v4874 = vunpack.c.h.b16 %v2749
        %v4875 = vunpack.c.l.b16 %v2750
        %v4876 = vunpack.c.h.b16 %v2750
        %v4877 = vunpack.c.l.b16 %v2751
        %v4878 = vunpack.c.h.b16 %v2751
        %v4879 = vunpack.c.l.b16 %v2752
        %v4880 = vunpack.c.h.b16 %v2752
        %v4881 = vunpack.c.l.b16 %v2753
        %v4882 = vunpack.c.h.b16 %v2753
        %v4883 = vunpack.c.l.b16 %v2754
        %v4884 = vunpack.c.h.b16 %v2754
        %v4885 = vunpack.c.l.b16 %v2755
        %v4886 = vunpack.c.h.b16 %v2755
        %v4887 = vunpack.c.l.b16 %v2756
        %v4888 = vunpack.c.h.b16 %v2756
        %v4889 = vunpack.c.l.b16 %v2757
        %v4890 = vunpack.c.h.b16 %v2757
        %v4891 = vunpack.c.l.b16 %v2758
        %v4892 = vunpack.c.h.b16 %v2758
        %v4893 = vunpack.c.l.b16 %v2759
        %v4894 = vunpack.c.h.b16 %v2759
        %v4895 = vunpack.c.l.b16 %v2760
        %v4896 = vunpack.c.h.b16 %v2760
        %v4897 = vunpack.c.l.b16 %v2761
        %v4898 = vunpack.c.h.b16 %v2761
        %v4899 = vunpack.c.l.b16 %v2762
        %v4900 = vunpack.c.h.b16 %v2762
        %v4901 = vunpack.c.l.b16 %v2763
        %v4902 = vunpack.c.h.b16 %v2763
        %v4903 = vunpack.c.l.b16 %v2764
        %v4904 = vunpack.c.h.b16 %v2764
        %v4905 = vunpack.c.l.b16 %v2765
        %v4906 = vunpack.c.h.b16 %v2765
        %v4907 = vunpack.c.l.b16 %v2766
        %v4908 = vunpack.c.h.b16 %v2766
        %v4909 = vunpack.c.l.b16 %v2767
        %v4910 = vunpack.c.h.b16 %v2767
        %v4911 = vunpack.c.l.b16 %v2768
        %v4912 = vunpack.c.h.b16 %v2768
        %v4913 = vunpack.c.l.b16 %v2769
        %v4914 = vunpack.c.h.b16 %v2769
        %v4915 = vunpack.c.l.b16 %v2770
        %v4916 = vunpack.c.h.b16 %v2770
        %v4917 = vunpack.c.l.b16 %v2771
        %v4918 = vunpack.c.h.b16 %v2771
        %v4919 = vunpack.c.l.b16 %v2772
        %v4920 = vunpack.c.h.b16 %v2772
        %v4921 = vunpack.c.l.b16 %v2773
        %v4922 = vunpack.c.h.b16 %v2773
        %v4923 = vunpack.c.l.b16 %v2774
        %v4924 = vunpack.c.h.b16 %v2774
        %v4925 = vunpack.c.l.b16 %v2775
        %v4926 = vunpack.c.h.b16 %v2775
        %v4927 = vunpack.c.l.b16 %v2776
        %v4928 = vunpack.c.h.b16 %v2776
        %v4929 = vunpack.c.l.b16 %v2777
        %v4930 = vunpack.c.h.b16 %v2777
        %v4931 = vunpack.c.l.b16 %v2778
        %v4932 = vunpack.c.h.b16 %v2778
        %v4933 = vunpack.c.l.b16 %v2779
        %v4934 = vunpack.c.h.b16 %v2779
        %v4935 = vunpack.c.l.b16 %v2780
        %v4936 = vunpack.c.h.b16 %v2780
        %v4937 = vunpack.c.l.b16 %v2781
        %v4938 = vunpack.c.h.b16 %v2781
        %v4939 = vunpack.c.l.b16 %v2782
        %v4940 = vunpack.c.h.b16 %v2782
        %v4941 = vunpack.c.l.b16 %v2783
        %v4942 = vunpack.c.h.b16 %v2783
        %v4943 = vunpack.c.l.b16 %v2784
        %v4944 = vunpack.c.h.b16 %v2784
        %v4945 = vunpack.c.l.b16 %v2785
        %v4946 = vunpack.c.h.b16 %v2785
        %v4947 = vunpack.c.l.b16 %v2786
        %v4948 = vunpack.c.h.b16 %v2786
        %v4949 = vunpack.c.l.b16 %v2787
        %v4950 = vunpack.c.h.b16 %v2787
        %v4951 = vunpack.c.l.b16 %v2788
        %v4952 = vunpack.c.h.b16 %v2788
        %v4953 = vunpack.c.l.b16 %v2789
        %v4954 = vunpack.c.h.b16 %v2789
        %v4955 = vunpack.c.l.b16 %v2790
        %v4956 = vunpack.c.h.b16 %v2790
        %v4957 = vunpack.c.l.b16 %v2791
        %v4958 = vunpack.c.h.b16 %v2791
        %v4959 = vunpack.c.l.b16 %v2792
        %v4960 = vunpack.c.h.b16 %v2792
        %v4961 = vunpack.c.l.b16 %v2793
        %v4962 = vunpack.c.h.b16 %v2793
        %v4963 = vunpack.c.l.b16 %v2794
        %v4964 = vunpack.c.h.b16 %v2794
        %v4965 = vunpack.c.l.b16 %v2795
        %v4966 = vunpack.c.h.b16 %v2795
        %v4967 = vunpack.c.l.b16 %v2796
        %v4968 = vunpack.c.h.b16 %v2796
        %v4969 = vunpack.c.l.b16 %v2797
        %v4970 = vunpack.c.h.b16 %v2797
        %v4971 = vunpack.c.l.b16 %v2798
        %v4972 = vunpack.c.h.b16 %v2798
        %v4973 = vunpack.c.l.b16 %v2799
        %v4974 = vunpack.c.h.b16 %v2799
        %v4975 = vunpack.c.l.b16 %v2800
        %v4976 = vunpack.c.h.b16 %v2800
        %v4977 = vunpack.c.l.b16 %v2801
        %v4978 = vunpack.c.h.b16 %v2801
        %v4979 = vunpack.c.l.b16 %v2802
        %v4980 = vunpack.c.h.b16 %v2802
        %v4981 = vunpack.c.l.b16 %v2803
        %v4982 = vunpack.c.h.b16 %v2803
        %v4983 = vunpack.c.l.b16 %v2804
        %v4984 = vunpack.c.h.b16 %v2804
        %v4985 = vunpack.c.l.b16 %v2805
        %v4986 = vunpack.c.h.b16 %v2805
        %v4987 = vunpack.c.l.b16 %v2806
        %v4988 = vunpack.c.h.b16 %v2806
        %v4989 = vunpack.c.l.b16 %v2807
        %v4990 = vunpack.c.h.b16 %v2807
        %v4991 = vunpack.c.l.b16 %v2808
        %v4992 = vunpack.c.h.b16 %v2808
        %v4993 = vunpack.c.l.b16 %v2809
        %v4994 = vunpack.c.h.b16 %v2809
        %v4995 = vunpack.c.l.b16 %v2810
        %v4996 = vunpack.c.h.b16 %v2810
        %v4997 = vunpack.c.l.b16 %v2811
        %v4998 = vunpack.c.h.b16 %v2811
        %v4999 = vunpack.c.l.b16 %v2812
        %v5000 = vunpack.c.h.b16 %v2812
        %v5001 = vunpack.c.l.b16 %v2813
        %v5002 = vunpack.c.h.b16 %v2813
        %v5003 = vunpack.c.l.b16 %v2814
        %v5004 = vunpack.c.h.b16 %v2814
        %v5005 = vunpack.c.l.b16 %v2815
        %v5006 = vunpack.c.h.b16 %v2815
        %v5007 = vunpack.c.l.b16 %v2816
        %v5008 = vunpack.c.h.b16 %v2816
        %v5009 = vunpack.c.l.b16 %v2817
        %v5010 = vunpack.c.h.b16 %v2817
        %v5011 = vunpack.c.l.b16 %v2818
        %v5012 = vunpack.c.h.b16 %v2818
        %v5013 = vunpack.c.l.b16 %v2819
        %v5014 = vunpack.c.h.b16 %v2819
        %v5015 = vunpack.c.l.b16 %v2820
        %v5016 = vunpack.c.h.b16 %v2820
        %v5017 = vunpack.c.l.b16 %v2821
        %v5018 = vunpack.c.h.b16 %v2821
        %v5019 = vunpack.c.l.b16 %v2822
        %v5020 = vunpack.c.h.b16 %v2822
        %v5021 = vunpack.c.l.b16 %v2823
        %v5022 = vunpack.c.h.b16 %v2823
        %v5023 = vunpack.c.l.b16 %v2824
        %v5024 = vunpack.c.h.b16 %v2824
        %v5025 = vunpack.c.l.b16 %v2825
        %v5026 = vunpack.c.h.b16 %v2825
        %v5027 = vunpack.c.l.b16 %v2826
        %v5028 = vunpack.c.h.b16 %v2826
        %v5029 = vunpack.c.l.b16 %v2827
        %v5030 = vunpack.c.h.b16 %v2827
        %v5031 = vunpack.c.l.b16 %v2828
        %v5032 = vunpack.c.h.b16 %v2828
        %v5033 = vunpack.c.l.b16 %v2829
        %v5034 = vunpack.c.h.b16 %v2829
        %v5035 = vunpack.c.l.b16 %v2830
        %v5036 = vunpack.c.h.b16 %v2830
        %v5037 = vunpack.c.l.b16 %v2831
        %v5038 = vunpack.c.h.b16 %v2831
        %v5039 = vunpack.c.l.b16 %v2832
        %v5040 = vunpack.c.h.b16 %v2832
        %v5041 = vunpack.c.l.b16 %v2833
        %v5042 = vunpack.c.h.b16 %v2833
        %v5043 = vunpack.c.l.b16 %v2834
        %v5044 = vunpack.c.h.b16 %v2834
        %v5045 = vunpack.c.l.b16 %v2835
        %v5046 = vunpack.c.h.b16 %v2835
        %v5047 = vunpack.c.l.b16 %v2836
        %v5048 = vunpack.c.h.b16 %v2836
        %v5049 = vunpack.c.l.b16 %v2837
        %v5050 = vunpack.c.h.b16 %v2837
        %v5051 = vunpack.c.l.b16 %v2838
        %v5052 = vunpack.c.h.b16 %v2838
        %v5053 = vunpack.c.l.b16 %v2839
        %v5054 = vunpack.c.h.b16 %v2839
        %v5055 = vunpack.c.l.b16 %v2840
        %v5056 = vunpack.c.h.b16 %v2840
        %v5057 = vunpack.c.l.b16 %v2841
        %v5058 = vunpack.c.h.b16 %v2841
        %v5059 = vunpack.c.l.b16 %v2842
        %v5060 = vunpack.c.h.b16 %v2842
        %v5061 = vunpack.c.l.b16 %v2843
        %v5062 = vunpack.c.h.b16 %v2843
        %v5063 = vunpack.c.l.b16 %v2844
        %v5064 = vunpack.c.h.b16 %v2844
        %v5065 = vunpack.c.l.b16 %v2845
        %v5066 = vunpack.c.h.b16 %v2845
        %v5067 = vunpack.c.l.b16 %v2846
        %v5068 = vunpack.c.h.b16 %v2846
        %v5069 = vunpack.c.l.b16 %v2847
        %v5070 = vunpack.c.h.b16 %v2847
        %v5071 = vunpack.c.l.b16 %v2848
        %v5072 = vunpack.c.h.b16 %v2848
        %v5073 = vunpack.c.l.b16 %v2849
        %v5074 = vunpack.c.h.b16 %v2849
        %v5075 = vunpack.c.l.b16 %v2850
        %v5076 = vunpack.c.h.b16 %v2850
        %v5077 = vunpack.c.l.b16 %v2851
        %v5078 = vunpack.c.h.b16 %v2851
        %v5079 = vunpack.c.l.b16 %v2852
        %v5080 = vunpack.c.h.b16 %v2852
        %v5081 = vunpack.c.l.b16 %v2853
        %v5082 = vunpack.c.h.b16 %v2853
        %v5083 = vunpack.c.l.b16 %v2854
        %v5084 = vunpack.c.h.b16 %v2854
        %v5085 = vunpack.c.l.b16 %v2855
        %v5086 = vunpack.c.h.b16 %v2855
        %v5087 = vunpack.c.l.b16 %v2856
        %v5088 = vunpack.c.h.b16 %v2856
        %v5089 = vunpack.c.l.b16 %v2857
        %v5090 = vunpack.c.h.b16 %v2857
        %v5091 = vunpack.c.l.b16 %v2858
        %v5092 = vunpack.c.h.b16 %v2858
        %v5093 = vunpack.c.l.b16 %v2859
        %v5094 = vunpack.c.h.b16 %v2859
        %v5095 = vunpack.c.l.b16 %v2860
        %v5096 = vunpack.c.h.b16 %v2860
        %v5097 = vunpack.c.l.b16 %v2861
        %v5098 = vunpack.c.h.b16 %v2861
        %v5099 = vunpack.c.l.b16 %v2862
        %v5100 = vunpack.c.h.b16 %v2862
        %v5101 = vunpack.c.l.b16 %v2863
        %v5102 = vunpack.c.h.b16 %v2863
        %v5103 = vunpack.c.l.b16 %v2864
        %v5104 = vunpack.c.h.b16 %v2864
        %v5105 = vunpack.c.l.b16 %v2865
        %v5106 = vunpack.c.h.b16 %v2865
        %v5107 = vunpack.c.l.b16 %v2866
        %v5108 = vunpack.c.h.b16 %v2866
        %v5109 = vunpack.c.l.b16 %v2867
        %v5110 = vunpack.c.h.b16 %v2867
        %v5111 = vunpack.c.l.b16 %v2868
        %v5112 = vunpack.c.h.b16 %v2868
        %v5113 = vunpack.c.l.b16 %v2869
        %v5114 = vunpack.c.h.b16 %v2869
        %v5115 = vunpack.c.l.b16 %v2870
        %v5116 = vunpack.c.h.b16 %v2870
        %v5117 = vunpack.c.l.b16 %v2871
        %v5118 = vunpack.c.h.b16 %v2871
        %v5119 = vunpack.c.l.b16 %v2872
        %v5120 = vunpack.c.h.b16 %v2872
        %v5121 = vunpack.c.l.b16 %v2873
        %v5122 = vunpack.c.h.b16 %v2873
        %v5123 = vunpack.c.l.b16 %v2874
        %v5124 = vunpack.c.h.b16 %v2874
        %v5125 = vunpack.c.l.b16 %v2875
        %v5126 = vunpack.c.h.b16 %v2875
        %v5127 = vunpack.c.l.b16 %v2876
        %v5128 = vunpack.c.h.b16 %v2876
        %v5129 = vunpack.c.l.b16 %v2877
        %v5130 = vunpack.c.h.b16 %v2877
        %v5131 = vunpack.c.l.b16 %v2878
        %v5132 = vunpack.c.h.b16 %v2878
        %v5133 = vunpack.c.l.b16 %v2879
        %v5134 = vunpack.c.h.b16 %v2879
        %v5135 = vunpack.c.l.b16 %v2880
        %v5136 = vunpack.c.h.b16 %v2880
        %v5137 = vunpack.c.l.b16 %v2881
        %v5138 = vunpack.c.h.b16 %v2881
        %v5139 = vunpack.c.l.b16 %v2882
        %v5140 = vunpack.c.h.b16 %v2882
        %v5141 = vunpack.c.l.b16 %v2883
        %v5142 = vunpack.c.h.b16 %v2883
        %v5143 = vunpack.c.l.b16 %v2884
        %v5144 = vunpack.c.h.b16 %v2884
        %v5145 = vunpack.c.l.b16 %v2885
        %v5146 = vunpack.c.h.b16 %v2885
        %v5147 = vunpack.c.l.b16 %v2886
        %v5148 = vunpack.c.h.b16 %v2886
        %v5149 = vunpack.c.l.b16 %v2887
        %v5150 = vunpack.c.h.b16 %v2887
        %v5151 = vunpack.c.l.b16 %v2888
        %v5152 = vunpack.c.h.b16 %v2888
        %v5153 = vunpack.c.l.b16 %v2889
        %v5154 = vunpack.c.h.b16 %v2889
        %v5155 = vunpack.c.l.b16 %v2890
        %v5156 = vunpack.c.h.b16 %v2890
        %v5157 = vunpack.c.l.b16 %v2891
        %v5158 = vunpack.c.h.b16 %v2891
        %v5159 = vunpack.c.l.b16 %v2892
        %v5160 = vunpack.c.h.b16 %v2892
        %v5161 = vunpack.c.l.b16 %v2893
        %v5162 = vunpack.c.h.b16 %v2893
        %v5163 = vunpack.c.l.b16 %v2894
        %v5164 = vunpack.c.h.b16 %v2894
        %v5165 = vunpack.c.l.b16 %v2895
        %v5166 = vunpack.c.h.b16 %v2895
        %v5167 = vunpack.c.l.b16 %v2896
        %v5168 = vunpack.c.h.b16 %v2896
        %v5169 = vunpack.c.l.b16 %v2897
        %v5170 = vunpack.c.h.b16 %v2897
        %v5171 = vunpack.c.l.b16 %v2898
        %v5172 = vunpack.c.h.b16 %v2898
        %v5173 = vunpack.c.l.b16 %v2899
        %v5174 = vunpack.c.h.b16 %v2899
        %v5175 = vunpack.c.l.b16 %v2900
        %v5176 = vunpack.c.h.b16 %v2900
        %v5177 = vunpack.c.l.b16 %v2901
        %v5178 = vunpack.c.h.b16 %v2901
        %v5179 = vunpack.c.l.b16 %v2902
        %v5180 = vunpack.c.h.b16 %v2902
        %v5181 = vunpack.c.l.b16 %v2903
        %v5182 = vunpack.c.h.b16 %v2903
        %v5183 = vunpack.c.l.b16 %v2904
        %v5184 = vunpack.c.h.b16 %v2904
        %v5185 = vunpack.c.l.b16 %v2905
        %v5186 = vunpack.c.h.b16 %v2905
        %v5187 = vunpack.c.l.b16 %v2906
        %v5188 = vunpack.c.h.b16 %v2906
        %v5189 = vunpack.c.l.b16 %v2907
        %v5190 = vunpack.c.h.b16 %v2907
        %v5191 = vunpack.c.l.b16 %v2908
        %v5192 = vunpack.c.h.b16 %v2908
        %v5193 = vunpack.c.l.b16 %v2909
        %v5194 = vunpack.c.h.b16 %v2909
        %v5195 = vunpack.c.l.b16 %v2910
        %v5196 = vunpack.c.h.b16 %v2910
        %v5197 = vunpack.c.l.b16 %v2911
        %v5198 = vunpack.c.h.b16 %v2911
        %v5199 = vunpack.c.l.b16 %v2912
        %v5200 = vunpack.c.h.b16 %v2912
        %v5201 = vunpack.c.l.b16 %v2913
        %v5202 = vunpack.c.h.b16 %v2913
        %v5203 = vunpack.c.l.b16 %v2914
        %v5204 = vunpack.c.h.b16 %v2914
        %v5205 = vunpack.c.l.b16 %v2915
        %v5206 = vunpack.c.h.b16 %v2915
        %v5207 = vunpack.c.l.b16 %v2916
        %v5208 = vunpack.c.h.b16 %v2916
        %v5209 = vunpack.c.l.b16 %v2917
        %v5210 = vunpack.c.h.b16 %v2917
        %v5211 = vunpack.c.l.b16 %v2918
        %v5212 = vunpack.c.h.b16 %v2918
        %v5213 = vunpack.c.l.b16 %v2919
        %v5214 = vunpack.c.h.b16 %v2919
        %v5215 = vunpack.c.l.b16 %v2920
        %v5216 = vunpack.c.h.b16 %v2920
        %v5217 = vunpack.c.l.b16 %v2921
        %v5218 = vunpack.c.h.b16 %v2921
        %v5219 = vunpack.c.l.b16 %v2922
        %v5220 = vunpack.c.h.b16 %v2922
        %v5221 = vunpack.c.l.b16 %v2923
        %v5222 = vunpack.c.h.b16 %v2923
        %v5223 = vunpack.c.l.b16 %v2924
        %v5224 = vunpack.c.h.b16 %v2924
        %v5225 = vunpack.c.l.b16 %v2925
        %v5226 = vunpack.c.h.b16 %v2925
        %v5227 = vunpack.c.l.b16 %v2926
        %v5228 = vunpack.c.h.b16 %v2926
        %v5229 = vunpack.c.l.b16 %v2927
        %v5230 = vunpack.c.h.b16 %v2927
        %v5231 = vunpack.c.l.b16 %v2928
        %v5232 = vunpack.c.h.b16 %v2928
        %v5233 = vunpack.c.l.b16 %v2929
        %v5234 = vunpack.c.h.b16 %v2929
        %v5235 = vunpack.c.l.b16 %v2930
        %v5236 = vunpack.c.h.b16 %v2930
        %v5237 = vunpack.c.l.b16 %v2931
        %v5238 = vunpack.c.h.b16 %v2931
        %v5239 = vunpack.c.l.b16 %v2932
        %v5240 = vunpack.c.h.b16 %v2932
        %v5241 = vunpack.c.l.b16 %v2933
        %v5242 = vunpack.c.h.b16 %v2933
        %v5243 = vunpack.c.l.b16 %v2934
        %v5244 = vunpack.c.h.b16 %v2934
        %v5245 = vunpack.c.l.b16 %v2935
        %v5246 = vunpack.c.h.b16 %v2935
        %v5247 = vunpack.c.l.b16 %v2936
        %v5248 = vunpack.c.h.b16 %v2936
        %v5249 = vunpack.c.l.b16 %v2937
        %v5250 = vunpack.c.h.b16 %v2937
        %v5251 = vunpack.c.l.b16 %v2938
        %v5252 = vunpack.c.h.b16 %v2938
        %v5253 = vunpack.c.l.b16 %v2939
        %v5254 = vunpack.c.h.b16 %v2939
        %v5255 = vunpack.c.l.b16 %v2940
        %v5256 = vunpack.c.h.b16 %v2940
        %v5257 = vunpack.c.l.b16 %v2941
        %v5258 = vunpack.c.h.b16 %v2941
        %v5259 = vunpack.c.l.b16 %v2942
        %v5260 = vunpack.c.h.b16 %v2942
        %v5261 = vunpack.c.l.b16 %v2943
        %v5262 = vunpack.c.h.b16 %v2943
        %v5263 = vunpack.c.l.b16 %v2944
        %v5264 = vunpack.c.h.b16 %v2944
        %v5265 = vunpack.c.l.b16 %v2945
        %v5266 = vunpack.c.h.b16 %v2945
        %v5267 = vunpack.c.l.b16 %v2946
        %v5268 = vunpack.c.h.b16 %v2946
        %v5269 = vunpack.c.l.b16 %v2947
        %v5270 = vunpack.c.h.b16 %v2947
        %v5271 = vunpack.c.l.b16 %v2948
        %v5272 = vunpack.c.h.b16 %v2948
        %v5273 = vunpack.c.l.b16 %v2949
        %v5274 = vunpack.c.h.b16 %v2949
        %v5275 = vunpack.c.l.b16 %v2950
        %v5276 = vunpack.c.h.b16 %v2950
        %v5277 = vunpack.c.l.b16 %v2951
        %v5278 = vunpack.c.h.b16 %v2951
        %v5279 = vunpack.c.l.b16 %v2952
        %v5280 = vunpack.c.h.b16 %v2952
        %v5281 = vunpack.c.l.b16 %v2953
        %v5282 = vunpack.c.h.b16 %v2953
        %v5283 = vunpack.c.l.b16 %v2954
        %v5284 = vunpack.c.h.b16 %v2954
        %v5285 = vunpack.c.l.b16 %v2955
        %v5286 = vunpack.c.h.b16 %v2955
        %v5287 = vunpack.c.l.b16 %v2956
        %v5288 = vunpack.c.h.b16 %v2956
        %v5289 = vunpack.c.l.b16 %v2957
        %v5290 = vunpack.c.h.b16 %v2957
        %v5291 = vunpack.c.l.b16 %v2958
        %v5292 = vunpack.c.h.b16 %v2958
        %v5293 = vunpack.c.l.b16 %v2959
        %v5294 = vunpack.c.h.b16 %v2959
        %v5295 = vunpack.c.l.b16 %v2960
        %v5296 = vunpack.c.h.b16 %v2960
        %v5297 = vunpack.c.l.b16 %v2961
        %v5298 = vunpack.c.h.b16 %v2961
        %v5299 = vunpack.c.l.b16 %v2962
        %v5300 = vunpack.c.h.b16 %v2962
        %v5301 = vunpack.c.l.b16 %v2963
        %v5302 = vunpack.c.h.b16 %v2963
        %v5303 = vunpack.c.l.b16 %v2964
        %v5304 = vunpack.c.h.b16 %v2964
        %v5305 = vunpack.c.l.b16 %v2965
        %v5306 = vunpack.c.h.b16 %v2965
        %v5307 = vunpack.c.l.b16 %v2966
        %v5308 = vunpack.c.h.b16 %v2966
        %v5309 = vunpack.c.l.b16 %v2967
        %v5310 = vunpack.c.h.b16 %v2967
        %v5311 = vunpack.c.l.b16 %v2968
        %v5312 = vunpack.c.h.b16 %v2968
        %v5313 = vunpack.c.l.b16 %v2969
        %v5314 = vunpack.c.h.b16 %v2969
        %v5315 = vunpack.c.l.b16 %v2970
        %v5316 = vunpack.c.h.b16 %v2970
        %v5317 = vunpack.c.l.b16 %v2971
        %v5318 = vunpack.c.h.b16 %v2971
        %v5319 = vunpack.c.l.b16 %v2972
        %v5320 = vunpack.c.h.b16 %v2972
        %v5321 = vunpack.c.l.b16 %v2973
        %v5322 = vunpack.c.h.b16 %v2973
        %v5323 = vunpack.c.l.b16 %v2974
        %v5324 = vunpack.c.h.b16 %v2974
        %v5325 = vunpack.c.l.b16 %v2975
        %v5326 = vunpack.c.h.b16 %v2975
        %v5327 = vunpack.c.l.b16 %v2976
        %v5328 = vunpack.c.h.b16 %v2976
        %v5329 = vunpack.c.l.b16 %v2977
        %v5330 = vunpack.c.h.b16 %v2977
        %v5331 = vunpack.c.l.b16 %v2978
        %v5332 = vunpack.c.h.b16 %v2978
        %v5333 = vunpack.c.l.b16 %v2979
        %v5334 = vunpack.c.h.b16 %v2979
        %v5335 = vunpack.c.l.b16 %v2980
        %v5336 = vunpack.c.h.b16 %v2980
        %v5337 = vunpack.c.l.b16 %v2981
        %v5338 = vunpack.c.h.b16 %v2981
        %v5339 = vunpack.c.l.b16 %v2982
        %v5340 = vunpack.c.h.b16 %v2982
        %v5341 = vunpack.c.l.b16 %v2983
        %v5342 = vunpack.c.h.b16 %v2983
        %v5343 = vunpack.c.l.b16 %v2984
        %v5344 = vunpack.c.h.b16 %v2984
        %v5345 = vunpack.c.l.b16 %v2985
        %v5346 = vunpack.c.h.b16 %v2985
        %v5347 = vunpack.c.l.b16 %v2986
        %v5348 = vunpack.c.h.b16 %v2986
        %v5349 = vunpack.c.l.b16 %v2987
        %v5350 = vunpack.c.h.b16 %v2987
        %v5351 = vunpack.c.l.b16 %v2988
        %v5352 = vunpack.c.h.b16 %v2988
        %v5353 = vunpack.c.l.b16 %v2989
        %v5354 = vunpack.c.h.b16 %v2989
        %v5355 = vunpack.c.l.b16 %v2990
        %v5356 = vunpack.c.h.b16 %v2990
        %v5357 = vunpack.c.l.b16 %v2991
        %v5358 = vunpack.c.h.b16 %v2991
        %v5359 = vunpack.c.l.b16 %v2992
        %v5360 = vunpack.c.h.b16 %v2992
        %v5361 = vunpack.c.l.b16 %v2993
        %v5362 = vunpack.c.h.b16 %v2993
        %v5363 = vunpack.c.l.b16 %v2994
        %v5364 = vunpack.c.h.b16 %v2994
        %v5365 = vunpack.c.l.b16 %v2995
        %v5366 = vunpack.c.h.b16 %v2995
        %v5367 = vunpack.c.l.b16 %v2996
        %v5368 = vunpack.c.h.b16 %v2996
        %v5369 = vunpack.c.l.b16 %v2997
        %v5370 = vunpack.c.h.b16 %v2997
        %v5371 = vunpack.c.l.b16 %v2998
        %v5372 = vunpack.c.h.b16 %v2998
        %v5373 = vunpack.c.l.b16 %v2999
        %v5374 = vunpack.c.h.b16 %v2999
        %v5375 = vunpack.c.l.b16 %v3000
        %v5376 = vunpack.c.h.b16 %v3000
        %v5377 = vunpack.c.l.b16 %v3001
        %v5378 = vunpack.c.h.b16 %v3001
        %v5379 = vunpack.c.l.b16 %v3002
        %v5380 = vunpack.c.h.b16 %v3002
        %v5381 = vunpack.c.l.b16 %v3003
        %v5382 = vunpack.c.h.b16 %v3003
        %v5383 = vunpack.c.l.b16 %v3004
        %v5384 = vunpack.c.h.b16 %v3004
        %v5385 = vunpack.c.l.b16 %v3005
        %v5386 = vunpack.c.h.b16 %v3005
        %v5387 = vunpack.c.l.b16 %v3006
        %v5388 = vunpack.c.h.b16 %v3006
        %v5389 = vunpack.c.l.b16 %v3007
        %v5390 = vunpack.c.h.b16 %v3007
        %v5391 = vunpack.c.l.b16 %v3008
        %v5392 = vunpack.c.h.b16 %v3008
        %v5393 = vunpack.c.l.b16 %v3009
        %v5394 = vunpack.c.h.b16 %v3009
        %v5395 = vunpack.c.l.b16 %v3010
        %v5396 = vunpack.c.h.b16 %v3010
        %v5397 = vunpack.c.l.b16 %v3011
        %v5398 = vunpack.c.h.b16 %v3011
        %v5399 = vunpack.c.l.b16 %v3012
        %v5400 = vunpack.c.h.b16 %v3012
        %v5401 = vunpack.c.l.b16 %v3013
        %v5402 = vunpack.c.h.b16 %v3013
        %v5403 = vunpack.c.l.b16 %v3014
        %v5404 = vunpack.c.h.b16 %v3014
        %v5405 = vunpack.c.l.b16 %v3015
        %v5406 = vunpack.c.h.b16 %v3015
        %v5407 = vunpack.c.l.b16 %v3016
        %v5408 = vunpack.c.h.b16 %v3016
        %v5409 = vunpack.c.l.b16 %v3017
        %v5410 = vunpack.c.h.b16 %v3017
        %v5411 = vunpack.c.l.b16 %v3018
        %v5412 = vunpack.c.h.b16 %v3018
        %v5413 = vunpack.c.l.b16 %v3019
        %v5414 = vunpack.c.h.b16 %v3019
        %v5415 = vunpack.c.l.b16 %v3020
        %v5416 = vunpack.c.h.b16 %v3020
        %v5417 = vunpack.c.l.b16 %v3021
        %v5418 = vunpack.c.h.b16 %v3021
        %v5419 = vunpack.c.l.b16 %v3022
        %v5420 = vunpack.c.h.b16 %v3022
        %v5421 = vunpack.c.l.b16 %v3023
        %v5422 = vunpack.c.h.b16 %v3023
        %v5423 = vunpack.c.l.b16 %v3024
        %v5424 = vunpack.c.h.b16 %v3024
        %v5425 = vunpack.c.l.b16 %v3025
        %v5426 = vunpack.c.h.b16 %v3025
        %v5427 = vunpack.c.l.b16 %v3026
        %v5428 = vunpack.c.h.b16 %v3026
        %v5429 = vunpack.c.l.b16 %v3027
        %v5430 = vunpack.c.h.b16 %v3027
        %v5431 = vunpack.c.l.b16 %v3028
        %v5432 = vunpack.c.h.b16 %v3028
        %v5433 = vunpack.c.l.b16 %v3029
        %v5434 = vunpack.c.h.b16 %v3029
        %v5435 = vunpack.c.l.b16 %v3030
        %v5436 = vunpack.c.h.b16 %v3030
        %v5437 = vunpack.c.l.b16 %v3031
        %v5438 = vunpack.c.h.b16 %v3031
        %v5439 = vunpack.c.l.b16 %v3032
        %v5440 = vunpack.c.h.b16 %v3032
        %v5441 = vunpack.c.l.b16 %v3033
        %v5442 = vunpack.c.h.b16 %v3033
        %v5443 = vunpack.c.l.b16 %v3034
        %v5444 = vunpack.c.h.b16 %v3034
        %v5445 = vunpack.c.l.b16 %v3035
        %v5446 = vunpack.c.h.b16 %v3035
        %v5447 = vunpack.c.l.b16 %v3036
        %v5448 = vunpack.c.h.b16 %v3036
        %v5449 = vunpack.c.l.b16 %v3037
        %v5450 = vunpack.c.h.b16 %v3037
        %v5451 = vunpack.c.l.b16 %v3038
        %v5452 = vunpack.c.h.b16 %v3038
        %v5453 = vunpack.c.l.b16 %v3039
        %v5454 = vunpack.c.h.b16 %v3039
        %v5455 = vunpack.c.l.b16 %v3040
        %v5456 = vunpack.c.h.b16 %v3040
        %v5457 = vunpack.c.l.b16 %v3041
        %v5458 = vunpack.c.h.b16 %v3041
        %v5459 = vunpack.c.l.b16 %v3042
        %v5460 = vunpack.c.h.b16 %v3042
        %v5461 = vunpack.c.l.b16 %v3043
        %v5462 = vunpack.c.h.b16 %v3043
        %v5463 = vunpack.c.l.b16 %v3044
        %v5464 = vunpack.c.h.b16 %v3044
        %v5465 = vunpack.c.l.b16 %v3045
        %v5466 = vunpack.c.h.b16 %v3045
        %v5467 = vunpack.c.l.b16 %v3046
        %v5468 = vunpack.c.h.b16 %v3046
        %v5469 = vunpack.c.l.b16 %v3047
        %v5470 = vunpack.c.h.b16 %v3047
        %v5471 = vunpack.c.l.b16 %v3048
        %v5472 = vunpack.c.h.b16 %v3048
        %v5473 = vunpack.c.l.b16 %v3049
        %v5474 = vunpack.c.h.b16 %v3049
        %v5475 = vunpack.c.l.b16 %v3050
        %v5476 = vunpack.c.h.b16 %v3050
        %v5477 = vunpack.c.l.b16 %v3051
        %v5478 = vunpack.c.h.b16 %v3051
        %v5479 = vunpack.c.l.b16 %v3052
        %v5480 = vunpack.c.h.b16 %v3052
        %v5481 = vunpack.c.l.b16 %v3053
        %v5482 = vunpack.c.h.b16 %v3053
        %v5483 = vunpack.c.l.b16 %v3054
        %v5484 = vunpack.c.h.b16 %v3054
        %v5485 = vunpack.c.l.b16 %v3055
        %v5486 = vunpack.c.h.b16 %v3055
        %v5487 = vunpack.c.l.b16 %v3056
        %v5488 = vunpack.c.h.b16 %v3056
        %v5489 = vunpack.c.l.b16 %v3057
        %v5490 = vunpack.c.h.b16 %v3057
        %v5491 = vunpack.c.l.b16 %v3058
        %v5492 = vunpack.c.h.b16 %v3058
        %v5493 = vunpack.c.l.b16 %v3059
        %v5494 = vunpack.c.h.b16 %v3059
        %v5495 = vunpack.c.l.b16 %v3060
        %v5496 = vunpack.c.h.b16 %v3060
        %v5497 = vunpack.c.l.b16 %v3061
        %v5498 = vunpack.c.h.b16 %v3061
        %v5499 = vunpack.c.l.b16 %v3062
        %v5500 = vunpack.c.h.b16 %v3062
        %v5501 = vunpack.c.l.b16 %v3063
        %v5502 = vunpack.c.h.b16 %v3063
        %v5503 = vunpack.c.l.b16 %v3064
        %v5504 = vunpack.c.h.b16 %v3064
        %v5505 = vunpack.c.l.b16 %v3065
        %v5506 = vunpack.c.h.b16 %v3065
        %v5507 = vunpack.c.l.b16 %v3066
        %v5508 = vunpack.c.h.b16 %v3066
        %v5509 = vunpack.c.l.b16 %v3067
        %v5510 = vunpack.c.h.b16 %v3067
        %v5511 = vunpack.c.l.b16 %v3068
        %v5512 = vunpack.c.h.b16 %v3068
        %v5513 = vunpack.c.l.b16 %v3069
        %v5514 = vunpack.c.h.b16 %v3069
        %v5515 = vunpack.c.l.b16 %v3070
        %v5516 = vunpack.c.h.b16 %v3070
        %v5517 = vunpack.c.l.b16 %v3071
        %v5518 = vunpack.c.h.b16 %v3071
        %v5519 = vunpack.c.l.b16 %v3072
        %v5520 = vunpack.c.h.b16 %v3072
        %v5521 = vunpack.c.l.b16 %v3073
        %v5522 = vunpack.c.h.b16 %v3073
        %v5523 = vunpack.c.l.b16 %v3074
        %v5524 = vunpack.c.h.b16 %v3074
        %v5525 = vunpack.c.l.b16 %v3075
        %v5526 = vunpack.c.h.b16 %v3075
        %v5527 = vunpack.c.l.b16 %v3076
        %v5528 = vunpack.c.h.b16 %v3076
        %v5529 = vunpack.c.l.b16 %v3077
        %v5530 = vunpack.c.h.b16 %v3077
        %v5531 = vunpack.c.l.b16 %v3078
        %v5532 = vunpack.c.h.b16 %v3078
        %v5533 = vunpack.c.l.b16 %v3079
        %v5534 = vunpack.c.h.b16 %v3079
        %v5535 = vunpack.c.l.b16 %v3080
        %v5536 = vunpack.c.h.b16 %v3080
        %v5537 = vunpack.c.l.b16 %v3081
        %v5538 = vunpack.c.h.b16 %v3081
        %v5539 = vunpack.c.l.b16 %v3082
        %v5540 = vunpack.c.h.b16 %v3082
        %v5541 = vunpack.c.l.b16 %v3083
        %v5542 = vunpack.c.h.b16 %v3083
        %v5543 = vunpack.c.l.b16 %v3084
        %v5544 = vunpack.c.h.b16 %v3084
        %v5545 = vunpack.c.l.b16 %v3085
        %v5546 = vunpack.c.h.b16 %v3085
        %v5547 = vunpack.c.l.b16 %v3086
        %v5548 = vunpack.c.h.b16 %v3086
        %v5549 = vunpack.c.l.b16 %v3087
        %v5550 = vunpack.c.h.b16 %v3087
        %v5551 = vunpack.c.l.b16 %v3088
        %v5552 = vunpack.c.h.b16 %v3088
        %v5553 = vunpack.c.l.b16 %v3089
        %v5554 = vunpack.c.h.b16 %v3089
        %v5555 = vunpack.c.l.b16 %v3090
        %v5556 = vunpack.c.h.b16 %v3090
        %v5557 = vunpack.c.l.b16 %v3091
        %v5558 = vunpack.c.h.b16 %v3091
        %v5559 = vunpack.c.l.b16 %v3092
        %v5560 = vunpack.c.h.b16 %v3092
        %v5561 = vunpack.c.l.b16 %v3093
        %v5562 = vunpack.c.h.b16 %v3093
        %v5563 = vunpack.c.l.b16 %v3094
        %v5564 = vunpack.c.h.b16 %v3094
        %v5565 = vunpack.c.l.b16 %v3095
        %v5566 = vunpack.c.h.b16 %v3095
        %v5567 = vunpack.c.l.b16 %v3096
        %v5568 = vunpack.c.h.b16 %v3096
        %v5569 = vunpack.c.l.b16 %v3097
        %v5570 = vunpack.c.h.b16 %v3097
        %v5571 = vunpack.c.l.b16 %v3098
        %v5572 = vunpack.c.h.b16 %v3098
        %v5573 = vunpack.c.l.b16 %v3099
        %v5574 = vunpack.c.h.b16 %v3099
        %v5575 = vunpack.c.l.b16 %v3100
        %v5576 = vunpack.c.h.b16 %v3100
        %v5577 = vunpack.c.l.b16 %v3101
        %v5578 = vunpack.c.h.b16 %v3101
        %v5579 = vunpack.c.l.b16 %v3102
        %v5580 = vunpack.c.h.b16 %v3102
        %v5581 = vunpack.c.l.b16 %v3103
        %v5582 = vunpack.c.h.b16 %v3103
        %v5583 = vunpack.c.l.b16 %v3104
        %v5584 = vunpack.c.h.b16 %v3104
        %v5585 = vunpack.c.l.b16 %v3105
        %v5586 = vunpack.c.h.b16 %v3105
        %v5587 = vunpack.c.l.b16 %v3106
        %v5588 = vunpack.c.h.b16 %v3106
        %v5589 = vunpack.c.l.b16 %v3107
        %v5590 = vunpack.c.h.b16 %v3107
        %v5591 = vunpack.c.l.b16 %v3108
        %v5592 = vunpack.c.h.b16 %v3108
        %v5593 = vunpack.c.l.b16 %v3109
        %v5594 = vunpack.c.h.b16 %v3109
        %v5595 = vunpack.c.l.b16 %v3110
        %v5596 = vunpack.c.h.b16 %v3110
        %v5597 = vunpack.c.l.b16 %v3111
        %v5598 = vunpack.c.h.b16 %v3111
        %v5599 = vunpack.c.l.b16 %v3112
        %v5600 = vunpack.c.h.b16 %v3112
        %v5601 = vunpack.c.l.b16 %v3113
        %v5602 = vunpack.c.h.b16 %v3113
        %v5603 = vunpack.c.l.b16 %v3114
        %v5604 = vunpack.c.h.b16 %v3114
        %v5605 = vunpack.c.l.b16 %v3115
        %v5606 = vunpack.c.h.b16 %v3115
        %v5607 = vunpack.c.l.b16 %v3116
        %v5608 = vunpack.c.h.b16 %v3116
        %v5609 = vunpack.c.l.b16 %v3117
        %v5610 = vunpack.c.h.b16 %v3117
        %v5611 = vunpack.c.l.b16 %v3118
        %v5612 = vunpack.c.h.b16 %v3118
        %v5613 = vunpack.c.l.b16 %v3119
        %v5614 = vunpack.c.h.b16 %v3119
        %v5615 = vunpack.c.l.b16 %v3120
        %v5616 = vunpack.c.h.b16 %v3120
        %v5617 = vunpack.c.l.b16 %v3121
        %v5618 = vunpack.c.h.b16 %v3121
        %v5619 = vunpack.c.l.b16 %v3122
        %v5620 = vunpack.c.h.b16 %v3122
        %v5621 = vunpack.c.l.b16 %v3123
        %v5622 = vunpack.c.h.b16 %v3123
        %v5623 = vunpack.c.l.b16 %v3124
        %v5624 = vunpack.c.h.b16 %v3124
        %v5625 = vunpack.c.l.b16 %v3125
        %v5626 = vunpack.c.h.b16 %v3125
        %v5627 = vunpack.c.l.b16 %v3126
        %v5628 = vunpack.c.h.b16 %v3126
        %v5629 = vunpack.c.l.b16 %v3127
        %v5630 = vunpack.c.h.b16 %v3127
        %v5631 = vunpack.c.l.b16 %v3128
        %v5632 = vunpack.c.h.b16 %v3128
        %v5633 = vunpack.c.l.b16 %v3129
        %v5634 = vunpack.c.h.b16 %v3129
        %v5635 = vunpack.c.l.b16 %v3130
        %v5636 = vunpack.c.h.b16 %v3130
        %v5637 = vunpack.c.l.b16 %v3131
        %v5638 = vunpack.c.h.b16 %v3131
        %v5639 = vunpack.c.l.b16 %v3132
        %v5640 = vunpack.c.h.b16 %v3132
        %v5641 = vunpack.c.l.b16 %v3133
        %v5642 = vunpack.c.h.b16 %v3133
        %v5643 = vunpack.c.l.b16 %v3134
        %v5644 = vunpack.c.h.b16 %v3134
        %v5645 = vunpack.c.l.b16 %v3135
        %v5646 = vunpack.c.h.b16 %v3135
        %v5647 = vunpack.c.l.b16 %v3136
        %v5648 = vunpack.c.h.b16 %v3136
        %v5649 = vunpack.c.l.b16 %v3137
        %v5650 = vunpack.c.h.b16 %v3137
        %v5651 = vunpack.c.l.b16 %v3138
        %v5652 = vunpack.c.h.b16 %v3138
        %v5653 = vunpack.c.l.b16 %v3139
        %v5654 = vunpack.c.h.b16 %v3139
        %v5655 = vunpack.c.l.b16 %v3140
        %v5656 = vunpack.c.h.b16 %v3140
        %v5657 = vunpack.c.l.b16 %v3141
        %v5658 = vunpack.c.h.b16 %v3141
        %v5659 = vunpack.c.l.b16 %v3142
        %v5660 = vunpack.c.h.b16 %v3142
        %v5661 = vunpack.c.l.b16 %v3143
        %v5662 = vunpack.c.h.b16 %v3143
        %v5663 = vunpack.c.l.b16 %v3144
        %v5664 = vunpack.c.h.b16 %v3144
        %v5665 = vunpack.c.l.b16 %v3145
        %v5666 = vunpack.c.h.b16 %v3145
        %v5667 = vunpack.c.l.b16 %v3146
        %v5668 = vunpack.c.h.b16 %v3146
        %v5669 = vunpack.c.l.b16 %v3147
        %v5670 = vunpack.c.h.b16 %v3147
        %v5671 = vunpack.c.l.b16 %v3148
        %v5672 = vunpack.c.h.b16 %v3148
        %v5673 = vunpack.c.l.b16 %v3149
        %v5674 = vunpack.c.h.b16 %v3149
        %v5675 = vunpack.c.l.b16 %v3150
        %v5676 = vunpack.c.h.b16 %v3150
        %v5677 = vunpack.c.l.b16 %v3151
        %v5678 = vunpack.c.h.b16 %v3151
        %v5679 = vunpack.c.l.b16 %v3152
        %v5680 = vunpack.c.h.b16 %v3152
        %v5681 = vunpack.c.l.b16 %v3153
        %v5682 = vunpack.c.h.b16 %v3153
        %v5683 = vunpack.c.l.b16 %v3154
        %v5684 = vunpack.c.h.b16 %v3154
        %v5685 = vunpack.c.l.b16 %v3155
        %v5686 = vunpack.c.h.b16 %v3155
        %v5687 = vunpack.c.l.b16 %v3156
        %v5688 = vunpack.c.h.b16 %v3156
        %v5689 = vunpack.c.l.b16 %v3157
        %v5690 = vunpack.c.h.b16 %v3157
        %v5691 = vunpack.c.l.b16 %v3158
        %v5692 = vunpack.c.h.b16 %v3158
        %v5693 = vunpack.c.l.b16 %v3159
        %v5694 = vunpack.c.h.b16 %v3159
        %v5695 = vunpack.c.l.b16 %v3160
        %v5696 = vunpack.c.h.b16 %v3160
        %v5697 = vunpack.c.l.b16 %v3161
        %v5698 = vunpack.c.h.b16 %v3161
        %v5699 = vunpack.c.l.b16 %v3162
        %v5700 = vunpack.c.h.b16 %v3162
        %v5701 = vunpack.c.l.b16 %v3163
        %v5702 = vunpack.c.h.b16 %v3163
        %v5703 = vunpack.c.l.b16 %v3164
        %v5704 = vunpack.c.h.b16 %v3164
        %v5705 = vunpack.c.l.b16 %v3165
        %v5706 = vunpack.c.h.b16 %v3165
        %v5707 = vunpack.c.l.b16 %v3166
        %v5708 = vunpack.c.h.b16 %v3166
        %v5709 = vunpack.c.l.b16 %v3167
        %v5710 = vunpack.c.h.b16 %v3167
        %v5711 = vunpack.c.l.b16 %v3168
        %v5712 = vunpack.c.h.b16 %v3168
        %v5713 = vunpack.c.l.b16 %v3169
        %v5714 = vunpack.c.h.b16 %v3169
        %v5715 = vunpack.c.l.b16 %v3170
        %v5716 = vunpack.c.h.b16 %v3170
        %v5717 = vunpack.c.l.b16 %v3171
        %v5718 = vunpack.c.h.b16 %v3171
        %v5719 = vunpack.c.l.b16 %v3172
        %v5720 = vunpack.c.h.b16 %v3172
        %v5721 = vunpack.c.l.b16 %v3173
        %v5722 = vunpack.c.h.b16 %v3173
        %v5723 = vunpack.c.l.b16 %v3174
        %v5724 = vunpack.c.h.b16 %v3174
        %v5725 = vunpack.c.l.b16 %v3175
        %v5726 = vunpack.c.h.b16 %v3175
        %v5727 = vunpack.c.l.b16 %v3176
        %v5728 = vunpack.c.h.b16 %v3176
        %v5729 = vunpack.c.l.b16 %v3177
        %v5730 = vunpack.c.h.b16 %v3177
        %v5731 = vunpack.c.l.b16 %v3178
        %v5732 = vunpack.c.h.b16 %v3178
        %v5733 = vunpack.c.l.b16 %v3179
        %v5734 = vunpack.c.h.b16 %v3179
        %v5735 = vunpack.c.l.b16 %v3180
        %v5736 = vunpack.c.h.b16 %v3180
        %v5737 = vunpack.c.l.b16 %v3181
        %v5738 = vunpack.c.h.b16 %v3181
        %v5739 = vunpack.c.l.b16 %v3182
        %v5740 = vunpack.c.h.b16 %v3182
        %v5741 = vunpack.c.l.b16 %v3183
        %v5742 = vunpack.c.h.b16 %v3183
        %v5743 = vunpack.c.l.b16 %v3184
        %v5744 = vunpack.c.h.b16 %v3184
        %v5745 = vunpack.c.l.b16 %v3185
        %v5746 = vunpack.c.h.b16 %v3185
        %v5747 = vunpack.c.l.b16 %v3186
        %v5748 = vunpack.c.h.b16 %v3186
        %v5749 = vunpack.c.l.b16 %v3187
        %v5750 = vunpack.c.h.b16 %v3187
        %v5751 = vunpack.c.l.b16 %v3188
        %v5752 = vunpack.c.h.b16 %v3188
        %v5753 = vunpack.c.l.b16 %v3189
        %v5754 = vunpack.c.h.b16 %v3189
        %v5755 = vunpack.c.l.b16 %v3190
        %v5756 = vunpack.c.h.b16 %v3190
        %v5757 = vunpack.c.l.b16 %v3191
        %v5758 = vunpack.c.h.b16 %v3191
        %v5759 = vunpack.c.l.b16 %v3192
        %v5760 = vunpack.c.h.b16 %v3192
        %v5761 = vunpack.c.l.b16 %v3193
        %v5762 = vunpack.c.h.b16 %v3193
        %v5763 = vunpack.c.l.b16 %v3194
        %v5764 = vunpack.c.h.b16 %v3194
        %v5765 = vunpack.c.l.b16 %v3195
        %v5766 = vunpack.c.h.b16 %v3195
        %v5767 = vunpack.c.l.b16 %v3196
        %v5768 = vunpack.c.h.b16 %v3196
        %v5769 = vunpack.c.l.b16 %v3197
        %v5770 = vunpack.c.h.b16 %v3197
        %v5771 = vunpack.c.l.b16 %v3198
        %v5772 = vunpack.c.h.b16 %v3198
        %v5773 = vunpack.c.l.b16 %v3199
        %v5774 = vunpack.c.h.b16 %v3199
        %v5775 = vunpack.c.l.b16 %v3200
        %v5776 = vunpack.c.h.b16 %v3200
        %v5777 = vunpack.c.l.b16 %v3201
        %v5778 = vunpack.c.h.b16 %v3201
        %v5779 = vunpack.c.l.b16 %v3202
        %v5780 = vunpack.c.h.b16 %v3202
        %v5781 = vunpack.c.l.b16 %v3203
        %v5782 = vunpack.c.h.b16 %v3203
        %v5783 = vunpack.c.l.b16 %v3204
        %v5784 = vunpack.c.h.b16 %v3204
        %v5785 = vunpack.c.l.b16 %v3205
        %v5786 = vunpack.c.h.b16 %v3205
        %v5787 = vunpack.c.l.b16 %v3206
        %v5788 = vunpack.c.h.b16 %v3206
        %v5789 = vunpack.c.l.b16 %v3207
        %v5790 = vunpack.c.h.b16 %v3207
        %v5791 = vunpack.c.l.b16 %v3208
        %v5792 = vunpack.c.h.b16 %v3208
        %v5793 = vunpack.c.l.b16 %v3209
        %v5794 = vunpack.c.h.b16 %v3209
        %v5795 = vunpack.c.l.b16 %v3210
        %v5796 = vunpack.c.h.b16 %v3210
        %v5797 = vunpack.c.l.b16 %v3211
        %v5798 = vunpack.c.h.b16 %v3211
        %v5799 = vunpack.c.l.b16 %v3212
        %v5800 = vunpack.c.h.b16 %v3212
        %v5801 = vunpack.c.l.b16 %v3213
        %v5802 = vunpack.c.h.b16 %v3213
        %v5803 = vunpack.c.l.b16 %v3214
        %v5804 = vunpack.c.h.b16 %v3214
        %v5805 = vunpack.c.l.b16 %v3215
        %v5806 = vunpack.c.h.b16 %v3215
        %v5807 = vunpack.c.l.b16 %v3216
        %v5808 = vunpack.c.h.b16 %v3216
        %v5809 = vunpack.c.l.b16 %v3217
        %v5810 = vunpack.c.h.b16 %v3217
        %v5811 = vunpack.c.l.b16 %v3218
        %v5812 = vunpack.c.h.b16 %v3218
        %v5813 = vunpack.c.l.b16 %v3219
        %v5814 = vunpack.c.h.b16 %v3219
        %v5815 = vunpack.c.l.b16 %v3220
        %v5816 = vunpack.c.h.b16 %v3220
        %v5817 = vunpack.c.l.b16 %v3221
        %v5818 = vunpack.c.h.b16 %v3221
        %v5819 = vunpack.c.l.b16 %v3222
        %v5820 = vunpack.c.h.b16 %v3222
        %v5821 = vunpack.c.l.b16 %v3223
        %v5822 = vunpack.c.h.b16 %v3223
        %v5823 = vunpack.c.l.b16 %v3224
        %v5824 = vunpack.c.h.b16 %v3224
        %v5825 = vunpack.c.l.b16 %v3225
        %v5826 = vunpack.c.h.b16 %v3225
        %v5827 = vunpack.c.l.b16 %v3226
        %v5828 = vunpack.c.h.b16 %v3226
        %v5829 = vunpack.c.l.b16 %v3227
        %v5830 = vunpack.c.h.b16 %v3227
        %v5831 = vunpack.c.l.b16 %v3228
        %v5832 = vunpack.c.h.b16 %v3228
        %v5833 = vunpack.c.l.b16 %v3229
        %v5834 = vunpack.c.h.b16 %v3229
        %v5835 = vunpack.c.l.b16 %v3230
        %v5836 = vunpack.c.h.b16 %v3230
        %v5837 = vunpack.c.l.b16 %v3231
        %v5838 = vunpack.c.h.b16 %v3231
        %v5839 = vunpack.c.l.b16 %v3232
        %v5840 = vunpack.c.h.b16 %v3232
        %v5841 = vunpack.c.l.b16 %v3233
        %v5842 = vunpack.c.h.b16 %v3233
        %v5843 = vunpack.c.l.b16 %v3234
        %v5844 = vunpack.c.h.b16 %v3234
        %v5845 = vunpack.c.l.b16 %v3235
        %v5846 = vunpack.c.h.b16 %v3235
        %v5847 = vunpack.c.l.b16 %v3236
        %v5848 = vunpack.c.h.b16 %v3236
        %v5849 = vunpack.c.l.b16 %v3237
        %v5850 = vunpack.c.h.b16 %v3237
        %v5851 = vunpack.c.l.b16 %v3238
        %v5852 = vunpack.c.h.b16 %v3238
        %v5853 = vunpack.c.l.b16 %v3239
        %v5854 = vunpack.c.h.b16 %v3239
        %v5855 = vunpack.c.l.b16 %v3240
        %v5856 = vunpack.c.h.b16 %v3240
        %v5857 = vunpack.c.l.b16 %v3241
        %v5858 = vunpack.c.h.b16 %v3241
        %v5859 = vunpack.c.l.b16 %v3242
        %v5860 = vunpack.c.h.b16 %v3242
        %v5861 = vunpack.c.l.b16 %v3243
        %v5862 = vunpack.c.h.b16 %v3243
        %v5863 = vunpack.c.l.b16 %v3244
        %v5864 = vunpack.c.h.b16 %v3244
        %v5865 = vunpack.c.l.b16 %v3245
        %v5866 = vunpack.c.h.b16 %v3245
        %v5867 = vunpack.c.l.b16 %v3246
        %v5868 = vunpack.c.h.b16 %v3246
        %v5869 = vunpack.c.l.b16 %v3247
        %v5870 = vunpack.c.h.b16 %v3247
        %v5871 = vunpack.c.l.b16 %v3248
        %v5872 = vunpack.c.h.b16 %v3248
        %v5873 = vunpack.c.l.b16 %v3249
        %v5874 = vunpack.c.h.b16 %v3249
        %v5875 = vunpack.c.l.b16 %v3250
        %v5876 = vunpack.c.h.b16 %v3250
        %v5877 = vunpack.c.l.b16 %v3251
        %v5878 = vunpack.c.h.b16 %v3251
        %v5879 = vunpack.c.l.b16 %v3252
        %v5880 = vunpack.c.h.b16 %v3252
        %v5881 = vunpack.c.l.b16 %v3253
        %v5882 = vunpack.c.h.b16 %v3253
        %v5883 = vunpack.c.l.b16 %v3254
        %v5884 = vunpack.c.h.b16 %v3254
        %v5885 = vunpack.c.l.b16 %v3255
        %v5886 = vunpack.c.h.b16 %v3255
        %v5887 = vunpack.c.l.b16 %v3256
        %v5888 = vunpack.c.h.b16 %v3256
        %v5889 = vunpack.c.l.b16 %v3257
        %v5890 = vunpack.c.h.b16 %v3257
        %v5891 = vunpack.c.l.b16 %v3258
        %v5892 = vunpack.c.h.b16 %v3258
        %v5893 = vunpack.c.l.b16 %v3259
        %v5894 = vunpack.c.h.b16 %v3259
        %v5895 = vunpack.c.l.b16 %v3260
        %v5896 = vunpack.c.h.b16 %v3260
        %v5897 = vunpack.c.l.b16 %v3261
        %v5898 = vunpack.c.h.b16 %v3261
        %v5899 = vunpack.c.l.b16 %v3262
        %v5900 = vunpack.c.h.b16 %v3262
        %v5901 = vunpack.c.l.b16 %v3263
        %v5902 = vunpack.c.h.b16 %v3263
        %v5903 = vunpack.c.l.b16 %v3264
        %v5904 = vunpack.c.h.b16 %v3264
        %v5905 = vunpack.c.l.b16 %v3265
        %v5906 = vunpack.c.h.b16 %v3265
        %v5907 = vunpack.c.l.b16 %v3266
        %v5908 = vunpack.c.h.b16 %v3266
        %v5909 = vunpack.c.l.b16 %v3267
        %v5910 = vunpack.c.h.b16 %v3267
        %v5911 = vunpack.c.l.b16 %v3268
        %v5912 = vunpack.c.h.b16 %v3268
        %v5913 = vunpack.c.l.b16 %v3269
        %v5914 = vunpack.c.h.b16 %v3269
        %v5915 = vunpack.c.l.b16 %v3270
        %v5916 = vunpack.c.h.b16 %v3270
        %v5917 = vunpack.c.l.b16 %v3271
        %v5918 = vunpack.c.h.b16 %v3271
        %v5919 = vunpack.c.l.b16 %v3272
        %v5920 = vunpack.c.h.b16 %v3272
        %v5921 = vunpack.c.l.b16 %v3273
        %v5922 = vunpack.c.h.b16 %v3273
        %v5923 = vunpack.c.l.b16 %v3274
        %v5924 = vunpack.c.h.b16 %v3274
        %v5925 = vunpack.c.l.b16 %v3275
        %v5926 = vunpack.c.h.b16 %v3275
        %v5927 = vunpack.c.l.b16 %v3276
        %v5928 = vunpack.c.h.b16 %v3276
        %v5929 = vunpack.c.l.b16 %v3277
        %v5930 = vunpack.c.h.b16 %v3277
        %v5931 = vunpack.c.l.b16 %v3278
        %v5932 = vunpack.c.h.b16 %v3278
        %v5933 = vunpack.c.l.b16 %v3279
        %v5934 = vunpack.c.h.b16 %v3279
        %v5935 = vunpack.c.l.b16 %v3280
        %v5936 = vunpack.c.h.b16 %v3280
        %v5937 = vunpack.c.l.b16 %v3281
        %v5938 = vunpack.c.h.b16 %v3281
        %v5939 = vunpack.c.l.b16 %v3282
        %v5940 = vunpack.c.h.b16 %v3282
        %v5941 = vunpack.c.l.b16 %v3283
        %v5942 = vunpack.c.h.b16 %v3283
        %v5943 = vunpack.c.l.b16 %v3284
        %v5944 = vunpack.c.h.b16 %v3284
        %v5945 = vunpack.c.l.b16 %v3285
        %v5946 = vunpack.c.h.b16 %v3285
        %v5947 = vunpack.c.l.b16 %v3286
        %v5948 = vunpack.c.h.b16 %v3286
        %v5949 = vunpack.c.l.b16 %v3287
        %v5950 = vunpack.c.h.b16 %v3287
        %v5951 = vunpack.c.l.b16 %v3288
        %v5952 = vunpack.c.h.b16 %v3288
        %v5953 = vunpack.c.l.b16 %v3289
        %v5954 = vunpack.c.h.b16 %v3289
        %v5955 = vunpack.c.l.b16 %v3290
        %v5956 = vunpack.c.h.b16 %v3290
        %v5957 = vunpack.c.l.b16 %v3291
        %v5958 = vunpack.c.h.b16 %v3291
        %v5959 = vunpack.c.l.b16 %v3292
        %v5960 = vunpack.c.h.b16 %v3292
        %v5961 = vunpack.c.l.b16 %v3293
        %v5962 = vunpack.c.h.b16 %v3293
        %v5963 = vunpack.c.l.b16 %v3294
        %v5964 = vunpack.c.h.b16 %v3294
        %v5965 = vunpack.c.l.b16 %v3295
        %v5966 = vunpack.c.h.b16 %v3295
        %v5967 = vunpack.c.l.b16 %v3296
        %v5968 = vunpack.c.h.b16 %v3296
        %v5969 = vunpack.c.l.b16 %v3297
        %v5970 = vunpack.c.h.b16 %v3297
        %v5971 = vunpack.c.l.b16 %v3298
        %v5972 = vunpack.c.h.b16 %v3298
        %v5973 = vunpack.c.l.b16 %v3299
        %v5974 = vunpack.c.h.b16 %v3299
        %v5975 = vunpack.c.l.b16 %v3300
        %v5976 = vunpack.c.h.b16 %v3300
        %v5977 = vunpack.c.l.b16 %v3301
        %v5978 = vunpack.c.h.b16 %v3301
        %v5979 = vunpack.c.l.b16 %v3302
        %v5980 = vunpack.c.h.b16 %v3302
        %v5981 = vunpack.c.l.b16 %v3303
        %v5982 = vunpack.c.h.b16 %v3303
        %v5983 = vunpack.c.l.b16 %v3304
        %v5984 = vunpack.c.h.b16 %v3304
        %v5985 = vunpack.c.l.b16 %v3305
        %v5986 = vunpack.c.h.b16 %v3305
        %v5987 = vunpack.c.l.b16 %v3306
        %v5988 = vunpack.c.h.b16 %v3306
        %v5989 = vunpack.c.l.b16 %v3307
        %v5990 = vunpack.c.h.b16 %v3307
        %v5991 = vunpack.c.l.b16 %v3308
        %v5992 = vunpack.c.h.b16 %v3308
        %v5993 = vunpack.c.l.b16 %v3309
        %v5994 = vunpack.c.h.b16 %v3309
        %v5995 = vunpack.c.l.b16 %v3310
        %v5996 = vunpack.c.h.b16 %v3310
        %v5997 = vunpack.c.l.b16 %v3311
        %v5998 = vunpack.c.h.b16 %v3311
        %v5999 = vunpack.c.l.b16 %v3312
        %v6000 = vunpack.c.h.b16 %v3312
        %v6001 = vunpack.c.l.b16 %v3313
        %v6002 = vunpack.c.h.b16 %v3313
        %v6003 = vunpack.c.l.b16 %v3314
        %v6004 = vunpack.c.h.b16 %v3314
        %v6005 = vunpack.c.l.b16 %v3315
        %v6006 = vunpack.c.h.b16 %v3315
        %v6007 = vunpack.c.l.b16 %v3316
        %v6008 = vunpack.c.h.b16 %v3316
        %v6009 = vunpack.c.l.b16 %v3317
        %v6010 = vunpack.c.h.b16 %v3317
        %v6011 = vunpack.c.l.b16 %v3318
        %v6012 = vunpack.c.h.b16 %v3318
        %v6013 = vunpack.c.l.b16 %v3319
        %v6014 = vunpack.c.h.b16 %v3319
        %v6015 = vunpack.c.l.b16 %v3320
        %v6016 = vunpack.c.h.b16 %v3320
        %v6017 = vunpack.c.l.b16 %v3321
        %v6018 = vunpack.c.h.b16 %v3321
        %v6019 = vunpack.c.l.b16 %v3322
        %v6020 = vunpack.c.h.b16 %v3322
        %v6021 = vunpack.c.l.b16 %v3323
        %v6022 = vunpack.c.h.b16 %v3323
        %v6023 = vunpack.c.l.b16 %v3324
        %v6024 = vunpack.c.h.b16 %v3324
        %v6025 = vunpack.c.l.b16 %v3325
        %v6026 = vunpack.c.h.b16 %v3325
        %v6027 = vunpack.c.l.b16 %v3326
        %v6028 = vunpack.c.h.b16 %v3326
        %v6029 = vunpack.c.l.b16 %v3327
        %v6030 = vunpack.c.h.b16 %v3327
        %v6031 = vunpack.c.l.b16 %v3328
        %v6032 = vunpack.c.h.b16 %v3328
        %v6033 = vunpack.c.l.b16 %v3329
        %v6034 = vunpack.c.h.b16 %v3329
        %v6035 = vunpack.c.l.b16 %v3330
        %v6036 = vunpack.c.h.b16 %v3330
        %v6037 = vunpack.c.l.b16 %v3331
        %v6038 = vunpack.c.h.b16 %v3331
        %v6039 = vunpack.c.l.b16 %v3332
        %v6040 = vunpack.c.h.b16 %v3332
        %v6041 = vunpack.c.l.b16 %v3333
        %v6042 = vunpack.c.h.b16 %v3333
        %v6043 = vunpack.c.l.b16 %v3334
        %v6044 = vunpack.c.h.b16 %v3334
        %v6045 = vunpack.c.l.b16 %v3335
        %v6046 = vunpack.c.h.b16 %v3335
        %v6047 = vunpack.c.l.b16 %v3336
        %v6048 = vunpack.c.h.b16 %v3336
        %v6049 = vunpack.c.l.b16 %v3337
        %v6050 = vunpack.c.h.b16 %v3337
        %v6051 = vunpack.c.l.b16 %v3338
        %v6052 = vunpack.c.h.b16 %v3338
        %v6053 = vunpack.c.l.b16 %v3339
        %v6054 = vunpack.c.h.b16 %v3339
        %v6055 = vunpack.c.l.b16 %v3340
        %v6056 = vunpack.c.h.b16 %v3340
        %v6057 = vunpack.c.l.b16 %v3341
        %v6058 = vunpack.c.h.b16 %v3341
        %v6059 = vunpack.c.l.b16 %v3342
        %v6060 = vunpack.c.h.b16 %v3342
        %v6061 = vunpack.c.l.b16 %v3343
        %v6062 = vunpack.c.h.b16 %v3343
        %v6063 = vunpack.c.l.b16 %v3344
        %v6064 = vunpack.c.h.b16 %v3344
        %v6065 = vunpack.c.l.b16 %v3345
        %v6066 = vunpack.c.h.b16 %v3345
        %v6067 = vunpack.c.l.b16 %v3346
        %v6068 = vunpack.c.h.b16 %v3346
        %v6069 = vunpack.c.l.b16 %v3347
        %v6070 = vunpack.c.h.b16 %v3347
        %v6071 = vunpack.c.l.b16 %v3348
        %v6072 = vunpack.c.h.b16 %v3348
        %v6073 = vunpack.c.l.b16 %v3349
        %v6074 = vunpack.c.h.b16 %v3349
        %v6075 = vunpack.c.l.b16 %v3350
        %v6076 = vunpack.c.h.b16 %v3350
        %v6077 = vunpack.c.l.b16 %v3351
        %v6078 = vunpack.c.h.b16 %v3351
        %v6079 = vunpack.c.l.b16 %v3352
        %v6080 = vunpack.c.h.b16 %v3352
        %v6081 = vunpack.c.l.b16 %v3353
        %v6082 = vunpack.c.h.b16 %v3353
        %v6083 = vunpack.c.l.b16 %v3354
        %v6084 = vunpack.c.h.b16 %v3354
        %v6085 = vunpack.c.l.b16 %v3355
        %v6086 = vunpack.c.h.b16 %v3355
        %v6087 = vunpack.c.l.b16 %v3356
        %v6088 = vunpack.c.h.b16 %v3356
        %v6089 = vunpack.c.l.b16 %v3357
        %v6090 = vunpack.c.h.b16 %v3357
        %v6091 = vunpack.c.l.b16 %v3358
        %v6092 = vunpack.c.h.b16 %v3358
        %v6093 = vunpack.c.l.b16 %v3359
        %v6094 = vunpack.c.h.b16 %v3359
        %v6095 = vunpack.c.l.b16 %v3360
        %v6096 = vunpack.c.h.b16 %v3360
        %v6097 = vunpack.c.l.b16 %v3361
        %v6098 = vunpack.c.h.b16 %v3361
        %v6099 = vunpack.c.l.b16 %v3362
        %v6100 = vunpack.c.h.b16 %v3362
        %v6101 = vunpack.c.l.b16 %v3363
        %v6102 = vunpack.c.h.b16 %v3363
        %v6103 = vunpack.c.l.b16 %v3364
        %v6104 = vunpack.c.h.b16 %v3364
        %v6105 = vunpack.c.l.b16 %v3365
        %v6106 = vunpack.c.h.b16 %v3365
        %v6107 = vunpack.c.l.b16 %v3366
        %v6108 = vunpack.c.h.b16 %v3366
        %v6109 = vunpack.c.l.b16 %v3367
        %v6110 = vunpack.c.h.b16 %v3367
        %v6111 = vunpack.c.l.b16 %v3368
        %v6112 = vunpack.c.h.b16 %v3368
        %v6113 = vunpack.c.l.b16 %v3369
        %v6114 = vunpack.c.h.b16 %v3369
        %v6115 = vunpack.c.l.b16 %v3370
        %v6116 = vunpack.c.h.b16 %v3370
        %v6117 = vunpack.c.l.b16 %v3371
        %v6118 = vunpack.c.h.b16 %v3371
        %v6119 = vunpack.c.l.b16 %v3372
        %v6120 = vunpack.c.h.b16 %v3372
        %v6121 = vunpack.c.l.b16 %v3373
        %v6122 = vunpack.c.h.b16 %v3373
        %v6123 = vunpack.c.l.b16 %v3374
        %v6124 = vunpack.c.h.b16 %v3374
        %v6125 = vunpack.c.l.b16 %v3375
        %v6126 = vunpack.c.h.b16 %v3375
        %v6127 = vunpack.c.l.b16 %v3376
        %v6128 = vunpack.c.h.b16 %v3376
        %v6129 = vunpack.c.l.b16 %v3377
        %v6130 = vunpack.c.h.b16 %v3377
        %v6131 = vunpack.c.l.b16 %v3378
        %v6132 = vunpack.c.h.b16 %v3378
        %v6133 = vunpack.c.l.b16 %v3379
        %v6134 = vunpack.c.h.b16 %v3379
        %v6135 = vunpack.c.l.b16 %v3380
        %v6136 = vunpack.c.h.b16 %v3380
        %v6137 = vunpack.c.l.b16 %v3381
        %v6138 = vunpack.c.h.b16 %v3381
        %v6139 = vunpack.c.l.b16 %v3382
        %v6140 = vunpack.c.h.b16 %v3382
        %v6141 = vunpack.c.l.b16 %v3383
        %v6142 = vunpack.c.h.b16 %v3383
        %v6143 = vunpack.c.l.b16 %v3384
        %v6144 = vunpack.c.h.b16 %v3384
        %v6145 = vunpack.c.l.b16 %v3385
        %v6146 = vunpack.c.h.b16 %v3385
        %v6147 = vunpack.c.l.b16 %v3386
        %v6148 = vunpack.c.h.b16 %v3386
        %v6149 = vunpack.c.l.b16 %v3387
        %v6150 = vunpack.c.h.b16 %v3387
        %v6151 = vunpack.c.l.b16 %v3388
        %v6152 = vunpack.c.h.b16 %v3388
        %v6153 = vunpack.c.l.b16 %v3389
        %v6154 = vunpack.c.h.b16 %v3389
        %v6155 = vunpack.c.l.b16 %v3390
        %v6156 = vunpack.c.h.b16 %v3390
        %v6157 = vunpack.c.l.b16 %v3391
        %v6158 = vunpack.c.h.b16 %v3391
        %v6159 = vunpack.c.l.b16 %v3392
        %v6160 = vunpack.c.h.b16 %v3392
        %v6161 = vunpack.c.l.b16 %v3393
        %v6162 = vunpack.c.h.b16 %v3393
        %v6163 = vunpack.c.l.b16 %v3394
        %v6164 = vunpack.c.h.b16 %v3394
        %v6165 = vunpack.c.l.b16 %v3395
        %v6166 = vunpack.c.h.b16 %v3395
        %v6167 = vunpack.c.l.b16 %v3396
        %v6168 = vunpack.c.h.b16 %v3396
        %v6169 = vunpack.c.l.b16 %v3397
        %v6170 = vunpack.c.h.b16 %v3397
        %v6171 = vunpack.c.l.b16 %v3398
        %v6172 = vunpack.c.h.b16 %v3398
        %v6173 = vunpack.c.l.b16 %v3399
        %v6174 = vunpack.c.h.b16 %v3399
        %v6175 = vunpack.c.l.b16 %v3400
        %v6176 = vunpack.c.h.b16 %v3400
        %v6177 = vunpack.c.l.b16 %v3401
        %v6178 = vunpack.c.h.b16 %v3401
        %v6179 = vunpack.c.l.b16 %v3402
        %v6180 = vunpack.c.h.b16 %v3402
        %v6181 = vunpack.c.l.b16 %v3403
        %v6182 = vunpack.c.h.b16 %v3403
        %v6183 = vunpack.c.l.b16 %v3404
        %v6184 = vunpack.c.h.b16 %v3404
        %v6185 = vunpack.c.l.b16 %v3405
        %v6186 = vunpack.c.h.b16 %v3405
        %v6187 = vunpack.c.l.b16 %v3406
        %v6188 = vunpack.c.h.b16 %v3406
        %v6189 = vunpack.c.l.b16 %v3407
        %v6190 = vunpack.c.h.b16 %v3407
        %v6191 = vunpack.c.l.b16 %v3408
        %v6192 = vunpack.c.h.b16 %v3408
        %v6193 = vunpack.c.l.b16 %v3409
        %v6194 = vunpack.c.h.b16 %v3409
        %v6195 = vunpack.c.l.b16 %v3410
        %v6196 = vunpack.c.h.b16 %v3410
        %v6197 = vunpack.c.l.b16 %v3411
        %v6198 = vunpack.c.h.b16 %v3411
        %v6199 = vunpack.c.l.b16 %v3412
        %v6200 = vunpack.c.h.b16 %v3412
        %v6201 = vunpack.c.l.b16 %v3413
        %v6202 = vunpack.c.h.b16 %v3413
        %v6203 = vunpack.c.l.b16 %v3414
        %v6204 = vunpack.c.h.b16 %v3414
        %v6205 = vunpack.c.l.b16 %v3415
        %v6206 = vunpack.c.h.b16 %v3415
        %v6207 = vunpack.c.l.b16 %v3416
        %v6208 = vunpack.c.h.b16 %v3416
        %v6209 = vunpack.c.l.b16 %v3417
        %v6210 = vunpack.c.h.b16 %v3417
        %v6211 = vunpack.c.l.b16 %v3418
        %v6212 = vunpack.c.h.b16 %v3418
        %v6213 = vunpack.c.l.b16 %v3419
        %v6214 = vunpack.c.h.b16 %v3419
        %v6215 = vunpack.c.l.b16 %v3420
        %v6216 = vunpack.c.h.b16 %v3420
        %v6217 = vunpack.c.l.b16 %v3421
        %v6218 = vunpack.c.h.b16 %v3421
        %v6219 = vunpack.c.l.b16 %v3422
        %v6220 = vunpack.c.h.b16 %v3422
        %v6221 = vunpack.c.l.b16 %v3423
        %v6222 = vunpack.c.h.b16 %v3423
        %v6223 = vunpack.c.l.b16 %v3424
        %v6224 = vunpack.c.h.b16 %v3424
        %v6225 = vunpack.c.l.b16 %v3425
        %v6226 = vunpack.c.h.b16 %v3425
        %v6227 = vunpack.c.l.b16 %v3426
        %v6228 = vunpack.c.h.b16 %v3426
        %v6229 = vunpack.c.l.b16 %v3427
        %v6230 = vunpack.c.h.b16 %v3427
        %v6231 = vunpack.c.l.b16 %v3428
        %v6232 = vunpack.c.h.b16 %v3428
        %v6233 = vunpack.c.l.b16 %v3429
        %v6234 = vunpack.c.h.b16 %v3429
        %v6235 = vunpack.c.l.b16 %v3430
        %v6236 = vunpack.c.h.b16 %v3430
        %v6237 = vunpack.c.l.b16 %v3431
        %v6238 = vunpack.c.h.b16 %v3431
        %v6239 = vunpack.c.l.b16 %v3432
        %v6240 = vunpack.c.h.b16 %v3432
        %v6241 = vunpack.c.l.b16 %v3433
        %v6242 = vunpack.c.h.b16 %v3433
        %v6243 = vunpack.c.l.b16 %v3434
        %v6244 = vunpack.c.h.b16 %v3434
        %v6245 = vunpack.c.l.b16 %v3435
        %v6246 = vunpack.c.h.b16 %v3435
        %v6247 = vunpack.c.l.b16 %v3436
        %v6248 = vunpack.c.h.b16 %v3436
        %v6249 = vunpack.c.l.b16 %v3437
        %v6250 = vunpack.c.h.b16 %v3437
        %v6251 = vunpack.c.l.b16 %v3438
        %v6252 = vunpack.c.h.b16 %v3438
        %v6253 = vunpack.c.l.b16 %v3439
        %v6254 = vunpack.c.h.b16 %v3439
        %v6255 = vunpack.c.l.b16 %v3440
        %v6256 = vunpack.c.h.b16 %v3440
        %v6257 = vunpack.c.l.b16 %v3441
        %v6258 = vunpack.c.h.b16 %v3441
        %v6259 = vunpack.c.l.b16 %v3442
        %v6260 = vunpack.c.h.b16 %v3442
        %v6261 = vunpack.c.l.b16 %v3443
        %v6262 = vunpack.c.h.b16 %v3443
        %v6263 = vunpack.c.l.b16 %v3444
        %v6264 = vunpack.c.h.b16 %v3444
        %v6265 = vunpack.c.l.b16 %v3445
        %v6266 = vunpack.c.h.b16 %v3445
        %v6267 = vunpack.c.l.b16 %v3446
        %v6268 = vunpack.c.h.b16 %v3446
        %v6269 = vunpack.c.l.b16 %v3447
        %v6270 = vunpack.c.h.b16 %v3447
        %v6271 = vunpack.c.l.b16 %v3448
        %v6272 = vunpack.c.h.b16 %v3448
        %v6273 = vunpack.c.l.b16 %v3449
        %v6274 = vunpack.c.h.b16 %v3449
        %v6275 = vunpack.c.l.b16 %v3450
        %v6276 = vunpack.c.h.b16 %v3450
        %v6277 = vunpack.c.l.b16 %v3451
        %v6278 = vunpack.c.h.b16 %v3451
        %v6279 = vunpack.c.l.b16 %v3452
        %v6280 = vunpack.c.h.b16 %v3452
        %v6281 = vunpack.c.l.b16 %v3453
        %v6282 = vunpack.c.h.b16 %v3453
        %v6283 = vunpack.c.l.b16 %v3454
        %v6284 = vunpack.c.h.b16 %v3454
        %v6285 = vunpack.c.l.b16 %v3455
        %v6286 = vunpack.c.h.b16 %v3455
        %v6287 = vunpack.c.l.b16 %v3456
        %v6288 = vunpack.c.h.b16 %v3456
        %v6289 = vunpack.c.l.b16 %v3457
        %v6290 = vunpack.c.h.b16 %v3457
        %v6291 = vunpack.c.l.b16 %v3458
        %v6292 = vunpack.c.h.b16 %v3458
        %v6293 = vunpack.c.l.b16 %v3459
        %v6294 = vunpack.c.h.b16 %v3459
        %v6295 = vunpack.c.l.b16 %v3460
        %v6296 = vunpack.c.h.b16 %v3460
        %v6297 = vunpack.c.l.b16 %v3461
        %v6298 = vunpack.c.h.b16 %v3461
        %v6299 = vunpack.c.l.b16 %v3462
        %v6300 = vunpack.c.h.b16 %v3462
        %v6301 = vunpack.c.l.b16 %v3463
        %v6302 = vunpack.c.h.b16 %v3463
        %v6303 = vunpack.c.l.b16 %v3464
        %v6304 = vunpack.c.h.b16 %v3464
        %v6305 = vunpack.c.l.b16 %v3465
        %v6306 = vunpack.c.h.b16 %v3465
        %v6307 = vunpack.c.l.b16 %v3466
        %v6308 = vunpack.c.h.b16 %v3466
        %v6309 = vunpack.c.l.b16 %v3467
        %v6310 = vunpack.c.h.b16 %v3467
        %v6311 = vunpack.c.l.b16 %v3468
        %v6312 = vunpack.c.h.b16 %v3468
        %v6313 = vunpack.c.l.b16 %v3469
        %v6314 = vunpack.c.h.b16 %v3469
        %v6315 = vunpack.c.l.b16 %v3470
        %v6316 = vunpack.c.h.b16 %v3470
        %v6317 = vunpack.c.l.b16 %v3471
        %v6318 = vunpack.c.h.b16 %v3471
        %v6319 = vunpack.c.l.b16 %v3472
        %v6320 = vunpack.c.h.b16 %v3472
        %v6321 = vunpack.c.l.b16 %v3473
        %v6322 = vunpack.c.h.b16 %v3473
        %v6323 = vunpack.c.l.b16 %v3474
        %v6324 = vunpack.c.h.b16 %v3474
        %v6325 = vunpack.c.l.b16 %v3475
        %v6326 = vunpack.c.h.b16 %v3475
        %v6327 = vunpack.c.l.b16 %v3476
        %v6328 = vunpack.c.h.b16 %v3476
        %v6329 = vunpack.c.l.b16 %v3477
        %v6330 = vunpack.c.h.b16 %v3477
        %v6331 = vunpack.c.l.b16 %v3478
        %v6332 = vunpack.c.h.b16 %v3478
        %v6333 = vunpack.c.l.b16 %v3479
        %v6334 = vunpack.c.h.b16 %v3479
        %v6335 = vunpack.c.l.b16 %v3480
        %v6336 = vunpack.c.h.b16 %v3480
        %v6337 = vunpack.c.l.b16 %v3481
        %v6338 = vunpack.c.h.b16 %v3481
        %v6339 = vunpack.c.l.b16 %v3482
        %v6340 = vunpack.c.h.b16 %v3482
        %v6341 = vunpack.c.l.b16 %v3483
        %v6342 = vunpack.c.h.b16 %v3483
        %v6343 = vunpack.c.l.b16 %v3484
        %v6344 = vunpack.c.h.b16 %v3484
        %v6345 = vunpack.c.l.b16 %v3485
        %v6346 = vunpack.c.h.b16 %v3485
        %v6347 = vunpack.c.l.b16 %v3486
        %v6348 = vunpack.c.h.b16 %v3486
        %v6349 = vunpack.c.l.b16 %v3487
        %v6350 = vunpack.c.h.b16 %v3487
        %v6351 = vunpack.c.l.b16 %v3488
        %v6352 = vunpack.c.h.b16 %v3488
        %v6353 = vunpack.c.l.b16 %v3489
        %v6354 = vunpack.c.h.b16 %v3489
        %v6355 = vunpack.c.l.b16 %v3490
        %v6356 = vunpack.c.h.b16 %v3490
        %v6357 = vunpack.c.l.b16 %v3491
        %v6358 = vunpack.c.h.b16 %v3491
        %v6359 = vunpack.c.l.b16 %v3492
        %v6360 = vunpack.c.h.b16 %v3492
        %v6361 = vunpack.c.l.b16 %v3493
        %v6362 = vunpack.c.h.b16 %v3493
        %v6363 = vunpack.c.l.b16 %v3494
        %v6364 = vunpack.c.h.b16 %v3494
        %v6365 = vunpack.c.l.b16 %v3495
        %v6366 = vunpack.c.h.b16 %v3495
        %v6367 = vunpack.c.l.b16 %v3496
        %v6368 = vunpack.c.h.b16 %v3496
        %v6369 = vunpack.c.l.b16 %v3497
        %v6370 = vunpack.c.h.b16 %v3497
        %v6371 = vunpack.c.l.b16 %v3498
        %v6372 = vunpack.c.h.b16 %v3498
        %v6373 = vunpack.c.l.b16 %v3499
        %v6374 = vunpack.c.h.b16 %v3499
        %v6375 = vunpack.c.l.b16 %v3500
        %v6376 = vunpack.c.h.b16 %v3500
        %v6377 = vunpack.c.l.b16 %v3501
        %v6378 = vunpack.c.h.b16 %v3501
        %v6379 = vunpack.c.l.b16 %v3502
        %v6380 = vunpack.c.h.b16 %v3502
        %v6381 = vunpack.c.l.b16 %v3503
        %v6382 = vunpack.c.h.b16 %v3503
        %v6383 = vunpack.c.l.b16 %v3504
        %v6384 = vunpack.c.h.b16 %v3504
        %v6385 = vunpack.c.l.b16 %v3505
        %v6386 = vunpack.c.h.b16 %v3505
        %v6387 = vunpack.c.l.b16 %v3506
        %v6388 = vunpack.c.h.b16 %v3506
        %v6389 = vunpack.c.l.b16 %v3507
        %v6390 = vunpack.c.h.b16 %v3507
        %v6391 = vunpack.c.l.b16 %v3508
        %v6392 = vunpack.c.h.b16 %v3508
        %v6393 = vunpack.c.l.b16 %v3509
        %v6394 = vunpack.c.h.b16 %v3509
        %v6395 = vunpack.c.l.b16 %v3510
        %v6396 = vunpack.c.h.b16 %v3510
        %v6397 = vunpack.c.l.b16 %v3511
        %v6398 = vunpack.c.h.b16 %v3511
        %v6399 = vunpack.c.l.b16 %v3512
        %v6400 = vunpack.c.h.b16 %v3512
        %v6401 = vunpack.c.l.b16 %v3513
        %v6402 = vunpack.c.h.b16 %v3513
        %v6403 = vunpack.c.l.b16 %v3514
        %v6404 = vunpack.c.h.b16 %v3514
        %v6405 = vunpack.c.l.b16 %v3515
        %v6406 = vunpack.c.h.b16 %v3515
        %v6407 = vunpack.c.l.b16 %v3516
        %v6408 = vunpack.c.h.b16 %v3516
        %v6409 = vunpack.c.l.b16 %v3517
        %v6410 = vunpack.c.h.b16 %v3517
        %v6411 = vunpack.c.l.b16 %v3518
        %v6412 = vunpack.c.h.b16 %v3518
        %v6413 = vunpack.c.l.b16 %v3519
        %v6414 = vunpack.c.h.b16 %v3519
        %v6415 = vunpack.c.l.b16 %v3520
        %v6416 = vunpack.c.h.b16 %v3520
        %v6417 = vunpack.c.l.b16 %v3521
        %v6418 = vunpack.c.h.b16 %v3521
        %v6419 = vunpack.c.l.b16 %v3522
        %v6420 = vunpack.c.h.b16 %v3522
        %v6421 = vunpack.c.l.b16 %v3523
        %v6422 = vunpack.c.h.b16 %v3523
        %v6423 = vunpack.c.l.b16 %v3524
        %v6424 = vunpack.c.h.b16 %v3524
        %v6425 = vunpack.c.l.b16 %v3525
        %v6426 = vunpack.c.h.b16 %v3525
        %v6427 = vunpack.c.l.b16 %v3526
        %v6428 = vunpack.c.h.b16 %v3526
        %v6429 = vunpack.c.l.b16 %v3527
        %v6430 = vunpack.c.h.b16 %v3527
        %v6431 = vunpack.c.l.b16 %v3528
        %v6432 = vunpack.c.h.b16 %v3528
        %v6433 = vunpack.c.l.b16 %v3529
        %v6434 = vunpack.c.h.b16 %v3529
        %v6435 = vunpack.c.l.b16 %v3530
        %v6436 = vunpack.c.h.b16 %v3530
        %v6437 = vunpack.c.l.b16 %v3531
        %v6438 = vunpack.c.h.b16 %v3531
        %v6439 = vunpack.c.l.b16 %v3532
        %v6440 = vunpack.c.h.b16 %v3532
        %v6441 = vunpack.c.l.b16 %v3533
        %v6442 = vunpack.c.h.b16 %v3533
        %v6443 = vunpack.c.l.b16 %v3534
        %v6444 = vunpack.c.h.b16 %v3534
        %v6445 = vunpack.c.l.b16 %v3535
        %v6446 = vunpack.c.h.b16 %v3535
        %v6447 = vunpack.c.l.b16 %v3536
        %v6448 = vunpack.c.h.b16 %v3536
        %v6449 = vunpack.c.l.b16 %v3537
        %v6450 = vunpack.c.h.b16 %v3537
        %v6451 = vunpack.c.l.b16 %v3538
        %v6452 = vunpack.c.h.b16 %v3538
        %v6453 = vunpack.c.l.b16 %v3539
        %v6454 = vunpack.c.h.b16 %v3539
        %v6455 = vunpack.c.l.b16 %v3540
        %v6456 = vunpack.c.h.b16 %v3540
        %v6457 = vunpack.c.l.b16 %v3541
        %v6458 = vunpack.c.h.b16 %v3541
        %v6459 = vunpack.c.l.b16 %v3542
        %v6460 = vunpack.c.h.b16 %v3542
        %v6461 = vunpack.c.l.b16 %v3543
        %v6462 = vunpack.c.h.b16 %v3543
        %v6463 = vunpack.c.l.b16 %v3544
        %v6464 = vunpack.c.h.b16 %v3544
        %v6465 = vunpack.c.l.b16 %v3545
        %v6466 = vunpack.c.h.b16 %v3545
        %v6467 = vunpack.c.l.b16 %v3546
        %v6468 = vunpack.c.h.b16 %v3546
        %v6469 = vunpack.c.l.b16 %v3547
        %v6470 = vunpack.c.h.b16 %v3547
        %v6471 = vunpack.c.l.b16 %v3548
        %v6472 = vunpack.c.h.b16 %v3548
        %v6473 = vunpack.c.l.b16 %v3549
        %v6474 = vunpack.c.h.b16 %v3549
        %v6475 = vunpack.c.l.b16 %v3550
        %v6476 = vunpack.c.h.b16 %v3550
        %v6477 = vunpack.c.l.b16 %v3551
        %v6478 = vunpack.c.h.b16 %v3551
        %v6479 = vunpack.c.l.b16 %v3552
        %v6480 = vunpack.c.h.b16 %v3552
        %v6481 = vunpack.c.l.b16 %v3553
        %v6482 = vunpack.c.h.b16 %v3553
        %v6483 = vunpack.c.l.b16 %v3554
        %v6484 = vunpack.c.h.b16 %v3554
        %v6485 = vunpack.c.l.b16 %v3555
        %v6486 = vunpack.c.h.b16 %v3555
        %v6487 = vunpack.c.l.b16 %v3556
        %v6488 = vunpack.c.h.b16 %v3556
        %v6489 = vunpack.c.l.b16 %v3557
        %v6490 = vunpack.c.h.b16 %v3557
        %v6491 = vunpack.c.l.b16 %v3558
        %v6492 = vunpack.c.h.b16 %v3558
        %v6493 = vunpack.c.l.b16 %v3559
        %v6494 = vunpack.c.h.b16 %v3559
        %v6495 = vunpack.c.l.b16 %v3560
        %v6496 = vunpack.c.h.b16 %v3560
        %v6497 = vunpack.c.l.b16 %v3561
        %v6498 = vunpack.c.h.b16 %v3561
        %v6499 = vunpack.c.l.b16 %v3562
        %v6500 = vunpack.c.h.b16 %v3562
        %v6501 = vunpack.c.l.b16 %v3563
        %v6502 = vunpack.c.h.b16 %v3563
        %v6503 = vunpack.c.l.b16 %v3564
        %v6504 = vunpack.c.h.b16 %v3564
        %v6505 = vunpack.c.l.b16 %v3565
        %v6506 = vunpack.c.h.b16 %v3565
        %v6507 = vunpack.c.l.b16 %v3566
        %v6508 = vunpack.c.h.b16 %v3566
        %v6509 = vunpack.c.l.b16 %v3567
        %v6510 = vunpack.c.h.b16 %v3567
        %v6511 = vunpack.c.l.b16 %v3568
        %v6512 = vunpack.c.h.b16 %v3568
        %v6513 = vunpack.c.l.b16 %v3569
        %v6514 = vunpack.c.h.b16 %v3569
        %v6515 = vunpack.c.l.b16 %v3570
        %v6516 = vunpack.c.h.b16 %v3570
        %v6517 = vunpack.c.l.b16 %v3571
        %v6518 = vunpack.c.h.b16 %v3571
        %v6519 = vunpack.c.l.b16 %v3572
        %v6520 = vunpack.c.h.b16 %v3572
        %v6521 = vunpack.c.l.b16 %v3573
        %v6522 = vunpack.c.h.b16 %v3573
        %v6523 = vunpack.c.l.b16 %v3574
        %v6524 = vunpack.c.h.b16 %v3574
        %v6525 = vunpack.c.l.b16 %v3575
        %v6526 = vunpack.c.h.b16 %v3575
        %v6527 = vunpack.c.l.b16 %v3576
        %v6528 = vunpack.c.h.b16 %v3576
        %v6529 = vunpack.c.l.b16 %v3577
        %v6530 = vunpack.c.h.b16 %v3577
        %v6531 = vunpack.c.l.b16 %v3578
        %v6532 = vunpack.c.h.b16 %v3578
        %v6533 = vunpack.c.l.b16 %v3579
        %v6534 = vunpack.c.h.b16 %v3579
        %v6535 = vunpack.c.l.b16 %v3580
        %v6536 = vunpack.c.h.b16 %v3580
        %v6537 = vunpack.c.l.b16 %v3581
        %v6538 = vunpack.c.h.b16 %v3581
        %v6539 = vunpack.c.l.b16 %v3582
        %v6540 = vunpack.c.h.b16 %v3582
        %v6541 = vunpack.c.l.b16 %v3583
        %v6542 = vunpack.c.h.b16 %v3583
        %v6543 = vunpack.c.l.b16 %v3584
        %v6544 = vunpack.c.h.b16 %v3584
        %v6545 = vunpack.c.l.b16 %v3585
        %v6546 = vunpack.c.h.b16 %v3585
        %v6547 = vunpack.c.l.b16 %v3586
        %v6548 = vunpack.c.h.b16 %v3586
        %v6549 = vunpack.c.l.b16 %v3587
        %v6550 = vunpack.c.h.b16 %v3587
        %v6551 = vunpack.c.l.b16 %v3588
        %v6552 = vunpack.c.h.b16 %v3588
        %v6553 = vunpack.c.l.b16 %v3589
        %v6554 = vunpack.c.h.b16 %v3589
        %v6555 = vunpack.c.l.b16 %v3590
        %v6556 = vunpack.c.h.b16 %v3590
        %v6557 = vunpack.c.l.b16 %v3591
        %v6558 = vunpack.c.h.b16 %v3591
        %v6559 = vunpack.c.l.b16 %v3592
        %v6560 = vunpack.c.h.b16 %v3592
        %v6561 = vunpack.c.l.b16 %v3593
        %v6562 = vunpack.c.h.b16 %v3593
        %v6563 = vunpack.c.l.b16 %v3594
        %v6564 = vunpack.c.h.b16 %v3594
        %v6565 = vunpack.c.l.b16 %v3595
        %v6566 = vunpack.c.h.b16 %v3595
        %v6567 = vunpack.c.l.b16 %v3596
        %v6568 = vunpack.c.h.b16 %v3596
        %v6569 = vunpack.c.l.b16 %v3597
        %v6570 = vunpack.c.h.b16 %v3597
        %v6571 = vunpack.c.l.b16 %v3598
        %v6572 = vunpack.c.h.b16 %v3598
        %v6573 = vunpack.c.l.b16 %v3599
        %v6574 = vunpack.c.h.b16 %v3599
        %v6575 = vunpack.c.l.b16 %v3600
        %v6576 = vunpack.c.h.b16 %v3600
        %v6577 = vunpack.c.l.b16 %v3601
        %v6578 = vunpack.c.h.b16 %v3601
        %v6579 = vunpack.c.l.b16 %v3602
        %v6580 = vunpack.c.h.b16 %v3602
        %v6581 = vunpack.c.l.b16 %v3603
        %v6582 = vunpack.c.h.b16 %v3603
        %v6583 = vunpack.c.l.b16 %v3604
        %v6584 = vunpack.c.h.b16 %v3604
        %v6585 = vunpack.c.l.b16 %v3605
        %v6586 = vunpack.c.h.b16 %v3605
        %v6587 = vunpack.c.l.b16 %v3606
        %v6588 = vunpack.c.h.b16 %v3606
        %v6589 = vunpack.c.l.b16 %v3607
        %v6590 = vunpack.c.h.b16 %v3607
        %v6591 = vunpack.c.l.b16 %v3608
        %v6592 = vunpack.c.h.b16 %v3608
        %v6593 = vunpack.c.l.b16 %v3609
        %v6594 = vunpack.c.h.b16 %v3609
        %v6595 = vunpack.c.l.b16 %v3610
        %v6596 = vunpack.c.h.b16 %v3610
        %v6597 = vunpack.c.l.b16 %v3611
        %v6598 = vunpack.c.h.b16 %v3611
        %v6599 = vunpack.c.l.b16 %v3612
        %v6600 = vunpack.c.h.b16 %v3612
        %v6601 = vunpack.c.l.b16 %v3613
        %v6602 = vunpack.c.h.b16 %v3613
        %v6603 = vunpack.c.l.b16 %v3614
        %v6604 = vunpack.c.h.b16 %v3614
        %v6605 = vunpack.c.l.b16 %v3615
        %v6606 = vunpack.c.h.b16 %v3615
        %v6607 = vunpack.c.l.b16 %v3616
        %v6608 = vunpack.c.h.b16 %v3616
        %v6609 = vunpack.c.l.b16 %v3617
        %v6610 = vunpack.c.h.b16 %v3617
        %v6611 = vunpack.c.l.b16 %v3618
        %v6612 = vunpack.c.h.b16 %v3618
        %v6613 = vunpack.c.l.b16 %v3619
        %v6614 = vunpack.c.h.b16 %v3619
        %v6615 = vunpack.c.l.b16 %v3620
        %v6616 = vunpack.c.h.b16 %v3620
        %v6617 = vunpack.c.l.b16 %v3621
        %v6618 = vunpack.c.h.b16 %v3621
        %v6619 = vunpack.c.l.b16 %v3622
        %v6620 = vunpack.c.h.b16 %v3622
        %v6621 = vunpack.c.l.b16 %v3623
        %v6622 = vunpack.c.h.b16 %v3623
        %v6623 = vunpack.c.l.b16 %v3624
        %v6624 = vunpack.c.h.b16 %v3624
        %v6625 = vunpack.c.l.b16 %v3625
        %v6626 = vunpack.c.h.b16 %v3625
        %v6627 = vunpack.c.l.b16 %v3626
        %v6628 = vunpack.c.h.b16 %v3626
        %v6629 = vunpack.c.l.b16 %v3627
        %v6630 = vunpack.c.h.b16 %v3627
        %v6631 = vunpack.c.l.b16 %v3628
        %v6632 = vunpack.c.h.b16 %v3628
        %v6633 = vunpack.c.l.b16 %v3629
        %v6634 = vunpack.c.h.b16 %v3629
        %v6635 = vunpack.c.l.b16 %v3630
        %v6636 = vunpack.c.h.b16 %v3630
        %v6637 = vunpack.c.l.b16 %v3631
        %v6638 = vunpack.c.h.b16 %v3631
        %v6639 = vunpack.c.l.b16 %v3632
        %v6640 = vunpack.c.h.b16 %v3632
        %v6641 = vunpack.c.l.b16 %v3633
        %v6642 = vunpack.c.h.b16 %v3633
        %v6643 = vunpack.c.l.b16 %v3634
        %v6644 = vunpack.c.h.b16 %v3634
        %v6645 = vunpack.c.l.b16 %v3635
        %v6646 = vunpack.c.h.b16 %v3635
        %v6647 = vunpack.c.l.b16 %v3636
        %v6648 = vunpack.c.h.b16 %v3636
        %v6649 = vunpack.c.l.b16 %v3637
        %v6650 = vunpack.c.h.b16 %v3637
        %v6651 = vunpack.c.l.b16 %v3638
        %v6652 = vunpack.c.h.b16 %v3638
        %v6653 = vunpack.c.l.b16 %v3639
        %v6654 = vunpack.c.h.b16 %v3639
        %v6655 = vunpack.c.l.b16 %v3640
        %v6656 = vunpack.c.h.b16 %v3640
        %v6657 = vunpack.c.l.b16 %v3641
        %v6658 = vunpack.c.h.b16 %v3641
        %v6659 = vunpack.c.l.b16 %v3642
        %v6660 = vunpack.c.h.b16 %v3642
        %v6661 = vunpack.c.l.b16 %v3643
        %v6662 = vunpack.c.h.b16 %v3643
        %v6663 = vunpack.c.l.b16 %v3644
        %v6664 = vunpack.c.h.b16 %v3644
        %v6665 = vunpack.c.l.b16 %v3645
        %v6666 = vunpack.c.h.b16 %v3645
        %v6667 = vunpack.c.l.b16 %v3646
        %v6668 = vunpack.c.h.b16 %v3646
        %v6669 = vunpack.c.l.b16 %v3647
        %v6670 = vunpack.c.h.b16 %v3647
        %v6671 = vunpack.c.l.b16 %v3648
        %v6672 = vunpack.c.h.b16 %v3648
        %v6673 = vunpack.c.l.b16 %v3649
        %v6674 = vunpack.c.h.b16 %v3649
        %v6675 = vunpack.c.l.b16 %v3650
        %v6676 = vunpack.c.h.b16 %v3650
        %v6677 = vunpack.c.l.b16 %v3651
        %v6678 = vunpack.c.h.b16 %v3651
        %v6679 = vunpack.c.l.b16 %v3652
        %v6680 = vunpack.c.h.b16 %v3652
        %v6681 = vunpack.c.l.b16 %v3653
        %v6682 = vunpack.c.h.b16 %v3653
        %v6683 = vunpack.c.l.b16 %v3654
        %v6684 = vunpack.c.h.b16 %v3654
        %v6685 = vunpack.c.l.b16 %v3655
        %v6686 = vunpack.c.h.b16 %v3655
        %v6687 = vunpack.c.l.b16 %v3656
        %v6688 = vunpack.c.h.b16 %v3656
        %v6689 = vunpack.c.l.b16 %v3657
        %v6690 = vunpack.c.h.b16 %v3657
        %v6691 = vunpack.c.l.b16 %v3658
        %v6692 = vunpack.c.h.b16 %v3658
        %v6693 = vunpack.c.l.b16 %v3659
        %v6694 = vunpack.c.h.b16 %v3659
        %v6695 = vunpack.c.l.b16 %v3660
        %v6696 = vunpack.c.h.b16 %v3660
        %v6697 = vunpack.c.l.b16 %v3661
        %v6698 = vunpack.c.h.b16 %v3661
        %v6699 = vunpack.c.l.b16 %v3662
        %v6700 = vunpack.c.h.b16 %v3662
        %v6701 = vunpack.c.l.b16 %v3663
        %v6702 = vunpack.c.h.b16 %v3663
        %v6703 = vunpack.c.l.b16 %v3664
        %v6704 = vunpack.c.h.b16 %v3664
        %v6705 = vunpack.c.l.b16 %v3665
        %v6706 = vunpack.c.h.b16 %v3665
        %v6707 = vunpack.c.l.b16 %v3666
        %v6708 = vunpack.c.h.b16 %v3666
        %v6709 = vunpack.c.l.b16 %v3667
        %v6710 = vunpack.c.h.b16 %v3667
        %v6711 = vunpack.c.l.b16 %v3668
        %v6712 = vunpack.c.h.b16 %v3668
        %v6713 = vunpack.c.l.b16 %v3669
        %v6714 = vunpack.c.h.b16 %v3669
        %v6715 = vunpack.c.l.b16 %v3670
        %v6716 = vunpack.c.h.b16 %v3670
        %v6717 = vunpack.c.l.b16 %v3671
        %v6718 = vunpack.c.h.b16 %v3671
        %v6719 = vunpack.c.l.b16 %v3672
        %v6720 = vunpack.c.h.b16 %v3672
        %v6721 = vunpack.c.l.b16 %v3673
        %v6722 = vunpack.c.h.b16 %v3673
        %v6723 = vunpack.c.l.b16 %v3674
        %v6724 = vunpack.c.h.b16 %v3674
        %v6725 = vunpack.c.l.b16 %v3675
        %v6726 = vunpack.c.h.b16 %v3675
        %v6727 = vunpack.c.l.b16 %v3676
        %v6728 = vunpack.c.h.b16 %v3676
        %v6729 = vunpack.c.l.b16 %v3677
        %v6730 = vunpack.c.h.b16 %v3677
        %v6731 = vunpack.c.l.b16 %v3678
        %v6732 = vunpack.c.h.b16 %v3678
        %v6733 = vunpack.c.l.b16 %v3679
        %v6734 = vunpack.c.h.b16 %v3679
        %v6735 = vunpack.c.l.b16 %v3680
        %v6736 = vunpack.c.h.b16 %v3680
        %v6737 = vunpack.c.l.b16 %v3681
        %v6738 = vunpack.c.h.b16 %v3681
        %v6739 = vunpack.c.l.b16 %v3682
        %v6740 = vunpack.c.h.b16 %v3682
        %v6741 = vunpack.c.l.b16 %v3683
        %v6742 = vunpack.c.h.b16 %v3683
        %v6743 = vunpack.c.l.b16 %v3684
        %v6744 = vunpack.c.h.b16 %v3684
        %v6745 = vunpack.c.l.b16 %v3685
        %v6746 = vunpack.c.h.b16 %v3685
        %v6747 = vunpack.c.l.b16 %v3686
        %v6748 = vunpack.c.h.b16 %v3686
        %v6749 = vunpack.c.l.b16 %v3687
        %v6750 = vunpack.c.h.b16 %v3687
        %v6751 = vunpack.c.l.b16 %v3688
        %v6752 = vunpack.c.h.b16 %v3688
        %v6753 = vunpack.c.l.b16 %v3689
        %v6754 = vunpack.c.h.b16 %v3689
        %v6755 = vunpack.c.l.b16 %v3690
        %v6756 = vunpack.c.h.b16 %v3690
        %v6757 = vunpack.c.l.b16 %v3691
        %v6758 = vunpack.c.h.b16 %v3691
        %v6759 = vunpack.c.l.b16 %v3692
        %v6760 = vunpack.c.h.b16 %v3692
        %v6761 = vunpack.c.l.b16 %v3693
        %v6762 = vunpack.c.h.b16 %v3693
        %v6763 = vunpack.c.l.b16 %v3694
        %v6764 = vunpack.c.h.b16 %v3694
        %v6765 = vunpack.c.l.b16 %v3695
        %v6766 = vunpack.c.h.b16 %v3695
        %v6767 = vunpack.c.l.b16 %v3696
        %v6768 = vunpack.c.h.b16 %v3696
        %v6769 = vunpack.c.l.b16 %v3697
        %v6770 = vunpack.c.h.b16 %v3697
        %v6771 = vunpack.c.l.b16 %v3698
        %v6772 = vunpack.c.h.b16 %v3698
        %v6773 = vunpack.c.l.b16 %v3699
        %v6774 = vunpack.c.h.b16 %v3699
        %v6775 = vunpack.c.l.b16 %v3700
        %v6776 = vunpack.c.h.b16 %v3700
        %v6777 = vunpack.c.l.b16 %v3701
        %v6778 = vunpack.c.h.b16 %v3701
        %v6779 = vunpack.c.l.b16 %v3702
        %v6780 = vunpack.c.h.b16 %v3702
        %v6781 = vunpack.c.l.b16 %v3703
        %v6782 = vunpack.c.h.b16 %v3703
        %v6783 = vunpack.c.l.b16 %v3704
        %v6784 = vunpack.c.h.b16 %v3704
        %v6785 = vunpack.c.l.b16 %v3705
        %v6786 = vunpack.c.h.b16 %v3705
        %v6787 = vunpack.c.l.b16 %v3706
        %v6788 = vunpack.c.h.b16 %v3706
        %v6789 = vunpack.c.l.b16 %v3707
        %v6790 = vunpack.c.h.b16 %v3707
        %v6791 = vunpack.c.l.b16 %v3708
        %v6792 = vunpack.c.h.b16 %v3708
        %v6793 = vunpack.c.l.b16 %v3709
        %v6794 = vunpack.c.h.b16 %v3709
        %v6795 = vunpack.c.l.b16 %v3710
        %v6796 = vunpack.c.h.b16 %v3710
        %v6797 = vunpack.c.l.b16 %v3711
        %v6798 = vunpack.c.h.b16 %v3711
        %v6799 = vunpack.c.l.b16 %v3712
        %v6800 = vunpack.c.h.b16 %v3712
        %v6801 = vunpack.c.l.b16 %v3713
        %v6802 = vunpack.c.h.b16 %v3713
        %v6803 = vunpack.c.l.b16 %v3714
        %v6804 = vunpack.c.h.b16 %v3714
        %v6805 = vunpack.c.l.b16 %v3715
        %v6806 = vunpack.c.h.b16 %v3715
        %v6807 = vunpack.c.l.b16 %v3716
        %v6808 = vunpack.c.h.b16 %v3716
        %v6809 = vunpack.c.l.b16 %v3717
        %v6810 = vunpack.c.h.b16 %v3717
        %v6811 = vunpack.c.l.b16 %v3718
        %v6812 = vunpack.c.h.b16 %v3718
        %v6813 = vunpack.c.l.b16 %v3719
        %v6814 = vunpack.c.h.b16 %v3719
        %v6815 = vunpack.c.l.b16 %v3720
        %v6816 = vunpack.c.h.b16 %v3720
        %v6817 = vunpack.c.l.b16 %v3721
        %v6818 = vunpack.c.h.b16 %v3721
        %v6819 = vunpack.c.l.b16 %v3722
        %v6820 = vunpack.c.h.b16 %v3722
        %v6821 = vunpack.c.l.b16 %v3723
        %v6822 = vunpack.c.h.b16 %v3723
        %v6823 = vunpack.c.l.b16 %v3724
        %v6824 = vunpack.c.h.b16 %v3724
        %v6825 = vunpack.c.l.b16 %v3725
        %v6826 = vunpack.c.h.b16 %v3725
        %v6827 = vunpack.c.l.b16 %v3726
        %v6828 = vunpack.c.h.b16 %v3726
        %v6829 = vunpack.c.l.b16 %v3727
        %v6830 = vunpack.c.h.b16 %v3727
        %v6831 = vunpack.c.l.b16 %v3728
        %v6832 = vunpack.c.h.b16 %v3728
        %v6833 = vunpack.c.l.b16 %v3729
        %v6834 = vunpack.c.h.b16 %v3729
        %v6835 = vunpack.c.l.b16 %v3730
        %v6836 = vunpack.c.h.b16 %v3730
        %v6837 = vunpack.c.l.b16 %v3731
        %v6838 = vunpack.c.h.b16 %v3731
        %v6839 = vunpack.c.l.b16 %v3732
        %v6840 = vunpack.c.h.b16 %v3732
        %v6841 = vunpack.c.l.b16 %v3733
        %v6842 = vunpack.c.h.b16 %v3733
        %v6843 = vunpack.c.l.b16 %v3734
        %v6844 = vunpack.c.h.b16 %v3734
        %v6845 = vunpack.c.l.b16 %v3735
        %v6846 = vunpack.c.h.b16 %v3735
        %v6847 = vunpack.c.l.b16 %v3736
        %v6848 = vunpack.c.h.b16 %v3736
        %v6849 = vunpack.c.l.b16 %v3737
        %v6850 = vunpack.c.h.b16 %v3737
        %v6851 = vunpack.c.l.b16 %v3738
        %v6852 = vunpack.c.h.b16 %v3738
        %v6853 = vpack.c.b16 %v4813, %v4805
        %v6854 = vpack.c.b16 %v4814, %v4806
        %v6855 = vpack.c.b16 %v4815, %v4807
        %v6856 = vpack.c.b16 %v4816, %v4808
        %v6857 = vpack.c.b16 %v4817, %v4809
        %v6858 = vpack.c.b16 %v4818, %v4810
        %v6859 = vpack.c.b16 %v4819, %v4811
        %v6860 = vpack.c.b16 %v4820, %v4812
        %v6861 = vpack.c.b16 %v4829, %v4821
        %v6862 = vpack.c.b16 %v4830, %v4822
        %v6863 = vpack.c.b16 %v4831, %v4823
        %v6864 = vpack.c.b16 %v4832, %v4824
        %v6865 = vpack.c.b16 %v4833, %v4825
        %v6866 = vpack.c.b16 %v4834, %v4826
        %v6867 = vpack.c.b16 %v4835, %v4827
        %v6868 = vpack.c.b16 %v4836, %v4828
        %v6869 = vpack.c.b16 %v4845, %v4837
        %v6870 = vpack.c.b16 %v4846, %v4838
        %v6871 = vpack.c.b16 %v4847, %v4839
        %v6872 = vpack.c.b16 %v4848, %v4840
        %v6873 = vpack.c.b16 %v4849, %v4841
        %v6874 = vpack.c.b16 %v4850, %v4842
        %v6875 = vpack.c.b16 %v4851, %v4843
        %v6876 = vpack.c.b16 %v4852, %v4844
        %v6877 = vpack.c.b16 %v4861, %v4853
        %v6878 = vpack.c.b16 %v4862, %v4854
        %v6879 = vpack.c.b16 %v4863, %v4855
        %v6880 = vpack.c.b16 %v4864, %v4856
        %v6881 = vpack.c.b16 %v4865, %v4857
        %v6882 = vpack.c.b16 %v4866, %v4858
        %v6883 = vpack.c.b16 %v4867, %v4859
        %v6884 = vpack.c.b16 %v4868, %v4860
        %v6885 = vpack.c.b16 %v4877, %v4869
        %v6886 = vpack.c.b16 %v4878, %v4870
        %v6887 = vpack.c.b16 %v4879, %v4871
        %v6888 = vpack.c.b16 %v4880, %v4872
        %v6889 = vpack.c.b16 %v4881, %v4873
        %v6890 = vpack.c.b16 %v4882, %v4874
        %v6891 = vpack.c.b16 %v4883, %v4875
        %v6892 = vpack.c.b16 %v4884, %v4876
        %v6893 = vpack.c.b16 %v4893, %v4885
        %v6894 = vpack.c.b16 %v4894, %v4886
        %v6895 = vpack.c.b16 %v4895, %v4887
        %v6896 = vpack.c.b16 %v4896, %v4888
        %v6897 = vpack.c.b16 %v4897, %v4889
        %v6898 = vpack.c.b16 %v4898, %v4890
        %v6899 = vpack.c.b16 %v4899, %v4891
        %v6900 = vpack.c.b16 %v4900, %v4892
        %v6901 = vpack.c.b16 %v4909, %v4901
        %v6902 = vpack.c.b16 %v4910, %v4902
        %v6903 = vpack.c.b16 %v4911, %v4903
        %v6904 = vpack.c.b16 %v4912, %v4904
        %v6905 = vpack.c.b16 %v4913, %v4905
        %v6906 = vpack.c.b16 %v4914, %v4906
        %v6907 = vpack.c.b16 %v4915, %v4907
        %v6908 = vpack.c.b16 %v4916, %v4908
        %v6909 = vpack.c.b16 %v4925, %v4917
        %v6910 = vpack.c.b16 %v4926, %v4918
        %v6911 = vpack.c.b16 %v4927, %v4919
        %v6912 = vpack.c.b16 %v4928, %v4920
        %v6913 = vpack.c.b16 %v4929, %v4921
        %v6914 = vpack.c.b16 %v4930, %v4922
        %v6915 = vpack.c.b16 %v4931, %v4923
        %v6916 = vpack.c.b16 %v4932, %v4924
        %v6917 = vpack.c.b16 %v4941, %v4933
        %v6918 = vpack.c.b16 %v4942, %v4934
        %v6919 = vpack.c.b16 %v4943, %v4935
        %v6920 = vpack.c.b16 %v4944, %v4936
        %v6921 = vpack.c.b16 %v4945, %v4937
        %v6922 = vpack.c.b16 %v4946, %v4938
        %v6923 = vpack.c.b16 %v4947, %v4939
        %v6924 = vpack.c.b16 %v4948, %v4940
        %v6925 = vpack.c.b16 %v4957, %v4949
        %v6926 = vpack.c.b16 %v4958, %v4950
        %v6927 = vpack.c.b16 %v4959, %v4951
        %v6928 = vpack.c.b16 %v4960, %v4952
        %v6929 = vpack.c.b16 %v4961, %v4953
        %v6930 = vpack.c.b16 %v4962, %v4954
        %v6931 = vpack.c.b16 %v4963, %v4955
        %v6932 = vpack.c.b16 %v4964, %v4956
        %v6933 = vpack.c.b16 %v4973, %v4965
        %v6934 = vpack.c.b16 %v4974, %v4966
        %v6935 = vpack.c.b16 %v4975, %v4967
        %v6936 = vpack.c.b16 %v4976, %v4968
        %v6937 = vpack.c.b16 %v4977, %v4969
        %v6938 = vpack.c.b16 %v4978, %v4970
        %v6939 = vpack.c.b16 %v4979, %v4971
        %v6940 = vpack.c.b16 %v4980, %v4972
        %v6941 = vpack.c.b16 %v4989, %v4981
        %v6942 = vpack.c.b16 %v4990, %v4982
        %v6943 = vpack.c.b16 %v4991, %v4983
        %v6944 = vpack.c.b16 %v4992, %v4984
        %v6945 = vpack.c.b16 %v4993, %v4985
        %v6946 = vpack.c.b16 %v4994, %v4986
        %v6947 = vpack.c.b16 %v4995, %v4987
        %v6948 = vpack.c.b16 %v4996, %v4988
        %v6949 = vpack.c.b16 %v5005, %v4997
        %v6950 = vpack.c.b16 %v5006, %v4998
        %v6951 = vpack.c.b16 %v5007, %v4999
        %v6952 = vpack.c.b16 %v5008, %v5000
        %v6953 = vpack.c.b16 %v5009, %v5001
        %v6954 = vpack.c.b16 %v5010, %v5002
        %v6955 = vpack.c.b16 %v5011, %v5003
        %v6956 = vpack.c.b16 %v5012, %v5004
        %v6957 = vpack.c.b16 %v5021, %v5013
        %v6958 = vpack.c.b16 %v5022, %v5014
        %v6959 = vpack.c.b16 %v5023, %v5015
        %v6960 = vpack.c.b16 %v5024, %v5016
        %v6961 = vpack.c.b16 %v5025, %v5017
        %v6962 = vpack.c.b16 %v5026, %v5018
        %v6963 = vpack.c.b16 %v5027, %v5019
        %v6964 = vpack.c.b16 %v5028, %v5020
        %v6965 = vpack.c.b16 %v5037, %v5029
        %v6966 = vpack.c.b16 %v5038, %v5030
        %v6967 = vpack.c.b16 %v5039, %v5031
        %v6968 = vpack.c.b16 %v5040, %v5032
        %v6969 = vpack.c.b16 %v5041, %v5033
        %v6970 = vpack.c.b16 %v5042, %v5034
        %v6971 = vpack.c.b16 %v5043, %v5035
        %v6972 = vpack.c.b16 %v5044, %v5036
        %v6973 = vpack.c.b16 %v5053, %v5045
        %v6974 = vpack.c.b16 %v5054, %v5046
        %v6975 = vpack.c.b16 %v5055, %v5047
        %v6976 = vpack.c.b16 %v5056, %v5048
        %v6977 = vpack.c.b16 %v5057, %v5049
        %v6978 = vpack.c.b16 %v5058, %v5050
        %v6979 = vpack.c.b16 %v5059, %v5051
        %v6980 = vpack.c.b16 %v5060, %v5052
        %v6981 = vpack.c.b16 %v5069, %v5061
        %v6982 = vpack.c.b16 %v5070, %v5062
        %v6983 = vpack.c.b16 %v5071, %v5063
        %v6984 = vpack.c.b16 %v5072, %v5064
        %v6985 = vpack.c.b16 %v5073, %v5065
        %v6986 = vpack.c.b16 %v5074, %v5066
        %v6987 = vpack.c.b16 %v5075, %v5067
        %v6988 = vpack.c.b16 %v5076, %v5068
        %v6989 = vpack.c.b16 %v5085, %v5077
        %v6990 = vpack.c.b16 %v5086, %v5078
        %v6991 = vpack.c.b16 %v5087, %v5079
        %v6992 = vpack.c.b16 %v5088, %v5080
        %v6993 = vpack.c.b16 %v5089, %v5081
        %v6994 = vpack.c.b16 %v5090, %v5082
        %v6995 = vpack.c.b16 %v5091, %v5083
        %v6996 = vpack.c.b16 %v5092, %v5084
        %v6997 = vpack.c.b16 %v5101, %v5093
        %v6998 = vpack.c.b16 %v5102, %v5094
        %v6999 = vpack.c.b16 %v5103, %v5095
        %v7000 = vpack.c.b16 %v5104, %v5096
        %v7001 = vpack.c.b16 %v5105, %v5097
        %v7002 = vpack.c.b16 %v5106, %v5098
        %v7003 = vpack.c.b16 %v5107, %v5099
        %v7004 = vpack.c.b16 %v5108, %v5100
        %v7005 = vpack.c.b16 %v5117, %v5109
        %v7006 = vpack.c.b16 %v5118, %v5110
        %v7007 = vpack.c.b16 %v5119, %v5111
        %v7008 = vpack.c.b16 %v5120, %v5112
        %v7009 = vpack.c.b16 %v5121, %v5113
        %v7010 = vpack.c.b16 %v5122, %v5114
        %v7011 = vpack.c.b16 %v5123, %v5115
        %v7012 = vpack.c.b16 %v5124, %v5116
        %v7013 = vpack.c.b16 %v5133, %v5125
        %v7014 = vpack.c.b16 %v5134, %v5126
        %v7015 = vpack.c.b16 %v5135, %v5127
        %v7016 = vpack.c.b16 %v5136, %v5128
        %v7017 = vpack.c.b16 %v5137, %v5129
        %v7018 = vpack.c.b16 %v5138, %v5130
        %v7019 = vpack.c.b16 %v5139, %v5131
        %v7020 = vpack.c.b16 %v5140, %v5132
        %v7021 = vpack.c.b16 %v5149, %v5141
        %v7022 = vpack.c.b16 %v5150, %v5142
        %v7023 = vpack.c.b16 %v5151, %v5143
        %v7024 = vpack.c.b16 %v5152, %v5144
        %v7025 = vpack.c.b16 %v5153, %v5145
        %v7026 = vpack.c.b16 %v5154, %v5146
        %v7027 = vpack.c.b16 %v5155, %v5147
        %v7028 = vpack.c.b16 %v5156, %v5148
        %v7029 = vpack.c.b16 %v5165, %v5157
        %v7030 = vpack.c.b16 %v5166, %v5158
        %v7031 = vpack.c.b16 %v5167, %v5159
        %v7032 = vpack.c.b16 %v5168, %v5160
        %v7033 = vpack.c.b16 %v5169, %v5161
        %v7034 = vpack.c.b16 %v5170, %v5162
        %v7035 = vpack.c.b16 %v5171, %v5163
        %v7036 = vpack.c.b16 %v5172, %v5164
        %v7037 = vpack.c.b16 %v5181, %v5173
        %v7038 = vpack.c.b16 %v5182, %v5174
        %v7039 = vpack.c.b16 %v5183, %v5175
        %v7040 = vpack.c.b16 %v5184, %v5176
        %v7041 = vpack.c.b16 %v5185, %v5177
        %v7042 = vpack.c.b16 %v5186, %v5178
        %v7043 = vpack.c.b16 %v5187, %v5179
        %v7044 = vpack.c.b16 %v5188, %v5180
        %v7045 = vpack.c.b16 %v5197, %v5189
        %v7046 = vpack.c.b16 %v5198, %v5190
        %v7047 = vpack.c.b16 %v5199, %v5191
        %v7048 = vpack.c.b16 %v5200, %v5192
        %v7049 = vpack.c.b16 %v5201, %v5193
        %v7050 = vpack.c.b16 %v5202, %v5194
        %v7051 = vpack.c.b16 %v5203, %v5195
        %v7052 = vpack.c.b16 %v5204, %v5196
        %v7053 = vpack.c.b16 %v5213, %v5205
        %v7054 = vpack.c.b16 %v5214, %v5206
        %v7055 = vpack.c.b16 %v5215, %v5207
        %v7056 = vpack.c.b16 %v5216, %v5208
        %v7057 = vpack.c.b16 %v5217, %v5209
        %v7058 = vpack.c.b16 %v5218, %v5210
        %v7059 = vpack.c.b16 %v5219, %v5211
        %v7060 = vpack.c.b16 %v5220, %v5212
        %v7061 = vpack.c.b16 %v5229, %v5221
        %v7062 = vpack.c.b16 %v5230, %v5222
        %v7063 = vpack.c.b16 %v5231, %v5223
        %v7064 = vpack.c.b16 %v5232, %v5224
        %v7065 = vpack.c.b16 %v5233, %v5225
        %v7066 = vpack.c.b16 %v5234, %v5226
        %v7067 = vpack.c.b16 %v5235, %v5227
        %v7068 = vpack.c.b16 %v5236, %v5228
        %v7069 = vpack.c.b16 %v5245, %v5237
        %v7070 = vpack.c.b16 %v5246, %v5238
        %v7071 = vpack.c.b16 %v5247, %v5239
        %v7072 = vpack.c.b16 %v5248, %v5240
        %v7073 = vpack.c.b16 %v5249, %v5241
        %v7074 = vpack.c.b16 %v5250, %v5242
        %v7075 = vpack.c.b16 %v5251, %v5243
        %v7076 = vpack.c.b16 %v5252, %v5244
        %v7077 = vpack.c.b16 %v5261, %v5253
        %v7078 = vpack.c.b16 %v5262, %v5254
        %v7079 = vpack.c.b16 %v5263, %v5255
        %v7080 = vpack.c.b16 %v5264, %v5256
        %v7081 = vpack.c.b16 %v5265, %v5257
        %v7082 = vpack.c.b16 %v5266, %v5258
        %v7083 = vpack.c.b16 %v5267, %v5259
        %v7084 = vpack.c.b16 %v5268, %v5260
        %v7085 = vpack.c.b16 %v5277, %v5269
        %v7086 = vpack.c.b16 %v5278, %v5270
        %v7087 = vpack.c.b16 %v5279, %v5271
        %v7088 = vpack.c.b16 %v5280, %v5272
        %v7089 = vpack.c.b16 %v5281, %v5273
        %v7090 = vpack.c.b16 %v5282, %v5274
        %v7091 = vpack.c.b16 %v5283, %v5275
        %v7092 = vpack.c.b16 %v5284, %v5276
        %v7093 = vpack.c.b16 %v5293, %v5285
        %v7094 = vpack.c.b16 %v5294, %v5286
        %v7095 = vpack.c.b16 %v5295, %v5287
        %v7096 = vpack.c.b16 %v5296, %v5288
        %v7097 = vpack.c.b16 %v5297, %v5289
        %v7098 = vpack.c.b16 %v5298, %v5290
        %v7099 = vpack.c.b16 %v5299, %v5291
        %v7100 = vpack.c.b16 %v5300, %v5292
        %v7101 = vpack.c.b16 %v5309, %v5301
        %v7102 = vpack.c.b16 %v5310, %v5302
        %v7103 = vpack.c.b16 %v5311, %v5303
        %v7104 = vpack.c.b16 %v5312, %v5304
        %v7105 = vpack.c.b16 %v5313, %v5305
        %v7106 = vpack.c.b16 %v5314, %v5306
        %v7107 = vpack.c.b16 %v5315, %v5307
        %v7108 = vpack.c.b16 %v5316, %v5308
        %v7109 = vpack.c.b16 %v5325, %v5317
        %v7110 = vpack.c.b16 %v5326, %v5318
        %v7111 = vpack.c.b16 %v5327, %v5319
        %v7112 = vpack.c.b16 %v5328, %v5320
        %v7113 = vpack.c.b16 %v5329, %v5321
        %v7114 = vpack.c.b16 %v5330, %v5322
        %v7115 = vpack.c.b16 %v5331, %v5323
        %v7116 = vpack.c.b16 %v5332, %v5324
        %v7117 = vpack.c.b16 %v5341, %v5333
        %v7118 = vpack.c.b16 %v5342, %v5334
        %v7119 = vpack.c.b16 %v5343, %v5335
        %v7120 = vpack.c.b16 %v5344, %v5336
        %v7121 = vpack.c.b16 %v5345, %v5337
        %v7122 = vpack.c.b16 %v5346, %v5338
        %v7123 = vpack.c.b16 %v5347, %v5339
        %v7124 = vpack.c.b16 %v5348, %v5340
        %v7125 = vpack.c.b16 %v5357, %v5349
        %v7126 = vpack.c.b16 %v5358, %v5350
        %v7127 = vpack.c.b16 %v5359, %v5351
        %v7128 = vpack.c.b16 %v5360, %v5352
        %v7129 = vpack.c.b16 %v5361, %v5353
        %v7130 = vpack.c.b16 %v5362, %v5354
        %v7131 = vpack.c.b16 %v5363, %v5355
        %v7132 = vpack.c.b16 %v5364, %v5356
        %v7133 = vpack.c.b16 %v5373, %v5365
        %v7134 = vpack.c.b16 %v5374, %v5366
        %v7135 = vpack.c.b16 %v5375, %v5367
        %v7136 = vpack.c.b16 %v5376, %v5368
        %v7137 = vpack.c.b16 %v5377, %v5369
        %v7138 = vpack.c.b16 %v5378, %v5370
        %v7139 = vpack.c.b16 %v5379, %v5371
        %v7140 = vpack.c.b16 %v5380, %v5372
        %v7141 = vpack.c.b16 %v5389, %v5381
        %v7142 = vpack.c.b16 %v5390, %v5382
        %v7143 = vpack.c.b16 %v5391, %v5383
        %v7144 = vpack.c.b16 %v5392, %v5384
        %v7145 = vpack.c.b16 %v5393, %v5385
        %v7146 = vpack.c.b16 %v5394, %v5386
        %v7147 = vpack.c.b16 %v5395, %v5387
        %v7148 = vpack.c.b16 %v5396, %v5388
        %v7149 = vpack.c.b16 %v5405, %v5397
        %v7150 = vpack.c.b16 %v5406, %v5398
        %v7151 = vpack.c.b16 %v5407, %v5399
        %v7152 = vpack.c.b16 %v5408, %v5400
        %v7153 = vpack.c.b16 %v5409, %v5401
        %v7154 = vpack.c.b16 %v5410, %v5402
        %v7155 = vpack.c.b16 %v5411, %v5403
        %v7156 = vpack.c.b16 %v5412, %v5404
        %v7157 = vpack.c.b16 %v5421, %v5413
        %v7158 = vpack.c.b16 %v5422, %v5414
        %v7159 = vpack.c.b16 %v5423, %v5415
        %v7160 = vpack.c.b16 %v5424, %v5416
        %v7161 = vpack.c.b16 %v5425, %v5417
        %v7162 = vpack.c.b16 %v5426, %v5418
        %v7163 = vpack.c.b16 %v5427, %v5419
        %v7164 = vpack.c.b16 %v5428, %v5420
        %v7165 = vpack.c.b16 %v5437, %v5429
        %v7166 = vpack.c.b16 %v5438, %v5430
        %v7167 = vpack.c.b16 %v5439, %v5431
        %v7168 = vpack.c.b16 %v5440, %v5432
        %v7169 = vpack.c.b16 %v5441, %v5433
        %v7170 = vpack.c.b16 %v5442, %v5434
        %v7171 = vpack.c.b16 %v5443, %v5435
        %v7172 = vpack.c.b16 %v5444, %v5436
        %v7173 = vpack.c.b16 %v5453, %v5445
        %v7174 = vpack.c.b16 %v5454, %v5446
        %v7175 = vpack.c.b16 %v5455, %v5447
        %v7176 = vpack.c.b16 %v5456, %v5448
        %v7177 = vpack.c.b16 %v5457, %v5449
        %v7178 = vpack.c.b16 %v5458, %v5450
        %v7179 = vpack.c.b16 %v5459, %v5451
        %v7180 = vpack.c.b16 %v5460, %v5452
        %v7181 = vpack.c.b16 %v5469, %v5461
        %v7182 = vpack.c.b16 %v5470, %v5462
        %v7183 = vpack.c.b16 %v5471, %v5463
        %v7184 = vpack.c.b16 %v5472, %v5464
        %v7185 = vpack.c.b16 %v5473, %v5465
        %v7186 = vpack.c.b16 %v5474, %v5466
        %v7187 = vpack.c.b16 %v5475, %v5467
        %v7188 = vpack.c.b16 %v5476, %v5468
        %v7189 = vpack.c.b16 %v5485, %v5477
        %v7190 = vpack.c.b16 %v5486, %v5478
        %v7191 = vpack.c.b16 %v5487, %v5479
        %v7192 = vpack.c.b16 %v5488, %v5480
        %v7193 = vpack.c.b16 %v5489, %v5481
        %v7194 = vpack.c.b16 %v5490, %v5482
        %v7195 = vpack.c.b16 %v5491, %v5483
        %v7196 = vpack.c.b16 %v5492, %v5484
        %v7197 = vpack.c.b16 %v5501, %v5493
        %v7198 = vpack.c.b16 %v5502, %v5494
        %v7199 = vpack.c.b16 %v5503, %v5495
        %v7200 = vpack.c.b16 %v5504, %v5496
        %v7201 = vpack.c.b16 %v5505, %v5497
        %v7202 = vpack.c.b16 %v5506, %v5498
        %v7203 = vpack.c.b16 %v5507, %v5499
        %v7204 = vpack.c.b16 %v5508, %v5500
        %v7205 = vpack.c.b16 %v5517, %v5509
        %v7206 = vpack.c.b16 %v5518, %v5510
        %v7207 = vpack.c.b16 %v5519, %v5511
        %v7208 = vpack.c.b16 %v5520, %v5512
        %v7209 = vpack.c.b16 %v5521, %v5513
        %v7210 = vpack.c.b16 %v5522, %v5514
        %v7211 = vpack.c.b16 %v5523, %v5515
        %v7212 = vpack.c.b16 %v5524, %v5516
        %v7213 = vpack.c.b16 %v5533, %v5525
        %v7214 = vpack.c.b16 %v5534, %v5526
        %v7215 = vpack.c.b16 %v5535, %v5527
        %v7216 = vpack.c.b16 %v5536, %v5528
        %v7217 = vpack.c.b16 %v5537, %v5529
        %v7218 = vpack.c.b16 %v5538, %v5530
        %v7219 = vpack.c.b16 %v5539, %v5531
        %v7220 = vpack.c.b16 %v5540, %v5532
        %v7221 = vpack.c.b16 %v5549, %v5541
        %v7222 = vpack.c.b16 %v5550, %v5542
        %v7223 = vpack.c.b16 %v5551, %v5543
        %v7224 = vpack.c.b16 %v5552, %v5544
        %v7225 = vpack.c.b16 %v5553, %v5545
        %v7226 = vpack.c.b16 %v5554, %v5546
        %v7227 = vpack.c.b16 %v5555, %v5547
        %v7228 = vpack.c.b16 %v5556, %v5548
        %v7229 = vpack.c.b16 %v5565, %v5557
        %v7230 = vpack.c.b16 %v5566, %v5558
        %v7231 = vpack.c.b16 %v5567, %v5559
        %v7232 = vpack.c.b16 %v5568, %v5560
        %v7233 = vpack.c.b16 %v5569, %v5561
        %v7234 = vpack.c.b16 %v5570, %v5562
        %v7235 = vpack.c.b16 %v5571, %v5563
        %v7236 = vpack.c.b16 %v5572, %v5564
        %v7237 = vpack.c.b16 %v5581, %v5573
        %v7238 = vpack.c.b16 %v5582, %v5574
        %v7239 = vpack.c.b16 %v5583, %v5575
        %v7240 = vpack.c.b16 %v5584, %v5576
        %v7241 = vpack.c.b16 %v5585, %v5577
        %v7242 = vpack.c.b16 %v5586, %v5578
        %v7243 = vpack.c.b16 %v5587, %v5579
        %v7244 = vpack.c.b16 %v5588, %v5580
        %v7245 = vpack.c.b16 %v5597, %v5589
        %v7246 = vpack.c.b16 %v5598, %v5590
        %v7247 = vpack.c.b16 %v5599, %v5591
        %v7248 = vpack.c.b16 %v5600, %v5592
        %v7249 = vpack.c.b16 %v5601, %v5593
        %v7250 = vpack.c.b16 %v5602, %v5594
        %v7251 = vpack.c.b16 %v5603, %v5595
        %v7252 = vpack.c.b16 %v5604, %v5596
        %v7253 = vpack.c.b16 %v5613, %v5605
        %v7254 = vpack.c.b16 %v5614, %v5606
        %v7255 = vpack.c.b16 %v5615, %v5607
        %v7256 = vpack.c.b16 %v5616, %v5608
        %v7257 = vpack.c.b16 %v5617, %v5609
        %v7258 = vpack.c.b16 %v5618, %v5610
        %v7259 = vpack.c.b16 %v5619, %v5611
        %v7260 = vpack.c.b16 %v5620, %v5612
        %v7261 = vpack.c.b16 %v5629, %v5621
        %v7262 = vpack.c.b16 %v5630, %v5622
        %v7263 = vpack.c.b16 %v5631, %v5623
        %v7264 = vpack.c.b16 %v5632, %v5624
        %v7265 = vpack.c.b16 %v5633, %v5625
        %v7266 = vpack.c.b16 %v5634, %v5626
        %v7267 = vpack.c.b16 %v5635, %v5627
        %v7268 = vpack.c.b16 %v5636, %v5628
        %v7269 = vpack.c.b16 %v5645, %v5637
        %v7270 = vpack.c.b16 %v5646, %v5638
        %v7271 = vpack.c.b16 %v5647, %v5639
        %v7272 = vpack.c.b16 %v5648, %v5640
        %v7273 = vpack.c.b16 %v5649, %v5641
        %v7274 = vpack.c.b16 %v5650, %v5642
        %v7275 = vpack.c.b16 %v5651, %v5643
        %v7276 = vpack.c.b16 %v5652, %v5644
        %v7277 = vpack.c.b16 %v5661, %v5653
        %v7278 = vpack.c.b16 %v5662, %v5654
        %v7279 = vpack.c.b16 %v5663, %v5655
        %v7280 = vpack.c.b16 %v5664, %v5656
        %v7281 = vpack.c.b16 %v5665, %v5657
        %v7282 = vpack.c.b16 %v5666, %v5658
        %v7283 = vpack.c.b16 %v5667, %v5659
        %v7284 = vpack.c.b16 %v5668, %v5660
        %v7285 = vpack.c.b16 %v5677, %v5669
        %v7286 = vpack.c.b16 %v5678, %v5670
        %v7287 = vpack.c.b16 %v5679, %v5671
        %v7288 = vpack.c.b16 %v5680, %v5672
        %v7289 = vpack.c.b16 %v5681, %v5673
        %v7290 = vpack.c.b16 %v5682, %v5674
        %v7291 = vpack.c.b16 %v5683, %v5675
        %v7292 = vpack.c.b16 %v5684, %v5676
        %v7293 = vpack.c.b16 %v5693, %v5685
        %v7294 = vpack.c.b16 %v5694, %v5686
        %v7295 = vpack.c.b16 %v5695, %v5687
        %v7296 = vpack.c.b16 %v5696, %v5688
        %v7297 = vpack.c.b16 %v5697, %v5689
        %v7298 = vpack.c.b16 %v5698, %v5690
        %v7299 = vpack.c.b16 %v5699, %v5691
        %v7300 = vpack.c.b16 %v5700, %v5692
        %v7301 = vpack.c.b16 %v5709, %v5701
        %v7302 = vpack.c.b16 %v5710, %v5702
        %v7303 = vpack.c.b16 %v5711, %v5703
        %v7304 = vpack.c.b16 %v5712, %v5704
        %v7305 = vpack.c.b16 %v5713, %v5705
        %v7306 = vpack.c.b16 %v5714, %v5706
        %v7307 = vpack.c.b16 %v5715, %v5707
        %v7308 = vpack.c.b16 %v5716, %v5708
        %v7309 = vpack.c.b16 %v5725, %v5717
        %v7310 = vpack.c.b16 %v5726, %v5718
        %v7311 = vpack.c.b16 %v5727, %v5719
        %v7312 = vpack.c.b16 %v5728, %v5720
        %v7313 = vpack.c.b16 %v5729, %v5721
        %v7314 = vpack.c.b16 %v5730, %v5722
        %v7315 = vpack.c.b16 %v5731, %v5723
        %v7316 = vpack.c.b16 %v5732, %v5724
        %v7317 = vpack.c.b16 %v5741, %v5733
        %v7318 = vpack.c.b16 %v5742, %v5734
        %v7319 = vpack.c.b16 %v5743, %v5735
        %v7320 = vpack.c.b16 %v5744, %v5736
        %v7321 = vpack.c.b16 %v5745, %v5737
        %v7322 = vpack.c.b16 %v5746, %v5738
        %v7323 = vpack.c.b16 %v5747, %v5739
        %v7324 = vpack.c.b16 %v5748, %v5740
        %v7325 = vpack.c.b16 %v5757, %v5749
        %v7326 = vpack.c.b16 %v5758, %v5750
        %v7327 = vpack.c.b16 %v5759, %v5751
        %v7328 = vpack.c.b16 %v5760, %v5752
        %v7329 = vpack.c.b16 %v5761, %v5753
        %v7330 = vpack.c.b16 %v5762, %v5754
        %v7331 = vpack.c.b16 %v5763, %v5755
        %v7332 = vpack.c.b16 %v5764, %v5756
        %v7333 = vpack.c.b16 %v5773, %v5765
        %v7334 = vpack.c.b16 %v5774, %v5766
        %v7335 = vpack.c.b16 %v5775, %v5767
        %v7336 = vpack.c.b16 %v5776, %v5768
        %v7337 = vpack.c.b16 %v5777, %v5769
        %v7338 = vpack.c.b16 %v5778, %v5770
        %v7339 = vpack.c.b16 %v5779, %v5771
        %v7340 = vpack.c.b16 %v5780, %v5772
        %v7341 = vpack.c.b16 %v5789, %v5781
        %v7342 = vpack.c.b16 %v5790, %v5782
        %v7343 = vpack.c.b16 %v5791, %v5783
        %v7344 = vpack.c.b16 %v5792, %v5784
        %v7345 = vpack.c.b16 %v5793, %v5785
        %v7346 = vpack.c.b16 %v5794, %v5786
        %v7347 = vpack.c.b16 %v5795, %v5787
        %v7348 = vpack.c.b16 %v5796, %v5788
        %v7349 = vpack.c.b16 %v5805, %v5797
        %v7350 = vpack.c.b16 %v5806, %v5798
        %v7351 = vpack.c.b16 %v5807, %v5799
        %v7352 = vpack.c.b16 %v5808, %v5800
        %v7353 = vpack.c.b16 %v5809, %v5801
        %v7354 = vpack.c.b16 %v5810, %v5802
        %v7355 = vpack.c.b16 %v5811, %v5803
        %v7356 = vpack.c.b16 %v5812, %v5804
        %v7357 = vpack.c.b16 %v5821, %v5813
        %v7358 = vpack.c.b16 %v5822, %v5814
        %v7359 = vpack.c.b16 %v5823, %v5815
        %v7360 = vpack.c.b16 %v5824, %v5816
        %v7361 = vpack.c.b16 %v5825, %v5817
        %v7362 = vpack.c.b16 %v5826, %v5818
        %v7363 = vpack.c.b16 %v5827, %v5819
        %v7364 = vpack.c.b16 %v5828, %v5820
        %v7365 = vpack.c.b16 %v5837, %v5829
        %v7366 = vpack.c.b16 %v5838, %v5830
        %v7367 = vpack.c.b16 %v5839, %v5831
        %v7368 = vpack.c.b16 %v5840, %v5832
        %v7369 = vpack.c.b16 %v5841, %v5833
        %v7370 = vpack.c.b16 %v5842, %v5834
        %v7371 = vpack.c.b16 %v5843, %v5835
        %v7372 = vpack.c.b16 %v5844, %v5836
        %v7373 = vpack.c.b16 %v5853, %v5845
        %v7374 = vpack.c.b16 %v5854, %v5846
        %v7375 = vpack.c.b16 %v5855, %v5847
        %v7376 = vpack.c.b16 %v5856, %v5848
        %v7377 = vpack.c.b16 %v5857, %v5849
        %v7378 = vpack.c.b16 %v5858, %v5850
        %v7379 = vpack.c.b16 %v5859, %v5851
        %v7380 = vpack.c.b16 %v5860, %v5852
        %v7381 = vpack.c.b16 %v5869, %v5861
        %v7382 = vpack.c.b16 %v5870, %v5862
        %v7383 = vpack.c.b16 %v5871, %v5863
        %v7384 = vpack.c.b16 %v5872, %v5864
        %v7385 = vpack.c.b16 %v5873, %v5865
        %v7386 = vpack.c.b16 %v5874, %v5866
        %v7387 = vpack.c.b16 %v5875, %v5867
        %v7388 = vpack.c.b16 %v5876, %v5868
        %v7389 = vpack.c.b16 %v5885, %v5877
        %v7390 = vpack.c.b16 %v5886, %v5878
        %v7391 = vpack.c.b16 %v5887, %v5879
        %v7392 = vpack.c.b16 %v5888, %v5880
        %v7393 = vpack.c.b16 %v5889, %v5881
        %v7394 = vpack.c.b16 %v5890, %v5882
        %v7395 = vpack.c.b16 %v5891, %v5883
        %v7396 = vpack.c.b16 %v5892, %v5884
        %v7397 = vpack.c.b16 %v5901, %v5893
        %v7398 = vpack.c.b16 %v5902, %v5894
        %v7399 = vpack.c.b16 %v5903, %v5895
        %v7400 = vpack.c.b16 %v5904, %v5896
        %v7401 = vpack.c.b16 %v5905, %v5897
        %v7402 = vpack.c.b16 %v5906, %v5898
        %v7403 = vpack.c.b16 %v5907, %v5899
        %v7404 = vpack.c.b16 %v5908, %v5900
        %v7405 = vpack.c.b16 %v5917, %v5909
        %v7406 = vpack.c.b16 %v5918, %v5910
        %v7407 = vpack.c.b16 %v5919, %v5911
        %v7408 = vpack.c.b16 %v5920, %v5912
        %v7409 = vpack.c.b16 %v5921, %v5913
        %v7410 = vpack.c.b16 %v5922, %v5914
        %v7411 = vpack.c.b16 %v5923, %v5915
        %v7412 = vpack.c.b16 %v5924, %v5916
        %v7413 = vpack.c.b16 %v5933, %v5925
        %v7414 = vpack.c.b16 %v5934, %v5926
        %v7415 = vpack.c.b16 %v5935, %v5927
        %v7416 = vpack.c.b16 %v5936, %v5928
        %v7417 = vpack.c.b16 %v5937, %v5929
        %v7418 = vpack.c.b16 %v5938, %v5930
        %v7419 = vpack.c.b16 %v5939, %v5931
        %v7420 = vpack.c.b16 %v5940, %v5932
        %v7421 = vpack.c.b16 %v5949, %v5941
        %v7422 = vpack.c.b16 %v5950, %v5942
        %v7423 = vpack.c.b16 %v5951, %v5943
        %v7424 = vpack.c.b16 %v5952, %v5944
        %v7425 = vpack.c.b16 %v5953, %v5945
        %v7426 = vpack.c.b16 %v5954, %v5946
        %v7427 = vpack.c.b16 %v5955, %v5947
        %v7428 = vpack.c.b16 %v5956, %v5948
        %v7429 = vpack.c.b16 %v5965, %v5957
        %v7430 = vpack.c.b16 %v5966, %v5958
        %v7431 = vpack.c.b16 %v5967, %v5959
        %v7432 = vpack.c.b16 %v5968, %v5960
        %v7433 = vpack.c.b16 %v5969, %v5961
        %v7434 = vpack.c.b16 %v5970, %v5962
        %v7435 = vpack.c.b16 %v5971, %v5963
        %v7436 = vpack.c.b16 %v5972, %v5964
        %v7437 = vpack.c.b16 %v5981, %v5973
        %v7438 = vpack.c.b16 %v5982, %v5974
        %v7439 = vpack.c.b16 %v5983, %v5975
        %v7440 = vpack.c.b16 %v5984, %v5976
        %v7441 = vpack.c.b16 %v5985, %v5977
        %v7442 = vpack.c.b16 %v5986, %v5978
        %v7443 = vpack.c.b16 %v5987, %v5979
        %v7444 = vpack.c.b16 %v5988, %v5980
        %v7445 = vpack.c.b16 %v5997, %v5989
        %v7446 = vpack.c.b16 %v5998, %v5990
        %v7447 = vpack.c.b16 %v5999, %v5991
        %v7448 = vpack.c.b16 %v6000, %v5992
        %v7449 = vpack.c.b16 %v6001, %v5993
        %v7450 = vpack.c.b16 %v6002, %v5994
        %v7451 = vpack.c.b16 %v6003, %v5995
        %v7452 = vpack.c.b16 %v6004, %v5996
        %v7453 = vpack.c.b16 %v6013, %v6005
        %v7454 = vpack.c.b16 %v6014, %v6006
        %v7455 = vpack.c.b16 %v6015, %v6007
        %v7456 = vpack.c.b16 %v6016, %v6008
        %v7457 = vpack.c.b16 %v6017, %v6009
        %v7458 = vpack.c.b16 %v6018, %v6010
        %v7459 = vpack.c.b16 %v6019, %v6011
        %v7460 = vpack.c.b16 %v6020, %v6012
        %v7461 = vpack.c.b16 %v6029, %v6021
        %v7462 = vpack.c.b16 %v6030, %v6022
        %v7463 = vpack.c.b16 %v6031, %v6023
        %v7464 = vpack.c.b16 %v6032, %v6024
        %v7465 = vpack.c.b16 %v6033, %v6025
        %v7466 = vpack.c.b16 %v6034, %v6026
        %v7467 = vpack.c.b16 %v6035, %v6027
        %v7468 = vpack.c.b16 %v6036, %v6028
        %v7469 = vpack.c.b16 %v6045, %v6037
        %v7470 = vpack.c.b16 %v6046, %v6038
        %v7471 = vpack.c.b16 %v6047, %v6039
        %v7472 = vpack.c.b16 %v6048, %v6040
        %v7473 = vpack.c.b16 %v6049, %v6041
        %v7474 = vpack.c.b16 %v6050, %v6042
        %v7475 = vpack.c.b16 %v6051, %v6043
        %v7476 = vpack.c.b16 %v6052, %v6044
        %v7477 = vpack.c.b16 %v6061, %v6053
        %v7478 = vpack.c.b16 %v6062, %v6054
        %v7479 = vpack.c.b16 %v6063, %v6055
        %v7480 = vpack.c.b16 %v6064, %v6056
        %v7481 = vpack.c.b16 %v6065, %v6057
        %v7482 = vpack.c.b16 %v6066, %v6058
        %v7483 = vpack.c.b16 %v6067, %v6059
        %v7484 = vpack.c.b16 %v6068, %v6060
        %v7485 = vpack.c.b16 %v6077, %v6069
        %v7486 = vpack.c.b16 %v6078, %v6070
        %v7487 = vpack.c.b16 %v6079, %v6071
        %v7488 = vpack.c.b16 %v6080, %v6072
        %v7489 = vpack.c.b16 %v6081, %v6073
        %v7490 = vpack.c.b16 %v6082, %v6074
        %v7491 = vpack.c.b16 %v6083, %v6075
        %v7492 = vpack.c.b16 %v6084, %v6076
        %v7493 = vpack.c.b16 %v6093, %v6085
        %v7494 = vpack.c.b16 %v6094, %v6086
        %v7495 = vpack.c.b16 %v6095, %v6087
        %v7496 = vpack.c.b16 %v6096, %v6088
        %v7497 = vpack.c.b16 %v6097, %v6089
        %v7498 = vpack.c.b16 %v6098, %v6090
        %v7499 = vpack.c.b16 %v6099, %v6091
        %v7500 = vpack.c.b16 %v6100, %v6092
        %v7501 = vpack.c.b16 %v6109, %v6101
        %v7502 = vpack.c.b16 %v6110, %v6102
        %v7503 = vpack.c.b16 %v6111, %v6103
        %v7504 = vpack.c.b16 %v6112, %v6104
        %v7505 = vpack.c.b16 %v6113, %v6105
        %v7506 = vpack.c.b16 %v6114, %v6106
        %v7507 = vpack.c.b16 %v6115, %v6107
        %v7508 = vpack.c.b16 %v6116, %v6108
        %v7509 = vpack.c.b16 %v6125, %v6117
        %v7510 = vpack.c.b16 %v6126, %v6118
        %v7511 = vpack.c.b16 %v6127, %v6119
        %v7512 = vpack.c.b16 %v6128, %v6120
        %v7513 = vpack.c.b16 %v6129, %v6121
        %v7514 = vpack.c.b16 %v6130, %v6122
        %v7515 = vpack.c.b16 %v6131, %v6123
        %v7516 = vpack.c.b16 %v6132, %v6124
        %v7517 = vpack.c.b16 %v6141, %v6133
        %v7518 = vpack.c.b16 %v6142, %v6134
        %v7519 = vpack.c.b16 %v6143, %v6135
        %v7520 = vpack.c.b16 %v6144, %v6136
        %v7521 = vpack.c.b16 %v6145, %v6137
        %v7522 = vpack.c.b16 %v6146, %v6138
        %v7523 = vpack.c.b16 %v6147, %v6139
        %v7524 = vpack.c.b16 %v6148, %v6140
        %v7525 = vpack.c.b16 %v6157, %v6149
        %v7526 = vpack.c.b16 %v6158, %v6150
        %v7527 = vpack.c.b16 %v6159, %v6151
        %v7528 = vpack.c.b16 %v6160, %v6152
        %v7529 = vpack.c.b16 %v6161, %v6153
        %v7530 = vpack.c.b16 %v6162, %v6154
        %v7531 = vpack.c.b16 %v6163, %v6155
        %v7532 = vpack.c.b16 %v6164, %v6156
        %v7533 = vpack.c.b16 %v6173, %v6165
        %v7534 = vpack.c.b16 %v6174, %v6166
        %v7535 = vpack.c.b16 %v6175, %v6167
        %v7536 = vpack.c.b16 %v6176, %v6168
        %v7537 = vpack.c.b16 %v6177, %v6169
        %v7538 = vpack.c.b16 %v6178, %v6170
        %v7539 = vpack.c.b16 %v6179, %v6171
        %v7540 = vpack.c.b16 %v6180, %v6172
        %v7541 = vpack.c.b16 %v6189, %v6181
        %v7542 = vpack.c.b16 %v6190, %v6182
        %v7543 = vpack.c.b16 %v6191, %v6183
        %v7544 = vpack.c.b16 %v6192, %v6184
        %v7545 = vpack.c.b16 %v6193, %v6185
        %v7546 = vpack.c.b16 %v6194, %v6186
        %v7547 = vpack.c.b16 %v6195, %v6187
        %v7548 = vpack.c.b16 %v6196, %v6188
        %v7549 = vpack.c.b16 %v6205, %v6197
        %v7550 = vpack.c.b16 %v6206, %v6198
        %v7551 = vpack.c.b16 %v6207, %v6199
        %v7552 = vpack.c.b16 %v6208, %v6200
        %v7553 = vpack.c.b16 %v6209, %v6201
        %v7554 = vpack.c.b16 %v6210, %v6202
        %v7555 = vpack.c.b16 %v6211, %v6203
        %v7556 = vpack.c.b16 %v6212, %v6204
        %v7557 = vpack.c.b16 %v6221, %v6213
        %v7558 = vpack.c.b16 %v6222, %v6214
        %v7559 = vpack.c.b16 %v6223, %v6215
        %v7560 = vpack.c.b16 %v6224, %v6216
        %v7561 = vpack.c.b16 %v6225, %v6217
        %v7562 = vpack.c.b16 %v6226, %v6218
        %v7563 = vpack.c.b16 %v6227, %v6219
        %v7564 = vpack.c.b16 %v6228, %v6220
        %v7565 = vpack.c.b16 %v6237, %v6229
        %v7566 = vpack.c.b16 %v6238, %v6230
        %v7567 = vpack.c.b16 %v6239, %v6231
        %v7568 = vpack.c.b16 %v6240, %v6232
        %v7569 = vpack.c.b16 %v6241, %v6233
        %v7570 = vpack.c.b16 %v6242, %v6234
        %v7571 = vpack.c.b16 %v6243, %v6235
        %v7572 = vpack.c.b16 %v6244, %v6236
        %v7573 = vpack.c.b16 %v6253, %v6245
        %v7574 = vpack.c.b16 %v6254, %v6246
        %v7575 = vpack.c.b16 %v6255, %v6247
        %v7576 = vpack.c.b16 %v6256, %v6248
        %v7577 = vpack.c.b16 %v6257, %v6249
        %v7578 = vpack.c.b16 %v6258, %v6250
        %v7579 = vpack.c.b16 %v6259, %v6251
        %v7580 = vpack.c.b16 %v6260, %v6252
        %v7581 = vpack.c.b16 %v6269, %v6261
        %v7582 = vpack.c.b16 %v6270, %v6262
        %v7583 = vpack.c.b16 %v6271, %v6263
        %v7584 = vpack.c.b16 %v6272, %v6264
        %v7585 = vpack.c.b16 %v6273, %v6265
        %v7586 = vpack.c.b16 %v6274, %v6266
        %v7587 = vpack.c.b16 %v6275, %v6267
        %v7588 = vpack.c.b16 %v6276, %v6268
        %v7589 = vpack.c.b16 %v6285, %v6277
        %v7590 = vpack.c.b16 %v6286, %v6278
        %v7591 = vpack.c.b16 %v6287, %v6279
        %v7592 = vpack.c.b16 %v6288, %v6280
        %v7593 = vpack.c.b16 %v6289, %v6281
        %v7594 = vpack.c.b16 %v6290, %v6282
        %v7595 = vpack.c.b16 %v6291, %v6283
        %v7596 = vpack.c.b16 %v6292, %v6284
        %v7597 = vpack.c.b16 %v6301, %v6293
        %v7598 = vpack.c.b16 %v6302, %v6294
        %v7599 = vpack.c.b16 %v6303, %v6295
        %v7600 = vpack.c.b16 %v6304, %v6296
        %v7601 = vpack.c.b16 %v6305, %v6297
        %v7602 = vpack.c.b16 %v6306, %v6298
        %v7603 = vpack.c.b16 %v6307, %v6299
        %v7604 = vpack.c.b16 %v6308, %v6300
        %v7605 = vpack.c.b16 %v6317, %v6309
        %v7606 = vpack.c.b16 %v6318, %v6310
        %v7607 = vpack.c.b16 %v6319, %v6311
        %v7608 = vpack.c.b16 %v6320, %v6312
        %v7609 = vpack.c.b16 %v6321, %v6313
        %v7610 = vpack.c.b16 %v6322, %v6314
        %v7611 = vpack.c.b16 %v6323, %v6315
        %v7612 = vpack.c.b16 %v6324, %v6316
        %v7613 = vpack.c.b16 %v6333, %v6325
        %v7614 = vpack.c.b16 %v6334, %v6326
        %v7615 = vpack.c.b16 %v6335, %v6327
        %v7616 = vpack.c.b16 %v6336, %v6328
        %v7617 = vpack.c.b16 %v6337, %v6329
        %v7618 = vpack.c.b16 %v6338, %v6330
        %v7619 = vpack.c.b16 %v6339, %v6331
        %v7620 = vpack.c.b16 %v6340, %v6332
        %v7621 = vpack.c.b16 %v6349, %v6341
        %v7622 = vpack.c.b16 %v6350, %v6342
        %v7623 = vpack.c.b16 %v6351, %v6343
        %v7624 = vpack.c.b16 %v6352, %v6344
        %v7625 = vpack.c.b16 %v6353, %v6345
        %v7626 = vpack.c.b16 %v6354, %v6346
        %v7627 = vpack.c.b16 %v6355, %v6347
        %v7628 = vpack.c.b16 %v6356, %v6348
        %v7629 = vpack.c.b16 %v6365, %v6357
        %v7630 = vpack.c.b16 %v6366, %v6358
        %v7631 = vpack.c.b16 %v6367, %v6359
        %v7632 = vpack.c.b16 %v6368, %v6360
        %v7633 = vpack.c.b16 %v6369, %v6361
        %v7634 = vpack.c.b16 %v6370, %v6362
        %v7635 = vpack.c.b16 %v6371, %v6363
        %v7636 = vpack.c.b16 %v6372, %v6364
        %v7637 = vpack.c.b16 %v6381, %v6373
        %v7638 = vpack.c.b16 %v6382, %v6374
        %v7639 = vpack.c.b16 %v6383, %v6375
        %v7640 = vpack.c.b16 %v6384, %v6376
        %v7641 = vpack.c.b16 %v6385, %v6377
        %v7642 = vpack.c.b16 %v6386, %v6378
        %v7643 = vpack.c.b16 %v6387, %v6379
        %v7644 = vpack.c.b16 %v6388, %v6380
        %v7645 = vpack.c.b16 %v6397, %v6389
        %v7646 = vpack.c.b16 %v6398, %v6390
        %v7647 = vpack.c.b16 %v6399, %v6391
        %v7648 = vpack.c.b16 %v6400, %v6392
        %v7649 = vpack.c.b16 %v6401, %v6393
        %v7650 = vpack.c.b16 %v6402, %v6394
        %v7651 = vpack.c.b16 %v6403, %v6395
        %v7652 = vpack.c.b16 %v6404, %v6396
        %v7653 = vpack.c.b16 %v6413, %v6405
        %v7654 = vpack.c.b16 %v6414, %v6406
        %v7655 = vpack.c.b16 %v6415, %v6407
        %v7656 = vpack.c.b16 %v6416, %v6408
        %v7657 = vpack.c.b16 %v6417, %v6409
        %v7658 = vpack.c.b16 %v6418, %v6410
        %v7659 = vpack.c.b16 %v6419, %v6411
        %v7660 = vpack.c.b16 %v6420, %v6412
        %v7661 = vpack.c.b16 %v6429, %v6421
        %v7662 = vpack.c.b16 %v6430, %v6422
        %v7663 = vpack.c.b16 %v6431, %v6423
        %v7664 = vpack.c.b16 %v6432, %v6424
        %v7665 = vpack.c.b16 %v6433, %v6425
        %v7666 = vpack.c.b16 %v6434, %v6426
        %v7667 = vpack.c.b16 %v6435, %v6427
        %v7668 = vpack.c.b16 %v6436, %v6428
        %v7669 = vpack.c.b16 %v6445, %v6437
        %v7670 = vpack.c.b16 %v6446, %v6438
        %v7671 = vpack.c.b16 %v6447, %v6439
        %v7672 = vpack.c.b16 %v6448, %v6440
        %v7673 = vpack.c.b16 %v6449, %v6441
        %v7674 = vpack.c.b16 %v6450, %v6442
        %v7675 = vpack.c.b16 %v6451, %v6443
        %v7676 = vpack.c.b16 %v6452, %v6444
        %v7677 = vpack.c.b16 %v6461, %v6453
        %v7678 = vpack.c.b16 %v6462, %v6454
        %v7679 = vpack.c.b16 %v6463, %v6455
        %v7680 = vpack.c.b16 %v6464, %v6456
        %v7681 = vpack.c.b16 %v6465, %v6457
        %v7682 = vpack.c.b16 %v6466, %v6458
        %v7683 = vpack.c.b16 %v6467, %v6459
        %v7684 = vpack.c.b16 %v6468, %v6460
        %v7685 = vpack.c.b16 %v6477, %v6469
        %v7686 = vpack.c.b16 %v6478, %v6470
        %v7687 = vpack.c.b16 %v6479, %v6471
        %v7688 = vpack.c.b16 %v6480, %v6472
        %v7689 = vpack.c.b16 %v6481, %v6473
        %v7690 = vpack.c.b16 %v6482, %v6474
        %v7691 = vpack.c.b16 %v6483, %v6475
        %v7692 = vpack.c.b16 %v6484, %v6476
        %v7693 = vpack.c.b16 %v6493, %v6485
        %v7694 = vpack.c.b16 %v6494, %v6486
        %v7695 = vpack.c.b16 %v6495, %v6487
        %v7696 = vpack.c.b16 %v6496, %v6488
        %v7697 = vpack.c.b16 %v6497, %v6489
        %v7698 = vpack.c.b16 %v6498, %v6490
        %v7699 = vpack.c.b16 %v6499, %v6491
        %v7700 = vpack.c.b16 %v6500, %v6492
        %v7701 = vpack.c.b16 %v6509, %v6501
        %v7702 = vpack.c.b16 %v6510, %v6502
        %v7703 = vpack.c.b16 %v6511, %v6503
        %v7704 = vpack.c.b16 %v6512, %v6504
        %v7705 = vpack.c.b16 %v6513, %v6505
        %v7706 = vpack.c.b16 %v6514, %v6506
        %v7707 = vpack.c.b16 %v6515, %v6507
        %v7708 = vpack.c.b16 %v6516, %v6508
        %v7709 = vpack.c.b16 %v6525, %v6517
        %v7710 = vpack.c.b16 %v6526, %v6518
        %v7711 = vpack.c.b16 %v6527, %v6519
        %v7712 = vpack.c.b16 %v6528, %v6520
        %v7713 = vpack.c.b16 %v6529, %v6521
        %v7714 = vpack.c.b16 %v6530, %v6522
        %v7715 = vpack.c.b16 %v6531, %v6523
        %v7716 = vpack.c.b16 %v6532, %v6524
        %v7717 = vpack.c.b16 %v6541, %v6533
        %v7718 = vpack.c.b16 %v6542, %v6534
        %v7719 = vpack.c.b16 %v6543, %v6535
        %v7720 = vpack.c.b16 %v6544, %v6536
        %v7721 = vpack.c.b16 %v6545, %v6537
        %v7722 = vpack.c.b16 %v6546, %v6538
        %v7723 = vpack.c.b16 %v6547, %v6539
        %v7724 = vpack.c.b16 %v6548, %v6540
        %v7725 = vpack.c.b16 %v6557, %v6549
        %v7726 = vpack.c.b16 %v6558, %v6550
        %v7727 = vpack.c.b16 %v6559, %v6551
        %v7728 = vpack.c.b16 %v6560, %v6552
        %v7729 = vpack.c.b16 %v6561, %v6553
        %v7730 = vpack.c.b16 %v6562, %v6554
        %v7731 = vpack.c.b16 %v6563, %v6555
        %v7732 = vpack.c.b16 %v6564, %v6556
        %v7733 = vpack.c.b16 %v6573, %v6565
        %v7734 = vpack.c.b16 %v6574, %v6566
        %v7735 = vpack.c.b16 %v6575, %v6567
        %v7736 = vpack.c.b16 %v6576, %v6568
        %v7737 = vpack.c.b16 %v6577, %v6569
        %v7738 = vpack.c.b16 %v6578, %v6570
        %v7739 = vpack.c.b16 %v6579, %v6571
        %v7740 = vpack.c.b16 %v6580, %v6572
        %v7741 = vpack.c.b16 %v6589, %v6581
        %v7742 = vpack.c.b16 %v6590, %v6582
        %v7743 = vpack.c.b16 %v6591, %v6583
        %v7744 = vpack.c.b16 %v6592, %v6584
        %v7745 = vpack.c.b16 %v6593, %v6585
        %v7746 = vpack.c.b16 %v6594, %v6586
        %v7747 = vpack.c.b16 %v6595, %v6587
        %v7748 = vpack.c.b16 %v6596, %v6588
        %v7749 = vpack.c.b16 %v6605, %v6597
        %v7750 = vpack.c.b16 %v6606, %v6598
        %v7751 = vpack.c.b16 %v6607, %v6599
        %v7752 = vpack.c.b16 %v6608, %v6600
        %v7753 = vpack.c.b16 %v6609, %v6601
        %v7754 = vpack.c.b16 %v6610, %v6602
        %v7755 = vpack.c.b16 %v6611, %v6603
        %v7756 = vpack.c.b16 %v6612, %v6604
        %v7757 = vpack.c.b16 %v6621, %v6613
        %v7758 = vpack.c.b16 %v6622, %v6614
        %v7759 = vpack.c.b16 %v6623, %v6615
        %v7760 = vpack.c.b16 %v6624, %v6616
        %v7761 = vpack.c.b16 %v6625, %v6617
        %v7762 = vpack.c.b16 %v6626, %v6618
        %v7763 = vpack.c.b16 %v6627, %v6619
        %v7764 = vpack.c.b16 %v6628, %v6620
        %v7765 = vpack.c.b16 %v6637, %v6629
        %v7766 = vpack.c.b16 %v6638, %v6630
        %v7767 = vpack.c.b16 %v6639, %v6631
        %v7768 = vpack.c.b16 %v6640, %v6632
        %v7769 = vpack.c.b16 %v6641, %v6633
        %v7770 = vpack.c.b16 %v6642, %v6634
        %v7771 = vpack.c.b16 %v6643, %v6635
        %v7772 = vpack.c.b16 %v6644, %v6636
        %v7773 = vpack.c.b16 %v6653, %v6645
        %v7774 = vpack.c.b16 %v6654, %v6646
        %v7775 = vpack.c.b16 %v6655, %v6647
        %v7776 = vpack.c.b16 %v6656, %v6648
        %v7777 = vpack.c.b16 %v6657, %v6649
        %v7778 = vpack.c.b16 %v6658, %v6650
        %v7779 = vpack.c.b16 %v6659, %v6651
        %v7780 = vpack.c.b16 %v6660, %v6652
        %v7781 = vpack.c.b16 %v6669, %v6661
        %v7782 = vpack.c.b16 %v6670, %v6662
        %v7783 = vpack.c.b16 %v6671, %v6663
        %v7784 = vpack.c.b16 %v6672, %v6664
        %v7785 = vpack.c.b16 %v6673, %v6665
        %v7786 = vpack.c.b16 %v6674, %v6666
        %v7787 = vpack.c.b16 %v6675, %v6667
        %v7788 = vpack.c.b16 %v6676, %v6668
        %v7789 = vpack.c.b16 %v6685, %v6677
        %v7790 = vpack.c.b16 %v6686, %v6678
        %v7791 = vpack.c.b16 %v6687, %v6679
        %v7792 = vpack.c.b16 %v6688, %v6680
        %v7793 = vpack.c.b16 %v6689, %v6681
        %v7794 = vpack.c.b16 %v6690, %v6682
        %v7795 = vpack.c.b16 %v6691, %v6683
        %v7796 = vpack.c.b16 %v6692, %v6684
        %v7797 = vpack.c.b16 %v6701, %v6693
        %v7798 = vpack.c.b16 %v6702, %v6694
        %v7799 = vpack.c.b16 %v6703, %v6695
        %v7800 = vpack.c.b16 %v6704, %v6696
        %v7801 = vpack.c.b16 %v6705, %v6697
        %v7802 = vpack.c.b16 %v6706, %v6698
        %v7803 = vpack.c.b16 %v6707, %v6699
        %v7804 = vpack.c.b16 %v6708, %v6700
        %v7805 = vpack.c.b16 %v6717, %v6709
        %v7806 = vpack.c.b16 %v6718, %v6710
        %v7807 = vpack.c.b16 %v6719, %v6711
        %v7808 = vpack.c.b16 %v6720, %v6712
        %v7809 = vpack.c.b16 %v6721, %v6713
        %v7810 = vpack.c.b16 %v6722, %v6714
        %v7811 = vpack.c.b16 %v6723, %v6715
        %v7812 = vpack.c.b16 %v6724, %v6716
        %v7813 = vpack.c.b16 %v6733, %v6725
        %v7814 = vpack.c.b16 %v6734, %v6726
        %v7815 = vpack.c.b16 %v6735, %v6727
        %v7816 = vpack.c.b16 %v6736, %v6728
        %v7817 = vpack.c.b16 %v6737, %v6729
        %v7818 = vpack.c.b16 %v6738, %v6730
        %v7819 = vpack.c.b16 %v6739, %v6731
        %v7820 = vpack.c.b16 %v6740, %v6732
        %v7821 = vpack.c.b16 %v6749, %v6741
        %v7822 = vpack.c.b16 %v6750, %v6742
        %v7823 = vpack.c.b16 %v6751, %v6743
        %v7824 = vpack.c.b16 %v6752, %v6744
        %v7825 = vpack.c.b16 %v6753, %v6745
        %v7826 = vpack.c.b16 %v6754, %v6746
        %v7827 = vpack.c.b16 %v6755, %v6747
        %v7828 = vpack.c.b16 %v6756, %v6748
        %v7829 = vpack.c.b16 %v6765, %v6757
        %v7830 = vpack.c.b16 %v6766, %v6758
        %v7831 = vpack.c.b16 %v6767, %v6759
        %v7832 = vpack.c.b16 %v6768, %v6760
        %v7833 = vpack.c.b16 %v6769, %v6761
        %v7834 = vpack.c.b16 %v6770, %v6762
        %v7835 = vpack.c.b16 %v6771, %v6763
        %v7836 = vpack.c.b16 %v6772, %v6764
        %v7837 = vpack.c.b16 %v6781, %v6773
        %v7838 = vpack.c.b16 %v6782, %v6774
        %v7839 = vpack.c.b16 %v6783, %v6775
        %v7840 = vpack.c.b16 %v6784, %v6776
        %v7841 = vpack.c.b16 %v6785, %v6777
        %v7842 = vpack.c.b16 %v6786, %v6778
        %v7843 = vpack.c.b16 %v6787, %v6779
        %v7844 = vpack.c.b16 %v6788, %v6780
        %v7845 = vpack.c.b16 %v6797, %v6789
        %v7846 = vpack.c.b16 %v6798, %v6790
        %v7847 = vpack.c.b16 %v6799, %v6791
        %v7848 = vpack.c.b16 %v6800, %v6792
        %v7849 = vpack.c.b16 %v6801, %v6793
        %v7850 = vpack.c.b16 %v6802, %v6794
        %v7851 = vpack.c.b16 %v6803, %v6795
        %v7852 = vpack.c.b16 %v6804, %v6796
        %v7853 = vpack.c.b16 %v6813, %v6805
        %v7854 = vpack.c.b16 %v6814, %v6806
        %v7855 = vpack.c.b16 %v6815, %v6807
        %v7856 = vpack.c.b16 %v6816, %v6808
        %v7857 = vpack.c.b16 %v6817, %v6809
        %v7858 = vpack.c.b16 %v6818, %v6810
        %v7859 = vpack.c.b16 %v6819, %v6811
        %v7860 = vpack.c.b16 %v6820, %v6812
        %v7861 = vpack.c.b16 %v6829, %v6821
        %v7862 = vpack.c.b16 %v6830, %v6822
        %v7863 = vpack.c.b16 %v6831, %v6823
        %v7864 = vpack.c.b16 %v6832, %v6824
        %v7865 = vpack.c.b16 %v6833, %v6825
        %v7866 = vpack.c.b16 %v6834, %v6826
        %v7867 = vpack.c.b16 %v6835, %v6827
        %v7868 = vpack.c.b16 %v6836, %v6828
        %v7869 = vpack.c.b16 %v6845, %v6837
        %v7870 = vpack.c.b16 %v6846, %v6838
        %v7871 = vpack.c.b16 %v6847, %v6839
        %v7872 = vpack.c.b16 %v6848, %v6840
        %v7873 = vpack.c.b16 %v6849, %v6841
        %v7874 = vpack.c.b16 %v6850, %v6842
        %v7875 = vpack.c.b16 %v6851, %v6843
        %v7876 = vpack.c.b16 %v6852, %v6844
        %8901 = vmatprep.subr.bf16.mxu0 %v6910
        %8902 = vmatpush1.bf16.msra.mxu0 %v6909
        %8903 = vmatprep.subr.bf16.mxu0 %v6902
        %8904 = vmatpush1.bf16.msra.mxu0 %v6901
        %8905 = vmatprep.subr.bf16.mxu0 %v6894
        %8906 = vmatpush1.bf16.msra.mxu0 %v6893
        %8907 = vmatprep.subr.bf16.mxu0 %v6886
        %8908 = vmatpush1.bf16.msra.mxu0 %v6885
        %8909 = vmatprep.subr.bf16.mxu0 %v6878
        %8910 = vmatpush1.bf16.msra.mxu0 %v6877
        %8911 = vmatprep.subr.bf16.mxu0 %v6870
        %8912 = vmatpush1.bf16.msra.mxu0 %v6869
        %8913 = vmatprep.subr.bf16.mxu0 %v6862
        %8914 = vmatpush1.bf16.msra.mxu0 %v6861
        %8915 = vmatprep.subr.bf16.mxu0 %v6854
        %8916 = vmatpush1.bf16.msra.mxu0 %v6853
        %8917 = vmatprep.subr.bf16.mxu0 %v6974
        %8918 = vmatpush2.bf16.msra.mxu0 %v6973
        %8919 = vmatprep.subr.bf16.mxu0 %v6966
        %8920 = vmatpush2.bf16.msra.mxu0 %v6965
        %8921 = vmatprep.subr.bf16.mxu0 %v6958
        %8922 = vmatpush2.bf16.msra.mxu0 %v6957
        %8923 = vmatprep.subr.bf16.mxu0 %v6950
        %8924 = vmatpush2.bf16.msra.mxu0 %v6949
        %8925 = vmatprep.subr.bf16.mxu0 %v6942
        %8926 = vmatpush2.bf16.msra.mxu0 %v6941
        %8927 = vmatprep.subr.bf16.mxu0 %v6934
        %8928 = vmatpush2.bf16.msra.mxu0 %v6933
        %8929 = vmatprep.subr.bf16.mxu0 %v6926
        %8930 = vmatpush2.bf16.msra.mxu0 %v6925
        %8931 = vmatprep.subr.bf16.mxu0 %v6918
        %8932 = vmatpush2.bf16.msra.mxu0 %v6917
        %8933 = vmatprep.mubr.bf16.mxu0 %v2700
        %8934 = vmatmul.mubr.bf16.gmra.mxu0 %v2699
        %v8935 = vpop.f32.mrf.mxu0
        %v8936 = vadd.f32 %v3744, %v8935
        %v8937 = vpop.f32.mrf.mxu0
        %v8938 = vadd.f32 %v3748, %v8937
        %v8939 = vpop.f32.mrf.mxu0
        %v8940 = vadd.f32 %v3744, %v8939
        %v8941 = vpop.f32.mrf.mxu0
        %v8942 = vadd.f32 %v3748, %v8941
        %8943 = vdwg.mxu0
        %8944 = vmatprep.subr.bf16.mxu0 %v7038
        %8945 = vmatpush1.bf16.msra.mxu0 %v7037
        %8946 = vmatprep.subr.bf16.mxu0 %v7030
        %8947 = vmatpush1.bf16.msra.mxu0 %v7029
        %8948 = vmatprep.subr.bf16.mxu0 %v7022
        %8949 = vmatpush1.bf16.msra.mxu0 %v7021
        %8950 = vmatprep.subr.bf16.mxu0 %v7014
        %8951 = vmatpush1.bf16.msra.mxu0 %v7013
        %8952 = vmatprep.subr.bf16.mxu0 %v7006
        %8953 = vmatpush1.bf16.msra.mxu0 %v7005
        %8954 = vmatprep.subr.bf16.mxu0 %v6998
        %8955 = vmatpush1.bf16.msra.mxu0 %v6997
        %8956 = vmatprep.subr.bf16.mxu0 %v6990
        %8957 = vmatpush1.bf16.msra.mxu0 %v6989
        %8958 = vmatprep.subr.bf16.mxu0 %v6982
        %8959 = vmatpush1.bf16.msra.mxu0 %v6981
        %8960 = vmatprep.subr.bf16.mxu0 %v7102
        %8961 = vmatpush2.bf16.msra.mxu0 %v7101
        %8962 = vmatprep.subr.bf16.mxu0 %v7094
        %8963 = vmatpush2.bf16.msra.mxu0 %v7093
        %8964 = vmatprep.subr.bf16.mxu0 %v7086
        %8965 = vmatpush2.bf16.msra.mxu0 %v7085
        %8966 = vmatprep.subr.bf16.mxu0 %v7078
        %8967 = vmatpush2.bf16.msra.mxu0 %v7077
        %8968 = vmatprep.subr.bf16.mxu0 %v7070
        %8969 = vmatpush2.bf16.msra.mxu0 %v7069
        %8970 = vmatprep.subr.bf16.mxu0 %v7062
        %8971 = vmatpush2.bf16.msra.mxu0 %v7061
        %8972 = vmatprep.subr.bf16.mxu0 %v7054
        %8973 = vmatpush2.bf16.msra.mxu0 %v7053
        %8974 = vmatprep.subr.bf16.mxu0 %v7046
        %8975 = vmatpush2.bf16.msra.mxu0 %v7045
        %8976 = vmatprep.mubr.bf16.mxu0 %v2702
        %8977 = vmatmul.mubr.bf16.gmra.mxu0 %v2701
        %v8978 = vpop.f32.mrf.mxu0
        %v8979 = vadd.f32 %v8936, %v8978
        %v8980 = vpop.f32.mrf.mxu0
        %v8981 = vadd.f32 %v8938, %v8980
        %v8982 = vpop.f32.mrf.mxu0
        %v8983 = vadd.f32 %v8940, %v8982
        %v8984 = vpop.f32.mrf.mxu0
        %v8985 = vadd.f32 %v8942, %v8984
        %8986 = vdwg.mxu0
        %8987 = vmatprep.subr.bf16.mxu0 %v7166
        %8988 = vmatpush1.bf16.msra.mxu0 %v7165
        %8989 = vmatprep.subr.bf16.mxu0 %v7158
        %8990 = vmatpush1.bf16.msra.mxu0 %v7157
        %8991 = vmatprep.subr.bf16.mxu0 %v7150
        %8992 = vmatpush1.bf16.msra.mxu0 %v7149
        %8993 = vmatprep.subr.bf16.mxu0 %v7142
        %8994 = vmatpush1.bf16.msra.mxu0 %v7141
        %8995 = vmatprep.subr.bf16.mxu0 %v7134
        %8996 = vmatpush1.bf16.msra.mxu0 %v7133
        %8997 = vmatprep.subr.bf16.mxu0 %v7126
        %8998 = vmatpush1.bf16.msra.mxu0 %v7125
        %8999 = vmatprep.subr.bf16.mxu0 %v7118
        %9000 = vmatpush1.bf16.msra.mxu0 %v7117
        %9001 = vmatprep.subr.bf16.mxu0 %v7110
        %9002 = vmatpush1.bf16.msra.mxu0 %v7109
        %9003 = vmatprep.subr.bf16.mxu0 %v7230
        %9004 = vmatpush2.bf16.msra.mxu0 %v7229
        %9005 = vmatprep.subr.bf16.mxu0 %v7222
        %9006 = vmatpush2.bf16.msra.mxu0 %v7221
        %9007 = vmatprep.subr.bf16.mxu0 %v7214
        %9008 = vmatpush2.bf16.msra.mxu0 %v7213
        %9009 = vmatprep.subr.bf16.mxu0 %v7206
        %9010 = vmatpush2.bf16.msra.mxu0 %v7205
        %9011 = vmatprep.subr.bf16.mxu0 %v7198
        %9012 = vmatpush2.bf16.msra.mxu0 %v7197
        %9013 = vmatprep.subr.bf16.mxu0 %v7190
        %9014 = vmatpush2.bf16.msra.mxu0 %v7189
        %9015 = vmatprep.subr.bf16.mxu0 %v7182
        %9016 = vmatpush2.bf16.msra.mxu0 %v7181
        %9017 = vmatprep.subr.bf16.mxu0 %v7174
        %9018 = vmatpush2.bf16.msra.mxu0 %v7173
        %9019 = vmatprep.mubr.bf16.mxu0 %v2704
        %9020 = vmatmul.mubr.bf16.gmra.mxu0 %v2703
        %v9021 = vpop.f32.mrf.mxu0
        %v9022 = vadd.f32 %v8979, %v9021
        %v9023 = vpop.f32.mrf.mxu0
        %v9024 = vadd.f32 %v8981, %v9023
        %v9025 = vpop.f32.mrf.mxu0
        %v9026 = vadd.f32 %v8983, %v9025
        %v9027 = vpop.f32.mrf.mxu0
        %v9028 = vadd.f32 %v8985, %v9027
        %9029 = vdwg.mxu0
        %9030 = vmatprep.subr.bf16.mxu0 %v7294
        %9031 = vmatpush1.bf16.msra.mxu0 %v7293
        %9032 = vmatprep.subr.bf16.mxu0 %v7286
        %9033 = vmatpush1.bf16.msra.mxu0 %v7285
        %9034 = vmatprep.subr.bf16.mxu0 %v7278
        %9035 = vmatpush1.bf16.msra.mxu0 %v7277
        %9036 = vmatprep.subr.bf16.mxu0 %v7270
        %9037 = vmatpush1.bf16.msra.mxu0 %v7269
        %9038 = vmatprep.subr.bf16.mxu0 %v7262
        %9039 = vmatpush1.bf16.msra.mxu0 %v7261
        %9040 = vmatprep.subr.bf16.mxu0 %v7254
        %9041 = vmatpush1.bf16.msra.mxu0 %v7253
        %9042 = vmatprep.subr.bf16.mxu0 %v7246
        %9043 = vmatpush1.bf16.msra.mxu0 %v7245
        %9044 = vmatprep.subr.bf16.mxu0 %v7238
        %9045 = vmatpush1.bf16.msra.mxu0 %v7237
        %9046 = vmatprep.subr.bf16.mxu0 %v7358
        %9047 = vmatpush2.bf16.msra.mxu0 %v7357
        %9048 = vmatprep.subr.bf16.mxu0 %v7350
        %9049 = vmatpush2.bf16.msra.mxu0 %v7349
        %9050 = vmatprep.subr.bf16.mxu0 %v7342
        %9051 = vmatpush2.bf16.msra.mxu0 %v7341
        %9052 = vmatprep.subr.bf16.mxu0 %v7334
        %9053 = vmatpush2.bf16.msra.mxu0 %v7333
        %9054 = vmatprep.subr.bf16.mxu0 %v7326
        %9055 = vmatpush2.bf16.msra.mxu0 %v7325
        %9056 = vmatprep.subr.bf16.mxu0 %v7318
        %9057 = vmatpush2.bf16.msra.mxu0 %v7317
        %9058 = vmatprep.subr.bf16.mxu0 %v7310
        %9059 = vmatpush2.bf16.msra.mxu0 %v7309
        %9060 = vmatprep.subr.bf16.mxu0 %v7302
        %9061 = vmatpush2.bf16.msra.mxu0 %v7301
        %9062 = vmatprep.mubr.bf16.mxu0 %v2706
        %9063 = vmatmul.mubr.bf16.gmra.mxu0 %v2705
        %v9064 = vpop.f32.mrf.mxu0
        %v9065 = vadd.f32 %v9022, %v9064
        %v9066 = vpop.f32.mrf.mxu0
        %v9067 = vadd.f32 %v9024, %v9066
        %v9068 = vpop.f32.mrf.mxu0
        %v9069 = vadd.f32 %v9026, %v9068
        %v9070 = vpop.f32.mrf.mxu0
        %v9071 = vadd.f32 %v9028, %v9070
        %9072 = vdwg.mxu0
        %9073 = vmatprep.subr.bf16.mxu0 %v7422
        %9074 = vmatpush1.bf16.msra.mxu0 %v7421
        %9075 = vmatprep.subr.bf16.mxu0 %v7414
        %9076 = vmatpush1.bf16.msra.mxu0 %v7413
        %9077 = vmatprep.subr.bf16.mxu0 %v7406
        %9078 = vmatpush1.bf16.msra.mxu0 %v7405
        %9079 = vmatprep.subr.bf16.mxu0 %v7398
        %9080 = vmatpush1.bf16.msra.mxu0 %v7397
        %9081 = vmatprep.subr.bf16.mxu0 %v7390
        %9082 = vmatpush1.bf16.msra.mxu0 %v7389
        %9083 = vmatprep.subr.bf16.mxu0 %v7382
        %9084 = vmatpush1.bf16.msra.mxu0 %v7381
        %9085 = vmatprep.subr.bf16.mxu0 %v7374
        %9086 = vmatpush1.bf16.msra.mxu0 %v7373
        %9087 = vmatprep.subr.bf16.mxu0 %v7366
        %9088 = vmatpush1.bf16.msra.mxu0 %v7365
        %9089 = vmatprep.subr.bf16.mxu0 %v7486
        %9090 = vmatpush2.bf16.msra.mxu0 %v7485
        %9091 = vmatprep.subr.bf16.mxu0 %v7478
        %9092 = vmatpush2.bf16.msra.mxu0 %v7477
        %9093 = vmatprep.subr.bf16.mxu0 %v7470
        %9094 = vmatpush2.bf16.msra.mxu0 %v7469
        %9095 = vmatprep.subr.bf16.mxu0 %v7462
        %9096 = vmatpush2.bf16.msra.mxu0 %v7461
        %9097 = vmatprep.subr.bf16.mxu0 %v7454
        %9098 = vmatpush2.bf16.msra.mxu0 %v7453
        %9099 = vmatprep.subr.bf16.mxu0 %v7446
        %9100 = vmatpush2.bf16.msra.mxu0 %v7445
        %9101 = vmatprep.subr.bf16.mxu0 %v7438
        %9102 = vmatpush2.bf16.msra.mxu0 %v7437
        %9103 = vmatprep.subr.bf16.mxu0 %v7430
        %9104 = vmatpush2.bf16.msra.mxu0 %v7429
        %9105 = vmatprep.mubr.bf16.mxu0 %v2708
        %9106 = vmatmul.mubr.bf16.gmra.mxu0 %v2707
        %v9107 = vpop.f32.mrf.mxu0
        %v9108 = vadd.f32 %v9065, %v9107
        %v9109 = vpop.f32.mrf.mxu0
        %v9110 = vadd.f32 %v9067, %v9109
        %v9111 = vpop.f32.mrf.mxu0
        %v9112 = vadd.f32 %v9069, %v9111
        %v9113 = vpop.f32.mrf.mxu0
        %v9114 = vadd.f32 %v9071, %v9113
        %9115 = vdwg.mxu0
        %9116 = vmatprep.subr.bf16.mxu0 %v7550
        %9117 = vmatpush1.bf16.msra.mxu0 %v7549
        %9118 = vmatprep.subr.bf16.mxu0 %v7542
        %9119 = vmatpush1.bf16.msra.mxu0 %v7541
        %9120 = vmatprep.subr.bf16.mxu0 %v7534
        %9121 = vmatpush1.bf16.msra.mxu0 %v7533
        %9122 = vmatprep.subr.bf16.mxu0 %v7526
        %9123 = vmatpush1.bf16.msra.mxu0 %v7525
        %9124 = vmatprep.subr.bf16.mxu0 %v7518
        %9125 = vmatpush1.bf16.msra.mxu0 %v7517
        %9126 = vmatprep.subr.bf16.mxu0 %v7510
        %9127 = vmatpush1.bf16.msra.mxu0 %v7509
        %9128 = vmatprep.subr.bf16.mxu0 %v7502
        %9129 = vmatpush1.bf16.msra.mxu0 %v7501
        %9130 = vmatprep.subr.bf16.mxu0 %v7494
        %9131 = vmatpush1.bf16.msra.mxu0 %v7493
        %9132 = vmatprep.subr.bf16.mxu0 %v7614
        %9133 = vmatpush2.bf16.msra.mxu0 %v7613
        %9134 = vmatprep.subr.bf16.mxu0 %v7606
        %9135 = vmatpush2.bf16.msra.mxu0 %v7605
        %9136 = vmatprep.subr.bf16.mxu0 %v7598
        %9137 = vmatpush2.bf16.msra.mxu0 %v7597
        %9138 = vmatprep.subr.bf16.mxu0 %v7590
        %9139 = vmatpush2.bf16.msra.mxu0 %v7589
        %9140 = vmatprep.subr.bf16.mxu0 %v7582
        %9141 = vmatpush2.bf16.msra.mxu0 %v7581
        %9142 = vmatprep.subr.bf16.mxu0 %v7574
        %9143 = vmatpush2.bf16.msra.mxu0 %v7573
        %9144 = vmatprep.subr.bf16.mxu0 %v7566
        %9145 = vmatpush2.bf16.msra.mxu0 %v7565
        %9146 = vmatprep.subr.bf16.mxu0 %v7558
        %9147 = vmatpush2.bf16.msra.mxu0 %v7557
        %9148 = vmatprep.mubr.bf16.mxu0 %v2710
        %9149 = vmatmul.mubr.bf16.gmra.mxu0 %v2709
        %v9150 = vpop.f32.mrf.mxu0
        %v9151 = vadd.f32 %v9108, %v9150
        %v9152 = vpop.f32.mrf.mxu0
        %v9153 = vadd.f32 %v9110, %v9152
        %v9154 = vpop.f32.mrf.mxu0
        %v9155 = vadd.f32 %v9112, %v9154
        %v9156 = vpop.f32.mrf.mxu0
        %v9157 = vadd.f32 %v9114, %v9156
        %9158 = vdwg.mxu0
        %9159 = vmatprep.subr.bf16.mxu0 %v7678
        %9160 = vmatpush1.bf16.msra.mxu0 %v7677
        %9161 = vmatprep.subr.bf16.mxu0 %v7670
        %9162 = vmatpush1.bf16.msra.mxu0 %v7669
        %9163 = vmatprep.subr.bf16.mxu0 %v7662
        %9164 = vmatpush1.bf16.msra.mxu0 %v7661
        %9165 = vmatprep.subr.bf16.mxu0 %v7654
        %9166 = vmatpush1.bf16.msra.mxu0 %v7653
        %9167 = vmatprep.subr.bf16.mxu0 %v7646
        %9168 = vmatpush1.bf16.msra.mxu0 %v7645
        %9169 = vmatprep.subr.bf16.mxu0 %v7638
        %9170 = vmatpush1.bf16.msra.mxu0 %v7637
        %9171 = vmatprep.subr.bf16.mxu0 %v7630
        %9172 = vmatpush1.bf16.msra.mxu0 %v7629
        %9173 = vmatprep.subr.bf16.mxu0 %v7622
        %9174 = vmatpush1.bf16.msra.mxu0 %v7621
        %9175 = vmatprep.subr.bf16.mxu0 %v7742
        %9176 = vmatpush2.bf16.msra.mxu0 %v7741
        %9177 = vmatprep.subr.bf16.mxu0 %v7734
        %9178 = vmatpush2.bf16.msra.mxu0 %v7733
        %9179 = vmatprep.subr.bf16.mxu0 %v7726
        %9180 = vmatpush2.bf16.msra.mxu0 %v7725
        %9181 = vmatprep.subr.bf16.mxu0 %v7718
        %9182 = vmatpush2.bf16.msra.mxu0 %v7717
        %9183 = vmatprep.subr.bf16.mxu0 %v7710
        %9184 = vmatpush2.bf16.msra.mxu0 %v7709
        %9185 = vmatprep.subr.bf16.mxu0 %v7702
        %9186 = vmatpush2.bf16.msra.mxu0 %v7701
        %9187 = vmatprep.subr.bf16.mxu0 %v7694
        %9188 = vmatpush2.bf16.msra.mxu0 %v7693
        %9189 = vmatprep.subr.bf16.mxu0 %v7686
        %9190 = vmatpush2.bf16.msra.mxu0 %v7685
        %9191 = vmatprep.mubr.bf16.mxu0 %v2712
        %9192 = vmatmul.mubr.bf16.gmra.mxu0 %v2711
        %v9193 = vpop.f32.mrf.mxu0
        %v9194 = vadd.f32 %v9151, %v9193
        %v9195 = vpop.f32.mrf.mxu0
        %v9196 = vadd.f32 %v9153, %v9195
        %v9197 = vpop.f32.mrf.mxu0
        %v9198 = vadd.f32 %v9155, %v9197
        %v9199 = vpop.f32.mrf.mxu0
        %v9200 = vadd.f32 %v9157, %v9199
        %9201 = vdwg.mxu0
        %9202 = vmatprep.subr.bf16.mxu0 %v7806
        %9203 = vmatpush1.bf16.msra.mxu0 %v7805
        %9204 = vmatprep.subr.bf16.mxu0 %v7798
        %9205 = vmatpush1.bf16.msra.mxu0 %v7797
        %9206 = vmatprep.subr.bf16.mxu0 %v7790
        %9207 = vmatpush1.bf16.msra.mxu0 %v7789
        %9208 = vmatprep.subr.bf16.mxu0 %v7782
        %9209 = vmatpush1.bf16.msra.mxu0 %v7781
        %9210 = vmatprep.subr.bf16.mxu0 %v7774
        %9211 = vmatpush1.bf16.msra.mxu0 %v7773
        %9212 = vmatprep.subr.bf16.mxu0 %v7766
        %9213 = vmatpush1.bf16.msra.mxu0 %v7765
        %9214 = vmatprep.subr.bf16.mxu0 %v7758
        %9215 = vmatpush1.bf16.msra.mxu0 %v7757
        %9216 = vmatprep.subr.bf16.mxu0 %v7750
        %9217 = vmatpush1.bf16.msra.mxu0 %v7749
        %9218 = vmatprep.subr.bf16.mxu0 %v7870
        %9219 = vmatpush2.bf16.msra.mxu0 %v7869
        %9220 = vmatprep.subr.bf16.mxu0 %v7862
        %9221 = vmatpush2.bf16.msra.mxu0 %v7861
        %9222 = vmatprep.subr.bf16.mxu0 %v7854
        %9223 = vmatpush2.bf16.msra.mxu0 %v7853
        %9224 = vmatprep.subr.bf16.mxu0 %v7846
        %9225 = vmatpush2.bf16.msra.mxu0 %v7845
        %9226 = vmatprep.subr.bf16.mxu0 %v7838
        %9227 = vmatpush2.bf16.msra.mxu0 %v7837
        %9228 = vmatprep.subr.bf16.mxu0 %v7830
        %9229 = vmatpush2.bf16.msra.mxu0 %v7829
        %9230 = vmatprep.subr.bf16.mxu0 %v7822
        %9231 = vmatpush2.bf16.msra.mxu0 %v7821
        %9232 = vmatprep.subr.bf16.mxu0 %v7814
        %9233 = vmatpush2.bf16.msra.mxu0 %v7813
        %9234 = vmatprep.mubr.bf16.mxu0 %v2714
        %9235 = vmatmul.mubr.bf16.gmra.mxu0 %v2713
        %v9236 = vpop.f32.mrf.mxu0
        %v9237 = vadd.f32 %v9194, %v9236
        %v9238 = vpop.f32.mrf.mxu0
        %v9239 = vadd.f32 %v9196, %v9238
        %v9240 = vpop.f32.mrf.mxu0
        %v9241 = vadd.f32 %v9198, %v9240
        %v9242 = vpop.f32.mrf.mxu0
        %v9243 = vadd.f32 %v9200, %v9242
        %9244 = vdwg.mxu0
        %9245 = vmatprep.subr.bf16.mxu0 %v6912
        %9246 = vmatpush1.bf16.msra.mxu0 %v6911
        %9247 = vmatprep.subr.bf16.mxu0 %v6904
        %9248 = vmatpush1.bf16.msra.mxu0 %v6903
        %9249 = vmatprep.subr.bf16.mxu0 %v6896
        %9250 = vmatpush1.bf16.msra.mxu0 %v6895
        %9251 = vmatprep.subr.bf16.mxu0 %v6888
        %9252 = vmatpush1.bf16.msra.mxu0 %v6887
        %9253 = vmatprep.subr.bf16.mxu0 %v6880
        %9254 = vmatpush1.bf16.msra.mxu0 %v6879
        %9255 = vmatprep.subr.bf16.mxu0 %v6872
        %9256 = vmatpush1.bf16.msra.mxu0 %v6871
        %9257 = vmatprep.subr.bf16.mxu0 %v6864
        %9258 = vmatpush1.bf16.msra.mxu0 %v6863
        %9259 = vmatprep.subr.bf16.mxu0 %v6856
        %9260 = vmatpush1.bf16.msra.mxu0 %v6855
        %9261 = vmatprep.subr.bf16.mxu0 %v6976
        %9262 = vmatpush2.bf16.msra.mxu0 %v6975
        %9263 = vmatprep.subr.bf16.mxu0 %v6968
        %9264 = vmatpush2.bf16.msra.mxu0 %v6967
        %9265 = vmatprep.subr.bf16.mxu0 %v6960
        %9266 = vmatpush2.bf16.msra.mxu0 %v6959
        %9267 = vmatprep.subr.bf16.mxu0 %v6952
        %9268 = vmatpush2.bf16.msra.mxu0 %v6951
        %9269 = vmatprep.subr.bf16.mxu0 %v6944
        %9270 = vmatpush2.bf16.msra.mxu0 %v6943
        %9271 = vmatprep.subr.bf16.mxu0 %v6936
        %9272 = vmatpush2.bf16.msra.mxu0 %v6935
        %9273 = vmatprep.subr.bf16.mxu0 %v6928
        %9274 = vmatpush2.bf16.msra.mxu0 %v6927
        %9275 = vmatprep.subr.bf16.mxu0 %v6920
        %9276 = vmatpush2.bf16.msra.mxu0 %v6919
        %9277 = vmatprep.mubr.bf16.mxu0 %v2700
        %9278 = vmatmul.mubr.bf16.gmra.mxu0 %v2699
        %v9279 = vpop.f32.mrf.mxu0
        %v9280 = vadd.f32 %v3752, %v9279
        %v9281 = vpop.f32.mrf.mxu0
        %v9282 = vadd.f32 %v3756, %v9281
        %v9283 = vpop.f32.mrf.mxu0
        %v9284 = vadd.f32 %v3752, %v9283
        %v9285 = vpop.f32.mrf.mxu0
        %v9286 = vadd.f32 %v3756, %v9285
        %9287 = vdwg.mxu0
        %9288 = vmatprep.subr.bf16.mxu0 %v7040
        %9289 = vmatpush1.bf16.msra.mxu0 %v7039
        %9290 = vmatprep.subr.bf16.mxu0 %v7032
        %9291 = vmatpush1.bf16.msra.mxu0 %v7031
        %9292 = vmatprep.subr.bf16.mxu0 %v7024
        %9293 = vmatpush1.bf16.msra.mxu0 %v7023
        %9294 = vmatprep.subr.bf16.mxu0 %v7016
        %9295 = vmatpush1.bf16.msra.mxu0 %v7015
        %9296 = vmatprep.subr.bf16.mxu0 %v7008
        %9297 = vmatpush1.bf16.msra.mxu0 %v7007
        %9298 = vmatprep.subr.bf16.mxu0 %v7000
        %9299 = vmatpush1.bf16.msra.mxu0 %v6999
        %9300 = vmatprep.subr.bf16.mxu0 %v6992
        %9301 = vmatpush1.bf16.msra.mxu0 %v6991
        %9302 = vmatprep.subr.bf16.mxu0 %v6984
        %9303 = vmatpush1.bf16.msra.mxu0 %v6983
        %9304 = vmatprep.subr.bf16.mxu0 %v7104
        %9305 = vmatpush2.bf16.msra.mxu0 %v7103
        %9306 = vmatprep.subr.bf16.mxu0 %v7096
        %9307 = vmatpush2.bf16.msra.mxu0 %v7095
        %9308 = vmatprep.subr.bf16.mxu0 %v7088
        %9309 = vmatpush2.bf16.msra.mxu0 %v7087
        %9310 = vmatprep.subr.bf16.mxu0 %v7080
        %9311 = vmatpush2.bf16.msra.mxu0 %v7079
        %9312 = vmatprep.subr.bf16.mxu0 %v7072
        %9313 = vmatpush2.bf16.msra.mxu0 %v7071
        %9314 = vmatprep.subr.bf16.mxu0 %v7064
        %9315 = vmatpush2.bf16.msra.mxu0 %v7063
        %9316 = vmatprep.subr.bf16.mxu0 %v7056
        %9317 = vmatpush2.bf16.msra.mxu0 %v7055
        %9318 = vmatprep.subr.bf16.mxu0 %v7048
        %9319 = vmatpush2.bf16.msra.mxu0 %v7047
        %9320 = vmatprep.mubr.bf16.mxu0 %v2702
        %9321 = vmatmul.mubr.bf16.gmra.mxu0 %v2701
        %v9322 = vpop.f32.mrf.mxu0
        %v9323 = vadd.f32 %v9280, %v9322
        %v9324 = vpop.f32.mrf.mxu0
        %v9325 = vadd.f32 %v9282, %v9324
        %v9326 = vpop.f32.mrf.mxu0
        %v9327 = vadd.f32 %v9284, %v9326
        %v9328 = vpop.f32.mrf.mxu0
        %v9329 = vadd.f32 %v9286, %v9328
        %9330 = vdwg.mxu0
        %9331 = vmatprep.subr.bf16.mxu0 %v7168
        %9332 = vmatpush1.bf16.msra.mxu0 %v7167
        %9333 = vmatprep.subr.bf16.mxu0 %v7160
        %9334 = vmatpush1.bf16.msra.mxu0 %v7159
        %9335 = vmatprep.subr.bf16.mxu0 %v7152
        %9336 = vmatpush1.bf16.msra.mxu0 %v7151
        %9337 = vmatprep.subr.bf16.mxu0 %v7144
        %9338 = vmatpush1.bf16.msra.mxu0 %v7143
        %9339 = vmatprep.subr.bf16.mxu0 %v7136
        %9340 = vmatpush1.bf16.msra.mxu0 %v7135
        %9341 = vmatprep.subr.bf16.mxu0 %v7128
        %9342 = vmatpush1.bf16.msra.mxu0 %v7127
        %9343 = vmatprep.subr.bf16.mxu0 %v7120
        %9344 = vmatpush1.bf16.msra.mxu0 %v7119
        %9345 = vmatprep.subr.bf16.mxu0 %v7112
        %9346 = vmatpush1.bf16.msra.mxu0 %v7111
        %9347 = vmatprep.subr.bf16.mxu0 %v7232
        %9348 = vmatpush2.bf16.msra.mxu0 %v7231
        %9349 = vmatprep.subr.bf16.mxu0 %v7224
        %9350 = vmatpush2.bf16.msra.mxu0 %v7223
        %9351 = vmatprep.subr.bf16.mxu0 %v7216
        %9352 = vmatpush2.bf16.msra.mxu0 %v7215
        %9353 = vmatprep.subr.bf16.mxu0 %v7208
        %9354 = vmatpush2.bf16.msra.mxu0 %v7207
        %9355 = vmatprep.subr.bf16.mxu0 %v7200
        %9356 = vmatpush2.bf16.msra.mxu0 %v7199
        %9357 = vmatprep.subr.bf16.mxu0 %v7192
        %9358 = vmatpush2.bf16.msra.mxu0 %v7191
        %9359 = vmatprep.subr.bf16.mxu0 %v7184
        %9360 = vmatpush2.bf16.msra.mxu0 %v7183
        %9361 = vmatprep.subr.bf16.mxu0 %v7176
        %9362 = vmatpush2.bf16.msra.mxu0 %v7175
        %9363 = vmatprep.mubr.bf16.mxu0 %v2704
        %9364 = vmatmul.mubr.bf16.gmra.mxu0 %v2703
        %v9365 = vpop.f32.mrf.mxu0
        %v9366 = vadd.f32 %v9323, %v9365
        %v9367 = vpop.f32.mrf.mxu0
        %v9368 = vadd.f32 %v9325, %v9367
        %v9369 = vpop.f32.mrf.mxu0
        %v9370 = vadd.f32 %v9327, %v9369
        %v9371 = vpop.f32.mrf.mxu0
        %v9372 = vadd.f32 %v9329, %v9371
        %9373 = vdwg.mxu0
        %9374 = vmatprep.subr.bf16.mxu0 %v7296
        %9375 = vmatpush1.bf16.msra.mxu0 %v7295
        %9376 = vmatprep.subr.bf16.mxu0 %v7288
        %9377 = vmatpush1.bf16.msra.mxu0 %v7287
        %9378 = vmatprep.subr.bf16.mxu0 %v7280
        %9379 = vmatpush1.bf16.msra.mxu0 %v7279
        %9380 = vmatprep.subr.bf16.mxu0 %v7272
        %9381 = vmatpush1.bf16.msra.mxu0 %v7271
        %9382 = vmatprep.subr.bf16.mxu0 %v7264
        %9383 = vmatpush1.bf16.msra.mxu0 %v7263
        %9384 = vmatprep.subr.bf16.mxu0 %v7256
        %9385 = vmatpush1.bf16.msra.mxu0 %v7255
        %9386 = vmatprep.subr.bf16.mxu0 %v7248
        %9387 = vmatpush1.bf16.msra.mxu0 %v7247
        %9388 = vmatprep.subr.bf16.mxu0 %v7240
        %9389 = vmatpush1.bf16.msra.mxu0 %v7239
        %9390 = vmatprep.subr.bf16.mxu0 %v7360
        %9391 = vmatpush2.bf16.msra.mxu0 %v7359
        %9392 = vmatprep.subr.bf16.mxu0 %v7352
        %9393 = vmatpush2.bf16.msra.mxu0 %v7351
        %9394 = vmatprep.subr.bf16.mxu0 %v7344
        %9395 = vmatpush2.bf16.msra.mxu0 %v7343
        %9396 = vmatprep.subr.bf16.mxu0 %v7336
        %9397 = vmatpush2.bf16.msra.mxu0 %v7335
        %9398 = vmatprep.subr.bf16.mxu0 %v7328
        %9399 = vmatpush2.bf16.msra.mxu0 %v7327
        %9400 = vmatprep.subr.bf16.mxu0 %v7320
        %9401 = vmatpush2.bf16.msra.mxu0 %v7319
        %9402 = vmatprep.subr.bf16.mxu0 %v7312
        %9403 = vmatpush2.bf16.msra.mxu0 %v7311
        %9404 = vmatprep.subr.bf16.mxu0 %v7304
        %9405 = vmatpush2.bf16.msra.mxu0 %v7303
        %9406 = vmatprep.mubr.bf16.mxu0 %v2706
        %9407 = vmatmul.mubr.bf16.gmra.mxu0 %v2705
        %v9408 = vpop.f32.mrf.mxu0
        %v9409 = vadd.f32 %v9366, %v9408
        %v9410 = vpop.f32.mrf.mxu0
        %v9411 = vadd.f32 %v9368, %v9410
        %v9412 = vpop.f32.mrf.mxu0
        %v9413 = vadd.f32 %v9370, %v9412
        %v9414 = vpop.f32.mrf.mxu0
        %v9415 = vadd.f32 %v9372, %v9414
        %9416 = vdwg.mxu0
        %9417 = vmatprep.subr.bf16.mxu0 %v7424
        %9418 = vmatpush1.bf16.msra.mxu0 %v7423
        %9419 = vmatprep.subr.bf16.mxu0 %v7416
        %9420 = vmatpush1.bf16.msra.mxu0 %v7415
        %9421 = vmatprep.subr.bf16.mxu0 %v7408
        %9422 = vmatpush1.bf16.msra.mxu0 %v7407
        %9423 = vmatprep.subr.bf16.mxu0 %v7400
        %9424 = vmatpush1.bf16.msra.mxu0 %v7399
        %9425 = vmatprep.subr.bf16.mxu0 %v7392
        %9426 = vmatpush1.bf16.msra.mxu0 %v7391
        %9427 = vmatprep.subr.bf16.mxu0 %v7384
        %9428 = vmatpush1.bf16.msra.mxu0 %v7383
        %9429 = vmatprep.subr.bf16.mxu0 %v7376
        %9430 = vmatpush1.bf16.msra.mxu0 %v7375
        %9431 = vmatprep.subr.bf16.mxu0 %v7368
        %9432 = vmatpush1.bf16.msra.mxu0 %v7367
        %9433 = vmatprep.subr.bf16.mxu0 %v7488
        %9434 = vmatpush2.bf16.msra.mxu0 %v7487
        %9435 = vmatprep.subr.bf16.mxu0 %v7480
        %9436 = vmatpush2.bf16.msra.mxu0 %v7479
        %9437 = vmatprep.subr.bf16.mxu0 %v7472
        %9438 = vmatpush2.bf16.msra.mxu0 %v7471
        %9439 = vmatprep.subr.bf16.mxu0 %v7464
        %9440 = vmatpush2.bf16.msra.mxu0 %v7463
        %9441 = vmatprep.subr.bf16.mxu0 %v7456
        %9442 = vmatpush2.bf16.msra.mxu0 %v7455
        %9443 = vmatprep.subr.bf16.mxu0 %v7448
        %9444 = vmatpush2.bf16.msra.mxu0 %v7447
        %9445 = vmatprep.subr.bf16.mxu0 %v7440
        %9446 = vmatpush2.bf16.msra.mxu0 %v7439
        %9447 = vmatprep.subr.bf16.mxu0 %v7432
        %9448 = vmatpush2.bf16.msra.mxu0 %v7431
        %9449 = vmatprep.mubr.bf16.mxu0 %v2708
        %9450 = vmatmul.mubr.bf16.gmra.mxu0 %v2707
        %v9451 = vpop.f32.mrf.mxu0
        %v9452 = vadd.f32 %v9409, %v9451
        %v9453 = vpop.f32.mrf.mxu0
        %v9454 = vadd.f32 %v9411, %v9453
        %v9455 = vpop.f32.mrf.mxu0
        %v9456 = vadd.f32 %v9413, %v9455
        %v9457 = vpop.f32.mrf.mxu0
        %v9458 = vadd.f32 %v9415, %v9457
        %9459 = vdwg.mxu0
        %9460 = vmatprep.subr.bf16.mxu0 %v7552
        %9461 = vmatpush1.bf16.msra.mxu0 %v7551
        %9462 = vmatprep.subr.bf16.mxu0 %v7544
        %9463 = vmatpush1.bf16.msra.mxu0 %v7543
        %9464 = vmatprep.subr.bf16.mxu0 %v7536
        %9465 = vmatpush1.bf16.msra.mxu0 %v7535
        %9466 = vmatprep.subr.bf16.mxu0 %v7528
        %9467 = vmatpush1.bf16.msra.mxu0 %v7527
        %9468 = vmatprep.subr.bf16.mxu0 %v7520
        %9469 = vmatpush1.bf16.msra.mxu0 %v7519
        %9470 = vmatprep.subr.bf16.mxu0 %v7512
        %9471 = vmatpush1.bf16.msra.mxu0 %v7511
        %9472 = vmatprep.subr.bf16.mxu0 %v7504
        %9473 = vmatpush1.bf16.msra.mxu0 %v7503
        %9474 = vmatprep.subr.bf16.mxu0 %v7496
        %9475 = vmatpush1.bf16.msra.mxu0 %v7495
        %9476 = vmatprep.subr.bf16.mxu0 %v7616
        %9477 = vmatpush2.bf16.msra.mxu0 %v7615
        %9478 = vmatprep.subr.bf16.mxu0 %v7608
        %9479 = vmatpush2.bf16.msra.mxu0 %v7607
        %9480 = vmatprep.subr.bf16.mxu0 %v7600
        %9481 = vmatpush2.bf16.msra.mxu0 %v7599
        %9482 = vmatprep.subr.bf16.mxu0 %v7592
        %9483 = vmatpush2.bf16.msra.mxu0 %v7591
        %9484 = vmatprep.subr.bf16.mxu0 %v7584
        %9485 = vmatpush2.bf16.msra.mxu0 %v7583
        %9486 = vmatprep.subr.bf16.mxu0 %v7576
        %9487 = vmatpush2.bf16.msra.mxu0 %v7575
        %9488 = vmatprep.subr.bf16.mxu0 %v7568
        %9489 = vmatpush2.bf16.msra.mxu0 %v7567
        %9490 = vmatprep.subr.bf16.mxu0 %v7560
        %9491 = vmatpush2.bf16.msra.mxu0 %v7559
        %9492 = vmatprep.mubr.bf16.mxu0 %v2710
        %9493 = vmatmul.mubr.bf16.gmra.mxu0 %v2709
        %v9494 = vpop.f32.mrf.mxu0
        %v9495 = vadd.f32 %v9452, %v9494
        %v9496 = vpop.f32.mrf.mxu0
        %v9497 = vadd.f32 %v9454, %v9496
        %v9498 = vpop.f32.mrf.mxu0
        %v9499 = vadd.f32 %v9456, %v9498
        %v9500 = vpop.f32.mrf.mxu0
        %v9501 = vadd.f32 %v9458, %v9500
        %9502 = vdwg.mxu0
        %9503 = vmatprep.subr.bf16.mxu0 %v7680
        %9504 = vmatpush1.bf16.msra.mxu0 %v7679
        %9505 = vmatprep.subr.bf16.mxu0 %v7672
        %9506 = vmatpush1.bf16.msra.mxu0 %v7671
        %9507 = vmatprep.subr.bf16.mxu0 %v7664
        %9508 = vmatpush1.bf16.msra.mxu0 %v7663
        %9509 = vmatprep.subr.bf16.mxu0 %v7656
        %9510 = vmatpush1.bf16.msra.mxu0 %v7655
        %9511 = vmatprep.subr.bf16.mxu0 %v7648
        %9512 = vmatpush1.bf16.msra.mxu0 %v7647
        %9513 = vmatprep.subr.bf16.mxu0 %v7640
        %9514 = vmatpush1.bf16.msra.mxu0 %v7639
        %9515 = vmatprep.subr.bf16.mxu0 %v7632
        %9516 = vmatpush1.bf16.msra.mxu0 %v7631
        %9517 = vmatprep.subr.bf16.mxu0 %v7624
        %9518 = vmatpush1.bf16.msra.mxu0 %v7623
        %9519 = vmatprep.subr.bf16.mxu0 %v7744
        %9520 = vmatpush2.bf16.msra.mxu0 %v7743
        %9521 = vmatprep.subr.bf16.mxu0 %v7736
        %9522 = vmatpush2.bf16.msra.mxu0 %v7735
        %9523 = vmatprep.subr.bf16.mxu0 %v7728
        %9524 = vmatpush2.bf16.msra.mxu0 %v7727
        %9525 = vmatprep.subr.bf16.mxu0 %v7720
        %9526 = vmatpush2.bf16.msra.mxu0 %v7719
        %9527 = vmatprep.subr.bf16.mxu0 %v7712
        %9528 = vmatpush2.bf16.msra.mxu0 %v7711
        %9529 = vmatprep.subr.bf16.mxu0 %v7704
        %9530 = vmatpush2.bf16.msra.mxu0 %v7703
        %9531 = vmatprep.subr.bf16.mxu0 %v7696
        %9532 = vmatpush2.bf16.msra.mxu0 %v7695
        %9533 = vmatprep.subr.bf16.mxu0 %v7688
        %9534 = vmatpush2.bf16.msra.mxu0 %v7687
        %9535 = vmatprep.mubr.bf16.mxu0 %v2712
        %9536 = vmatmul.mubr.bf16.gmra.mxu0 %v2711
        %v9537 = vpop.f32.mrf.mxu0
        %v9538 = vadd.f32 %v9495, %v9537
        %v9539 = vpop.f32.mrf.mxu0
        %v9540 = vadd.f32 %v9497, %v9539
        %v9541 = vpop.f32.mrf.mxu0
        %v9542 = vadd.f32 %v9499, %v9541
        %v9543 = vpop.f32.mrf.mxu0
        %v9544 = vadd.f32 %v9501, %v9543
        %9545 = vdwg.mxu0
        %9546 = vmatprep.subr.bf16.mxu0 %v7808
        %9547 = vmatpush1.bf16.msra.mxu0 %v7807
        %9548 = vmatprep.subr.bf16.mxu0 %v7800
        %9549 = vmatpush1.bf16.msra.mxu0 %v7799
        %9550 = vmatprep.subr.bf16.mxu0 %v7792
        %9551 = vmatpush1.bf16.msra.mxu0 %v7791
        %9552 = vmatprep.subr.bf16.mxu0 %v7784
        %9553 = vmatpush1.bf16.msra.mxu0 %v7783
        %9554 = vmatprep.subr.bf16.mxu0 %v7776
        %9555 = vmatpush1.bf16.msra.mxu0 %v7775
        %9556 = vmatprep.subr.bf16.mxu0 %v7768
        %9557 = vmatpush1.bf16.msra.mxu0 %v7767
        %9558 = vmatprep.subr.bf16.mxu0 %v7760
        %9559 = vmatpush1.bf16.msra.mxu0 %v7759
        %9560 = vmatprep.subr.bf16.mxu0 %v7752
        %9561 = vmatpush1.bf16.msra.mxu0 %v7751
        %9562 = vmatprep.subr.bf16.mxu0 %v7872
        %9563 = vmatpush2.bf16.msra.mxu0 %v7871
        %9564 = vmatprep.subr.bf16.mxu0 %v7864
        %9565 = vmatpush2.bf16.msra.mxu0 %v7863
        %9566 = vmatprep.subr.bf16.mxu0 %v7856
        %9567 = vmatpush2.bf16.msra.mxu0 %v7855
        %9568 = vmatprep.subr.bf16.mxu0 %v7848
        %9569 = vmatpush2.bf16.msra.mxu0 %v7847
        %9570 = vmatprep.subr.bf16.mxu0 %v7840
        %9571 = vmatpush2.bf16.msra.mxu0 %v7839
        %9572 = vmatprep.subr.bf16.mxu0 %v7832
        %9573 = vmatpush2.bf16.msra.mxu0 %v7831
        %9574 = vmatprep.subr.bf16.mxu0 %v7824
        %9575 = vmatpush2.bf16.msra.mxu0 %v7823
        %9576 = vmatprep.subr.bf16.mxu0 %v7816
        %9577 = vmatpush2.bf16.msra.mxu0 %v7815
        %9578 = vmatprep.mubr.bf16.mxu0 %v2714
        %9579 = vmatmul.mubr.bf16.gmra.mxu0 %v2713
        %v9580 = vpop.f32.mrf.mxu0
        %v9581 = vadd.f32 %v9538, %v9580
        %v9582 = vpop.f32.mrf.mxu0
        %v9583 = vadd.f32 %v9540, %v9582
        %v9584 = vpop.f32.mrf.mxu0
        %v9585 = vadd.f32 %v9542, %v9584
        %v9586 = vpop.f32.mrf.mxu0
        %v9587 = vadd.f32 %v9544, %v9586
        %9588 = vdwg.mxu0
        %9589 = vmatprep.subr.bf16.mxu0 %v6914
        %9590 = vmatpush1.bf16.msra.mxu0 %v6913
        %9591 = vmatprep.subr.bf16.mxu0 %v6906
        %9592 = vmatpush1.bf16.msra.mxu0 %v6905
        %9593 = vmatprep.subr.bf16.mxu0 %v6898
        %9594 = vmatpush1.bf16.msra.mxu0 %v6897
        %9595 = vmatprep.subr.bf16.mxu0 %v6890
        %9596 = vmatpush1.bf16.msra.mxu0 %v6889
        %9597 = vmatprep.subr.bf16.mxu0 %v6882
        %9598 = vmatpush1.bf16.msra.mxu0 %v6881
        %9599 = vmatprep.subr.bf16.mxu0 %v6874
        %9600 = vmatpush1.bf16.msra.mxu0 %v6873
        %9601 = vmatprep.subr.bf16.mxu0 %v6866
        %9602 = vmatpush1.bf16.msra.mxu0 %v6865
        %9603 = vmatprep.subr.bf16.mxu0 %v6858
        %9604 = vmatpush1.bf16.msra.mxu0 %v6857
        %9605 = vmatprep.subr.bf16.mxu0 %v6978
        %9606 = vmatpush2.bf16.msra.mxu0 %v6977
        %9607 = vmatprep.subr.bf16.mxu0 %v6970
        %9608 = vmatpush2.bf16.msra.mxu0 %v6969
        %9609 = vmatprep.subr.bf16.mxu0 %v6962
        %9610 = vmatpush2.bf16.msra.mxu0 %v6961
        %9611 = vmatprep.subr.bf16.mxu0 %v6954
        %9612 = vmatpush2.bf16.msra.mxu0 %v6953
        %9613 = vmatprep.subr.bf16.mxu0 %v6946
        %9614 = vmatpush2.bf16.msra.mxu0 %v6945
        %9615 = vmatprep.subr.bf16.mxu0 %v6938
        %9616 = vmatpush2.bf16.msra.mxu0 %v6937
        %9617 = vmatprep.subr.bf16.mxu0 %v6930
        %9618 = vmatpush2.bf16.msra.mxu0 %v6929
        %9619 = vmatprep.subr.bf16.mxu0 %v6922
        %9620 = vmatpush2.bf16.msra.mxu0 %v6921
        %9621 = vmatprep.mubr.bf16.mxu0 %v2700
        %9622 = vmatmul.mubr.bf16.gmra.mxu0 %v2699
        %v9623 = vpop.f32.mrf.mxu0
        %v9624 = vadd.f32 %v3760, %v9623
        %v9625 = vpop.f32.mrf.mxu0
        %v9626 = vadd.f32 %v3764, %v9625
        %v9627 = vpop.f32.mrf.mxu0
        %v9628 = vadd.f32 %v3760, %v9627
        %v9629 = vpop.f32.mrf.mxu0
        %v9630 = vadd.f32 %v3764, %v9629
        %9631 = vdwg.mxu0
        %9632 = vmatprep.subr.bf16.mxu0 %v7042
        %9633 = vmatpush1.bf16.msra.mxu0 %v7041
        %9634 = vmatprep.subr.bf16.mxu0 %v7034
        %9635 = vmatpush1.bf16.msra.mxu0 %v7033
        %9636 = vmatprep.subr.bf16.mxu0 %v7026
        %9637 = vmatpush1.bf16.msra.mxu0 %v7025
        %9638 = vmatprep.subr.bf16.mxu0 %v7018
        %9639 = vmatpush1.bf16.msra.mxu0 %v7017
        %9640 = vmatprep.subr.bf16.mxu0 %v7010
        %9641 = vmatpush1.bf16.msra.mxu0 %v7009
        %9642 = vmatprep.subr.bf16.mxu0 %v7002
        %9643 = vmatpush1.bf16.msra.mxu0 %v7001
        %9644 = vmatprep.subr.bf16.mxu0 %v6994
        %9645 = vmatpush1.bf16.msra.mxu0 %v6993
        %9646 = vmatprep.subr.bf16.mxu0 %v6986
        %9647 = vmatpush1.bf16.msra.mxu0 %v6985
        %9648 = vmatprep.subr.bf16.mxu0 %v7106
        %9649 = vmatpush2.bf16.msra.mxu0 %v7105
        %9650 = vmatprep.subr.bf16.mxu0 %v7098
        %9651 = vmatpush2.bf16.msra.mxu0 %v7097
        %9652 = vmatprep.subr.bf16.mxu0 %v7090
        %9653 = vmatpush2.bf16.msra.mxu0 %v7089
        %9654 = vmatprep.subr.bf16.mxu0 %v7082
        %9655 = vmatpush2.bf16.msra.mxu0 %v7081
        %9656 = vmatprep.subr.bf16.mxu0 %v7074
        %9657 = vmatpush2.bf16.msra.mxu0 %v7073
        %9658 = vmatprep.subr.bf16.mxu0 %v7066
        %9659 = vmatpush2.bf16.msra.mxu0 %v7065
        %9660 = vmatprep.subr.bf16.mxu0 %v7058
        %9661 = vmatpush2.bf16.msra.mxu0 %v7057
        %9662 = vmatprep.subr.bf16.mxu0 %v7050
        %9663 = vmatpush2.bf16.msra.mxu0 %v7049
        %9664 = vmatprep.mubr.bf16.mxu0 %v2702
        %9665 = vmatmul.mubr.bf16.gmra.mxu0 %v2701
        %v9666 = vpop.f32.mrf.mxu0
        %v9667 = vadd.f32 %v9624, %v9666
        %v9668 = vpop.f32.mrf.mxu0
        %v9669 = vadd.f32 %v9626, %v9668
        %v9670 = vpop.f32.mrf.mxu0
        %v9671 = vadd.f32 %v9628, %v9670
        %v9672 = vpop.f32.mrf.mxu0
        %v9673 = vadd.f32 %v9630, %v9672
        %9674 = vdwg.mxu0
        %9675 = vmatprep.subr.bf16.mxu0 %v7170
        %9676 = vmatpush1.bf16.msra.mxu0 %v7169
        %9677 = vmatprep.subr.bf16.mxu0 %v7162
        %9678 = vmatpush1.bf16.msra.mxu0 %v7161
        %9679 = vmatprep.subr.bf16.mxu0 %v7154
        %9680 = vmatpush1.bf16.msra.mxu0 %v7153
        %9681 = vmatprep.subr.bf16.mxu0 %v7146
        %9682 = vmatpush1.bf16.msra.mxu0 %v7145
        %9683 = vmatprep.subr.bf16.mxu0 %v7138
        %9684 = vmatpush1.bf16.msra.mxu0 %v7137
        %9685 = vmatprep.subr.bf16.mxu0 %v7130
        %9686 = vmatpush1.bf16.msra.mxu0 %v7129
        %9687 = vmatprep.subr.bf16.mxu0 %v7122
        %9688 = vmatpush1.bf16.msra.mxu0 %v7121
        %9689 = vmatprep.subr.bf16.mxu0 %v7114
        %9690 = vmatpush1.bf16.msra.mxu0 %v7113
        %9691 = vmatprep.subr.bf16.mxu0 %v7234
        %9692 = vmatpush2.bf16.msra.mxu0 %v7233
        %9693 = vmatprep.subr.bf16.mxu0 %v7226
        %9694 = vmatpush2.bf16.msra.mxu0 %v7225
        %9695 = vmatprep.subr.bf16.mxu0 %v7218
        %9696 = vmatpush2.bf16.msra.mxu0 %v7217
        %9697 = vmatprep.subr.bf16.mxu0 %v7210
        %9698 = vmatpush2.bf16.msra.mxu0 %v7209
        %9699 = vmatprep.subr.bf16.mxu0 %v7202
        %9700 = vmatpush2.bf16.msra.mxu0 %v7201
        %9701 = vmatprep.subr.bf16.mxu0 %v7194
        %9702 = vmatpush2.bf16.msra.mxu0 %v7193
        %9703 = vmatprep.subr.bf16.mxu0 %v7186
        %9704 = vmatpush2.bf16.msra.mxu0 %v7185
        %9705 = vmatprep.subr.bf16.mxu0 %v7178
        %9706 = vmatpush2.bf16.msra.mxu0 %v7177
        %9707 = vmatprep.mubr.bf16.mxu0 %v2704
        %9708 = vmatmul.mubr.bf16.gmra.mxu0 %v2703
        %v9709 = vpop.f32.mrf.mxu0
        %v9710 = vadd.f32 %v9667, %v9709
        %v9711 = vpop.f32.mrf.mxu0
        %v9712 = vadd.f32 %v9669, %v9711
        %v9713 = vpop.f32.mrf.mxu0
        %v9714 = vadd.f32 %v9671, %v9713
        %v9715 = vpop.f32.mrf.mxu0
        %v9716 = vadd.f32 %v9673, %v9715
        %9717 = vdwg.mxu0
        %9718 = vmatprep.subr.bf16.mxu0 %v7298
        %9719 = vmatpush1.bf16.msra.mxu0 %v7297
        %9720 = vmatprep.subr.bf16.mxu0 %v7290
        %9721 = vmatpush1.bf16.msra.mxu0 %v7289
        %9722 = vmatprep.subr.bf16.mxu0 %v7282
        %9723 = vmatpush1.bf16.msra.mxu0 %v7281
        %9724 = vmatprep.subr.bf16.mxu0 %v7274
        %9725 = vmatpush1.bf16.msra.mxu0 %v7273
        %9726 = vmatprep.subr.bf16.mxu0 %v7266
        %9727 = vmatpush1.bf16.msra.mxu0 %v7265
        %9728 = vmatprep.subr.bf16.mxu0 %v7258
        %9729 = vmatpush1.bf16.msra.mxu0 %v7257
        %9730 = vmatprep.subr.bf16.mxu0 %v7250
        %9731 = vmatpush1.bf16.msra.mxu0 %v7249
        %9732 = vmatprep.subr.bf16.mxu0 %v7242
        %9733 = vmatpush1.bf16.msra.mxu0 %v7241
        %9734 = vmatprep.subr.bf16.mxu0 %v7362
        %9735 = vmatpush2.bf16.msra.mxu0 %v7361
        %9736 = vmatprep.subr.bf16.mxu0 %v7354
        %9737 = vmatpush2.bf16.msra.mxu0 %v7353
        %9738 = vmatprep.subr.bf16.mxu0 %v7346
        %9739 = vmatpush2.bf16.msra.mxu0 %v7345
        %9740 = vmatprep.subr.bf16.mxu0 %v7338
        %9741 = vmatpush2.bf16.msra.mxu0 %v7337
        %9742 = vmatprep.subr.bf16.mxu0 %v7330
        %9743 = vmatpush2.bf16.msra.mxu0 %v7329
        %9744 = vmatprep.subr.bf16.mxu0 %v7322
        %9745 = vmatpush2.bf16.msra.mxu0 %v7321
        %9746 = vmatprep.subr.bf16.mxu0 %v7314
        %9747 = vmatpush2.bf16.msra.mxu0 %v7313
        %9748 = vmatprep.subr.bf16.mxu0 %v7306
        %9749 = vmatpush2.bf16.msra.mxu0 %v7305
        %9750 = vmatprep.mubr.bf16.mxu0 %v2706
        %9751 = vmatmul.mubr.bf16.gmra.mxu0 %v2705
        %v9752 = vpop.f32.mrf.mxu0
        %v9753 = vadd.f32 %v9710, %v9752
        %v9754 = vpop.f32.mrf.mxu0
        %v9755 = vadd.f32 %v9712, %v9754
        %v9756 = vpop.f32.mrf.mxu0
        %v9757 = vadd.f32 %v9714, %v9756
        %v9758 = vpop.f32.mrf.mxu0
        %v9759 = vadd.f32 %v9716, %v9758
        %9760 = vdwg.mxu0
        %9761 = vmatprep.subr.bf16.mxu0 %v7426
        %9762 = vmatpush1.bf16.msra.mxu0 %v7425
        %9763 = vmatprep.subr.bf16.mxu0 %v7418
        %9764 = vmatpush1.bf16.msra.mxu0 %v7417
        %9765 = vmatprep.subr.bf16.mxu0 %v7410
        %9766 = vmatpush1.bf16.msra.mxu0 %v7409
        %9767 = vmatprep.subr.bf16.mxu0 %v7402
        %9768 = vmatpush1.bf16.msra.mxu0 %v7401
        %9769 = vmatprep.subr.bf16.mxu0 %v7394
        %9770 = vmatpush1.bf16.msra.mxu0 %v7393
        %9771 = vmatprep.subr.bf16.mxu0 %v7386
        %9772 = vmatpush1.bf16.msra.mxu0 %v7385
        %9773 = vmatprep.subr.bf16.mxu0 %v7378
        %9774 = vmatpush1.bf16.msra.mxu0 %v7377
        %9775 = vmatprep.subr.bf16.mxu0 %v7370
        %9776 = vmatpush1.bf16.msra.mxu0 %v7369
        %9777 = vmatprep.subr.bf16.mxu0 %v7490
        %9778 = vmatpush2.bf16.msra.mxu0 %v7489
        %9779 = vmatprep.subr.bf16.mxu0 %v7482
        %9780 = vmatpush2.bf16.msra.mxu0 %v7481
        %9781 = vmatprep.subr.bf16.mxu0 %v7474
        %9782 = vmatpush2.bf16.msra.mxu0 %v7473
        %9783 = vmatprep.subr.bf16.mxu0 %v7466
        %9784 = vmatpush2.bf16.msra.mxu0 %v7465
        %9785 = vmatprep.subr.bf16.mxu0 %v7458
        %9786 = vmatpush2.bf16.msra.mxu0 %v7457
        %9787 = vmatprep.subr.bf16.mxu0 %v7450
        %9788 = vmatpush2.bf16.msra.mxu0 %v7449
        %9789 = vmatprep.subr.bf16.mxu0 %v7442
        %9790 = vmatpush2.bf16.msra.mxu0 %v7441
        %9791 = vmatprep.subr.bf16.mxu0 %v7434
        %9792 = vmatpush2.bf16.msra.mxu0 %v7433
        %9793 = vmatprep.mubr.bf16.mxu0 %v2708
        %9794 = vmatmul.mubr.bf16.gmra.mxu0 %v2707
        %v9795 = vpop.f32.mrf.mxu0
        %v9796 = vadd.f32 %v9753, %v9795
        %v9797 = vpop.f32.mrf.mxu0
        %v9798 = vadd.f32 %v9755, %v9797
        %v9799 = vpop.f32.mrf.mxu0
        %v9800 = vadd.f32 %v9757, %v9799
        %v9801 = vpop.f32.mrf.mxu0
        %v9802 = vadd.f32 %v9759, %v9801
        %9803 = vdwg.mxu0
        %9804 = vmatprep.subr.bf16.mxu0 %v7554
        %9805 = vmatpush1.bf16.msra.mxu0 %v7553
        %9806 = vmatprep.subr.bf16.mxu0 %v7546
        %9807 = vmatpush1.bf16.msra.mxu0 %v7545
        %9808 = vmatprep.subr.bf16.mxu0 %v7538
        %9809 = vmatpush1.bf16.msra.mxu0 %v7537
        %9810 = vmatprep.subr.bf16.mxu0 %v7530
        %9811 = vmatpush1.bf16.msra.mxu0 %v7529
        %9812 = vmatprep.subr.bf16.mxu0 %v7522
        %9813 = vmatpush1.bf16.msra.mxu0 %v7521
        %9814 = vmatprep.subr.bf16.mxu0 %v7514
        %9815 = vmatpush1.bf16.msra.mxu0 %v7513
        %9816 = vmatprep.subr.bf16.mxu0 %v7506
        %9817 = vmatpush1.bf16.msra.mxu0 %v7505
        %9818 = vmatprep.subr.bf16.mxu0 %v7498
        %9819 = vmatpush1.bf16.msra.mxu0 %v7497
        %9820 = vmatprep.subr.bf16.mxu0 %v7618
        %9821 = vmatpush2.bf16.msra.mxu0 %v7617
        %9822 = vmatprep.subr.bf16.mxu0 %v7610
        %9823 = vmatpush2.bf16.msra.mxu0 %v7609
        %9824 = vmatprep.subr.bf16.mxu0 %v7602
        %9825 = vmatpush2.bf16.msra.mxu0 %v7601
        %9826 = vmatprep.subr.bf16.mxu0 %v7594
        %9827 = vmatpush2.bf16.msra.mxu0 %v7593
        %9828 = vmatprep.subr.bf16.mxu0 %v7586
        %9829 = vmatpush2.bf16.msra.mxu0 %v7585
        %9830 = vmatprep.subr.bf16.mxu0 %v7578
        %9831 = vmatpush2.bf16.msra.mxu0 %v7577
        %9832 = vmatprep.subr.bf16.mxu0 %v7570
        %9833 = vmatpush2.bf16.msra.mxu0 %v7569
        %9834 = vmatprep.subr.bf16.mxu0 %v7562
        %9835 = vmatpush2.bf16.msra.mxu0 %v7561
        %9836 = vmatprep.mubr.bf16.mxu0 %v2710
        %9837 = vmatmul.mubr.bf16.gmra.mxu0 %v2709
        %v9838 = vpop.f32.mrf.mxu0
        %v9839 = vadd.f32 %v9796, %v9838
        %v9840 = vpop.f32.mrf.mxu0
        %v9841 = vadd.f32 %v9798, %v9840
        %v9842 = vpop.f32.mrf.mxu0
        %v9843 = vadd.f32 %v9800, %v9842
        %v9844 = vpop.f32.mrf.mxu0
        %v9845 = vadd.f32 %v9802, %v9844
        %9846 = vdwg.mxu0
        %9847 = vmatprep.subr.bf16.mxu0 %v7682
        %9848 = vmatpush1.bf16.msra.mxu0 %v7681
        %9849 = vmatprep.subr.bf16.mxu0 %v7674
        %9850 = vmatpush1.bf16.msra.mxu0 %v7673
        %9851 = vmatprep.subr.bf16.mxu0 %v7666
        %9852 = vmatpush1.bf16.msra.mxu0 %v7665
        %9853 = vmatprep.subr.bf16.mxu0 %v7658
        %9854 = vmatpush1.bf16.msra.mxu0 %v7657
        %9855 = vmatprep.subr.bf16.mxu0 %v7650
        %9856 = vmatpush1.bf16.msra.mxu0 %v7649
        %9857 = vmatprep.subr.bf16.mxu0 %v7642
        %9858 = vmatpush1.bf16.msra.mxu0 %v7641
        %9859 = vmatprep.subr.bf16.mxu0 %v7634
        %9860 = vmatpush1.bf16.msra.mxu0 %v7633
        %9861 = vmatprep.subr.bf16.mxu0 %v7626
        %9862 = vmatpush1.bf16.msra.mxu0 %v7625
        %9863 = vmatprep.subr.bf16.mxu0 %v7746
        %9864 = vmatpush2.bf16.msra.mxu0 %v7745
        %9865 = vmatprep.subr.bf16.mxu0 %v7738
        %9866 = vmatpush2.bf16.msra.mxu0 %v7737
        %9867 = vmatprep.subr.bf16.mxu0 %v7730
        %9868 = vmatpush2.bf16.msra.mxu0 %v7729
        %9869 = vmatprep.subr.bf16.mxu0 %v7722
        %9870 = vmatpush2.bf16.msra.mxu0 %v7721
        %9871 = vmatprep.subr.bf16.mxu0 %v7714
        %9872 = vmatpush2.bf16.msra.mxu0 %v7713
        %9873 = vmatprep.subr.bf16.mxu0 %v7706
        %9874 = vmatpush2.bf16.msra.mxu0 %v7705
        %9875 = vmatprep.subr.bf16.mxu0 %v7698
        %9876 = vmatpush2.bf16.msra.mxu0 %v7697
        %9877 = vmatprep.subr.bf16.mxu0 %v7690
        %9878 = vmatpush2.bf16.msra.mxu0 %v7689
        %9879 = vmatprep.mubr.bf16.mxu0 %v2712
        %9880 = vmatmul.mubr.bf16.gmra.mxu0 %v2711
        %v9881 = vpop.f32.mrf.mxu0
        %v9882 = vadd.f32 %v9839, %v9881
        %v9883 = vpop.f32.mrf.mxu0
        %v9884 = vadd.f32 %v9841, %v9883
        %v9885 = vpop.f32.mrf.mxu0
        %v9886 = vadd.f32 %v9843, %v9885
        %v9887 = vpop.f32.mrf.mxu0
        %v9888 = vadd.f32 %v9845, %v9887
        %9889 = vdwg.mxu0
        %9890 = vmatprep.subr.bf16.mxu0 %v7810
        %9891 = vmatpush1.bf16.msra.mxu0 %v7809
        %9892 = vmatprep.subr.bf16.mxu0 %v7802
        %9893 = vmatpush1.bf16.msra.mxu0 %v7801
        %9894 = vmatprep.subr.bf16.mxu0 %v7794
        %9895 = vmatpush1.bf16.msra.mxu0 %v7793
        %9896 = vmatprep.subr.bf16.mxu0 %v7786
        %9897 = vmatpush1.bf16.msra.mxu0 %v7785
        %9898 = vmatprep.subr.bf16.mxu0 %v7778
        %9899 = vmatpush1.bf16.msra.mxu0 %v7777
        %9900 = vmatprep.subr.bf16.mxu0 %v7770
        %9901 = vmatpush1.bf16.msra.mxu0 %v7769
        %9902 = vmatprep.subr.bf16.mxu0 %v7762
        %9903 = vmatpush1.bf16.msra.mxu0 %v7761
        %9904 = vmatprep.subr.bf16.mxu0 %v7754
        %9905 = vmatpush1.bf16.msra.mxu0 %v7753
        %9906 = vmatprep.subr.bf16.mxu0 %v7874
        %9907 = vmatpush2.bf16.msra.mxu0 %v7873
        %9908 = vmatprep.subr.bf16.mxu0 %v7866
        %9909 = vmatpush2.bf16.msra.mxu0 %v7865
        %9910 = vmatprep.subr.bf16.mxu0 %v7858
        %9911 = vmatpush2.bf16.msra.mxu0 %v7857
        %9912 = vmatprep.subr.bf16.mxu0 %v7850
        %9913 = vmatpush2.bf16.msra.mxu0 %v7849
        %9914 = vmatprep.subr.bf16.mxu0 %v7842
        %9915 = vmatpush2.bf16.msra.mxu0 %v7841
        %9916 = vmatprep.subr.bf16.mxu0 %v7834
        %9917 = vmatpush2.bf16.msra.mxu0 %v7833
        %9918 = vmatprep.subr.bf16.mxu0 %v7826
        %9919 = vmatpush2.bf16.msra.mxu0 %v7825
        %9920 = vmatprep.subr.bf16.mxu0 %v7818
        %9921 = vmatpush2.bf16.msra.mxu0 %v7817
        %9922 = vmatprep.mubr.bf16.mxu0 %v2714
        %9923 = vmatmul.mubr.bf16.gmra.mxu0 %v2713
        %v9924 = vpop.f32.mrf.mxu0
        %v9925 = vadd.f32 %v9882, %v9924
        %v9926 = vpop.f32.mrf.mxu0
        %v9927 = vadd.f32 %v9884, %v9926
        %v9928 = vpop.f32.mrf.mxu0
        %v9929 = vadd.f32 %v9886, %v9928
        %v9930 = vpop.f32.mrf.mxu0
        %v9931 = vadd.f32 %v9888, %v9930
        %9932 = vdwg.mxu0
        %9933 = vmatprep.subr.bf16.mxu0 %v6916
        %9934 = vmatpush1.bf16.msra.mxu0 %v6915
        %9935 = vmatprep.subr.bf16.mxu0 %v6908
        %9936 = vmatpush1.bf16.msra.mxu0 %v6907
        %9937 = vmatprep.subr.bf16.mxu0 %v6900
        %9938 = vmatpush1.bf16.msra.mxu0 %v6899
        %9939 = vmatprep.subr.bf16.mxu0 %v6892
        %9940 = vmatpush1.bf16.msra.mxu0 %v6891
        %9941 = vmatprep.subr.bf16.mxu0 %v6884
        %9942 = vmatpush1.bf16.msra.mxu0 %v6883
        %9943 = vmatprep.subr.bf16.mxu0 %v6876
        %9944 = vmatpush1.bf16.msra.mxu0 %v6875
        %9945 = vmatprep.subr.bf16.mxu0 %v6868
        %9946 = vmatpush1.bf16.msra.mxu0 %v6867
        %9947 = vmatprep.subr.bf16.mxu0 %v6860
        %9948 = vmatpush1.bf16.msra.mxu0 %v6859
        %9949 = vmatprep.subr.bf16.mxu0 %v6980
        %9950 = vmatpush2.bf16.msra.mxu0 %v6979
        %9951 = vmatprep.subr.bf16.mxu0 %v6972
        %9952 = vmatpush2.bf16.msra.mxu0 %v6971
        %9953 = vmatprep.subr.bf16.mxu0 %v6964
        %9954 = vmatpush2.bf16.msra.mxu0 %v6963
        %9955 = vmatprep.subr.bf16.mxu0 %v6956
        %9956 = vmatpush2.bf16.msra.mxu0 %v6955
        %9957 = vmatprep.subr.bf16.mxu0 %v6948
        %9958 = vmatpush2.bf16.msra.mxu0 %v6947
        %9959 = vmatprep.subr.bf16.mxu0 %v6940
        %9960 = vmatpush2.bf16.msra.mxu0 %v6939
        %9961 = vmatprep.subr.bf16.mxu0 %v6932
        %9962 = vmatpush2.bf16.msra.mxu0 %v6931
        %9963 = vmatprep.subr.bf16.mxu0 %v6924
        %9964 = vmatpush2.bf16.msra.mxu0 %v6923
        %9965 = vmatprep.mubr.bf16.mxu0 %v2700
        %9966 = vmatmul.mubr.bf16.gmra.mxu0 %v2699
        %v9967 = vpop.f32.mrf.mxu0
        %v9968 = vadd.f32 %v3768, %v9967
        %v9969 = vpop.f32.mrf.mxu0
        %v9970 = vadd.f32 %v3772, %v9969
        %v9971 = vpop.f32.mrf.mxu0
        %v9972 = vadd.f32 %v3768, %v9971
        %v9973 = vpop.f32.mrf.mxu0
        %v9974 = vadd.f32 %v3772, %v9973
        %9975 = vdwg.mxu0
        %9976 = vmatprep.subr.bf16.mxu0 %v7044
        %9977 = vmatpush1.bf16.msra.mxu0 %v7043
        %9978 = vmatprep.subr.bf16.mxu0 %v7036
        %9979 = vmatpush1.bf16.msra.mxu0 %v7035
        %9980 = vmatprep.subr.bf16.mxu0 %v7028
        %9981 = vmatpush1.bf16.msra.mxu0 %v7027
        %9982 = vmatprep.subr.bf16.mxu0 %v7020
        %9983 = vmatpush1.bf16.msra.mxu0 %v7019
        %9984 = vmatprep.subr.bf16.mxu0 %v7012
        %9985 = vmatpush1.bf16.msra.mxu0 %v7011
        %9986 = vmatprep.subr.bf16.mxu0 %v7004
        %9987 = vmatpush1.bf16.msra.mxu0 %v7003
        %9988 = vmatprep.subr.bf16.mxu0 %v6996
        %9989 = vmatpush1.bf16.msra.mxu0 %v6995
        %9990 = vmatprep.subr.bf16.mxu0 %v6988
        %9991 = vmatpush1.bf16.msra.mxu0 %v6987
        %9992 = vmatprep.subr.bf16.mxu0 %v7108
        %9993 = vmatpush2.bf16.msra.mxu0 %v7107
        %9994 = vmatprep.subr.bf16.mxu0 %v7100
        %9995 = vmatpush2.bf16.msra.mxu0 %v7099
        %9996 = vmatprep.subr.bf16.mxu0 %v7092
        %9997 = vmatpush2.bf16.msra.mxu0 %v7091
        %9998 = vmatprep.subr.bf16.mxu0 %v7084
        %9999 = vmatpush2.bf16.msra.mxu0 %v7083
        %10000 = vmatprep.subr.bf16.mxu0 %v7076
        %10001 = vmatpush2.bf16.msra.mxu0 %v7075
        %10002 = vmatprep.subr.bf16.mxu0 %v7068
        %10003 = vmatpush2.bf16.msra.mxu0 %v7067
        %10004 = vmatprep.subr.bf16.mxu0 %v7060
        %10005 = vmatpush2.bf16.msra.mxu0 %v7059
        %10006 = vmatprep.subr.bf16.mxu0 %v7052
        %10007 = vmatpush2.bf16.msra.mxu0 %v7051
        %10008 = vmatprep.mubr.bf16.mxu0 %v2702
        %10009 = vmatmul.mubr.bf16.gmra.mxu0 %v2701
        %v10010 = vpop.f32.mrf.mxu0
        %v10011 = vadd.f32 %v9968, %v10010
        %v10012 = vpop.f32.mrf.mxu0
        %v10013 = vadd.f32 %v9970, %v10012
        %v10014 = vpop.f32.mrf.mxu0
        %v10015 = vadd.f32 %v9972, %v10014
        %v10016 = vpop.f32.mrf.mxu0
        %v10017 = vadd.f32 %v9974, %v10016
        %10018 = vdwg.mxu0
        %10019 = vmatprep.subr.bf16.mxu0 %v7172
        %10020 = vmatpush1.bf16.msra.mxu0 %v7171
        %10021 = vmatprep.subr.bf16.mxu0 %v7164
        %10022 = vmatpush1.bf16.msra.mxu0 %v7163
        %10023 = vmatprep.subr.bf16.mxu0 %v7156
        %10024 = vmatpush1.bf16.msra.mxu0 %v7155
        %10025 = vmatprep.subr.bf16.mxu0 %v7148
        %10026 = vmatpush1.bf16.msra.mxu0 %v7147
        %10027 = vmatprep.subr.bf16.mxu0 %v7140
        %10028 = vmatpush1.bf16.msra.mxu0 %v7139
        %10029 = vmatprep.subr.bf16.mxu0 %v7132
        %10030 = vmatpush1.bf16.msra.mxu0 %v7131
        %10031 = vmatprep.subr.bf16.mxu0 %v7124
        %10032 = vmatpush1.bf16.msra.mxu0 %v7123
        %10033 = vmatprep.subr.bf16.mxu0 %v7116
        %10034 = vmatpush1.bf16.msra.mxu0 %v7115
        %10035 = vmatprep.subr.bf16.mxu0 %v7236
        %10036 = vmatpush2.bf16.msra.mxu0 %v7235
        %10037 = vmatprep.subr.bf16.mxu0 %v7228
        %10038 = vmatpush2.bf16.msra.mxu0 %v7227
        %10039 = vmatprep.subr.bf16.mxu0 %v7220
        %10040 = vmatpush2.bf16.msra.mxu0 %v7219
        %10041 = vmatprep.subr.bf16.mxu0 %v7212
        %10042 = vmatpush2.bf16.msra.mxu0 %v7211
        %10043 = vmatprep.subr.bf16.mxu0 %v7204
        %10044 = vmatpush2.bf16.msra.mxu0 %v7203
        %10045 = vmatprep.subr.bf16.mxu0 %v7196
        %10046 = vmatpush2.bf16.msra.mxu0 %v7195
        %10047 = vmatprep.subr.bf16.mxu0 %v7188
        %10048 = vmatpush2.bf16.msra.mxu0 %v7187
        %10049 = vmatprep.subr.bf16.mxu0 %v7180
        %10050 = vmatpush2.bf16.msra.mxu0 %v7179
        %10051 = vmatprep.mubr.bf16.mxu0 %v2704
        %10052 = vmatmul.mubr.bf16.gmra.mxu0 %v2703
        %v10053 = vpop.f32.mrf.mxu0
        %v10054 = vadd.f32 %v10011, %v10053
        %v10055 = vpop.f32.mrf.mxu0
        %v10056 = vadd.f32 %v10013, %v10055
        %v10057 = vpop.f32.mrf.mxu0
        %v10058 = vadd.f32 %v10015, %v10057
        %v10059 = vpop.f32.mrf.mxu0
        %v10060 = vadd.f32 %v10017, %v10059
        %10061 = vdwg.mxu0
        %10062 = vmatprep.subr.bf16.mxu0 %v7300
        %10063 = vmatpush1.bf16.msra.mxu0 %v7299
        %10064 = vmatprep.subr.bf16.mxu0 %v7292
        %10065 = vmatpush1.bf16.msra.mxu0 %v7291
        %10066 = vmatprep.subr.bf16.mxu0 %v7284
        %10067 = vmatpush1.bf16.msra.mxu0 %v7283
        %10068 = vmatprep.subr.bf16.mxu0 %v7276
        %10069 = vmatpush1.bf16.msra.mxu0 %v7275
        %10070 = vmatprep.subr.bf16.mxu0 %v7268
        %10071 = vmatpush1.bf16.msra.mxu0 %v7267
        %10072 = vmatprep.subr.bf16.mxu0 %v7260
        %10073 = vmatpush1.bf16.msra.mxu0 %v7259
        %10074 = vmatprep.subr.bf16.mxu0 %v7252
        %10075 = vmatpush1.bf16.msra.mxu0 %v7251
        %10076 = vmatprep.subr.bf16.mxu0 %v7244
        %10077 = vmatpush1.bf16.msra.mxu0 %v7243
        %10078 = vmatprep.subr.bf16.mxu0 %v7364
        %10079 = vmatpush2.bf16.msra.mxu0 %v7363
        %10080 = vmatprep.subr.bf16.mxu0 %v7356
        %10081 = vmatpush2.bf16.msra.mxu0 %v7355
        %10082 = vmatprep.subr.bf16.mxu0 %v7348
        %10083 = vmatpush2.bf16.msra.mxu0 %v7347
        %10084 = vmatprep.subr.bf16.mxu0 %v7340
        %10085 = vmatpush2.bf16.msra.mxu0 %v7339
        %10086 = vmatprep.subr.bf16.mxu0 %v7332
        %10087 = vmatpush2.bf16.msra.mxu0 %v7331
        %10088 = vmatprep.subr.bf16.mxu0 %v7324
        %10089 = vmatpush2.bf16.msra.mxu0 %v7323
        %10090 = vmatprep.subr.bf16.mxu0 %v7316
        %10091 = vmatpush2.bf16.msra.mxu0 %v7315
        %10092 = vmatprep.subr.bf16.mxu0 %v7308
        %10093 = vmatpush2.bf16.msra.mxu0 %v7307
        %10094 = vmatprep.mubr.bf16.mxu0 %v2706
        %10095 = vmatmul.mubr.bf16.gmra.mxu0 %v2705
        %v10096 = vpop.f32.mrf.mxu0
        %v10097 = vadd.f32 %v10054, %v10096
        %v10098 = vpop.f32.mrf.mxu0
        %v10099 = vadd.f32 %v10056, %v10098
        %v10100 = vpop.f32.mrf.mxu0
        %v10101 = vadd.f32 %v10058, %v10100
        %v10102 = vpop.f32.mrf.mxu0
        %v10103 = vadd.f32 %v10060, %v10102
        %10104 = vdwg.mxu0
        %10105 = vmatprep.subr.bf16.mxu0 %v7428
        %10106 = vmatpush1.bf16.msra.mxu0 %v7427
        %10107 = vmatprep.subr.bf16.mxu0 %v7420
        %10108 = vmatpush1.bf16.msra.mxu0 %v7419
        %10109 = vmatprep.subr.bf16.mxu0 %v7412
        %10110 = vmatpush1.bf16.msra.mxu0 %v7411
        %10111 = vmatprep.subr.bf16.mxu0 %v7404
        %10112 = vmatpush1.bf16.msra.mxu0 %v7403
        %10113 = vmatprep.subr.bf16.mxu0 %v7396
        %10114 = vmatpush1.bf16.msra.mxu0 %v7395
        %10115 = vmatprep.subr.bf16.mxu0 %v7388
        %10116 = vmatpush1.bf16.msra.mxu0 %v7387
        %10117 = vmatprep.subr.bf16.mxu0 %v7380
        %10118 = vmatpush1.bf16.msra.mxu0 %v7379
        %10119 = vmatprep.subr.bf16.mxu0 %v7372
        %10120 = vmatpush1.bf16.msra.mxu0 %v7371
        %10121 = vmatprep.subr.bf16.mxu0 %v7492
        %10122 = vmatpush2.bf16.msra.mxu0 %v7491
        %10123 = vmatprep.subr.bf16.mxu0 %v7484
        %10124 = vmatpush2.bf16.msra.mxu0 %v7483
        %10125 = vmatprep.subr.bf16.mxu0 %v7476
        %10126 = vmatpush2.bf16.msra.mxu0 %v7475
        %10127 = vmatprep.subr.bf16.mxu0 %v7468
        %10128 = vmatpush2.bf16.msra.mxu0 %v7467
        %10129 = vmatprep.subr.bf16.mxu0 %v7460
        %10130 = vmatpush2.bf16.msra.mxu0 %v7459
        %10131 = vmatprep.subr.bf16.mxu0 %v7452
        %10132 = vmatpush2.bf16.msra.mxu0 %v7451
        %10133 = vmatprep.subr.bf16.mxu0 %v7444
        %10134 = vmatpush2.bf16.msra.mxu0 %v7443
        %10135 = vmatprep.subr.bf16.mxu0 %v7436
        %10136 = vmatpush2.bf16.msra.mxu0 %v7435
        %10137 = vmatprep.mubr.bf16.mxu0 %v2708
        %10138 = vmatmul.mubr.bf16.gmra.mxu0 %v2707
        %v10139 = vpop.f32.mrf.mxu0
        %v10140 = vadd.f32 %v10097, %v10139
        %v10141 = vpop.f32.mrf.mxu0
        %v10142 = vadd.f32 %v10099, %v10141
        %v10143 = vpop.f32.mrf.mxu0
        %v10144 = vadd.f32 %v10101, %v10143
        %v10145 = vpop.f32.mrf.mxu0
        %v10146 = vadd.f32 %v10103, %v10145
        %10147 = vdwg.mxu0
        %10148 = vmatprep.subr.bf16.mxu0 %v7556
        %10149 = vmatpush1.bf16.msra.mxu0 %v7555
        %10150 = vmatprep.subr.bf16.mxu0 %v7548
        %10151 = vmatpush1.bf16.msra.mxu0 %v7547
        %10152 = vmatprep.subr.bf16.mxu0 %v7540
        %10153 = vmatpush1.bf16.msra.mxu0 %v7539
        %10154 = vmatprep.subr.bf16.mxu0 %v7532
        %10155 = vmatpush1.bf16.msra.mxu0 %v7531
        %10156 = vmatprep.subr.bf16.mxu0 %v7524
        %10157 = vmatpush1.bf16.msra.mxu0 %v7523
        %10158 = vmatprep.subr.bf16.mxu0 %v7516
        %10159 = vmatpush1.bf16.msra.mxu0 %v7515
        %10160 = vmatprep.subr.bf16.mxu0 %v7508
        %10161 = vmatpush1.bf16.msra.mxu0 %v7507
        %10162 = vmatprep.subr.bf16.mxu0 %v7500
        %10163 = vmatpush1.bf16.msra.mxu0 %v7499
        %10164 = vmatprep.subr.bf16.mxu0 %v7620
        %10165 = vmatpush2.bf16.msra.mxu0 %v7619
        %10166 = vmatprep.subr.bf16.mxu0 %v7612
        %10167 = vmatpush2.bf16.msra.mxu0 %v7611
        %10168 = vmatprep.subr.bf16.mxu0 %v7604
        %10169 = vmatpush2.bf16.msra.mxu0 %v7603
        %10170 = vmatprep.subr.bf16.mxu0 %v7596
        %10171 = vmatpush2.bf16.msra.mxu0 %v7595
        %10172 = vmatprep.subr.bf16.mxu0 %v7588
        %10173 = vmatpush2.bf16.msra.mxu0 %v7587
        %10174 = vmatprep.subr.bf16.mxu0 %v7580
        %10175 = vmatpush2.bf16.msra.mxu0 %v7579
        %10176 = vmatprep.subr.bf16.mxu0 %v7572
        %10177 = vmatpush2.bf16.msra.mxu0 %v7571
        %10178 = vmatprep.subr.bf16.mxu0 %v7564
        %10179 = vmatpush2.bf16.msra.mxu0 %v7563
        %10180 = vmatprep.mubr.bf16.mxu0 %v2710
        %10181 = vmatmul.mubr.bf16.gmra.mxu0 %v2709
        %v10182 = vpop.f32.mrf.mxu0
        %v10183 = vadd.f32 %v10140, %v10182
        %v10184 = vpop.f32.mrf.mxu0
        %v10185 = vadd.f32 %v10142, %v10184
        %v10186 = vpop.f32.mrf.mxu0
        %v10187 = vadd.f32 %v10144, %v10186
        %v10188 = vpop.f32.mrf.mxu0
        %v10189 = vadd.f32 %v10146, %v10188
        %10190 = vdwg.mxu0
        %10191 = vmatprep.subr.bf16.mxu0 %v7684
        %10192 = vmatpush1.bf16.msra.mxu0 %v7683
        %10193 = vmatprep.subr.bf16.mxu0 %v7676
        %10194 = vmatpush1.bf16.msra.mxu0 %v7675
        %10195 = vmatprep.subr.bf16.mxu0 %v7668
        %10196 = vmatpush1.bf16.msra.mxu0 %v7667
        %10197 = vmatprep.subr.bf16.mxu0 %v7660
        %10198 = vmatpush1.bf16.msra.mxu0 %v7659
        %10199 = vmatprep.subr.bf16.mxu0 %v7652
        %10200 = vmatpush1.bf16.msra.mxu0 %v7651
        %10201 = vmatprep.subr.bf16.mxu0 %v7644
        %10202 = vmatpush1.bf16.msra.mxu0 %v7643
        %10203 = vmatprep.subr.bf16.mxu0 %v7636
        %10204 = vmatpush1.bf16.msra.mxu0 %v7635
        %10205 = vmatprep.subr.bf16.mxu0 %v7628
        %10206 = vmatpush1.bf16.msra.mxu0 %v7627
        %10207 = vmatprep.subr.bf16.mxu0 %v7748
        %10208 = vmatpush2.bf16.msra.mxu0 %v7747
        %10209 = vmatprep.subr.bf16.mxu0 %v7740
        %10210 = vmatpush2.bf16.msra.mxu0 %v7739
        %10211 = vmatprep.subr.bf16.mxu0 %v7732
        %10212 = vmatpush2.bf16.msra.mxu0 %v7731
        %10213 = vmatprep.subr.bf16.mxu0 %v7724
        %10214 = vmatpush2.bf16.msra.mxu0 %v7723
        %10215 = vmatprep.subr.bf16.mxu0 %v7716
        %10216 = vmatpush2.bf16.msra.mxu0 %v7715
        %10217 = vmatprep.subr.bf16.mxu0 %v7708
        %10218 = vmatpush2.bf16.msra.mxu0 %v7707
        %10219 = vmatprep.subr.bf16.mxu0 %v7700
        %10220 = vmatpush2.bf16.msra.mxu0 %v7699
        %10221 = vmatprep.subr.bf16.mxu0 %v7692
        %10222 = vmatpush2.bf16.msra.mxu0 %v7691
        %10223 = vmatprep.mubr.bf16.mxu0 %v2712
        %10224 = vmatmul.mubr.bf16.gmra.mxu0 %v2711
        %v10225 = vpop.f32.mrf.mxu0
        %v10226 = vadd.f32 %v10183, %v10225
        %v10227 = vpop.f32.mrf.mxu0
        %v10228 = vadd.f32 %v10185, %v10227
        %v10229 = vpop.f32.mrf.mxu0
        %v10230 = vadd.f32 %v10187, %v10229
        %v10231 = vpop.f32.mrf.mxu0
        %v10232 = vadd.f32 %v10189, %v10231
        %10233 = vdwg.mxu0
        %10234 = vmatprep.subr.bf16.mxu0 %v7812
        %10235 = vmatpush1.bf16.msra.mxu0 %v7811
        %10236 = vmatprep.subr.bf16.mxu0 %v7804
        %10237 = vmatpush1.bf16.msra.mxu0 %v7803
        %10238 = vmatprep.subr.bf16.mxu0 %v7796
        %10239 = vmatpush1.bf16.msra.mxu0 %v7795
        %10240 = vmatprep.subr.bf16.mxu0 %v7788
        %10241 = vmatpush1.bf16.msra.mxu0 %v7787
        %10242 = vmatprep.subr.bf16.mxu0 %v7780
        %10243 = vmatpush1.bf16.msra.mxu0 %v7779
        %10244 = vmatprep.subr.bf16.mxu0 %v7772
        %10245 = vmatpush1.bf16.msra.mxu0 %v7771
        %10246 = vmatprep.subr.bf16.mxu0 %v7764
        %10247 = vmatpush1.bf16.msra.mxu0 %v7763
        %10248 = vmatprep.subr.bf16.mxu0 %v7756
        %10249 = vmatpush1.bf16.msra.mxu0 %v7755
        %10250 = vmatprep.subr.bf16.mxu0 %v7876
        %10251 = vmatpush2.bf16.msra.mxu0 %v7875
        %10252 = vmatprep.subr.bf16.mxu0 %v7868
        %10253 = vmatpush2.bf16.msra.mxu0 %v7867
        %10254 = vmatprep.subr.bf16.mxu0 %v7860
        %10255 = vmatpush2.bf16.msra.mxu0 %v7859
        %10256 = vmatprep.subr.bf16.mxu0 %v7852
        %10257 = vmatpush2.bf16.msra.mxu0 %v7851
        %10258 = vmatprep.subr.bf16.mxu0 %v7844
        %10259 = vmatpush2.bf16.msra.mxu0 %v7843
        %10260 = vmatprep.subr.bf16.mxu0 %v7836
        %10261 = vmatpush2.bf16.msra.mxu0 %v7835
        %10262 = vmatprep.subr.bf16.mxu0 %v7828
        %10263 = vmatpush2.bf16.msra.mxu0 %v7827
        %10264 = vmatprep.subr.bf16.mxu0 %v7820
        %10265 = vmatpush2.bf16.msra.mxu0 %v7819
        %10266 = vmatprep.mubr.bf16.mxu0 %v2714
        %10267 = vmatmul.mubr.bf16.gmra.mxu0 %v2713
        %v10268 = vpop.f32.mrf.mxu0
        %v10269 = vadd.f32 %v10226, %v10268
        %v10270 = vpop.f32.mrf.mxu0
        %v10271 = vadd.f32 %v10228, %v10270
        %v10272 = vpop.f32.mrf.mxu0
        %v10273 = vadd.f32 %v10230, %v10272
        %v10274 = vpop.f32.mrf.mxu0
        %v10275 = vadd.f32 %v10232, %v10274
        %10276 = vdwg.mxu0
        %v10277 = vmul.f32 %v9237, %v9237
        %v10278 = vmul.f32 %v9239, %v9239
        %v10279 = vmul.f32 %v9581, %v9581
        %v10280 = vmul.f32 %v9583, %v9583
        %v10281 = vmul.f32 %v9925, %v9925
        %v10282 = vmul.f32 %v9927, %v9927
        %v10283 = vmul.f32 %v10269, %v10269
        %v10284 = vmul.f32 %v10271, %v10271
        %v10285 = vmul.f32 %v9241, %v9241
        %v10286 = vmul.f32 %v9243, %v9243
        %v10287 = vmul.f32 %v9585, %v9585
        %v10288 = vmul.f32 %v9587, %v9587
        %v10289 = vmul.f32 %v9929, %v9929
        %v10290 = vmul.f32 %v9931, %v9931
        %v10291 = vmul.f32 %v10273, %v10273
        %v10292 = vmul.f32 %v10275, %v10275
        %v10293 = vmul.f32 %v9237, %v10277
        %v10294 = vmul.f32 %v9239, %v10278
        %v10295 = vmul.f32 %v9581, %v10279
        %v10296 = vmul.f32 %v9583, %v10280
        %v10297 = vmul.f32 %v9925, %v10281
        %v10298 = vmul.f32 %v9927, %v10282
        %v10299 = vmul.f32 %v10269, %v10283
        %v10300 = vmul.f32 %v10271, %v10284
        %v10301 = vmul.f32 %v9241, %v10285
        %v10302 = vmul.f32 %v9243, %v10286
        %v10303 = vmul.f32 %v9585, %v10287
        %v10304 = vmul.f32 %v9587, %v10288
        %v10305 = vmul.f32 %v9929, %v10289
        %v10306 = vmul.f32 %v9931, %v10290
        %v10307 = vmul.f32 %v10273, %v10291
        %v10308 = vmul.f32 %v10275, %v10292
        %v10309 = vmul.f32 %v10293, 0.044715
        %v10310 = vmul.f32 %v10294, 0.044715
        %v10311 = vmul.f32 %v10295, 0.044715
        %v10312 = vmul.f32 %v10296, 0.044715
        %v10313 = vmul.f32 %v10297, 0.044715
        %v10314 = vmul.f32 %v10298, 0.044715
        %v10315 = vmul.f32 %v10299, 0.044715
        %v10316 = vmul.f32 %v10300, 0.044715
        %v10317 = vmul.f32 %v10301, 0.044715
        %v10318 = vmul.f32 %v10302, 0.044715
        %v10319 = vmul.f32 %v10303, 0.044715
        %v10320 = vmul.f32 %v10304, 0.044715
        %v10321 = vmul.f32 %v10305, 0.044715
        %v10322 = vmul.f32 %v10306, 0.044715
        %v10323 = vmul.f32 %v10307, 0.044715
        %v10324 = vmul.f32 %v10308, 0.044715
        %v10325 = vadd.f32 %v9237, %v10309
        %v10326 = vadd.f32 %v9239, %v10310
        %v10327 = vadd.f32 %v9581, %v10311
        %v10328 = vadd.f32 %v9583, %v10312
        %v10329 = vadd.f32 %v9925, %v10313
        %v10330 = vadd.f32 %v9927, %v10314
        %v10331 = vadd.f32 %v10269, %v10315
        %v10332 = vadd.f32 %v10271, %v10316
        %v10333 = vadd.f32 %v9241, %v10317
        %v10334 = vadd.f32 %v9243, %v10318
        %v10335 = vadd.f32 %v9585, %v10319
        %v10336 = vadd.f32 %v9587, %v10320
        %v10337 = vadd.f32 %v9929, %v10321
        %v10338 = vadd.f32 %v9931, %v10322
        %v10339 = vadd.f32 %v10273, %v10323
        %v10340 = vadd.f32 %v10275, %v10324
        %v10341 = vmul.f32 %v10325, 0.7978846
        %v10342 = vmul.f32 %v10326, 0.7978846
        %v10343 = vmul.f32 %v10327, 0.7978846
        %v10344 = vmul.f32 %v10328, 0.7978846
        %v10345 = vmul.f32 %v10329, 0.7978846
        %v10346 = vmul.f32 %v10330, 0.7978846
        %v10347 = vmul.f32 %v10331, 0.7978846
        %v10348 = vmul.f32 %v10332, 0.7978846
        %v10349 = vmul.f32 %v10333, 0.7978846
        %v10350 = vmul.f32 %v10334, 0.7978846
        %v10351 = vmul.f32 %v10335, 0.7978846
        %v10352 = vmul.f32 %v10336, 0.7978846
        %v10353 = vmul.f32 %v10337, 0.7978846
        %v10354 = vmul.f32 %v10338, 0.7978846
        %v10355 = vmul.f32 %v10339, 0.7978846
        %v10356 = vmul.f32 %v10340, 0.7978846
        %v10357 = vtanh.pop %v10341
        %v10358 = vtanh.pop %v10342
        %v10359 = vtanh.pop %v10343
        %v10360 = vtanh.pop %v10344
        %v10361 = vtanh.pop %v10345
        %v10362 = vtanh.pop %v10346
        %v10363 = vtanh.pop %v10347
        %v10364 = vtanh.pop %v10348
        %v10365 = vtanh.pop %v10349
        %v10366 = vtanh.pop %v10350
        %v10367 = vtanh.pop %v10351
        %v10368 = vtanh.pop %v10352
        %v10369 = vtanh.pop %v10353
        %v10370 = vtanh.pop %v10354
        %v10371 = vtanh.pop %v10355
        %v10372 = vtanh.pop %v10356
        %v10373 = vadd.f32 %v10357, 1.0
        %v10374 = vadd.f32 %v10358, 1.0
        %v10375 = vadd.f32 %v10359, 1.0
        %v10376 = vadd.f32 %v10360, 1.0
        %v10377 = vadd.f32 %v10361, 1.0
        %v10378 = vadd.f32 %v10362, 1.0
        %v10379 = vadd.f32 %v10363, 1.0
        %v10380 = vadd.f32 %v10364, 1.0
        %v10381 = vadd.f32 %v10365, 1.0
        %v10382 = vadd.f32 %v10366, 1.0
        %v10383 = vadd.f32 %v10367, 1.0
        %v10384 = vadd.f32 %v10368, 1.0
        %v10385 = vadd.f32 %v10369, 1.0
        %v10386 = vadd.f32 %v10370, 1.0
        %v10387 = vadd.f32 %v10371, 1.0
        %v10388 = vadd.f32 %v10372, 1.0
        %v10389 = vmul.f32 %v10373, 0.5
        %v10390 = vmul.f32 %v10374, 0.5
        %v10391 = vmul.f32 %v10375, 0.5
        %v10392 = vmul.f32 %v10376, 0.5
        %v10393 = vmul.f32 %v10377, 0.5
        %v10394 = vmul.f32 %v10378, 0.5
        %v10395 = vmul.f32 %v10379, 0.5
        %v10396 = vmul.f32 %v10380, 0.5
        %v10397 = vmul.f32 %v10381, 0.5
        %v10398 = vmul.f32 %v10382, 0.5
        %v10399 = vmul.f32 %v10383, 0.5
        %v10400 = vmul.f32 %v10384, 0.5
        %v10401 = vmul.f32 %v10385, 0.5
        %v10402 = vmul.f32 %v10386, 0.5
        %v10403 = vmul.f32 %v10387, 0.5
        %v10404 = vmul.f32 %v10388, 0.5
        %v10405 = vmul.f32 %v9237, %v10389
        %v10406 = vmul.f32 %v9239, %v10390
        %v10407 = vmul.f32 %v9581, %v10391
        %v10408 = vmul.f32 %v9583, %v10392
        %v10409 = vmul.f32 %v9925, %v10393
        %v10410 = vmul.f32 %v9927, %v10394
        %v10411 = vmul.f32 %v10269, %v10395
        %v10412 = vmul.f32 %v10271, %v10396
        %v10413 = vmul.f32 %v9241, %v10397
        %v10414 = vmul.f32 %v9243, %v10398
        %v10415 = vmul.f32 %v9585, %v10399
        %v10416 = vmul.f32 %v9587, %v10400
        %v10417 = vmul.f32 %v9929, %v10401
        %v10418 = vmul.f32 %v9931, %v10402
        %v10419 = vmul.f32 %v10273, %v10403
        %v10420 = vmul.f32 %v10275, %v10404
        %s10421 = smul.u32 %s33, 1024
        %s10422 = sshra.s32 %s10421, 3
        %s10423 = sand.u32 %s10421, 7
        %s10424 = smul.addr %s10422, 4
        %s10425 = scalar_lea.vmem [#allocation11], %s10424
        %v10426 = vld [vmem:[%s10425] sm:$0xf]
        %v10427 = vld [vmem:[%s10425 + $0x4] sm:$0xf]
        %v10428 = vld [vmem:[%s10425 + $0x8] sm:$0xf]
        %v10429 = vld [vmem:[%s10425 + $0xc] sm:$0xf]
        %v10430 = vld [vmem:[%s10425 + $0x10] sm:$0xf]
        %v10431 = vld [vmem:[%s10425 + $0x14] sm:$0xf]
        %v10432 = vld [vmem:[%s10425 + $0x18] sm:$0xf]
        %v10433 = vld [vmem:[%s10425 + $0x1c] sm:$0xf]
        %v10434 = vld [vmem:[%s10425 + $0x20] sm:$0xf]
        %v10435 = vld [vmem:[%s10425 + $0x24] sm:$0xf]
        %v10436 = vld [vmem:[%s10425 + $0x28] sm:$0xf]
        %v10437 = vld [vmem:[%s10425 + $0x2c] sm:$0xf]
        %v10438 = vld [vmem:[%s10425 + $0x30] sm:$0xf]
        %v10439 = vld [vmem:[%s10425 + $0x34] sm:$0xf]
        %v10440 = vld [vmem:[%s10425 + $0x38] sm:$0xf]
        %v10441 = vld [vmem:[%s10425 + $0x3c] sm:$0xf]
        %v10442 = vld [vmem:[%s10425 + $0x40] sm:$0xf]
        %v10443 = vld [vmem:[%s10425 + $0x44] sm:$0xf]
        %v10444 = vld [vmem:[%s10425 + $0x48] sm:$0xf]
        %v10445 = vld [vmem:[%s10425 + $0x4c] sm:$0xf]
        %v10446 = vld [vmem:[%s10425 + $0x50] sm:$0xf]
        %v10447 = vld [vmem:[%s10425 + $0x54] sm:$0xf]
        %v10448 = vld [vmem:[%s10425 + $0x58] sm:$0xf]
        %v10449 = vld [vmem:[%s10425 + $0x5c] sm:$0xf]
        %v10450 = vld [vmem:[%s10425 + $0x60] sm:$0xf]
        %v10451 = vld [vmem:[%s10425 + $0x64] sm:$0xf]
        %v10452 = vld [vmem:[%s10425 + $0x68] sm:$0xf]
        %v10453 = vld [vmem:[%s10425 + $0x6c] sm:$0xf]
        %v10454 = vld [vmem:[%s10425 + $0x70] sm:$0xf]
        %v10455 = vld [vmem:[%s10425 + $0x74] sm:$0xf]
        %v10456 = vld [vmem:[%s10425 + $0x78] sm:$0xf]
        %v10457 = vld [vmem:[%s10425 + $0x7c] sm:$0xf]
        %v10458 = vld [vmem:[%s10425 + $0x80] sm:$0xf]
        %v10459 = vld [vmem:[%s10425 + $0x84] sm:$0xf]
        %v10460 = vld [vmem:[%s10425 + $0x88] sm:$0xf]
        %v10461 = vld [vmem:[%s10425 + $0x8c] sm:$0xf]
        %v10462 = vld [vmem:[%s10425 + $0x90] sm:$0xf]
        %v10463 = vld [vmem:[%s10425 + $0x94] sm:$0xf]
        %v10464 = vld [vmem:[%s10425 + $0x98] sm:$0xf]
        %v10465 = vld [vmem:[%s10425 + $0x9c] sm:$0xf]
        %v10466 = vld [vmem:[%s10425 + $0xa0] sm:$0xf]
        %v10467 = vld [vmem:[%s10425 + $0xa4] sm:$0xf]
        %v10468 = vld [vmem:[%s10425 + $0xa8] sm:$0xf]
        %v10469 = vld [vmem:[%s10425 + $0xac] sm:$0xf]
        %v10470 = vld [vmem:[%s10425 + $0xb0] sm:$0xf]
        %v10471 = vld [vmem:[%s10425 + $0xb4] sm:$0xf]
        %v10472 = vld [vmem:[%s10425 + $0xb8] sm:$0xf]
        %v10473 = vld [vmem:[%s10425 + $0xbc] sm:$0xf]
        %v10474 = vld [vmem:[%s10425 + $0xc0] sm:$0xf]
        %v10475 = vld [vmem:[%s10425 + $0xc4] sm:$0xf]
        %v10476 = vld [vmem:[%s10425 + $0xc8] sm:$0xf]
        %v10477 = vld [vmem:[%s10425 + $0xcc] sm:$0xf]
        %v10478 = vld [vmem:[%s10425 + $0xd0] sm:$0xf]
        %v10479 = vld [vmem:[%s10425 + $0xd4] sm:$0xf]
        %v10480 = vld [vmem:[%s10425 + $0xd8] sm:$0xf]
        %v10481 = vld [vmem:[%s10425 + $0xdc] sm:$0xf]
        %v10482 = vld [vmem:[%s10425 + $0xe0] sm:$0xf]
        %v10483 = vld [vmem:[%s10425 + $0xe4] sm:$0xf]
        %v10484 = vld [vmem:[%s10425 + $0xe8] sm:$0xf]
        %v10485 = vld [vmem:[%s10425 + $0xec] sm:$0xf]
        %v10486 = vld [vmem:[%s10425 + $0xf0] sm:$0xf]
        %v10487 = vld [vmem:[%s10425 + $0xf4] sm:$0xf]
        %v10488 = vld [vmem:[%s10425 + $0xf8] sm:$0xf]
        %v10489 = vld [vmem:[%s10425 + $0xfc] sm:$0xf]
        %v10490 = vld [vmem:[%s10425 + $0x100] sm:$0xf]
        %v10491 = vld [vmem:[%s10425 + $0x104] sm:$0xf]
        %v10492 = vld [vmem:[%s10425 + $0x108] sm:$0xf]
        %v10493 = vld [vmem:[%s10425 + $0x10c] sm:$0xf]
        %v10494 = vld [vmem:[%s10425 + $0x110] sm:$0xf]
        %v10495 = vld [vmem:[%s10425 + $0x114] sm:$0xf]
        %v10496 = vld [vmem:[%s10425 + $0x118] sm:$0xf]
        %v10497 = vld [vmem:[%s10425 + $0x11c] sm:$0xf]
        %v10498 = vld [vmem:[%s10425 + $0x120] sm:$0xf]
        %v10499 = vld [vmem:[%s10425 + $0x124] sm:$0xf]
        %v10500 = vld [vmem:[%s10425 + $0x128] sm:$0xf]
        %v10501 = vld [vmem:[%s10425 + $0x12c] sm:$0xf]
        %v10502 = vld [vmem:[%s10425 + $0x130] sm:$0xf]
        %v10503 = vld [vmem:[%s10425 + $0x134] sm:$0xf]
        %v10504 = vld [vmem:[%s10425 + $0x138] sm:$0xf]
        %v10505 = vld [vmem:[%s10425 + $0x13c] sm:$0xf]
        %v10506 = vld [vmem:[%s10425 + $0x140] sm:$0xf]
        %v10507 = vld [vmem:[%s10425 + $0x144] sm:$0xf]
        %v10508 = vld [vmem:[%s10425 + $0x148] sm:$0xf]
        %v10509 = vld [vmem:[%s10425 + $0x14c] sm:$0xf]
        %v10510 = vld [vmem:[%s10425 + $0x150] sm:$0xf]
        %v10511 = vld [vmem:[%s10425 + $0x154] sm:$0xf]
        %v10512 = vld [vmem:[%s10425 + $0x158] sm:$0xf]
        %v10513 = vld [vmem:[%s10425 + $0x15c] sm:$0xf]
        %v10514 = vld [vmem:[%s10425 + $0x160] sm:$0xf]
        %v10515 = vld [vmem:[%s10425 + $0x164] sm:$0xf]
        %v10516 = vld [vmem:[%s10425 + $0x168] sm:$0xf]
        %v10517 = vld [vmem:[%s10425 + $0x16c] sm:$0xf]
        %v10518 = vld [vmem:[%s10425 + $0x170] sm:$0xf]
        %v10519 = vld [vmem:[%s10425 + $0x174] sm:$0xf]
        %v10520 = vld [vmem:[%s10425 + $0x178] sm:$0xf]
        %v10521 = vld [vmem:[%s10425 + $0x17c] sm:$0xf]
        %v10522 = vld [vmem:[%s10425 + $0x180] sm:$0xf]
        %v10523 = vld [vmem:[%s10425 + $0x184] sm:$0xf]
        %v10524 = vld [vmem:[%s10425 + $0x188] sm:$0xf]
        %v10525 = vld [vmem:[%s10425 + $0x18c] sm:$0xf]
        %v10526 = vld [vmem:[%s10425 + $0x190] sm:$0xf]
        %v10527 = vld [vmem:[%s10425 + $0x194] sm:$0xf]
        %v10528 = vld [vmem:[%s10425 + $0x198] sm:$0xf]
        %v10529 = vld [vmem:[%s10425 + $0x19c] sm:$0xf]
        %v10530 = vld [vmem:[%s10425 + $0x1a0] sm:$0xf]
        %v10531 = vld [vmem:[%s10425 + $0x1a4] sm:$0xf]
        %v10532 = vld [vmem:[%s10425 + $0x1a8] sm:$0xf]
        %v10533 = vld [vmem:[%s10425 + $0x1ac] sm:$0xf]
        %v10534 = vld [vmem:[%s10425 + $0x1b0] sm:$0xf]
        %v10535 = vld [vmem:[%s10425 + $0x1b4] sm:$0xf]
        %v10536 = vld [vmem:[%s10425 + $0x1b8] sm:$0xf]
        %v10537 = vld [vmem:[%s10425 + $0x1bc] sm:$0xf]
        %v10538 = vld [vmem:[%s10425 + $0x1c0] sm:$0xf]
        %v10539 = vld [vmem:[%s10425 + $0x1c4] sm:$0xf]
        %v10540 = vld [vmem:[%s10425 + $0x1c8] sm:$0xf]
        %v10541 = vld [vmem:[%s10425 + $0x1cc] sm:$0xf]
        %v10542 = vld [vmem:[%s10425 + $0x1d0] sm:$0xf]
        %v10543 = vld [vmem:[%s10425 + $0x1d4] sm:$0xf]
        %v10544 = vld [vmem:[%s10425 + $0x1d8] sm:$0xf]
        %v10545 = vld [vmem:[%s10425 + $0x1dc] sm:$0xf]
        %v10546 = vld [vmem:[%s10425 + $0x1e0] sm:$0xf]
        %v10547 = vld [vmem:[%s10425 + $0x1e4] sm:$0xf]
        %v10548 = vld [vmem:[%s10425 + $0x1e8] sm:$0xf]
        %v10549 = vld [vmem:[%s10425 + $0x1ec] sm:$0xf]
        %v10550 = vld [vmem:[%s10425 + $0x1f0] sm:$0xf]
        %v10551 = vld [vmem:[%s10425 + $0x1f4] sm:$0xf]
        %v10552 = vld [vmem:[%s10425 + $0x1f8] sm:$0xf]
        %v10553 = vld [vmem:[%s10425 + $0x1fc] sm:$0xf]
        %v10554 = vpack.c.bf16 %v10413, %v10405
        %v10555 = vpack.c.bf16 %v10414, %v10406
        %v10556 = vpack.c.bf16 %v10415, %v10407
        %v10557 = vpack.c.bf16 %v10416, %v10408
        %v10558 = vpack.c.bf16 %v10417, %v10409
        %v10559 = vpack.c.bf16 %v10418, %v10410
        %v10560 = vpack.c.bf16 %v10419, %v10411
        %v10561 = vpack.c.bf16 %v10420, %v10412
        %v10690 = vunpack.c.l.b16 %v10426
        %v10691 = vunpack.c.l.b16 %v10427
        %v10692 = vunpack.c.l.b16 %v10428
        %v10693 = vunpack.c.l.b16 %v10429
        %v10694 = vunpack.c.l.b16 %v10430
        %v10695 = vunpack.c.l.b16 %v10431
        %v10696 = vunpack.c.l.b16 %v10432
        %v10697 = vunpack.c.l.b16 %v10433
        %v10698 = vunpack.c.l.b16 %v10434
        %v10699 = vunpack.c.l.b16 %v10435
        %v10700 = vunpack.c.l.b16 %v10436
        %v10701 = vunpack.c.l.b16 %v10437
        %v10702 = vunpack.c.l.b16 %v10438
        %v10703 = vunpack.c.l.b16 %v10439
        %v10704 = vunpack.c.l.b16 %v10440
        %v10705 = vunpack.c.l.b16 %v10441
        %v10706 = vunpack.c.l.b16 %v10442
        %v10707 = vunpack.c.l.b16 %v10443
        %v10708 = vunpack.c.l.b16 %v10444
        %v10709 = vunpack.c.l.b16 %v10445
        %v10710 = vunpack.c.l.b16 %v10446
        %v10711 = vunpack.c.l.b16 %v10447
        %v10712 = vunpack.c.l.b16 %v10448
        %v10713 = vunpack.c.l.b16 %v10449
        %v10714 = vunpack.c.l.b16 %v10450
        %v10715 = vunpack.c.l.b16 %v10451
        %v10716 = vunpack.c.l.b16 %v10452
        %v10717 = vunpack.c.l.b16 %v10453
        %v10718 = vunpack.c.l.b16 %v10454
        %v10719 = vunpack.c.l.b16 %v10455
        %v10720 = vunpack.c.l.b16 %v10456
        %v10721 = vunpack.c.l.b16 %v10457
        %v10722 = vunpack.c.l.b16 %v10458
        %v10723 = vunpack.c.l.b16 %v10459
        %v10724 = vunpack.c.l.b16 %v10460
        %v10725 = vunpack.c.l.b16 %v10461
        %v10726 = vunpack.c.l.b16 %v10462
        %v10727 = vunpack.c.l.b16 %v10463
        %v10728 = vunpack.c.l.b16 %v10464
        %v10729 = vunpack.c.l.b16 %v10465
        %v10730 = vunpack.c.l.b16 %v10466
        %v10731 = vunpack.c.l.b16 %v10467
        %v10732 = vunpack.c.l.b16 %v10468
        %v10733 = vunpack.c.l.b16 %v10469
        %v10734 = vunpack.c.l.b16 %v10470
        %v10735 = vunpack.c.l.b16 %v10471
        %v10736 = vunpack.c.l.b16 %v10472
        %v10737 = vunpack.c.l.b16 %v10473
        %v10738 = vunpack.c.l.b16 %v10474
        %v10739 = vunpack.c.l.b16 %v10475
        %v10740 = vunpack.c.l.b16 %v10476
        %v10741 = vunpack.c.l.b16 %v10477
        %v10742 = vunpack.c.l.b16 %v10478
        %v10743 = vunpack.c.l.b16 %v10479
        %v10744 = vunpack.c.l.b16 %v10480
        %v10745 = vunpack.c.l.b16 %v10481
        %v10746 = vunpack.c.l.b16 %v10482
        %v10747 = vunpack.c.l.b16 %v10483
        %v10748 = vunpack.c.l.b16 %v10484
        %v10749 = vunpack.c.l.b16 %v10485
        %v10750 = vunpack.c.l.b16 %v10486
        %v10751 = vunpack.c.l.b16 %v10487
        %v10752 = vunpack.c.l.b16 %v10488
        %v10753 = vunpack.c.l.b16 %v10489
        %v10754 = vunpack.c.l.b16 %v10490
        %v10755 = vunpack.c.l.b16 %v10491
        %v10756 = vunpack.c.l.b16 %v10492
        %v10757 = vunpack.c.l.b16 %v10493
        %v10758 = vunpack.c.l.b16 %v10494
        %v10759 = vunpack.c.l.b16 %v10495
        %v10760 = vunpack.c.l.b16 %v10496
        %v10761 = vunpack.c.l.b16 %v10497
        %v10762 = vunpack.c.l.b16 %v10498
        %v10763 = vunpack.c.l.b16 %v10499
        %v10764 = vunpack.c.l.b16 %v10500
        %v10765 = vunpack.c.l.b16 %v10501
        %v10766 = vunpack.c.l.b16 %v10502
        %v10767 = vunpack.c.l.b16 %v10503
        %v10768 = vunpack.c.l.b16 %v10504
        %v10769 = vunpack.c.l.b16 %v10505
        %v10770 = vunpack.c.l.b16 %v10506
        %v10771 = vunpack.c.l.b16 %v10507
        %v10772 = vunpack.c.l.b16 %v10508
        %v10773 = vunpack.c.l.b16 %v10509
        %v10774 = vunpack.c.l.b16 %v10510
        %v10775 = vunpack.c.l.b16 %v10511
        %v10776 = vunpack.c.l.b16 %v10512
        %v10777 = vunpack.c.l.b16 %v10513
        %v10778 = vunpack.c.l.b16 %v10514
        %v10779 = vunpack.c.l.b16 %v10515
        %v10780 = vunpack.c.l.b16 %v10516
        %v10781 = vunpack.c.l.b16 %v10517
        %v10782 = vunpack.c.l.b16 %v10518
        %v10783 = vunpack.c.l.b16 %v10519
        %v10784 = vunpack.c.l.b16 %v10520
        %v10785 = vunpack.c.l.b16 %v10521
        %v10786 = vunpack.c.l.b16 %v10522
        %v10787 = vunpack.c.l.b16 %v10523
        %v10788 = vunpack.c.l.b16 %v10524
        %v10789 = vunpack.c.l.b16 %v10525
        %v10790 = vunpack.c.l.b16 %v10526
        %v10791 = vunpack.c.l.b16 %v10527
        %v10792 = vunpack.c.l.b16 %v10528
        %v10793 = vunpack.c.l.b16 %v10529
        %v10794 = vunpack.c.l.b16 %v10530
        %v10795 = vunpack.c.l.b16 %v10531
        %v10796 = vunpack.c.l.b16 %v10532
        %v10797 = vunpack.c.l.b16 %v10533
        %v10798 = vunpack.c.l.b16 %v10534
        %v10799 = vunpack.c.l.b16 %v10535
        %v10800 = vunpack.c.l.b16 %v10536
        %v10801 = vunpack.c.l.b16 %v10537
        %v10802 = vunpack.c.l.b16 %v10538
        %v10803 = vunpack.c.l.b16 %v10539
        %v10804 = vunpack.c.l.b16 %v10540
        %v10805 = vunpack.c.l.b16 %v10541
        %v10806 = vunpack.c.l.b16 %v10542
        %v10807 = vunpack.c.l.b16 %v10543
        %v10808 = vunpack.c.l.b16 %v10544
        %v10809 = vunpack.c.l.b16 %v10545
        %v10810 = vunpack.c.l.b16 %v10546
        %v10811 = vunpack.c.l.b16 %v10547
        %v10812 = vunpack.c.l.b16 %v10548
        %v10813 = vunpack.c.l.b16 %v10549
        %v10814 = vunpack.c.l.b16 %v10550
        %v10815 = vunpack.c.l.b16 %v10551
        %v10816 = vunpack.c.l.b16 %v10552
        %v10817 = vunpack.c.l.b16 %v10553
        %v10818 = vpack.c.b16 %v10691, %v10690
        %v10819 = vpack.c.b16 %v10693, %v10692
        %v10820 = vpack.c.b16 %v10695, %v10694
        %v10821 = vpack.c.b16 %v10697, %v10696
        %v10822 = vpack.c.b16 %v10699, %v10698
        %v10823 = vpack.c.b16 %v10701, %v10700
        %v10824 = vpack.c.b16 %v10703, %v10702
        %v10825 = vpack.c.b16 %v10705, %v10704
        %v10826 = vpack.c.b16 %v10707, %v10706
        %v10827 = vpack.c.b16 %v10709, %v10708
        %v10828 = vpack.c.b16 %v10711, %v10710
        %v10829 = vpack.c.b16 %v10713, %v10712
        %v10830 = vpack.c.b16 %v10715, %v10714
        %v10831 = vpack.c.b16 %v10717, %v10716
        %v10832 = vpack.c.b16 %v10719, %v10718
        %v10833 = vpack.c.b16 %v10721, %v10720
        %v10834 = vpack.c.b16 %v10723, %v10722
        %v10835 = vpack.c.b16 %v10725, %v10724
        %v10836 = vpack.c.b16 %v10727, %v10726
        %v10837 = vpack.c.b16 %v10729, %v10728
        %v10838 = vpack.c.b16 %v10731, %v10730
        %v10839 = vpack.c.b16 %v10733, %v10732
        %v10840 = vpack.c.b16 %v10735, %v10734
        %v10841 = vpack.c.b16 %v10737, %v10736
        %v10842 = vpack.c.b16 %v10739, %v10738
        %v10843 = vpack.c.b16 %v10741, %v10740
        %v10844 = vpack.c.b16 %v10743, %v10742
        %v10845 = vpack.c.b16 %v10745, %v10744
        %v10846 = vpack.c.b16 %v10747, %v10746
        %v10847 = vpack.c.b16 %v10749, %v10748
        %v10848 = vpack.c.b16 %v10751, %v10750
        %v10849 = vpack.c.b16 %v10753, %v10752
        %v10850 = vpack.c.b16 %v10755, %v10754
        %v10851 = vpack.c.b16 %v10757, %v10756
        %v10852 = vpack.c.b16 %v10759, %v10758
        %v10853 = vpack.c.b16 %v10761, %v10760
        %v10854 = vpack.c.b16 %v10763, %v10762
        %v10855 = vpack.c.b16 %v10765, %v10764
        %v10856 = vpack.c.b16 %v10767, %v10766
        %v10857 = vpack.c.b16 %v10769, %v10768
        %v10858 = vpack.c.b16 %v10771, %v10770
        %v10859 = vpack.c.b16 %v10773, %v10772
        %v10860 = vpack.c.b16 %v10775, %v10774
        %v10861 = vpack.c.b16 %v10777, %v10776
        %v10862 = vpack.c.b16 %v10779, %v10778
        %v10863 = vpack.c.b16 %v10781, %v10780
        %v10864 = vpack.c.b16 %v10783, %v10782
        %v10865 = vpack.c.b16 %v10785, %v10784
        %v10866 = vpack.c.b16 %v10787, %v10786
        %v10867 = vpack.c.b16 %v10789, %v10788
        %v10868 = vpack.c.b16 %v10791, %v10790
        %v10869 = vpack.c.b16 %v10793, %v10792
        %v10870 = vpack.c.b16 %v10795, %v10794
        %v10871 = vpack.c.b16 %v10797, %v10796
        %v10872 = vpack.c.b16 %v10799, %v10798
        %v10873 = vpack.c.b16 %v10801, %v10800
        %v10874 = vpack.c.b16 %v10803, %v10802
        %v10875 = vpack.c.b16 %v10805, %v10804
        %v10876 = vpack.c.b16 %v10807, %v10806
        %v10877 = vpack.c.b16 %v10809, %v10808
        %v10878 = vpack.c.b16 %v10811, %v10810
        %v10879 = vpack.c.b16 %v10813, %v10812
        %v10880 = vpack.c.b16 %v10815, %v10814
        %v10881 = vpack.c.b16 %v10817, %v10816
        %10946 = vmatprep.subr.bf16.mxu0 0
        %10947 = vmatpush1.bf16.msra.mxu0 %v10825
        %10948 = vmatprep.subr.bf16.mxu0 0
        %10949 = vmatpush1.bf16.msra.mxu0 %v10824
        %10950 = vmatprep.subr.bf16.mxu0 0
        %10951 = vmatpush1.bf16.msra.mxu0 %v10823
        %10952 = vmatprep.subr.bf16.mxu0 0
        %10953 = vmatpush1.bf16.msra.mxu0 %v10822
        %10954 = vmatprep.subr.bf16.mxu0 0
        %10955 = vmatpush1.bf16.msra.mxu0 %v10821
        %10956 = vmatprep.subr.bf16.mxu0 0
        %10957 = vmatpush1.bf16.msra.mxu0 %v10820
        %10958 = vmatprep.subr.bf16.mxu0 0
        %10959 = vmatpush1.bf16.msra.mxu0 %v10819
        %10960 = vmatprep.subr.bf16.mxu0 0
        %10961 = vmatpush1.bf16.msra.mxu0 %v10818
        %10962 = vmatprep.subr.bf16.mxu0 0
        %10963 = vmatpush2.bf16.msra.mxu0 %v10833
        %10964 = vmatprep.subr.bf16.mxu0 0
        %10965 = vmatpush2.bf16.msra.mxu0 %v10832
        %10966 = vmatprep.subr.bf16.mxu0 0
        %10967 = vmatpush2.bf16.msra.mxu0 %v10831
        %10968 = vmatprep.subr.bf16.mxu0 0
        %10969 = vmatpush2.bf16.msra.mxu0 %v10830
        %10970 = vmatprep.subr.bf16.mxu0 0
        %10971 = vmatpush2.bf16.msra.mxu0 %v10829
        %10972 = vmatprep.subr.bf16.mxu0 0
        %10973 = vmatpush2.bf16.msra.mxu0 %v10828
        %10974 = vmatprep.subr.bf16.mxu0 0
        %10975 = vmatpush2.bf16.msra.mxu0 %v10827
        %10976 = vmatprep.subr.bf16.mxu0 0
        %10977 = vmatpush2.bf16.msra.mxu0 %v10826
        %10978 = vmatprep.mubr.bf16.mxu0 %v10555
        %10979 = vmatmul.mubr.bf16.gmra.mxu0 %v10554
        %v10980 = vpop.f32.mrf.mxu0
        %v10981 = vadd.f32 0.0, %v10980
        %v10982 = vpop.f32.mrf.mxu0
        %v10983 = vpop.f32.mrf.mxu0
        %v10984 = vadd.f32 0.0, %v10983
        %v10985 = vpop.f32.mrf.mxu0
        %10986 = vdwg.mxu0
        %10987 = vmatprep.subr.bf16.mxu0 0
        %10988 = vmatpush1.bf16.msra.mxu0 %v10841
        %10989 = vmatprep.subr.bf16.mxu0 0
        %10990 = vmatpush1.bf16.msra.mxu0 %v10840
        %10991 = vmatprep.subr.bf16.mxu0 0
        %10992 = vmatpush1.bf16.msra.mxu0 %v10839
        %10993 = vmatprep.subr.bf16.mxu0 0
        %10994 = vmatpush1.bf16.msra.mxu0 %v10838
        %10995 = vmatprep.subr.bf16.mxu0 0
        %10996 = vmatpush1.bf16.msra.mxu0 %v10837
        %10997 = vmatprep.subr.bf16.mxu0 0
        %10998 = vmatpush1.bf16.msra.mxu0 %v10836
        %10999 = vmatprep.subr.bf16.mxu0 0
        %11000 = vmatpush1.bf16.msra.mxu0 %v10835
        %11001 = vmatprep.subr.bf16.mxu0 0
        %11002 = vmatpush1.bf16.msra.mxu0 %v10834
        %11003 = vmatprep.subr.bf16.mxu0 0
        %11004 = vmatpush2.bf16.msra.mxu0 %v10849
        %11005 = vmatprep.subr.bf16.mxu0 0
        %11006 = vmatpush2.bf16.msra.mxu0 %v10848
        %11007 = vmatprep.subr.bf16.mxu0 0
        %11008 = vmatpush2.bf16.msra.mxu0 %v10847
        %11009 = vmatprep.subr.bf16.mxu0 0
        %11010 = vmatpush2.bf16.msra.mxu0 %v10846
        %11011 = vmatprep.subr.bf16.mxu0 0
        %11012 = vmatpush2.bf16.msra.mxu0 %v10845
        %11013 = vmatprep.subr.bf16.mxu0 0
        %11014 = vmatpush2.bf16.msra.mxu0 %v10844
        %11015 = vmatprep.subr.bf16.mxu0 0
        %11016 = vmatpush2.bf16.msra.mxu0 %v10843
        %11017 = vmatprep.subr.bf16.mxu0 0
        %11018 = vmatpush2.bf16.msra.mxu0 %v10842
        %11019 = vmatprep.mubr.bf16.mxu0 %v10557
        %11020 = vmatmul.mubr.bf16.gmra.mxu0 %v10556
        %v11021 = vpop.f32.mrf.mxu0
        %v11022 = vadd.f32 %v10981, %v11021
        %v11023 = vpop.f32.mrf.mxu0
        %v11024 = vpop.f32.mrf.mxu0
        %v11025 = vadd.f32 %v10984, %v11024
        %v11026 = vpop.f32.mrf.mxu0
        %11027 = vdwg.mxu0
        %11028 = vmatprep.subr.bf16.mxu0 0
        %11029 = vmatpush1.bf16.msra.mxu0 %v10857
        %11030 = vmatprep.subr.bf16.mxu0 0
        %11031 = vmatpush1.bf16.msra.mxu0 %v10856
        %11032 = vmatprep.subr.bf16.mxu0 0
        %11033 = vmatpush1.bf16.msra.mxu0 %v10855
        %11034 = vmatprep.subr.bf16.mxu0 0
        %11035 = vmatpush1.bf16.msra.mxu0 %v10854
        %11036 = vmatprep.subr.bf16.mxu0 0
        %11037 = vmatpush1.bf16.msra.mxu0 %v10853
        %11038 = vmatprep.subr.bf16.mxu0 0
        %11039 = vmatpush1.bf16.msra.mxu0 %v10852
        %11040 = vmatprep.subr.bf16.mxu0 0
        %11041 = vmatpush1.bf16.msra.mxu0 %v10851
        %11042 = vmatprep.subr.bf16.mxu0 0
        %11043 = vmatpush1.bf16.msra.mxu0 %v10850
        %11044 = vmatprep.subr.bf16.mxu0 0
        %11045 = vmatpush2.bf16.msra.mxu0 %v10865
        %11046 = vmatprep.subr.bf16.mxu0 0
        %11047 = vmatpush2.bf16.msra.mxu0 %v10864
        %11048 = vmatprep.subr.bf16.mxu0 0
        %11049 = vmatpush2.bf16.msra.mxu0 %v10863
        %11050 = vmatprep.subr.bf16.mxu0 0
        %11051 = vmatpush2.bf16.msra.mxu0 %v10862
        %11052 = vmatprep.subr.bf16.mxu0 0
        %11053 = vmatpush2.bf16.msra.mxu0 %v10861
        %11054 = vmatprep.subr.bf16.mxu0 0
        %11055 = vmatpush2.bf16.msra.mxu0 %v10860
        %11056 = vmatprep.subr.bf16.mxu0 0
        %11057 = vmatpush2.bf16.msra.mxu0 %v10859
        %11058 = vmatprep.subr.bf16.mxu0 0
        %11059 = vmatpush2.bf16.msra.mxu0 %v10858
        %11060 = vmatprep.mubr.bf16.mxu0 %v10559
        %11061 = vmatmul.mubr.bf16.gmra.mxu0 %v10558
        %v11062 = vpop.f32.mrf.mxu0
        %v11063 = vadd.f32 %v11022, %v11062
        %v11064 = vpop.f32.mrf.mxu0
        %v11065 = vpop.f32.mrf.mxu0
        %v11066 = vadd.f32 %v11025, %v11065
        %v11067 = vpop.f32.mrf.mxu0
        %11068 = vdwg.mxu0
        %11069 = vmatprep.subr.bf16.mxu0 0
        %11070 = vmatpush1.bf16.msra.mxu0 %v10873
        %11071 = vmatprep.subr.bf16.mxu0 0
        %11072 = vmatpush1.bf16.msra.mxu0 %v10872
        %11073 = vmatprep.subr.bf16.mxu0 0
        %11074 = vmatpush1.bf16.msra.mxu0 %v10871
        %11075 = vmatprep.subr.bf16.mxu0 0
        %11076 = vmatpush1.bf16.msra.mxu0 %v10870
        %11077 = vmatprep.subr.bf16.mxu0 0
        %11078 = vmatpush1.bf16.msra.mxu0 %v10869
        %11079 = vmatprep.subr.bf16.mxu0 0
        %11080 = vmatpush1.bf16.msra.mxu0 %v10868
        %11081 = vmatprep.subr.bf16.mxu0 0
        %11082 = vmatpush1.bf16.msra.mxu0 %v10867
        %11083 = vmatprep.subr.bf16.mxu0 0
        %11084 = vmatpush1.bf16.msra.mxu0 %v10866
        %11085 = vmatprep.subr.bf16.mxu0 0
        %11086 = vmatpush2.bf16.msra.mxu0 %v10881
        %11087 = vmatprep.subr.bf16.mxu0 0
        %11088 = vmatpush2.bf16.msra.mxu0 %v10880
        %11089 = vmatprep.subr.bf16.mxu0 0
        %11090 = vmatpush2.bf16.msra.mxu0 %v10879
        %11091 = vmatprep.subr.bf16.mxu0 0
        %11092 = vmatpush2.bf16.msra.mxu0 %v10878
        %11093 = vmatprep.subr.bf16.mxu0 0
        %11094 = vmatpush2.bf16.msra.mxu0 %v10877
        %11095 = vmatprep.subr.bf16.mxu0 0
        %11096 = vmatpush2.bf16.msra.mxu0 %v10876
        %11097 = vmatprep.subr.bf16.mxu0 0
        %11098 = vmatpush2.bf16.msra.mxu0 %v10875
        %11099 = vmatprep.subr.bf16.mxu0 0
        %11100 = vmatpush2.bf16.msra.mxu0 %v10874
        %11101 = vmatprep.mubr.bf16.mxu0 %v10561
        %11102 = vmatmul.mubr.bf16.gmra.mxu0 %v10560
        %v11103 = vpop.f32.mrf.mxu0
        %v11104 = vadd.f32 %v11063, %v11103
        %v11105 = vpop.f32.mrf.mxu0
        %v11106 = vpop.f32.mrf.mxu0
        %v11107 = vadd.f32 %v11066, %v11106
        %v11108 = vpop.f32.mrf.mxu0
        %11109 = vdwg.mxu0
        %11110 = vst [vmem:[%s431] sm:$0xff] %v11104
        %11111 = vst [vmem:[%s431 + $0x8] sm:$0xff] %v11107
        %s11112 = sand.u32 %s200, 1
        %s11113 = scalar_lea.sflag [#allocation4], %s11112
        %s11114 = sand.u32 %s200, 1
        %s11115 = smul.addr %s11114, 16
        %s11116 = scalar_lea.vmem [#allocation13], %s11115
        // Predicated region
        $region69: #{tpu_custom_call.1} parent=43 // pred_check
          %p11117 = pneg %p210
        $region70: #{tpu_custom_call.1} parent=43 // pred_check_branch
          %11119 = sbr.rel (%p11117) target = $region72
        $region71: #{tpu_custom_call.1} parent=43 // pred_region
          %s11121 = ssub.s32 256, 256
          %11122 = vsyncadd %s11113, %s11121
          %s11123 = smul.addr %s33, 2
          %s11124 = smul.addr %s32, 4
          %s11125 = sadd.s32 %s11123, %s11124
          %s11126 = smul.addr %s11125, 128
          %s11127 = scalar_lea.hbm %s6, %s11126
          %s11128 = sshll.u32 %s11116, 4
          %s11129 = int_to_ptr.vmem [resolvable:$true] %s11128
          %11134 = dma.vmem_to_hbm [thread:$0]  %s11129, 256, %s11127, %s11113, 128, 128, 8
        $region72: #{tpu_custom_call.1} parent=43 // pred_fallthru
          _
      $region44: #{tpu_custom_call.1} parent=5 // pred_fallthru
        _
      %p11135 = scmp.le.s32.totalorder 2, %s23
      // Predicated region
      $region73: #{tpu_custom_call.1} parent=5 // pred_check
        %p11136 = pneg %p11135
      $region74: #{tpu_custom_call.1} parent=5 // pred_check_branch
        %11138 = sbr.rel (%p11136) target = $region76
      $region75: #{tpu_custom_call.1} parent=5 // pred_region
        %s11139 = ssub.s32 %s23, 2
        // Predicated region
        $region77: #{tpu_custom_call.1} parent=75 // pred_check
          %p11140 = pneg %p216
        $region78: #{tpu_custom_call.1} parent=75 // pred_check_branch
          %11142 = sbr.rel (%p11140) target = $region80
        $region79: #{tpu_custom_call.1} parent=75 // pred_region
          %s11143 = sand.u32 %s201, 1
          %s11144 = scalar_lea.sflag [#allocation4], %s11143
          %s11145 = sand.u32 %s201, 1
          %s11146 = smul.addr %s11145, 16
          %s11147 = scalar_lea.vmem [#allocation13], %s11146
          %11148 = dma.done %s11144, 256
        $region80: #{tpu_custom_call.1} parent=75 // pred_fallthru
          _
      $region76: #{tpu_custom_call.1} parent=5 // pred_fallthru
        _
    $region6: #{tpu_custom_call.1} parent=1 // loop_footer
      %s27 = sadd.s32 1, %s23
    $region7: #{tpu_custom_call.1} parent=1 // loop_footer_branch
      %22 = sbr.rel target = $region3
    $region8: #{tpu_custom_call.1} parent=1 // loop_exit
      _
    %11149 = vsyncpa [#allocation3], 1
    %s11150 = scalar_lea.sflag [#allocation3], 1
    %11151 = vsyncpa %s11150, 1
    %11152 = vsyncpa [#allocation6], 1
    %s11153 = scalar_lea.sflag [#allocation6], 1
    %11154 = vsyncpa %s11153, 1
    %11155 = vsyncpa [#allocation9], 1
    %s11156 = scalar_lea.sflag [#allocation9], 1
    %11157 = vsyncpa %s11156, 1
    %11158 = vsyncpa [#allocation12], 1
    %11159 = vsyncpa [#allocation4], 1
    %s11160 = scalar_lea.sflag [#allocation4], 1
    %11161 = vsyncpa %s11160, 1

</llo_original>
